<compile_context>
chip_gen: v7x
topology: tpu7x:2x2x1
jax: 0.10.0
libtpu: 0.0.40
codegen_flags: <defaults>
</compile_context>

<pallas_src>
import functools

import jax
import jax.numpy as jnp
from jax.experimental import pallas as pl
from jax.experimental.pallas import tpu as pltpu

# PyTorch's F.binary_cross_entropy clamps log terms at -100 for numerical safety.
_LOG_CLAMP = -100.0

LANES = 128
MAX_ROW_TILE = 4096          # 4096 x 128 f32 = 2 MiB per input block
NUM_CORES = 2                # leading "parallel" axis; sharded across TCs on multi-TC chips
SMALL_ROWS = 1024            # below this, skip the kernel and use plain XLA
_VMEM_LIMIT_BYTES = 32 * 1024 * 1024


def _round_up(x, m):
    return ((x + m - 1) // m) * m


def _sublane_multiple(dtype):
    # f32 -> 8, bf16/f16 -> 16, int8/fp8 -> 32 (sub-32-bit dtypes pack along sublanes).
    return max(8, 32 // jnp.dtype(dtype).itemsize)


def _bce_sum_kernel(p_ref, t_ref, o_ref, acc_ref, *,
                    row_tile, rows_total, tiles_per_core):
    c = pl.program_id(0)          # "core" (parallel) axis
    i = pl.program_id(1)          # reduction ("arbitrary") axis

    @pl.when(i == 0)
    def _():
        acc_ref[...] = jnp.zeros_like(acc_ref)

    # Global tile index this step covers.  The index_map clamps OOB tiles onto a
    # valid block; such tiles (and the one real partial tile) are masked below.
    tile_linear = c * tiles_per_core + i

    p = p_ref[...].astype(jnp.float32)
    t = t_ref[...].astype(jnp.float32)
    log_p = jnp.maximum(jnp.log(p), _LOG_CLAMP)
    log_1mp = jnp.maximum(jnp.log(1.0 - p), _LOG_CLAMP)
    # Factored *negative* loss: per-element BCE = -(log_1mp + t*(log_p - log_1mp)).
    s = log_1mp + t * (log_p - log_1mp)

    # Only tiles that extend past the real data need the iota/compare/select work.
    needs_mask = (tile_linear + 1) * row_tile > rows_total

    @pl.when(jnp.logical_not(needs_mask))
    def _():
        # Interior tile fast path: pure elementwise + a vreg-slab accumulate.
        acc_ref[...] += jnp.sum(s.reshape(-1, 8, LANES), axis=0)

    @pl.when(needs_mask)
    def _():
        row_idx = (tile_linear * row_tile
                   + jax.lax.broadcasted_iota(jnp.int32, (row_tile, LANES), 0))
        # Post-mask with select: NaNs from log of OOB garbage cannot propagate
        # through the unselected branch of a select.
        s_masked = jnp.where(row_idx < rows_total, s, 0.0)
        acc_ref[...] += jnp.sum(s_masked.reshape(-1, 8, LANES), axis=0)

    @pl.when(i == pl.num_programs(1) - 1)
    def _():
        o_ref[...] = acc_ref[...].reshape(1, 8, LANES)


def _bce_sum_jax(p, t):
    """Sum of clamped BCE over flat arrays (plain XLA path)."""
    p = p.astype(jnp.float32)
    t = t.astype(jnp.float32)
    log_p = jnp.maximum(jnp.log(p), _LOG_CLAMP)
    log_1mp = jnp.maximum(jnp.log(1.0 - p), _LOG_CLAMP)
    return jnp.sum(-(log_1mp + t * (log_p - log_1mp)))


def my_loss(pred1, tar1):
    """Equivalent of MyLoss.forward: F.binary_cross_entropy(pred1, tar1) (mean)."""
    assert pred1.shape == tar1.shape
    n_total = pred1.size

    flat_p = pred1.reshape(-1)      # free reshape, native dtype on the wire
    flat_t = tar1.reshape(-1)
    rows = n_total // LANES

    # Small-input fast path: launch + pipeline prologue dominates tiny shapes.
    if rows < SMALL_ROWS:
        return _bce_sum_jax(flat_p, flat_t) / n_total

    rem = n_total - rows * LANES
    tail_sum = jnp.zeros((), jnp.float32)
    if rem:
        # Ragged lane tail (<128 elements): plain JAX.  The prefix slice below forces
        # XLA to materialize a copy of the main body before pallas_call.
        # TODO(synk): fold the lane tail into the kernel's last tile via a global
        # element-index mask to avoid that copy for non-multiple-of-128 sizes.
        tail_sum = _bce_sum_jax(flat_p[rows * LANES:], flat_t[rows * LANES:])
        flat_p = flat_p[: rows * LANES]
        flat_t = flat_t[: rows * LANES]

    p2d = flat_p.reshape(rows, LANES)
    t2d = flat_t.reshape(rows, LANES)

    sub = max(_sublane_multiple(p2d.dtype), _sublane_multiple(t2d.dtype))
    row_tile = min(MAX_ROW_TILE, _round_up(rows, sub))
    num_tiles = pl.cdiv(rows, row_tile)

    # Pay the 2-wide core axis (v7x TensorCore split) only when the <=1 redundant
    # clamped block is well amortized; single-TC chips then see at most one extra
    # block read on large inputs and none on small/medium ones.
    num_cores = NUM_CORES if num_tiles >= 4 else 1
    tiles_per_core = pl.cdiv(num_tiles, num_cores)

    def in_map(c, i):
        # Clamp so grid steps past the real data map onto a valid (fully masked) block.
        return (jnp.minimum(c * tiles_per_core + i, num_tiles - 1), 0)

    kernel = functools.partial(
        _bce_sum_kernel,
        row_tile=row_tile, rows_total=rows, tiles_per_core=tiles_per_core)

    itemsize = jnp.dtype(p2d.dtype).itemsize
    partials = pl.pallas_call(
        kernel,
        out_shape=jax.ShapeDtypeStruct((num_cores, 8, LANES), jnp.float32),
        grid_spec=pltpu.PrefetchScalarGridSpec(
            num_scalar_prefetch=0,
            grid=(num_cores, tiles_per_core),
            in_specs=[
                pl.BlockSpec((row_tile, LANES), in_map),
                pl.BlockSpec((row_tile, LANES), in_map),
            ],
            out_specs=pl.BlockSpec((1, 8, LANES), lambda c, i: (c, 0, 0)),
            scratch_shapes=[pltpu.VMEM((8, LANES), jnp.float32)],
        ),
        compiler_params=pltpu.CompilerParams(
            # "parallel" shards the leading axis across TensorCores on multi-TC chips
            # (no-op on v5e/v6e).
            # TODO(synk): switch to pltpu.CORE_PARALLEL if a v7x profile shows one
            # TensorCore idle with plain "parallel".
            dimension_semantics=("parallel", "arbitrary"),
            vmem_limit_bytes=_VMEM_LIMIT_BYTES,
        ),
        cost_estimate=pl.CostEstimate(
            flops=6 * n_total,
            transcendentals=2 * n_total,
            bytes_accessed=2 * n_total * itemsize + num_cores * 8 * LANES * 4,
        ),
    )(p2d, t2d)

    # The kernel accumulates the *negative* per-element loss; negate once here.
    return (tail_sum - jnp.sum(partials)) / n_total


def _ref_bce(pred1, tar1):
    p = pred1.astype(jnp.float32)
    t = tar1.astype(jnp.float32)
    lp = jnp.maximum(jnp.log(p), _LOG_CLAMP)
    l1p = jnp.maximum(jnp.log(1.0 - p), _LOG_CLAMP)
    return jnp.mean(-(t * lp + (1.0 - t) * l1p))


if __name__ == "__main__":
    key = jax.random.PRNGKey(0)
    keys = jax.random.split(key, 8)

    def check(shape, kp, kt, rtol=1e-4, atol=1e-6):
        pred = jax.nn.sigmoid(jax.random.normal(kp, shape, dtype=jnp.float32))
        tar = (jax.random.uniform(kt, shape) > 0.5).astype(jnp.float32)
        loss = my_loss(pred, tar)
        jax.block_until_ready(loss)
        ref = _ref_bce(pred, tar)
        assert jnp.allclose(loss, ref, rtol=rtol, atol=atol), (shape, loss, ref)

    # Small per-pixel binary prediction shape (fast path).
    check((2, 4, 16, 16), keys[0], keys[1])
    # Ragged small shape (fast path).
    check((2, 3, 5, 7), keys[2], keys[3])
    # Large enough to exercise the Pallas kernel: 4 tiles, 2-wide core axis,
    # masked partial last tile.
    check((13000, 128), keys[4], keys[5])
    # Ragged lane count on the kernel path (prefix slice + JAX lane tail).
    check((13000, 131), keys[6], keys[7])

    print("KERNEL_OK")
</pallas_src>

<mosaic_0001>
module attributes {stable_mosaic.version = 11 : i64} {
  func.func @_bce_sum_kernel(%arg0: i32, %arg1: i32, %arg2: memref<4096x128xf32, #tpu.memory_space<vmem>>, %arg3: memref<4096x128xf32, #tpu.memory_space<vmem>>, %arg4: memref<1x8x128xf32, #tpu.memory_space<vmem>>, %arg5: memref<8x128xf32, #tpu.memory_space<vmem>>) attributes {dimension_semantics = [#tpu.dimension_semantics<parallel>, #tpu.dimension_semantics<arbitrary>], iteration_bounds = array<i64: 2, 2>, scalar_prefetch = 0 : i64, scratch_operands = 1 : i64, tpu.core_type = #tpu.core_type<tc>, window_params = [{transform_indices = @transform_0, window_bounds = array<i64: 4096, 128>}, {transform_indices = @transform_1, window_bounds = array<i64: 4096, 128>}, {transform_indices = @transform_2, window_bounds = array<i64: 1, 8, 128>}]} {
    %c0_i32 = arith.constant 0 : i32
    %0 = arith.cmpi eq, %arg1, %c0_i32 : i32
    %1 = arith.extui %0 : i1 to i32
    %c0_i32_0 = arith.constant 0 : i32
    %2 = arith.cmpi ne, %1, %c0_i32_0 : i32
    scf.if %2 {
      %cst_10 = arith.constant 0.000000e+00 : f32
      %29 = vector.broadcast %cst_10 : f32 to vector<8x128xf32>
      %c0_11 = arith.constant 0 : index
      %c0_12 = arith.constant 0 : index
      %30 = vector.load %arg5[%c0_11, %c0_12] : memref<8x128xf32, #tpu.memory_space<vmem>>, vector<8x128xf32>
      tpu.vector_store %arg5[%c0_11, %c0_12], %29 {strides = array<i32>} : memref<8x128xf32, #tpu.memory_space<vmem>>, vector<8x128xf32>,
    } else {
    }
    %c2_i32 = arith.constant 2 : i32
    %3 = arith.muli %arg0, %c2_i32 : i32
    %4 = arith.addi %3, %arg1 : i32
    %c0 = arith.constant 0 : index
    %c0_1 = arith.constant 0 : index
    %5 = vector.load %arg2[%c0, %c0_1] : memref<4096x128xf32, #tpu.memory_space<vmem>>, vector<4096x128xf32>
    %c0_2 = arith.constant 0 : index
    %c0_3 = arith.constant 0 : index
    %6 = vector.load %arg3[%c0_2, %c0_3] : memref<4096x128xf32, #tpu.memory_space<vmem>>, vector<4096x128xf32>
    %7 = math.log %5 : vector<4096x128xf32>
    %cst = arith.constant -1.000000e+02 : f32
    %8 = vector.broadcast %cst : f32 to vector<4096x128xf32>
    %9 = arith.maximumf %7, %8 : vector<4096x128xf32>
    %cst_4 = arith.constant 1.000000e+00 : f32
    %10 = vector.broadcast %cst_4 : f32 to vector<4096x128xf32>
    %11 = arith.subf %10, %5 : vector<4096x128xf32>
    %12 = math.log %11 : vector<4096x128xf32>
    %cst_5 = arith.constant -1.000000e+02 : f32
    %13 = vector.broadcast %cst_5 : f32 to vector<4096x128xf32>
    %14 = arith.maximumf %12, %13 : vector<4096x128xf32>
    %15 = arith.subf %9, %14 : vector<4096x128xf32>
    %16 = arith.mulf %6, %15 : vector<4096x128xf32>
    %17 = arith.addf %14, %16 : vector<4096x128xf32>
    %c1_i32 = arith.constant 1 : i32
    %18 = arith.addi %4, %c1_i32 : i32
    %c4096_i32 = arith.constant 4096 : i32
    %19 = arith.muli %18, %c4096_i32 : i32
    %c13000_i32 = arith.constant 13000 : i32
    %20 = arith.cmpi sgt, %19, %c13000_i32 : i32
    %true = arith.constant true
    %21 = arith.xori %20, %true : i1
    %22 = arith.extui %21 : i1 to i32
    %c0_i32_6 = arith.constant 0 : i32
    %23 = arith.cmpi ne, %22, %c0_i32_6 : i32
    scf.if %23 {
      %c0_10 = arith.constant 0 : index
      %c0_11 = arith.constant 0 : index
      %29 = vector.load %arg5[%c0_10, %c0_11] : memref<8x128xf32, #tpu.memory_space<vmem>>, vector<8x128xf32>
      %30 = vector.shape_cast %17 : vector<4096x128xf32> to vector<512x8x128xf32>
      %cst_12 = arith.constant dense<0.000000e+00> : vector<8x128xf32>
      %31 = vector.multi_reduction <add>, %30, %cst_12 [0] : vector<512x8x128xf32> to vector<8x128xf32>
      %32 = arith.addf %29, %31 : vector<8x128xf32>
      %c0_13 = arith.constant 0 : index
      %c0_14 = arith.constant 0 : index
      %33 = vector.load %arg5[%c0_13, %c0_14] : memref<8x128xf32, #tpu.memory_space<vmem>>, vector<8x128xf32>
      tpu.vector_store %arg5[%c0_13, %c0_14], %32 {strides = array<i32>} : memref<8x128xf32, #tpu.memory_space<vmem>>, vector<8x128xf32>,
    } else {
    }
    %24 = arith.extui %20 : i1 to i32
    %c0_i32_7 = arith.constant 0 : i32
    %25 = arith.cmpi ne, %24, %c0_i32_7 : i32
    scf.if %25 {
      %c4096_i32_10 = arith.constant 4096 : i32
      %29 = arith.muli %4, %c4096_i32_10 : i32
      %30 = tpu.iota {dimensions = array<i32: 0>} : vector<4096x128xi32>
      %31 = vector.broadcast %29 : i32 to vector<4096x128xi32>
      %32 = arith.addi %31, %30 : vector<4096x128xi32>
      %c13000_i32_11 = arith.constant 13000 : i32
      %33 = vector.broadcast %c13000_i32_11 : i32 to vector<4096x128xi32>
      %34 = arith.cmpi slt, %32, %33 : vector<4096x128xi32>
      %cst_12 = arith.constant 0.000000e+00 : f32
      %35 = vector.broadcast %cst_12 : f32 to vector<4096x128xf32>
      %36 = arith.select %34, %17, %35 : vector<4096x128xi1>, vector<4096x128xf32>
      %c0_13 = arith.constant 0 : index
      %c0_14 = arith.constant 0 : index
      %37 = vector.load %arg5[%c0_13, %c0_14] : memref<8x128xf32, #tpu.memory_space<vmem>>, vector<8x128xf32>
      %38 = vector.shape_cast %36 : vector<4096x128xf32> to vector<512x8x128xf32>
      %cst_15 = arith.constant dense<0.000000e+00> : vector<8x128xf32>
      %39 = vector.multi_reduction <add>, %38, %cst_15 [0] : vector<512x8x128xf32> to vector<8x128xf32>
      %40 = arith.addf %37, %39 : vector<8x128xf32>
      %c0_16 = arith.constant 0 : index
      %c0_17 = arith.constant 0 : index
      %41 = vector.load %arg5[%c0_16, %c0_17] : memref<8x128xf32, #tpu.memory_space<vmem>>, vector<8x128xf32>
      tpu.vector_store %arg5[%c0_16, %c0_17], %40 {strides = array<i32>} : memref<8x128xf32, #tpu.memory_space<vmem>>, vector<8x128xf32>,
    } else {
    }
    %c1_i32_8 = arith.constant 1 : i32
    %26 = arith.cmpi eq, %arg1, %c1_i32_8 : i32
    %27 = arith.extui %26 : i1 to i32
    %c0_i32_9 = arith.constant 0 : i32
    %28 = arith.cmpi ne, %27, %c0_i32_9 : i32
    scf.if %28 {
      %c0_10 = arith.constant 0 : index
      %c0_11 = arith.constant 0 : index
      %29 = vector.load %arg5[%c0_10, %c0_11] : memref<8x128xf32, #tpu.memory_space<vmem>>, vector<8x128xf32>
      %30 = vector.shape_cast %29 : vector<8x128xf32> to vector<1x8x128xf32>
      %c0_12 = arith.constant 0 : index
      %c0_13 = arith.constant 0 : index
      %c0_14 = arith.constant 0 : index
      %31 = vector.load %arg4[%c0_12, %c0_13, %c0_14] : memref<1x8x128xf32, #tpu.memory_space<vmem>>, vector<1x8x128xf32>
      tpu.vector_store %arg4[%c0_12, %c0_13, %c0_14], %30 {strides = array<i32>} : memref<1x8x128xf32, #tpu.memory_space<vmem>>, vector<1x8x128xf32>,
    } else {
    }
    return
  }
  func.func @transform_0(%arg0: i32, %arg1: i32) -> (i32, i32) {
    %c2_i32 = arith.constant 2 : i32
    %0 = arith.muli %arg0, %c2_i32 : i32
    %1 = arith.addi %0, %arg1 : i32
    %c3_i32 = arith.constant 3 : i32
    %2 = arith.minsi %1, %c3_i32 : i32
    %c0_i32 = arith.constant 0 : i32
    %c0_i32_0 = arith.constant 0 : i32
    return %2, %c0_i32 : i32, i32
  }
  func.func @transform_1(%arg0: i32, %arg1: i32) -> (i32, i32) {
    %c2_i32 = arith.constant 2 : i32
    %0 = arith.muli %arg0, %c2_i32 : i32
    %1 = arith.addi %0, %arg1 : i32
    %c3_i32 = arith.constant 3 : i32
    %2 = arith.minsi %1, %c3_i32 : i32
    %c0_i32 = arith.constant 0 : i32
    %c0_i32_0 = arith.constant 0 : i32
    return %2, %c0_i32 : i32, i32
  }
  func.func @transform_2(%arg0: i32, %arg1: i32) -> (i32, i32, i32) {
    %c0_i32 = arith.constant 0 : i32
    %c0_i32_0 = arith.constant 0 : i32
    %c0_i32_1 = arith.constant 0 : i32
    return %arg0, %c0_i32, %c0_i32_0 : i32, i32, i32
  }
}

</mosaic_0001>

<llo_original>
// kernel: tpu_custom_call.1
$region0: #{tpu_custom_call.1}
  #allocation0 [shape = 'u32[]', space=smem, size = 0x4, offset = 0x4, fixed_abs, tag = 'smem constant byte address 0x4 - core index']
  #allocation1 [shape = 'u32[144,128]{1,0:T(1,128)}', space=vmem, size = 0x12000, scoped, tag = 'internal scratch']
  #allocation2 [shape = 'f32[8,128]{1,0:T(8,128)}', space=vmem, size = 0x1000, scoped, tag = 'scratch operand']
  %s0 = inlined_call_operand.hbm [shape: f32[13000,128], index: 0, kind: input, shape index: {}]
  %s1 = inlined_call_operand.hbm [shape: f32[13000,128], index: 1, kind: input, shape index: {}]
  %s2 = inlined_call_operand.hbm [shape: f32[2,8,128], index: 2, kind: output, shape index: {}]
  %s3 = sld [smem:[#allocation0]]
  $region65: #{tpu_custom_call.1} parent=0
    _
  %s5 = ssub.s32 1, %s3
  %s6 = scalar_select 0, %s5, %s3
  $region1: #{tpu_custom_call.1} parent=0
    #allocation3 [shape = 'u8[4194304]{0}', space=vmem, size = 0x400000, scoped, tag = 'input window, operand 0']
    #allocation4 [shape = 's32[2]{0}', space=sflag, size = 0x8, scoped, tag = 'scoped memory for tpu_custom_call.1']
    #allocation5 [shape = 's32[2]{0}', space=sflag, size = 0x8, scoped, tag = 'scoped memory for tpu_custom_call.1']
    #allocation6 [shape = 'u8[4194304]{0}', space=vmem, size = 0x400000, scoped, tag = 'input window, operand 1']
    #allocation7 [shape = 's32[2]{0}', space=sflag, size = 0x8, scoped, tag = 'scoped memory for tpu_custom_call.1']
    #allocation8 [shape = 'u8[8192]{0}', space=vmem, size = 0x2000, scoped, tag = 'output window, operand 0']
    %7 = vsyncpa [#allocation4], 0
    %s8 = scalar_lea.sflag [#allocation4], 1
    %9 = vsyncpa %s8, 0
    %10 = vsyncpa [#allocation7], 0
    %s11 = scalar_lea.sflag [#allocation7], 1
    %12 = vsyncpa %s11, 0
    %13 = vsyncpa [#allocation5], 0
    %s14 = scalar_lea.sflag [#allocation5], 1
    %15 = vsyncpa %s14, 0
    loop: start=0, step=1, limit=6
    $region2: #{tpu_custom_call.1} parent=1 // loop_pre_header
      _
    $region3: #{tpu_custom_call.1} parent=1 // loop_header
      %s17 = sphi 0, %s21
      %p18 = scmp.ge.s32.totalorder %s17, 6
      %s24 = sphi 0, %s36
      %s25 = sphi 0, %s32
      %s26 = sphi 0, %s24
      %s27 = sphi 0, %s25
      %s28 = sphi 0, %s26
      %s29 = sphi 0, %s27
      %s47 = sphi 0, %s49
      %s50 = sphi 0, %s47
      %s51 = sphi 0, %s50
      %s67 = sphi 0, %s51
      %s81 = sphi 0, %s83
      %s84 = sphi 0, %s81
      %s85 = sphi 0, %s84
      %s101 = sphi 0, %s85
      %s107 = sphi 0, %s109
      %s110 = sphi 0, %s107
      %s111 = sphi 0, %s110
      %s127 = sphi 0, %s111
    $region4: #{tpu_custom_call.1} parent=1 // loop_header_branch
      %20 = sbr.rel (%p18) target = $region8
    $region5: #{tpu_custom_call.1} parent=1 // loop_body
      %s22 = ssub.s32 %s17, 1
      %s23 = ssub.s32 %s17, 2
      %s30 = sadd.s32 1, %s25
      %p31 = scmp.ge.s32.totalorder %s30, 2
      %s32 = scalar_select %p31, 0, %s30
      %s33 = sadd.s32 1, %s24
      %s34 = scalar_select %p31, %s33, %s24
      %p35 = scmp.ge.s32.totalorder %s34, 2
      %s36 = scalar_select %p35, 0, %s34
      %s37 = smul.u32 %s24, 2
      %s38 = sadd.s32 %s37, %s25
      %p39 = scmp.lt.s32.totalorder %s38, 3
      %s40 = scalar_select %p39, %s38, 3
      %s41 = smul.u32 %s36, 2
      %s42 = sadd.s32 %s41, %s32
      %p43 = scmp.lt.s32.totalorder %s42, 3
      %s44 = scalar_select %p43, %s42, 3
      %s45 = ssub.s32 %s40, %s44
      %p46 = scmp.eq.s32.totalorder %s45, 0
      %s48 = sadd.s32 %s47, 1
      %s49 = scalar_select %p46, %s47, %s48
      %p52 = pneg %p46
      %p53 = scmp.eq.s32.totalorder %s17, 3
      %p54 = por %p52, %p53
      %p55 = scmp.ne.s32.totalorder %s47, %s50
      %p56 = scmp.eq.s32.totalorder %s17, 0
      %p57 = por %p55, %p56
      %p58 = scmp.ne.s32.totalorder %s47, %s50
      %p59 = scmp.eq.s32.totalorder %s22, 3
      %p60 = por %p58, %p59
      %p61 = scmp.ne.s32.totalorder %s50, %s51
      %p62 = scmp.eq.s32.totalorder %s22, 0
      %p63 = por %p61, %p62
      %p64 = scmp.ne.s32.totalorder %s50, %s51
      %p65 = scmp.eq.s32.totalorder %s23, 3
      %p66 = por %p64, %p65
      %p68 = scmp.ne.s32.totalorder %s51, %s67
      %p69 = scmp.eq.s32.totalorder %s23, 0
      %p70 = por %p68, %p69
      %s71 = smul.u32 %s24, 2
      %s72 = sadd.s32 %s71, %s25
      %p73 = scmp.lt.s32.totalorder %s72, 3
      %s74 = scalar_select %p73, %s72, 3
      %s75 = smul.u32 %s36, 2
      %s76 = sadd.s32 %s75, %s32
      %p77 = scmp.lt.s32.totalorder %s76, 3
      %s78 = scalar_select %p77, %s76, 3
      %s79 = ssub.s32 %s74, %s78
      %p80 = scmp.eq.s32.totalorder %s79, 0
      %s82 = sadd.s32 %s81, 1
      %s83 = scalar_select %p80, %s81, %s82
      %p86 = pneg %p80
      %p87 = scmp.eq.s32.totalorder %s17, 3
      %p88 = por %p86, %p87
      %p89 = scmp.ne.s32.totalorder %s81, %s84
      %p90 = scmp.eq.s32.totalorder %s17, 0
      %p91 = por %p89, %p90
      %p92 = scmp.ne.s32.totalorder %s81, %s84
      %p93 = scmp.eq.s32.totalorder %s22, 3
      %p94 = por %p92, %p93
      %p95 = scmp.ne.s32.totalorder %s84, %s85
      %p96 = scmp.eq.s32.totalorder %s22, 0
      %p97 = por %p95, %p96
      %p98 = scmp.ne.s32.totalorder %s84, %s85
      %p99 = scmp.eq.s32.totalorder %s23, 3
      %p100 = por %p98, %p99
      %p102 = scmp.ne.s32.totalorder %s85, %s101
      %p103 = scmp.eq.s32.totalorder %s23, 0
      %p104 = por %p102, %p103
      %s105 = ssub.s32 %s24, %s36
      %p106 = scmp.eq.s32.totalorder %s105, 0
      %s108 = sadd.s32 %s107, 1
      %s109 = scalar_select %p106, %s107, %s108
      %p112 = pneg %p106
      %p113 = scmp.eq.s32.totalorder %s17, 3
      %p114 = por %p112, %p113
      %p115 = scmp.ne.s32.totalorder %s107, %s110
      %p116 = scmp.eq.s32.totalorder %s17, 0
      %p117 = por %p115, %p116
      %p118 = scmp.ne.s32.totalorder %s107, %s110
      %p119 = scmp.eq.s32.totalorder %s22, 3
      %p120 = por %p118, %p119
      %p121 = scmp.ne.s32.totalorder %s110, %s111
      %p122 = scmp.eq.s32.totalorder %s22, 0
      %p123 = por %p121, %p122
      %p124 = scmp.ne.s32.totalorder %s110, %s111
      %p125 = scmp.eq.s32.totalorder %s23, 3
      %p126 = por %p124, %p125
      %p128 = scmp.ne.s32.totalorder %s111, %s127
      %p129 = scmp.eq.s32.totalorder %s23, 0
      %p130 = por %p128, %p129
      %p131 = scmp.le.s32.totalorder 1, %s17
      %p132 = scmp.lt.s32.totalorder %s17, 5
      %p133 = pnand %p131, %p132
      %p134 = pneg %p133
      // Predicated region
      $region9: #{tpu_custom_call.1} parent=5 // pred_check
        _
      $region10: #{tpu_custom_call.1} parent=5 // pred_check_branch
        %136 = sbr.rel (%p133) target = $region12
      $region11: #{tpu_custom_call.1} parent=5 // pred_region
        %s137 = ssub.s32 %s17, 1
      $region12: #{tpu_custom_call.1} parent=5 // pred_fallthru
        _
      %p138 = scmp.lt.s32.totalorder %s17, 4
      // Predicated region
      $region13: #{tpu_custom_call.1} parent=5 // pred_check
        %p139 = pneg %p138
      $region14: #{tpu_custom_call.1} parent=5 // pred_check_branch
        %141 = sbr.rel (%p139) target = $region16
      $region15: #{tpu_custom_call.1} parent=5 // pred_region
        // Predicated region
        $region17: #{tpu_custom_call.1} parent=15 // pred_check
          %p142 = pneg %p57
        $region18: #{tpu_custom_call.1} parent=15 // pred_check_branch
          %144 = sbr.rel (%p142) target = $region20
        $region19: #{tpu_custom_call.1} parent=15 // pred_region
          %s145 = sand.u32 %s47, 1
          %s146 = scalar_lea.sflag [#allocation4], %s145
          %s147 = sand.u32 %s47, 1
          %s148 = smul.addr %s147, 4096
          %s149 = scalar_lea.vmem [#allocation3], %s148
          %s150 = smul.u32 %s24, 2
          %s151 = sadd.s32 %s150, %s25
          %p152 = scmp.lt.s32.totalorder %s151, 3
          %s153 = scalar_select %p152, %s151, 3
          %s154 = smul.u32 512, %s153
          %s155 = ssub.s32 1625, %s154
          %p156 = scmp.lt.s32.totalorder %s155, 512
          %s157 = scalar_select %p156, %s155, 512
          %s158 = smul.u32 128, %s157
          %s160 = ssub.s32 65536, %s158
          %161 = vsyncadd %s146, %s160
          %p162 = scmp.ne.s32.totalorder 0, %s158
          %s163 = smul.addr %s154, 128
          %s164 = scalar_lea.hbm %s0, %s163
          %s165 = smul.u32 8, %s157
          %s166 = sshll.u32 %s149, 4
          %s167 = int_to_ptr.vmem [resolvable:$true] %s166
          %s168 = sshll.u32 %s165, 4
          %172 = dma.hbm_to_vmem [thread:$0]  (%p162), %s164, %s168, %s167, %s146, 128, 128, 8
        $region20: #{tpu_custom_call.1} parent=15 // pred_fallthru
          _
        // Predicated region
        $region21: #{tpu_custom_call.1} parent=15 // pred_check
          %p173 = pneg %p91
        $region22: #{tpu_custom_call.1} parent=15 // pred_check_branch
          %175 = sbr.rel (%p173) target = $region24
        $region23: #{tpu_custom_call.1} parent=15 // pred_region
          %s176 = sand.u32 %s81, 1
          %s177 = scalar_lea.sflag [#allocation7], %s176
          %s178 = sand.u32 %s81, 1
          %s179 = smul.addr %s178, 4096
          %s180 = scalar_lea.vmem [#allocation6], %s179
          %s181 = smul.u32 %s24, 2
          %s182 = sadd.s32 %s181, %s25
          %p183 = scmp.lt.s32.totalorder %s182, 3
          %s184 = scalar_select %p183, %s182, 3
          %s185 = smul.u32 512, %s184
          %s186 = ssub.s32 1625, %s185
          %p187 = scmp.lt.s32.totalorder %s186, 512
          %s188 = scalar_select %p187, %s186, 512
          %s189 = smul.u32 128, %s188
          %s191 = ssub.s32 65536, %s189
          %192 = vsyncadd %s177, %s191
          %p193 = scmp.ne.s32.totalorder 0, %s189
          %s194 = smul.addr %s185, 128
          %s195 = scalar_lea.hbm %s1, %s194
          %s196 = smul.u32 8, %s188
          %s197 = sshll.u32 %s180, 4
          %s198 = int_to_ptr.vmem [resolvable:$true] %s197
          %s199 = sshll.u32 %s196, 4
          %203 = dma.hbm_to_vmem [thread:$0]  (%p193), %s195, %s199, %s198, %s177, 128, 128, 8
        $region24: #{tpu_custom_call.1} parent=15 // pred_fallthru
          _
      $region16: #{tpu_custom_call.1} parent=5 // pred_fallthru
        _
      %p204 = scmp.le.s32.totalorder 1, %s17
      %p205 = scmp.lt.s32.totalorder %s17, 5
      %p206 = pnand %p204, %p205
      %p207 = pneg %p206
      // Predicated region
      $region25: #{tpu_custom_call.1} parent=5 // pred_check
        _
      $region26: #{tpu_custom_call.1} parent=5 // pred_check_branch
        %209 = sbr.rel (%p206) target = $region28
      $region27: #{tpu_custom_call.1} parent=5 // pred_region
        %s210 = ssub.s32 %s17, 1
        %s211 = sand.u32 %s50, 1
        %s212 = scalar_lea.sflag [#allocation4], %s211
        %s213 = sand.u32 %s50, 1
        %s214 = smul.addr %s213, 4096
        %s215 = scalar_lea.vmem [#allocation3], %s214
        // Predicated region
        $region29: #{tpu_custom_call.1} parent=27 // pred_check
          %p216 = pneg %p63
        $region30: #{tpu_custom_call.1} parent=27 // pred_check_branch
          %218 = sbr.rel (%p216) target = $region32
        $region31: #{tpu_custom_call.1} parent=27 // pred_region
          %219 = dma.done %s212, 65536
        $region32: #{tpu_custom_call.1} parent=27 // pred_fallthru
          _
        %s220 = sand.u32 %s84, 1
        %s221 = scalar_lea.sflag [#allocation7], %s220
        %s222 = sand.u32 %s84, 1
        %s223 = smul.addr %s222, 4096
        %s224 = scalar_lea.vmem [#allocation6], %s223
        // Predicated region
        $region33: #{tpu_custom_call.1} parent=27 // pred_check
          %p225 = pneg %p97
        $region34: #{tpu_custom_call.1} parent=27 // pred_check_branch
          %227 = sbr.rel (%p225) target = $region36
        $region35: #{tpu_custom_call.1} parent=27 // pred_region
          %228 = dma.done %s221, 65536
        $region36: #{tpu_custom_call.1} parent=27 // pred_fallthru
          _
        %s229 = sand.u32 %s50, 1
        %s230 = scalar_lea.sflag [#allocation4], %s229
        %s231 = sand.u32 %s50, 1
        %s232 = smul.addr %s231, 4096
        %s233 = scalar_lea.vmem [#allocation3], %s232
        %p234 = pneg %p63
        %p235 = pneg %p60
        %s236 = sand.u32 %s84, 1
        %s237 = scalar_lea.sflag [#allocation7], %s236
        %s238 = sand.u32 %s84, 1
        %s239 = smul.addr %s238, 4096
        %s240 = scalar_lea.vmem [#allocation6], %s239
        %p241 = pneg %p97
        %p242 = pneg %p94
        %p243 = pneg %p123
        %p244 = pneg %p120
        %s245 = sand.u32 %s110, 1
        %s246 = scalar_lea.sflag [#allocation5], %s245
        %s247 = sand.u32 %s110, 1
        %s248 = smul.addr %s247, 8
        %s249 = scalar_lea.vmem [#allocation8], %s248
        %s250 = smul.u32 %s26, 2
        %s251 = sadd.s32 %s250, %s27
        %p252 = scmp.lt.s32.totalorder %s251, 3
        %s253 = scalar_select %p252, %s251, 3
        %s254 = smul.u32 512, %s253
        %s255 = ssub.s32 1625, %s254
        %p256 = scmp.lt.s32.totalorder %s255, 512
        %s257 = scalar_select %p256, %s255, 512
        %s258 = smul.u32 128, %s257
        %s259 = smul.u32 %s26, 2
        %s260 = sadd.s32 %s259, %s27
        %p261 = scmp.lt.s32.totalorder %s260, 3
        %s262 = scalar_select %p261, %s260, 3
        %s263 = smul.u32 512, %s262
        %s264 = ssub.s32 1625, %s263
        %p265 = scmp.lt.s32.totalorder %s264, 512
        %s266 = scalar_select %p265, %s264, 512
        %s267 = smul.u32 128, %s266
        %p268 = scmp.eq.s32.totalorder %s27, 0
        // Predicated region
        $region37: #{tpu_custom_call.1} parent=27 // pred_check
          %p269 = pneg %p268
        $region38: #{tpu_custom_call.1} parent=27 // pred_check_branch
          %271 = sbr.rel (%p269) target = $region40
        $region39: #{tpu_custom_call.1} parent=27 // pred_region
          %272 = vst [vmem:[#allocation2] sm:$0xff] 0.0
        $region40: #{tpu_custom_call.1} parent=27 // pred_fallthru
          _
        %s273 = smul.u32 %s26, 2
        %s274 = sadd.s32 %s273, %s27
        %v275 = vld [vmem:[%s215] sm:$0xff]
        %v276 = vld [vmem:[%s215 + $0x8] sm:$0xff]
        %v277 = vld [vmem:[%s215 + $0x10] sm:$0xff]
        %v278 = vld [vmem:[%s215 + $0x18] sm:$0xff]
        %v279 = vld [vmem:[%s215 + $0x20] sm:$0xff]
        %v280 = vld [vmem:[%s215 + $0x28] sm:$0xff]
        %v281 = vld [vmem:[%s215 + $0x30] sm:$0xff]
        %v282 = vld [vmem:[%s215 + $0x38] sm:$0xff]
        %v283 = vld [vmem:[%s215 + $0x40] sm:$0xff]
        %v284 = vld [vmem:[%s215 + $0x48] sm:$0xff]
        %v285 = vld [vmem:[%s215 + $0x50] sm:$0xff]
        %v286 = vld [vmem:[%s215 + $0x58] sm:$0xff]
        %v287 = vld [vmem:[%s215 + $0x60] sm:$0xff]
        %v288 = vld [vmem:[%s215 + $0x68] sm:$0xff]
        %v289 = vld [vmem:[%s215 + $0x70] sm:$0xff]
        %v290 = vld [vmem:[%s215 + $0x78] sm:$0xff]
        %v291 = vld [vmem:[%s215 + $0x80] sm:$0xff]
        %v292 = vld [vmem:[%s215 + $0x88] sm:$0xff]
        %v293 = vld [vmem:[%s215 + $0x90] sm:$0xff]
        %v294 = vld [vmem:[%s215 + $0x98] sm:$0xff]
        %v295 = vld [vmem:[%s215 + $0xa0] sm:$0xff]
        %v296 = vld [vmem:[%s215 + $0xa8] sm:$0xff]
        %v297 = vld [vmem:[%s215 + $0xb0] sm:$0xff]
        %v298 = vld [vmem:[%s215 + $0xb8] sm:$0xff]
        %v299 = vld [vmem:[%s215 + $0xc0] sm:$0xff]
        %v300 = vld [vmem:[%s215 + $0xc8] sm:$0xff]
        %v301 = vld [vmem:[%s215 + $0xd0] sm:$0xff]
        %v302 = vld [vmem:[%s215 + $0xd8] sm:$0xff]
        %v303 = vld [vmem:[%s215 + $0xe0] sm:$0xff]
        %v304 = vld [vmem:[%s215 + $0xe8] sm:$0xff]
        %v305 = vld [vmem:[%s215 + $0xf0] sm:$0xff]
        %v306 = vld [vmem:[%s215 + $0xf8] sm:$0xff]
        %v307 = vld [vmem:[%s215 + $0x100] sm:$0xff]
        %v308 = vld [vmem:[%s215 + $0x108] sm:$0xff]
        %v309 = vld [vmem:[%s215 + $0x110] sm:$0xff]
        %v310 = vld [vmem:[%s215 + $0x118] sm:$0xff]
        %v311 = vld [vmem:[%s215 + $0x120] sm:$0xff]
        %v312 = vld [vmem:[%s215 + $0x128] sm:$0xff]
        %v313 = vld [vmem:[%s215 + $0x130] sm:$0xff]
        %v314 = vld [vmem:[%s215 + $0x138] sm:$0xff]
        %v315 = vld [vmem:[%s215 + $0x140] sm:$0xff]
        %v316 = vld [vmem:[%s215 + $0x148] sm:$0xff]
        %v317 = vld [vmem:[%s215 + $0x150] sm:$0xff]
        %v318 = vld [vmem:[%s215 + $0x158] sm:$0xff]
        %v319 = vld [vmem:[%s215 + $0x160] sm:$0xff]
        %v320 = vld [vmem:[%s215 + $0x168] sm:$0xff]
        %v321 = vld [vmem:[%s215 + $0x170] sm:$0xff]
        %v322 = vld [vmem:[%s215 + $0x178] sm:$0xff]
        %v323 = vld [vmem:[%s215 + $0x180] sm:$0xff]
        %v324 = vld [vmem:[%s215 + $0x188] sm:$0xff]
        %v325 = vld [vmem:[%s215 + $0x190] sm:$0xff]
        %v326 = vld [vmem:[%s215 + $0x198] sm:$0xff]
        %v327 = vld [vmem:[%s215 + $0x1a0] sm:$0xff]
        %v328 = vld [vmem:[%s215 + $0x1a8] sm:$0xff]
        %v329 = vld [vmem:[%s215 + $0x1b0] sm:$0xff]
        %v330 = vld [vmem:[%s215 + $0x1b8] sm:$0xff]
        %v331 = vld [vmem:[%s215 + $0x1c0] sm:$0xff]
        %v332 = vld [vmem:[%s215 + $0x1c8] sm:$0xff]
        %v333 = vld [vmem:[%s215 + $0x1d0] sm:$0xff]
        %v334 = vld [vmem:[%s215 + $0x1d8] sm:$0xff]
        %v335 = vld [vmem:[%s215 + $0x1e0] sm:$0xff]
        %v336 = vld [vmem:[%s215 + $0x1e8] sm:$0xff]
        %v337 = vld [vmem:[%s215 + $0x1f0] sm:$0xff]
        %v338 = vld [vmem:[%s215 + $0x1f8] sm:$0xff]
        %v339 = vld [vmem:[%s215 + $0x200] sm:$0xff]
        %v340 = vld [vmem:[%s215 + $0x208] sm:$0xff]
        %v341 = vld [vmem:[%s215 + $0x210] sm:$0xff]
        %v342 = vld [vmem:[%s215 + $0x218] sm:$0xff]
        %v343 = vld [vmem:[%s215 + $0x220] sm:$0xff]
        %v344 = vld [vmem:[%s215 + $0x228] sm:$0xff]
        %v345 = vld [vmem:[%s215 + $0x230] sm:$0xff]
        %v346 = vld [vmem:[%s215 + $0x238] sm:$0xff]
        %v347 = vld [vmem:[%s215 + $0x240] sm:$0xff]
        %v348 = vld [vmem:[%s215 + $0x248] sm:$0xff]
        %v349 = vld [vmem:[%s215 + $0x250] sm:$0xff]
        %v350 = vld [vmem:[%s215 + $0x258] sm:$0xff]
        %v351 = vld [vmem:[%s215 + $0x260] sm:$0xff]
        %v352 = vld [vmem:[%s215 + $0x268] sm:$0xff]
        %v353 = vld [vmem:[%s215 + $0x270] sm:$0xff]
        %v354 = vld [vmem:[%s215 + $0x278] sm:$0xff]
        %v355 = vld [vmem:[%s215 + $0x280] sm:$0xff]
        %v356 = vld [vmem:[%s215 + $0x288] sm:$0xff]
        %v357 = vld [vmem:[%s215 + $0x290] sm:$0xff]
        %v358 = vld [vmem:[%s215 + $0x298] sm:$0xff]
        %v359 = vld [vmem:[%s215 + $0x2a0] sm:$0xff]
        %v360 = vld [vmem:[%s215 + $0x2a8] sm:$0xff]
        %v361 = vld [vmem:[%s215 + $0x2b0] sm:$0xff]
        %v362 = vld [vmem:[%s215 + $0x2b8] sm:$0xff]
        %v363 = vld [vmem:[%s215 + $0x2c0] sm:$0xff]
        %v364 = vld [vmem:[%s215 + $0x2c8] sm:$0xff]
        %v365 = vld [vmem:[%s215 + $0x2d0] sm:$0xff]
        %v366 = vld [vmem:[%s215 + $0x2d8] sm:$0xff]
        %v367 = vld [vmem:[%s215 + $0x2e0] sm:$0xff]
        %v368 = vld [vmem:[%s215 + $0x2e8] sm:$0xff]
        %v369 = vld [vmem:[%s215 + $0x2f0] sm:$0xff]
        %v370 = vld [vmem:[%s215 + $0x2f8] sm:$0xff]
        %v371 = vld [vmem:[%s215 + $0x300] sm:$0xff]
        %v372 = vld [vmem:[%s215 + $0x308] sm:$0xff]
        %v373 = vld [vmem:[%s215 + $0x310] sm:$0xff]
        %v374 = vld [vmem:[%s215 + $0x318] sm:$0xff]
        %v375 = vld [vmem:[%s215 + $0x320] sm:$0xff]
        %v376 = vld [vmem:[%s215 + $0x328] sm:$0xff]
        %v377 = vld [vmem:[%s215 + $0x330] sm:$0xff]
        %v378 = vld [vmem:[%s215 + $0x338] sm:$0xff]
        %v379 = vld [vmem:[%s215 + $0x340] sm:$0xff]
        %v380 = vld [vmem:[%s215 + $0x348] sm:$0xff]
        %v381 = vld [vmem:[%s215 + $0x350] sm:$0xff]
        %v382 = vld [vmem:[%s215 + $0x358] sm:$0xff]
        %v383 = vld [vmem:[%s215 + $0x360] sm:$0xff]
        %v384 = vld [vmem:[%s215 + $0x368] sm:$0xff]
        %v385 = vld [vmem:[%s215 + $0x370] sm:$0xff]
        %v386 = vld [vmem:[%s215 + $0x378] sm:$0xff]
        %v387 = vld [vmem:[%s215 + $0x380] sm:$0xff]
        %v388 = vld [vmem:[%s215 + $0x388] sm:$0xff]
        %v389 = vld [vmem:[%s215 + $0x390] sm:$0xff]
        %v390 = vld [vmem:[%s215 + $0x398] sm:$0xff]
        %v391 = vld [vmem:[%s215 + $0x3a0] sm:$0xff]
        %v392 = vld [vmem:[%s215 + $0x3a8] sm:$0xff]
        %v393 = vld [vmem:[%s215 + $0x3b0] sm:$0xff]
        %v394 = vld [vmem:[%s215 + $0x3b8] sm:$0xff]
        %v395 = vld [vmem:[%s215 + $0x3c0] sm:$0xff]
        %v396 = vld [vmem:[%s215 + $0x3c8] sm:$0xff]
        %v397 = vld [vmem:[%s215 + $0x3d0] sm:$0xff]
        %v398 = vld [vmem:[%s215 + $0x3d8] sm:$0xff]
        %v399 = vld [vmem:[%s215 + $0x3e0] sm:$0xff]
        %v400 = vld [vmem:[%s215 + $0x3e8] sm:$0xff]
        %v401 = vld [vmem:[%s215 + $0x3f0] sm:$0xff]
        %v402 = vld [vmem:[%s215 + $0x3f8] sm:$0xff]
        %v403 = vld [vmem:[%s215 + $0x400] sm:$0xff]
        %v404 = vld [vmem:[%s215 + $0x408] sm:$0xff]
        %v405 = vld [vmem:[%s215 + $0x410] sm:$0xff]
        %v406 = vld [vmem:[%s215 + $0x418] sm:$0xff]
        %v407 = vld [vmem:[%s215 + $0x420] sm:$0xff]
        %v408 = vld [vmem:[%s215 + $0x428] sm:$0xff]
        %v409 = vld [vmem:[%s215 + $0x430] sm:$0xff]
        %v410 = vld [vmem:[%s215 + $0x438] sm:$0xff]
        %v411 = vld [vmem:[%s215 + $0x440] sm:$0xff]
        %v412 = vld [vmem:[%s215 + $0x448] sm:$0xff]
        %v413 = vld [vmem:[%s215 + $0x450] sm:$0xff]
        %v414 = vld [vmem:[%s215 + $0x458] sm:$0xff]
        %v415 = vld [vmem:[%s215 + $0x460] sm:$0xff]
        %v416 = vld [vmem:[%s215 + $0x468] sm:$0xff]
        %v417 = vld [vmem:[%s215 + $0x470] sm:$0xff]
        %v418 = vld [vmem:[%s215 + $0x478] sm:$0xff]
        %v419 = vld [vmem:[%s215 + $0x480] sm:$0xff]
        %v420 = vld [vmem:[%s215 + $0x488] sm:$0xff]
        %v421 = vld [vmem:[%s215 + $0x490] sm:$0xff]
        %v422 = vld [vmem:[%s215 + $0x498] sm:$0xff]
        %v423 = vld [vmem:[%s215 + $0x4a0] sm:$0xff]
        %v424 = vld [vmem:[%s215 + $0x4a8] sm:$0xff]
        %v425 = vld [vmem:[%s215 + $0x4b0] sm:$0xff]
        %v426 = vld [vmem:[%s215 + $0x4b8] sm:$0xff]
        %v427 = vld [vmem:[%s215 + $0x4c0] sm:$0xff]
        %v428 = vld [vmem:[%s215 + $0x4c8] sm:$0xff]
        %v429 = vld [vmem:[%s215 + $0x4d0] sm:$0xff]
        %v430 = vld [vmem:[%s215 + $0x4d8] sm:$0xff]
        %v431 = vld [vmem:[%s215 + $0x4e0] sm:$0xff]
        %v432 = vld [vmem:[%s215 + $0x4e8] sm:$0xff]
        %v433 = vld [vmem:[%s215 + $0x4f0] sm:$0xff]
        %v434 = vld [vmem:[%s215 + $0x4f8] sm:$0xff]
        %v435 = vld [vmem:[%s215 + $0x500] sm:$0xff]
        %v436 = vld [vmem:[%s215 + $0x508] sm:$0xff]
        %v437 = vld [vmem:[%s215 + $0x510] sm:$0xff]
        %v438 = vld [vmem:[%s215 + $0x518] sm:$0xff]
        %v439 = vld [vmem:[%s215 + $0x520] sm:$0xff]
        %v440 = vld [vmem:[%s215 + $0x528] sm:$0xff]
        %v441 = vld [vmem:[%s215 + $0x530] sm:$0xff]
        %v442 = vld [vmem:[%s215 + $0x538] sm:$0xff]
        %v443 = vld [vmem:[%s215 + $0x540] sm:$0xff]
        %v444 = vld [vmem:[%s215 + $0x548] sm:$0xff]
        %v445 = vld [vmem:[%s215 + $0x550] sm:$0xff]
        %v446 = vld [vmem:[%s215 + $0x558] sm:$0xff]
        %v447 = vld [vmem:[%s215 + $0x560] sm:$0xff]
        %v448 = vld [vmem:[%s215 + $0x568] sm:$0xff]
        %v449 = vld [vmem:[%s215 + $0x570] sm:$0xff]
        %v450 = vld [vmem:[%s215 + $0x578] sm:$0xff]
        %v451 = vld [vmem:[%s215 + $0x580] sm:$0xff]
        %v452 = vld [vmem:[%s215 + $0x588] sm:$0xff]
        %v453 = vld [vmem:[%s215 + $0x590] sm:$0xff]
        %v454 = vld [vmem:[%s215 + $0x598] sm:$0xff]
        %v455 = vld [vmem:[%s215 + $0x5a0] sm:$0xff]
        %v456 = vld [vmem:[%s215 + $0x5a8] sm:$0xff]
        %v457 = vld [vmem:[%s215 + $0x5b0] sm:$0xff]
        %v458 = vld [vmem:[%s215 + $0x5b8] sm:$0xff]
        %v459 = vld [vmem:[%s215 + $0x5c0] sm:$0xff]
        %v460 = vld [vmem:[%s215 + $0x5c8] sm:$0xff]
        %v461 = vld [vmem:[%s215 + $0x5d0] sm:$0xff]
        %v462 = vld [vmem:[%s215 + $0x5d8] sm:$0xff]
        %v463 = vld [vmem:[%s215 + $0x5e0] sm:$0xff]
        %v464 = vld [vmem:[%s215 + $0x5e8] sm:$0xff]
        %v465 = vld [vmem:[%s215 + $0x5f0] sm:$0xff]
        %v466 = vld [vmem:[%s215 + $0x5f8] sm:$0xff]
        %v467 = vld [vmem:[%s215 + $0x600] sm:$0xff]
        %v468 = vld [vmem:[%s215 + $0x608] sm:$0xff]
        %v469 = vld [vmem:[%s215 + $0x610] sm:$0xff]
        %v470 = vld [vmem:[%s215 + $0x618] sm:$0xff]
        %v471 = vld [vmem:[%s215 + $0x620] sm:$0xff]
        %v472 = vld [vmem:[%s215 + $0x628] sm:$0xff]
        %v473 = vld [vmem:[%s215 + $0x630] sm:$0xff]
        %v474 = vld [vmem:[%s215 + $0x638] sm:$0xff]
        %v475 = vld [vmem:[%s215 + $0x640] sm:$0xff]
        %v476 = vld [vmem:[%s215 + $0x648] sm:$0xff]
        %v477 = vld [vmem:[%s215 + $0x650] sm:$0xff]
        %v478 = vld [vmem:[%s215 + $0x658] sm:$0xff]
        %v479 = vld [vmem:[%s215 + $0x660] sm:$0xff]
        %v480 = vld [vmem:[%s215 + $0x668] sm:$0xff]
        %v481 = vld [vmem:[%s215 + $0x670] sm:$0xff]
        %v482 = vld [vmem:[%s215 + $0x678] sm:$0xff]
        %v483 = vld [vmem:[%s215 + $0x680] sm:$0xff]
        %v484 = vld [vmem:[%s215 + $0x688] sm:$0xff]
        %v485 = vld [vmem:[%s215 + $0x690] sm:$0xff]
        %v486 = vld [vmem:[%s215 + $0x698] sm:$0xff]
        %v487 = vld [vmem:[%s215 + $0x6a0] sm:$0xff]
        %v488 = vld [vmem:[%s215 + $0x6a8] sm:$0xff]
        %v489 = vld [vmem:[%s215 + $0x6b0] sm:$0xff]
        %v490 = vld [vmem:[%s215 + $0x6b8] sm:$0xff]
        %v491 = vld [vmem:[%s215 + $0x6c0] sm:$0xff]
        %v492 = vld [vmem:[%s215 + $0x6c8] sm:$0xff]
        %v493 = vld [vmem:[%s215 + $0x6d0] sm:$0xff]
        %v494 = vld [vmem:[%s215 + $0x6d8] sm:$0xff]
        %v495 = vld [vmem:[%s215 + $0x6e0] sm:$0xff]
        %v496 = vld [vmem:[%s215 + $0x6e8] sm:$0xff]
        %v497 = vld [vmem:[%s215 + $0x6f0] sm:$0xff]
        %v498 = vld [vmem:[%s215 + $0x6f8] sm:$0xff]
        %v499 = vld [vmem:[%s215 + $0x700] sm:$0xff]
        %v500 = vld [vmem:[%s215 + $0x708] sm:$0xff]
        %v501 = vld [vmem:[%s215 + $0x710] sm:$0xff]
        %v502 = vld [vmem:[%s215 + $0x718] sm:$0xff]
        %v503 = vld [vmem:[%s215 + $0x720] sm:$0xff]
        %v504 = vld [vmem:[%s215 + $0x728] sm:$0xff]
        %v505 = vld [vmem:[%s215 + $0x730] sm:$0xff]
        %v506 = vld [vmem:[%s215 + $0x738] sm:$0xff]
        %v507 = vld [vmem:[%s215 + $0x740] sm:$0xff]
        %v508 = vld [vmem:[%s215 + $0x748] sm:$0xff]
        %v509 = vld [vmem:[%s215 + $0x750] sm:$0xff]
        %v510 = vld [vmem:[%s215 + $0x758] sm:$0xff]
        %v511 = vld [vmem:[%s215 + $0x760] sm:$0xff]
        %v512 = vld [vmem:[%s215 + $0x768] sm:$0xff]
        %v513 = vld [vmem:[%s215 + $0x770] sm:$0xff]
        %v514 = vld [vmem:[%s215 + $0x778] sm:$0xff]
        %v515 = vld [vmem:[%s215 + $0x780] sm:$0xff]
        %v516 = vld [vmem:[%s215 + $0x788] sm:$0xff]
        %v517 = vld [vmem:[%s215 + $0x790] sm:$0xff]
        %v518 = vld [vmem:[%s215 + $0x798] sm:$0xff]
        %v519 = vld [vmem:[%s215 + $0x7a0] sm:$0xff]
        %v520 = vld [vmem:[%s215 + $0x7a8] sm:$0xff]
        %v521 = vld [vmem:[%s215 + $0x7b0] sm:$0xff]
        %v522 = vld [vmem:[%s215 + $0x7b8] sm:$0xff]
        %v523 = vld [vmem:[%s215 + $0x7c0] sm:$0xff]
        %v524 = vld [vmem:[%s215 + $0x7c8] sm:$0xff]
        %v525 = vld [vmem:[%s215 + $0x7d0] sm:$0xff]
        %v526 = vld [vmem:[%s215 + $0x7d8] sm:$0xff]
        %v527 = vld [vmem:[%s215 + $0x7e0] sm:$0xff]
        %v528 = vld [vmem:[%s215 + $0x7e8] sm:$0xff]
        %v529 = vld [vmem:[%s215 + $0x7f0] sm:$0xff]
        %v530 = vld [vmem:[%s215 + $0x7f8] sm:$0xff]
        %v531 = vld [vmem:[%s215 + $0x800] sm:$0xff]
        %v532 = vld [vmem:[%s215 + $0x808] sm:$0xff]
        %v533 = vld [vmem:[%s215 + $0x810] sm:$0xff]
        %v534 = vld [vmem:[%s215 + $0x818] sm:$0xff]
        %v535 = vld [vmem:[%s215 + $0x820] sm:$0xff]
        %v536 = vld [vmem:[%s215 + $0x828] sm:$0xff]
        %v537 = vld [vmem:[%s215 + $0x830] sm:$0xff]
        %v538 = vld [vmem:[%s215 + $0x838] sm:$0xff]
        %v539 = vld [vmem:[%s215 + $0x840] sm:$0xff]
        %v540 = vld [vmem:[%s215 + $0x848] sm:$0xff]
        %v541 = vld [vmem:[%s215 + $0x850] sm:$0xff]
        %v542 = vld [vmem:[%s215 + $0x858] sm:$0xff]
        %v543 = vld [vmem:[%s215 + $0x860] sm:$0xff]
        %v544 = vld [vmem:[%s215 + $0x868] sm:$0xff]
        %v545 = vld [vmem:[%s215 + $0x870] sm:$0xff]
        %v546 = vld [vmem:[%s215 + $0x878] sm:$0xff]
        %v547 = vld [vmem:[%s215 + $0x880] sm:$0xff]
        %v548 = vld [vmem:[%s215 + $0x888] sm:$0xff]
        %v549 = vld [vmem:[%s215 + $0x890] sm:$0xff]
        %v550 = vld [vmem:[%s215 + $0x898] sm:$0xff]
        %v551 = vld [vmem:[%s215 + $0x8a0] sm:$0xff]
        %v552 = vld [vmem:[%s215 + $0x8a8] sm:$0xff]
        %v553 = vld [vmem:[%s215 + $0x8b0] sm:$0xff]
        %v554 = vld [vmem:[%s215 + $0x8b8] sm:$0xff]
        %v555 = vld [vmem:[%s215 + $0x8c0] sm:$0xff]
        %v556 = vld [vmem:[%s215 + $0x8c8] sm:$0xff]
        %v557 = vld [vmem:[%s215 + $0x8d0] sm:$0xff]
        %v558 = vld [vmem:[%s215 + $0x8d8] sm:$0xff]
        %v559 = vld [vmem:[%s215 + $0x8e0] sm:$0xff]
        %v560 = vld [vmem:[%s215 + $0x8e8] sm:$0xff]
        %v561 = vld [vmem:[%s215 + $0x8f0] sm:$0xff]
        %v562 = vld [vmem:[%s215 + $0x8f8] sm:$0xff]
        %v563 = vld [vmem:[%s215 + $0x900] sm:$0xff]
        %v564 = vld [vmem:[%s215 + $0x908] sm:$0xff]
        %v565 = vld [vmem:[%s215 + $0x910] sm:$0xff]
        %v566 = vld [vmem:[%s215 + $0x918] sm:$0xff]
        %v567 = vld [vmem:[%s215 + $0x920] sm:$0xff]
        %v568 = vld [vmem:[%s215 + $0x928] sm:$0xff]
        %v569 = vld [vmem:[%s215 + $0x930] sm:$0xff]
        %v570 = vld [vmem:[%s215 + $0x938] sm:$0xff]
        %v571 = vld [vmem:[%s215 + $0x940] sm:$0xff]
        %v572 = vld [vmem:[%s215 + $0x948] sm:$0xff]
        %v573 = vld [vmem:[%s215 + $0x950] sm:$0xff]
        %v574 = vld [vmem:[%s215 + $0x958] sm:$0xff]
        %v575 = vld [vmem:[%s215 + $0x960] sm:$0xff]
        %v576 = vld [vmem:[%s215 + $0x968] sm:$0xff]
        %v577 = vld [vmem:[%s215 + $0x970] sm:$0xff]
        %v578 = vld [vmem:[%s215 + $0x978] sm:$0xff]
        %v579 = vld [vmem:[%s215 + $0x980] sm:$0xff]
        %v580 = vld [vmem:[%s215 + $0x988] sm:$0xff]
        %v581 = vld [vmem:[%s215 + $0x990] sm:$0xff]
        %v582 = vld [vmem:[%s215 + $0x998] sm:$0xff]
        %v583 = vld [vmem:[%s215 + $0x9a0] sm:$0xff]
        %v584 = vld [vmem:[%s215 + $0x9a8] sm:$0xff]
        %v585 = vld [vmem:[%s215 + $0x9b0] sm:$0xff]
        %v586 = vld [vmem:[%s215 + $0x9b8] sm:$0xff]
        %v587 = vld [vmem:[%s215 + $0x9c0] sm:$0xff]
        %v588 = vld [vmem:[%s215 + $0x9c8] sm:$0xff]
        %v589 = vld [vmem:[%s215 + $0x9d0] sm:$0xff]
        %v590 = vld [vmem:[%s215 + $0x9d8] sm:$0xff]
        %v591 = vld [vmem:[%s215 + $0x9e0] sm:$0xff]
        %v592 = vld [vmem:[%s215 + $0x9e8] sm:$0xff]
        %v593 = vld [vmem:[%s215 + $0x9f0] sm:$0xff]
        %v594 = vld [vmem:[%s215 + $0x9f8] sm:$0xff]
        %v595 = vld [vmem:[%s215 + $0xa00] sm:$0xff]
        %v596 = vld [vmem:[%s215 + $0xa08] sm:$0xff]
        %v597 = vld [vmem:[%s215 + $0xa10] sm:$0xff]
        %v598 = vld [vmem:[%s215 + $0xa18] sm:$0xff]
        %v599 = vld [vmem:[%s215 + $0xa20] sm:$0xff]
        %v600 = vld [vmem:[%s215 + $0xa28] sm:$0xff]
        %v601 = vld [vmem:[%s215 + $0xa30] sm:$0xff]
        %v602 = vld [vmem:[%s215 + $0xa38] sm:$0xff]
        %v603 = vld [vmem:[%s215 + $0xa40] sm:$0xff]
        %v604 = vld [vmem:[%s215 + $0xa48] sm:$0xff]
        %v605 = vld [vmem:[%s215 + $0xa50] sm:$0xff]
        %v606 = vld [vmem:[%s215 + $0xa58] sm:$0xff]
        %v607 = vld [vmem:[%s215 + $0xa60] sm:$0xff]
        %v608 = vld [vmem:[%s215 + $0xa68] sm:$0xff]
        %v609 = vld [vmem:[%s215 + $0xa70] sm:$0xff]
        %v610 = vld [vmem:[%s215 + $0xa78] sm:$0xff]
        %v611 = vld [vmem:[%s215 + $0xa80] sm:$0xff]
        %v612 = vld [vmem:[%s215 + $0xa88] sm:$0xff]
        %v613 = vld [vmem:[%s215 + $0xa90] sm:$0xff]
        %v614 = vld [vmem:[%s215 + $0xa98] sm:$0xff]
        %v615 = vld [vmem:[%s215 + $0xaa0] sm:$0xff]
        %v616 = vld [vmem:[%s215 + $0xaa8] sm:$0xff]
        %v617 = vld [vmem:[%s215 + $0xab0] sm:$0xff]
        %v618 = vld [vmem:[%s215 + $0xab8] sm:$0xff]
        %v619 = vld [vmem:[%s215 + $0xac0] sm:$0xff]
        %v620 = vld [vmem:[%s215 + $0xac8] sm:$0xff]
        %v621 = vld [vmem:[%s215 + $0xad0] sm:$0xff]
        %v622 = vld [vmem:[%s215 + $0xad8] sm:$0xff]
        %v623 = vld [vmem:[%s215 + $0xae0] sm:$0xff]
        %v624 = vld [vmem:[%s215 + $0xae8] sm:$0xff]
        %v625 = vld [vmem:[%s215 + $0xaf0] sm:$0xff]
        %v626 = vld [vmem:[%s215 + $0xaf8] sm:$0xff]
        %v627 = vld [vmem:[%s215 + $0xb00] sm:$0xff]
        %v628 = vld [vmem:[%s215 + $0xb08] sm:$0xff]
        %v629 = vld [vmem:[%s215 + $0xb10] sm:$0xff]
        %v630 = vld [vmem:[%s215 + $0xb18] sm:$0xff]
        %v631 = vld [vmem:[%s215 + $0xb20] sm:$0xff]
        %v632 = vld [vmem:[%s215 + $0xb28] sm:$0xff]
        %v633 = vld [vmem:[%s215 + $0xb30] sm:$0xff]
        %v634 = vld [vmem:[%s215 + $0xb38] sm:$0xff]
        %v635 = vld [vmem:[%s215 + $0xb40] sm:$0xff]
        %v636 = vld [vmem:[%s215 + $0xb48] sm:$0xff]
        %v637 = vld [vmem:[%s215 + $0xb50] sm:$0xff]
        %v638 = vld [vmem:[%s215 + $0xb58] sm:$0xff]
        %v639 = vld [vmem:[%s215 + $0xb60] sm:$0xff]
        %v640 = vld [vmem:[%s215 + $0xb68] sm:$0xff]
        %v641 = vld [vmem:[%s215 + $0xb70] sm:$0xff]
        %v642 = vld [vmem:[%s215 + $0xb78] sm:$0xff]
        %v643 = vld [vmem:[%s215 + $0xb80] sm:$0xff]
        %v644 = vld [vmem:[%s215 + $0xb88] sm:$0xff]
        %v645 = vld [vmem:[%s215 + $0xb90] sm:$0xff]
        %v646 = vld [vmem:[%s215 + $0xb98] sm:$0xff]
        %v647 = vld [vmem:[%s215 + $0xba0] sm:$0xff]
        %v648 = vld [vmem:[%s215 + $0xba8] sm:$0xff]
        %v649 = vld [vmem:[%s215 + $0xbb0] sm:$0xff]
        %v650 = vld [vmem:[%s215 + $0xbb8] sm:$0xff]
        %v651 = vld [vmem:[%s215 + $0xbc0] sm:$0xff]
        %v652 = vld [vmem:[%s215 + $0xbc8] sm:$0xff]
        %v653 = vld [vmem:[%s215 + $0xbd0] sm:$0xff]
        %v654 = vld [vmem:[%s215 + $0xbd8] sm:$0xff]
        %v655 = vld [vmem:[%s215 + $0xbe0] sm:$0xff]
        %v656 = vld [vmem:[%s215 + $0xbe8] sm:$0xff]
        %v657 = vld [vmem:[%s215 + $0xbf0] sm:$0xff]
        %v658 = vld [vmem:[%s215 + $0xbf8] sm:$0xff]
        %v659 = vld [vmem:[%s215 + $0xc00] sm:$0xff]
        %v660 = vld [vmem:[%s215 + $0xc08] sm:$0xff]
        %v661 = vld [vmem:[%s215 + $0xc10] sm:$0xff]
        %v662 = vld [vmem:[%s215 + $0xc18] sm:$0xff]
        %v663 = vld [vmem:[%s215 + $0xc20] sm:$0xff]
        %v664 = vld [vmem:[%s215 + $0xc28] sm:$0xff]
        %v665 = vld [vmem:[%s215 + $0xc30] sm:$0xff]
        %v666 = vld [vmem:[%s215 + $0xc38] sm:$0xff]
        %v667 = vld [vmem:[%s215 + $0xc40] sm:$0xff]
        %v668 = vld [vmem:[%s215 + $0xc48] sm:$0xff]
        %v669 = vld [vmem:[%s215 + $0xc50] sm:$0xff]
        %v670 = vld [vmem:[%s215 + $0xc58] sm:$0xff]
        %v671 = vld [vmem:[%s215 + $0xc60] sm:$0xff]
        %v672 = vld [vmem:[%s215 + $0xc68] sm:$0xff]
        %v673 = vld [vmem:[%s215 + $0xc70] sm:$0xff]
        %v674 = vld [vmem:[%s215 + $0xc78] sm:$0xff]
        %v675 = vld [vmem:[%s215 + $0xc80] sm:$0xff]
        %v676 = vld [vmem:[%s215 + $0xc88] sm:$0xff]
        %v677 = vld [vmem:[%s215 + $0xc90] sm:$0xff]
        %v678 = vld [vmem:[%s215 + $0xc98] sm:$0xff]
        %v679 = vld [vmem:[%s215 + $0xca0] sm:$0xff]
        %v680 = vld [vmem:[%s215 + $0xca8] sm:$0xff]
        %v681 = vld [vmem:[%s215 + $0xcb0] sm:$0xff]
        %v682 = vld [vmem:[%s215 + $0xcb8] sm:$0xff]
        %v683 = vld [vmem:[%s215 + $0xcc0] sm:$0xff]
        %v684 = vld [vmem:[%s215 + $0xcc8] sm:$0xff]
        %v685 = vld [vmem:[%s215 + $0xcd0] sm:$0xff]
        %v686 = vld [vmem:[%s215 + $0xcd8] sm:$0xff]
        %v687 = vld [vmem:[%s215 + $0xce0] sm:$0xff]
        %v688 = vld [vmem:[%s215 + $0xce8] sm:$0xff]
        %v689 = vld [vmem:[%s215 + $0xcf0] sm:$0xff]
        %v690 = vld [vmem:[%s215 + $0xcf8] sm:$0xff]
        %v691 = vld [vmem:[%s215 + $0xd00] sm:$0xff]
        %v692 = vld [vmem:[%s215 + $0xd08] sm:$0xff]
        %v693 = vld [vmem:[%s215 + $0xd10] sm:$0xff]
        %v694 = vld [vmem:[%s215 + $0xd18] sm:$0xff]
        %v695 = vld [vmem:[%s215 + $0xd20] sm:$0xff]
        %v696 = vld [vmem:[%s215 + $0xd28] sm:$0xff]
        %v697 = vld [vmem:[%s215 + $0xd30] sm:$0xff]
        %v698 = vld [vmem:[%s215 + $0xd38] sm:$0xff]
        %v699 = vld [vmem:[%s215 + $0xd40] sm:$0xff]
        %v700 = vld [vmem:[%s215 + $0xd48] sm:$0xff]
        %v701 = vld [vmem:[%s215 + $0xd50] sm:$0xff]
        %v702 = vld [vmem:[%s215 + $0xd58] sm:$0xff]
        %v703 = vld [vmem:[%s215 + $0xd60] sm:$0xff]
        %v704 = vld [vmem:[%s215 + $0xd68] sm:$0xff]
        %v705 = vld [vmem:[%s215 + $0xd70] sm:$0xff]
        %v706 = vld [vmem:[%s215 + $0xd78] sm:$0xff]
        %v707 = vld [vmem:[%s215 + $0xd80] sm:$0xff]
        %v708 = vld [vmem:[%s215 + $0xd88] sm:$0xff]
        %v709 = vld [vmem:[%s215 + $0xd90] sm:$0xff]
        %v710 = vld [vmem:[%s215 + $0xd98] sm:$0xff]
        %v711 = vld [vmem:[%s215 + $0xda0] sm:$0xff]
        %v712 = vld [vmem:[%s215 + $0xda8] sm:$0xff]
        %v713 = vld [vmem:[%s215 + $0xdb0] sm:$0xff]
        %v714 = vld [vmem:[%s215 + $0xdb8] sm:$0xff]
        %v715 = vld [vmem:[%s215 + $0xdc0] sm:$0xff]
        %v716 = vld [vmem:[%s215 + $0xdc8] sm:$0xff]
        %v717 = vld [vmem:[%s215 + $0xdd0] sm:$0xff]
        %v718 = vld [vmem:[%s215 + $0xdd8] sm:$0xff]
        %v719 = vld [vmem:[%s215 + $0xde0] sm:$0xff]
        %v720 = vld [vmem:[%s215 + $0xde8] sm:$0xff]
        %v721 = vld [vmem:[%s215 + $0xdf0] sm:$0xff]
        %v722 = vld [vmem:[%s215 + $0xdf8] sm:$0xff]
        %v723 = vld [vmem:[%s215 + $0xe00] sm:$0xff]
        %v724 = vld [vmem:[%s215 + $0xe08] sm:$0xff]
        %v725 = vld [vmem:[%s215 + $0xe10] sm:$0xff]
        %v726 = vld [vmem:[%s215 + $0xe18] sm:$0xff]
        %v727 = vld [vmem:[%s215 + $0xe20] sm:$0xff]
        %v728 = vld [vmem:[%s215 + $0xe28] sm:$0xff]
        %v729 = vld [vmem:[%s215 + $0xe30] sm:$0xff]
        %v730 = vld [vmem:[%s215 + $0xe38] sm:$0xff]
        %v731 = vld [vmem:[%s215 + $0xe40] sm:$0xff]
        %v732 = vld [vmem:[%s215 + $0xe48] sm:$0xff]
        %v733 = vld [vmem:[%s215 + $0xe50] sm:$0xff]
        %v734 = vld [vmem:[%s215 + $0xe58] sm:$0xff]
        %v735 = vld [vmem:[%s215 + $0xe60] sm:$0xff]
        %v736 = vld [vmem:[%s215 + $0xe68] sm:$0xff]
        %v737 = vld [vmem:[%s215 + $0xe70] sm:$0xff]
        %v738 = vld [vmem:[%s215 + $0xe78] sm:$0xff]
        %v739 = vld [vmem:[%s215 + $0xe80] sm:$0xff]
        %v740 = vld [vmem:[%s215 + $0xe88] sm:$0xff]
        %v741 = vld [vmem:[%s215 + $0xe90] sm:$0xff]
        %v742 = vld [vmem:[%s215 + $0xe98] sm:$0xff]
        %v743 = vld [vmem:[%s215 + $0xea0] sm:$0xff]
        %v744 = vld [vmem:[%s215 + $0xea8] sm:$0xff]
        %v745 = vld [vmem:[%s215 + $0xeb0] sm:$0xff]
        %v746 = vld [vmem:[%s215 + $0xeb8] sm:$0xff]
        %v747 = vld [vmem:[%s215 + $0xec0] sm:$0xff]
        %v748 = vld [vmem:[%s215 + $0xec8] sm:$0xff]
        %v749 = vld [vmem:[%s215 + $0xed0] sm:$0xff]
        %v750 = vld [vmem:[%s215 + $0xed8] sm:$0xff]
        %v751 = vld [vmem:[%s215 + $0xee0] sm:$0xff]
        %v752 = vld [vmem:[%s215 + $0xee8] sm:$0xff]
        %v753 = vld [vmem:[%s215 + $0xef0] sm:$0xff]
        %v754 = vld [vmem:[%s215 + $0xef8] sm:$0xff]
        %v755 = vld [vmem:[%s215 + $0xf00] sm:$0xff]
        %v756 = vld [vmem:[%s215 + $0xf08] sm:$0xff]
        %v757 = vld [vmem:[%s215 + $0xf10] sm:$0xff]
        %v758 = vld [vmem:[%s215 + $0xf18] sm:$0xff]
        %v759 = vld [vmem:[%s215 + $0xf20] sm:$0xff]
        %v760 = vld [vmem:[%s215 + $0xf28] sm:$0xff]
        %v761 = vld [vmem:[%s215 + $0xf30] sm:$0xff]
        %v762 = vld [vmem:[%s215 + $0xf38] sm:$0xff]
        %v763 = vld [vmem:[%s215 + $0xf40] sm:$0xff]
        %v764 = vld [vmem:[%s215 + $0xf48] sm:$0xff]
        %v765 = vld [vmem:[%s215 + $0xf50] sm:$0xff]
        %v766 = vld [vmem:[%s215 + $0xf58] sm:$0xff]
        %v767 = vld [vmem:[%s215 + $0xf60] sm:$0xff]
        %v768 = vld [vmem:[%s215 + $0xf68] sm:$0xff]
        %v769 = vld [vmem:[%s215 + $0xf70] sm:$0xff]
        %v770 = vld [vmem:[%s215 + $0xf78] sm:$0xff]
        %v771 = vld [vmem:[%s215 + $0xf80] sm:$0xff]
        %v772 = vld [vmem:[%s215 + $0xf88] sm:$0xff]
        %v773 = vld [vmem:[%s215 + $0xf90] sm:$0xff]
        %v774 = vld [vmem:[%s215 + $0xf98] sm:$0xff]
        %v775 = vld [vmem:[%s215 + $0xfa0] sm:$0xff]
        %v776 = vld [vmem:[%s215 + $0xfa8] sm:$0xff]
        %v777 = vld [vmem:[%s215 + $0xfb0] sm:$0xff]
        %v778 = vld [vmem:[%s215 + $0xfb8] sm:$0xff]
        %v779 = vld [vmem:[%s215 + $0xfc0] sm:$0xff]
        %v780 = vld [vmem:[%s215 + $0xfc8] sm:$0xff]
        %v781 = vld [vmem:[%s215 + $0xfd0] sm:$0xff]
        %v782 = vld [vmem:[%s215 + $0xfd8] sm:$0xff]
        %v783 = vld [vmem:[%s215 + $0xfe0] sm:$0xff]
        %v784 = vld [vmem:[%s215 + $0xfe8] sm:$0xff]
        %v785 = vld [vmem:[%s215 + $0xff0] sm:$0xff]
        %v786 = vld [vmem:[%s215 + $0xff8] sm:$0xff]
        %v787 = vld [vmem:[%s224] sm:$0xff]
        %v788 = vld [vmem:[%s224 + $0x8] sm:$0xff]
        %v789 = vld [vmem:[%s224 + $0x10] sm:$0xff]
        %v790 = vld [vmem:[%s224 + $0x18] sm:$0xff]
        %v791 = vld [vmem:[%s224 + $0x20] sm:$0xff]
        %v792 = vld [vmem:[%s224 + $0x28] sm:$0xff]
        %v793 = vld [vmem:[%s224 + $0x30] sm:$0xff]
        %v794 = vld [vmem:[%s224 + $0x38] sm:$0xff]
        %v795 = vld [vmem:[%s224 + $0x40] sm:$0xff]
        %v796 = vld [vmem:[%s224 + $0x48] sm:$0xff]
        %v797 = vld [vmem:[%s224 + $0x50] sm:$0xff]
        %v798 = vld [vmem:[%s224 + $0x58] sm:$0xff]
        %v799 = vld [vmem:[%s224 + $0x60] sm:$0xff]
        %v800 = vld [vmem:[%s224 + $0x68] sm:$0xff]
        %v801 = vld [vmem:[%s224 + $0x70] sm:$0xff]
        %v802 = vld [vmem:[%s224 + $0x78] sm:$0xff]
        %v803 = vld [vmem:[%s224 + $0x80] sm:$0xff]
        %v804 = vld [vmem:[%s224 + $0x88] sm:$0xff]
        %v805 = vld [vmem:[%s224 + $0x90] sm:$0xff]
        %v806 = vld [vmem:[%s224 + $0x98] sm:$0xff]
        %v807 = vld [vmem:[%s224 + $0xa0] sm:$0xff]
        %v808 = vld [vmem:[%s224 + $0xa8] sm:$0xff]
        %v809 = vld [vmem:[%s224 + $0xb0] sm:$0xff]
        %v810 = vld [vmem:[%s224 + $0xb8] sm:$0xff]
        %v811 = vld [vmem:[%s224 + $0xc0] sm:$0xff]
        %v812 = vld [vmem:[%s224 + $0xc8] sm:$0xff]
        %v813 = vld [vmem:[%s224 + $0xd0] sm:$0xff]
        %v814 = vld [vmem:[%s224 + $0xd8] sm:$0xff]
        %v815 = vld [vmem:[%s224 + $0xe0] sm:$0xff]
        %v816 = vld [vmem:[%s224 + $0xe8] sm:$0xff]
        %v817 = vld [vmem:[%s224 + $0xf0] sm:$0xff]
        %v818 = vld [vmem:[%s224 + $0xf8] sm:$0xff]
        %v819 = vld [vmem:[%s224 + $0x100] sm:$0xff]
        %v820 = vld [vmem:[%s224 + $0x108] sm:$0xff]
        %v821 = vld [vmem:[%s224 + $0x110] sm:$0xff]
        %v822 = vld [vmem:[%s224 + $0x118] sm:$0xff]
        %v823 = vld [vmem:[%s224 + $0x120] sm:$0xff]
        %v824 = vld [vmem:[%s224 + $0x128] sm:$0xff]
        %v825 = vld [vmem:[%s224 + $0x130] sm:$0xff]
        %v826 = vld [vmem:[%s224 + $0x138] sm:$0xff]
        %v827 = vld [vmem:[%s224 + $0x140] sm:$0xff]
        %v828 = vld [vmem:[%s224 + $0x148] sm:$0xff]
        %v829 = vld [vmem:[%s224 + $0x150] sm:$0xff]
        %v830 = vld [vmem:[%s224 + $0x158] sm:$0xff]
        %v831 = vld [vmem:[%s224 + $0x160] sm:$0xff]
        %v832 = vld [vmem:[%s224 + $0x168] sm:$0xff]
        %v833 = vld [vmem:[%s224 + $0x170] sm:$0xff]
        %v834 = vld [vmem:[%s224 + $0x178] sm:$0xff]
        %v835 = vld [vmem:[%s224 + $0x180] sm:$0xff]
        %v836 = vld [vmem:[%s224 + $0x188] sm:$0xff]
        %v837 = vld [vmem:[%s224 + $0x190] sm:$0xff]
        %v838 = vld [vmem:[%s224 + $0x198] sm:$0xff]
        %v839 = vld [vmem:[%s224 + $0x1a0] sm:$0xff]
        %v840 = vld [vmem:[%s224 + $0x1a8] sm:$0xff]
        %v841 = vld [vmem:[%s224 + $0x1b0] sm:$0xff]
        %v842 = vld [vmem:[%s224 + $0x1b8] sm:$0xff]
        %v843 = vld [vmem:[%s224 + $0x1c0] sm:$0xff]
        %v844 = vld [vmem:[%s224 + $0x1c8] sm:$0xff]
        %v845 = vld [vmem:[%s224 + $0x1d0] sm:$0xff]
        %v846 = vld [vmem:[%s224 + $0x1d8] sm:$0xff]
        %v847 = vld [vmem:[%s224 + $0x1e0] sm:$0xff]
        %v848 = vld [vmem:[%s224 + $0x1e8] sm:$0xff]
        %v849 = vld [vmem:[%s224 + $0x1f0] sm:$0xff]
        %v850 = vld [vmem:[%s224 + $0x1f8] sm:$0xff]
        %v851 = vld [vmem:[%s224 + $0x200] sm:$0xff]
        %v852 = vld [vmem:[%s224 + $0x208] sm:$0xff]
        %v853 = vld [vmem:[%s224 + $0x210] sm:$0xff]
        %v854 = vld [vmem:[%s224 + $0x218] sm:$0xff]
        %v855 = vld [vmem:[%s224 + $0x220] sm:$0xff]
        %v856 = vld [vmem:[%s224 + $0x228] sm:$0xff]
        %v857 = vld [vmem:[%s224 + $0x230] sm:$0xff]
        %v858 = vld [vmem:[%s224 + $0x238] sm:$0xff]
        %v859 = vld [vmem:[%s224 + $0x240] sm:$0xff]
        %v860 = vld [vmem:[%s224 + $0x248] sm:$0xff]
        %v861 = vld [vmem:[%s224 + $0x250] sm:$0xff]
        %v862 = vld [vmem:[%s224 + $0x258] sm:$0xff]
        %v863 = vld [vmem:[%s224 + $0x260] sm:$0xff]
        %v864 = vld [vmem:[%s224 + $0x268] sm:$0xff]
        %v865 = vld [vmem:[%s224 + $0x270] sm:$0xff]
        %v866 = vld [vmem:[%s224 + $0x278] sm:$0xff]
        %v867 = vld [vmem:[%s224 + $0x280] sm:$0xff]
        %v868 = vld [vmem:[%s224 + $0x288] sm:$0xff]
        %v869 = vld [vmem:[%s224 + $0x290] sm:$0xff]
        %v870 = vld [vmem:[%s224 + $0x298] sm:$0xff]
        %v871 = vld [vmem:[%s224 + $0x2a0] sm:$0xff]
        %v872 = vld [vmem:[%s224 + $0x2a8] sm:$0xff]
        %v873 = vld [vmem:[%s224 + $0x2b0] sm:$0xff]
        %v874 = vld [vmem:[%s224 + $0x2b8] sm:$0xff]
        %v875 = vld [vmem:[%s224 + $0x2c0] sm:$0xff]
        %v876 = vld [vmem:[%s224 + $0x2c8] sm:$0xff]
        %v877 = vld [vmem:[%s224 + $0x2d0] sm:$0xff]
        %v878 = vld [vmem:[%s224 + $0x2d8] sm:$0xff]
        %v879 = vld [vmem:[%s224 + $0x2e0] sm:$0xff]
        %v880 = vld [vmem:[%s224 + $0x2e8] sm:$0xff]
        %v881 = vld [vmem:[%s224 + $0x2f0] sm:$0xff]
        %v882 = vld [vmem:[%s224 + $0x2f8] sm:$0xff]
        %v883 = vld [vmem:[%s224 + $0x300] sm:$0xff]
        %v884 = vld [vmem:[%s224 + $0x308] sm:$0xff]
        %v885 = vld [vmem:[%s224 + $0x310] sm:$0xff]
        %v886 = vld [vmem:[%s224 + $0x318] sm:$0xff]
        %v887 = vld [vmem:[%s224 + $0x320] sm:$0xff]
        %v888 = vld [vmem:[%s224 + $0x328] sm:$0xff]
        %v889 = vld [vmem:[%s224 + $0x330] sm:$0xff]
        %v890 = vld [vmem:[%s224 + $0x338] sm:$0xff]
        %v891 = vld [vmem:[%s224 + $0x340] sm:$0xff]
        %v892 = vld [vmem:[%s224 + $0x348] sm:$0xff]
        %v893 = vld [vmem:[%s224 + $0x350] sm:$0xff]
        %v894 = vld [vmem:[%s224 + $0x358] sm:$0xff]
        %v895 = vld [vmem:[%s224 + $0x360] sm:$0xff]
        %v896 = vld [vmem:[%s224 + $0x368] sm:$0xff]
        %v897 = vld [vmem:[%s224 + $0x370] sm:$0xff]
        %v898 = vld [vmem:[%s224 + $0x378] sm:$0xff]
        %v899 = vld [vmem:[%s224 + $0x380] sm:$0xff]
        %v900 = vld [vmem:[%s224 + $0x388] sm:$0xff]
        %v901 = vld [vmem:[%s224 + $0x390] sm:$0xff]
        %v902 = vld [vmem:[%s224 + $0x398] sm:$0xff]
        %v903 = vld [vmem:[%s224 + $0x3a0] sm:$0xff]
        %v904 = vld [vmem:[%s224 + $0x3a8] sm:$0xff]
        %v905 = vld [vmem:[%s224 + $0x3b0] sm:$0xff]
        %v906 = vld [vmem:[%s224 + $0x3b8] sm:$0xff]
        %v907 = vld [vmem:[%s224 + $0x3c0] sm:$0xff]
        %v908 = vld [vmem:[%s224 + $0x3c8] sm:$0xff]
        %v909 = vld [vmem:[%s224 + $0x3d0] sm:$0xff]
        %v910 = vld [vmem:[%s224 + $0x3d8] sm:$0xff]
        %v911 = vld [vmem:[%s224 + $0x3e0] sm:$0xff]
        %v912 = vld [vmem:[%s224 + $0x3e8] sm:$0xff]
        %v913 = vld [vmem:[%s224 + $0x3f0] sm:$0xff]
        %v914 = vld [vmem:[%s224 + $0x3f8] sm:$0xff]
        %v915 = vld [vmem:[%s224 + $0x400] sm:$0xff]
        %v916 = vld [vmem:[%s224 + $0x408] sm:$0xff]
        %v917 = vld [vmem:[%s224 + $0x410] sm:$0xff]
        %v918 = vld [vmem:[%s224 + $0x418] sm:$0xff]
        %v919 = vld [vmem:[%s224 + $0x420] sm:$0xff]
        %v920 = vld [vmem:[%s224 + $0x428] sm:$0xff]
        %v921 = vld [vmem:[%s224 + $0x430] sm:$0xff]
        %v922 = vld [vmem:[%s224 + $0x438] sm:$0xff]
        %v923 = vld [vmem:[%s224 + $0x440] sm:$0xff]
        %v924 = vld [vmem:[%s224 + $0x448] sm:$0xff]
        %v925 = vld [vmem:[%s224 + $0x450] sm:$0xff]
        %v926 = vld [vmem:[%s224 + $0x458] sm:$0xff]
        %v927 = vld [vmem:[%s224 + $0x460] sm:$0xff]
        %v928 = vld [vmem:[%s224 + $0x468] sm:$0xff]
        %v929 = vld [vmem:[%s224 + $0x470] sm:$0xff]
        %v930 = vld [vmem:[%s224 + $0x478] sm:$0xff]
        %v931 = vld [vmem:[%s224 + $0x480] sm:$0xff]
        %v932 = vld [vmem:[%s224 + $0x488] sm:$0xff]
        %v933 = vld [vmem:[%s224 + $0x490] sm:$0xff]
        %v934 = vld [vmem:[%s224 + $0x498] sm:$0xff]
        %v935 = vld [vmem:[%s224 + $0x4a0] sm:$0xff]
        %v936 = vld [vmem:[%s224 + $0x4a8] sm:$0xff]
        %v937 = vld [vmem:[%s224 + $0x4b0] sm:$0xff]
        %v938 = vld [vmem:[%s224 + $0x4b8] sm:$0xff]
        %v939 = vld [vmem:[%s224 + $0x4c0] sm:$0xff]
        %v940 = vld [vmem:[%s224 + $0x4c8] sm:$0xff]
        %v941 = vld [vmem:[%s224 + $0x4d0] sm:$0xff]
        %v942 = vld [vmem:[%s224 + $0x4d8] sm:$0xff]
        %v943 = vld [vmem:[%s224 + $0x4e0] sm:$0xff]
        %v944 = vld [vmem:[%s224 + $0x4e8] sm:$0xff]
        %v945 = vld [vmem:[%s224 + $0x4f0] sm:$0xff]
        %v946 = vld [vmem:[%s224 + $0x4f8] sm:$0xff]
        %v947 = vld [vmem:[%s224 + $0x500] sm:$0xff]
        %v948 = vld [vmem:[%s224 + $0x508] sm:$0xff]
        %v949 = vld [vmem:[%s224 + $0x510] sm:$0xff]
        %v950 = vld [vmem:[%s224 + $0x518] sm:$0xff]
        %v951 = vld [vmem:[%s224 + $0x520] sm:$0xff]
        %v952 = vld [vmem:[%s224 + $0x528] sm:$0xff]
        %v953 = vld [vmem:[%s224 + $0x530] sm:$0xff]
        %v954 = vld [vmem:[%s224 + $0x538] sm:$0xff]
        %v955 = vld [vmem:[%s224 + $0x540] sm:$0xff]
        %v956 = vld [vmem:[%s224 + $0x548] sm:$0xff]
        %v957 = vld [vmem:[%s224 + $0x550] sm:$0xff]
        %v958 = vld [vmem:[%s224 + $0x558] sm:$0xff]
        %v959 = vld [vmem:[%s224 + $0x560] sm:$0xff]
        %v960 = vld [vmem:[%s224 + $0x568] sm:$0xff]
        %v961 = vld [vmem:[%s224 + $0x570] sm:$0xff]
        %v962 = vld [vmem:[%s224 + $0x578] sm:$0xff]
        %v963 = vld [vmem:[%s224 + $0x580] sm:$0xff]
        %v964 = vld [vmem:[%s224 + $0x588] sm:$0xff]
        %v965 = vld [vmem:[%s224 + $0x590] sm:$0xff]
        %v966 = vld [vmem:[%s224 + $0x598] sm:$0xff]
        %v967 = vld [vmem:[%s224 + $0x5a0] sm:$0xff]
        %v968 = vld [vmem:[%s224 + $0x5a8] sm:$0xff]
        %v969 = vld [vmem:[%s224 + $0x5b0] sm:$0xff]
        %v970 = vld [vmem:[%s224 + $0x5b8] sm:$0xff]
        %v971 = vld [vmem:[%s224 + $0x5c0] sm:$0xff]
        %v972 = vld [vmem:[%s224 + $0x5c8] sm:$0xff]
        %v973 = vld [vmem:[%s224 + $0x5d0] sm:$0xff]
        %v974 = vld [vmem:[%s224 + $0x5d8] sm:$0xff]
        %v975 = vld [vmem:[%s224 + $0x5e0] sm:$0xff]
        %v976 = vld [vmem:[%s224 + $0x5e8] sm:$0xff]
        %v977 = vld [vmem:[%s224 + $0x5f0] sm:$0xff]
        %v978 = vld [vmem:[%s224 + $0x5f8] sm:$0xff]
        %v979 = vld [vmem:[%s224 + $0x600] sm:$0xff]
        %v980 = vld [vmem:[%s224 + $0x608] sm:$0xff]
        %v981 = vld [vmem:[%s224 + $0x610] sm:$0xff]
        %v982 = vld [vmem:[%s224 + $0x618] sm:$0xff]
        %v983 = vld [vmem:[%s224 + $0x620] sm:$0xff]
        %v984 = vld [vmem:[%s224 + $0x628] sm:$0xff]
        %v985 = vld [vmem:[%s224 + $0x630] sm:$0xff]
        %v986 = vld [vmem:[%s224 + $0x638] sm:$0xff]
        %v987 = vld [vmem:[%s224 + $0x640] sm:$0xff]
        %v988 = vld [vmem:[%s224 + $0x648] sm:$0xff]
        %v989 = vld [vmem:[%s224 + $0x650] sm:$0xff]
        %v990 = vld [vmem:[%s224 + $0x658] sm:$0xff]
        %v991 = vld [vmem:[%s224 + $0x660] sm:$0xff]
        %v992 = vld [vmem:[%s224 + $0x668] sm:$0xff]
        %v993 = vld [vmem:[%s224 + $0x670] sm:$0xff]
        %v994 = vld [vmem:[%s224 + $0x678] sm:$0xff]
        %v995 = vld [vmem:[%s224 + $0x680] sm:$0xff]
        %v996 = vld [vmem:[%s224 + $0x688] sm:$0xff]
        %v997 = vld [vmem:[%s224 + $0x690] sm:$0xff]
        %v998 = vld [vmem:[%s224 + $0x698] sm:$0xff]
        %v999 = vld [vmem:[%s224 + $0x6a0] sm:$0xff]
        %v1000 = vld [vmem:[%s224 + $0x6a8] sm:$0xff]
        %v1001 = vld [vmem:[%s224 + $0x6b0] sm:$0xff]
        %v1002 = vld [vmem:[%s224 + $0x6b8] sm:$0xff]
        %v1003 = vld [vmem:[%s224 + $0x6c0] sm:$0xff]
        %v1004 = vld [vmem:[%s224 + $0x6c8] sm:$0xff]
        %v1005 = vld [vmem:[%s224 + $0x6d0] sm:$0xff]
        %v1006 = vld [vmem:[%s224 + $0x6d8] sm:$0xff]
        %v1007 = vld [vmem:[%s224 + $0x6e0] sm:$0xff]
        %v1008 = vld [vmem:[%s224 + $0x6e8] sm:$0xff]
        %v1009 = vld [vmem:[%s224 + $0x6f0] sm:$0xff]
        %v1010 = vld [vmem:[%s224 + $0x6f8] sm:$0xff]
        %v1011 = vld [vmem:[%s224 + $0x700] sm:$0xff]
        %v1012 = vld [vmem:[%s224 + $0x708] sm:$0xff]
        %v1013 = vld [vmem:[%s224 + $0x710] sm:$0xff]
        %v1014 = vld [vmem:[%s224 + $0x718] sm:$0xff]
        %v1015 = vld [vmem:[%s224 + $0x720] sm:$0xff]
        %v1016 = vld [vmem:[%s224 + $0x728] sm:$0xff]
        %v1017 = vld [vmem:[%s224 + $0x730] sm:$0xff]
        %v1018 = vld [vmem:[%s224 + $0x738] sm:$0xff]
        %v1019 = vld [vmem:[%s224 + $0x740] sm:$0xff]
        %v1020 = vld [vmem:[%s224 + $0x748] sm:$0xff]
        %v1021 = vld [vmem:[%s224 + $0x750] sm:$0xff]
        %v1022 = vld [vmem:[%s224 + $0x758] sm:$0xff]
        %v1023 = vld [vmem:[%s224 + $0x760] sm:$0xff]
        %v1024 = vld [vmem:[%s224 + $0x768] sm:$0xff]
        %v1025 = vld [vmem:[%s224 + $0x770] sm:$0xff]
        %v1026 = vld [vmem:[%s224 + $0x778] sm:$0xff]
        %v1027 = vld [vmem:[%s224 + $0x780] sm:$0xff]
        %v1028 = vld [vmem:[%s224 + $0x788] sm:$0xff]
        %v1029 = vld [vmem:[%s224 + $0x790] sm:$0xff]
        %v1030 = vld [vmem:[%s224 + $0x798] sm:$0xff]
        %v1031 = vld [vmem:[%s224 + $0x7a0] sm:$0xff]
        %v1032 = vld [vmem:[%s224 + $0x7a8] sm:$0xff]
        %v1033 = vld [vmem:[%s224 + $0x7b0] sm:$0xff]
        %v1034 = vld [vmem:[%s224 + $0x7b8] sm:$0xff]
        %v1035 = vld [vmem:[%s224 + $0x7c0] sm:$0xff]
        %v1036 = vld [vmem:[%s224 + $0x7c8] sm:$0xff]
        %v1037 = vld [vmem:[%s224 + $0x7d0] sm:$0xff]
        %v1038 = vld [vmem:[%s224 + $0x7d8] sm:$0xff]
        %v1039 = vld [vmem:[%s224 + $0x7e0] sm:$0xff]
        %v1040 = vld [vmem:[%s224 + $0x7e8] sm:$0xff]
        %v1041 = vld [vmem:[%s224 + $0x7f0] sm:$0xff]
        %v1042 = vld [vmem:[%s224 + $0x7f8] sm:$0xff]
        %v1043 = vld [vmem:[%s224 + $0x800] sm:$0xff]
        %v1044 = vld [vmem:[%s224 + $0x808] sm:$0xff]
        %v1045 = vld [vmem:[%s224 + $0x810] sm:$0xff]
        %v1046 = vld [vmem:[%s224 + $0x818] sm:$0xff]
        %v1047 = vld [vmem:[%s224 + $0x820] sm:$0xff]
        %v1048 = vld [vmem:[%s224 + $0x828] sm:$0xff]
        %v1049 = vld [vmem:[%s224 + $0x830] sm:$0xff]
        %v1050 = vld [vmem:[%s224 + $0x838] sm:$0xff]
        %v1051 = vld [vmem:[%s224 + $0x840] sm:$0xff]
        %v1052 = vld [vmem:[%s224 + $0x848] sm:$0xff]
        %v1053 = vld [vmem:[%s224 + $0x850] sm:$0xff]
        %v1054 = vld [vmem:[%s224 + $0x858] sm:$0xff]
        %v1055 = vld [vmem:[%s224 + $0x860] sm:$0xff]
        %v1056 = vld [vmem:[%s224 + $0x868] sm:$0xff]
        %v1057 = vld [vmem:[%s224 + $0x870] sm:$0xff]
        %v1058 = vld [vmem:[%s224 + $0x878] sm:$0xff]
        %v1059 = vld [vmem:[%s224 + $0x880] sm:$0xff]
        %v1060 = vld [vmem:[%s224 + $0x888] sm:$0xff]
        %v1061 = vld [vmem:[%s224 + $0x890] sm:$0xff]
        %v1062 = vld [vmem:[%s224 + $0x898] sm:$0xff]
        %v1063 = vld [vmem:[%s224 + $0x8a0] sm:$0xff]
        %v1064 = vld [vmem:[%s224 + $0x8a8] sm:$0xff]
        %v1065 = vld [vmem:[%s224 + $0x8b0] sm:$0xff]
        %v1066 = vld [vmem:[%s224 + $0x8b8] sm:$0xff]
        %v1067 = vld [vmem:[%s224 + $0x8c0] sm:$0xff]
        %v1068 = vld [vmem:[%s224 + $0x8c8] sm:$0xff]
        %v1069 = vld [vmem:[%s224 + $0x8d0] sm:$0xff]
        %v1070 = vld [vmem:[%s224 + $0x8d8] sm:$0xff]
        %v1071 = vld [vmem:[%s224 + $0x8e0] sm:$0xff]
        %v1072 = vld [vmem:[%s224 + $0x8e8] sm:$0xff]
        %v1073 = vld [vmem:[%s224 + $0x8f0] sm:$0xff]
        %v1074 = vld [vmem:[%s224 + $0x8f8] sm:$0xff]
        %v1075 = vld [vmem:[%s224 + $0x900] sm:$0xff]
        %v1076 = vld [vmem:[%s224 + $0x908] sm:$0xff]
        %v1077 = vld [vmem:[%s224 + $0x910] sm:$0xff]
        %v1078 = vld [vmem:[%s224 + $0x918] sm:$0xff]
        %v1079 = vld [vmem:[%s224 + $0x920] sm:$0xff]
        %v1080 = vld [vmem:[%s224 + $0x928] sm:$0xff]
        %v1081 = vld [vmem:[%s224 + $0x930] sm:$0xff]
        %v1082 = vld [vmem:[%s224 + $0x938] sm:$0xff]
        %v1083 = vld [vmem:[%s224 + $0x940] sm:$0xff]
        %v1084 = vld [vmem:[%s224 + $0x948] sm:$0xff]
        %v1085 = vld [vmem:[%s224 + $0x950] sm:$0xff]
        %v1086 = vld [vmem:[%s224 + $0x958] sm:$0xff]
        %v1087 = vld [vmem:[%s224 + $0x960] sm:$0xff]
        %v1088 = vld [vmem:[%s224 + $0x968] sm:$0xff]
        %v1089 = vld [vmem:[%s224 + $0x970] sm:$0xff]
        %v1090 = vld [vmem:[%s224 + $0x978] sm:$0xff]
        %v1091 = vld [vmem:[%s224 + $0x980] sm:$0xff]
        %v1092 = vld [vmem:[%s224 + $0x988] sm:$0xff]
        %v1093 = vld [vmem:[%s224 + $0x990] sm:$0xff]
        %v1094 = vld [vmem:[%s224 + $0x998] sm:$0xff]
        %v1095 = vld [vmem:[%s224 + $0x9a0] sm:$0xff]
        %v1096 = vld [vmem:[%s224 + $0x9a8] sm:$0xff]
        %v1097 = vld [vmem:[%s224 + $0x9b0] sm:$0xff]
        %v1098 = vld [vmem:[%s224 + $0x9b8] sm:$0xff]
        %v1099 = vld [vmem:[%s224 + $0x9c0] sm:$0xff]
        %v1100 = vld [vmem:[%s224 + $0x9c8] sm:$0xff]
        %v1101 = vld [vmem:[%s224 + $0x9d0] sm:$0xff]
        %v1102 = vld [vmem:[%s224 + $0x9d8] sm:$0xff]
        %v1103 = vld [vmem:[%s224 + $0x9e0] sm:$0xff]
        %v1104 = vld [vmem:[%s224 + $0x9e8] sm:$0xff]
        %v1105 = vld [vmem:[%s224 + $0x9f0] sm:$0xff]
        %v1106 = vld [vmem:[%s224 + $0x9f8] sm:$0xff]
        %v1107 = vld [vmem:[%s224 + $0xa00] sm:$0xff]
        %v1108 = vld [vmem:[%s224 + $0xa08] sm:$0xff]
        %v1109 = vld [vmem:[%s224 + $0xa10] sm:$0xff]
        %v1110 = vld [vmem:[%s224 + $0xa18] sm:$0xff]
        %v1111 = vld [vmem:[%s224 + $0xa20] sm:$0xff]
        %v1112 = vld [vmem:[%s224 + $0xa28] sm:$0xff]
        %v1113 = vld [vmem:[%s224 + $0xa30] sm:$0xff]
        %v1114 = vld [vmem:[%s224 + $0xa38] sm:$0xff]
        %v1115 = vld [vmem:[%s224 + $0xa40] sm:$0xff]
        %v1116 = vld [vmem:[%s224 + $0xa48] sm:$0xff]
        %v1117 = vld [vmem:[%s224 + $0xa50] sm:$0xff]
        %v1118 = vld [vmem:[%s224 + $0xa58] sm:$0xff]
        %v1119 = vld [vmem:[%s224 + $0xa60] sm:$0xff]
        %v1120 = vld [vmem:[%s224 + $0xa68] sm:$0xff]
        %v1121 = vld [vmem:[%s224 + $0xa70] sm:$0xff]
        %v1122 = vld [vmem:[%s224 + $0xa78] sm:$0xff]
        %v1123 = vld [vmem:[%s224 + $0xa80] sm:$0xff]
        %v1124 = vld [vmem:[%s224 + $0xa88] sm:$0xff]
        %v1125 = vld [vmem:[%s224 + $0xa90] sm:$0xff]
        %v1126 = vld [vmem:[%s224 + $0xa98] sm:$0xff]
        %v1127 = vld [vmem:[%s224 + $0xaa0] sm:$0xff]
        %v1128 = vld [vmem:[%s224 + $0xaa8] sm:$0xff]
        %v1129 = vld [vmem:[%s224 + $0xab0] sm:$0xff]
        %v1130 = vld [vmem:[%s224 + $0xab8] sm:$0xff]
        %v1131 = vld [vmem:[%s224 + $0xac0] sm:$0xff]
        %v1132 = vld [vmem:[%s224 + $0xac8] sm:$0xff]
        %v1133 = vld [vmem:[%s224 + $0xad0] sm:$0xff]
        %v1134 = vld [vmem:[%s224 + $0xad8] sm:$0xff]
        %v1135 = vld [vmem:[%s224 + $0xae0] sm:$0xff]
        %v1136 = vld [vmem:[%s224 + $0xae8] sm:$0xff]
        %v1137 = vld [vmem:[%s224 + $0xaf0] sm:$0xff]
        %v1138 = vld [vmem:[%s224 + $0xaf8] sm:$0xff]
        %v1139 = vld [vmem:[%s224 + $0xb00] sm:$0xff]
        %v1140 = vld [vmem:[%s224 + $0xb08] sm:$0xff]
        %v1141 = vld [vmem:[%s224 + $0xb10] sm:$0xff]
        %v1142 = vld [vmem:[%s224 + $0xb18] sm:$0xff]
        %v1143 = vld [vmem:[%s224 + $0xb20] sm:$0xff]
        %v1144 = vld [vmem:[%s224 + $0xb28] sm:$0xff]
        %v1145 = vld [vmem:[%s224 + $0xb30] sm:$0xff]
        %v1146 = vld [vmem:[%s224 + $0xb38] sm:$0xff]
        %v1147 = vld [vmem:[%s224 + $0xb40] sm:$0xff]
        %v1148 = vld [vmem:[%s224 + $0xb48] sm:$0xff]
        %v1149 = vld [vmem:[%s224 + $0xb50] sm:$0xff]
        %v1150 = vld [vmem:[%s224 + $0xb58] sm:$0xff]
        %v1151 = vld [vmem:[%s224 + $0xb60] sm:$0xff]
        %v1152 = vld [vmem:[%s224 + $0xb68] sm:$0xff]
        %v1153 = vld [vmem:[%s224 + $0xb70] sm:$0xff]
        %v1154 = vld [vmem:[%s224 + $0xb78] sm:$0xff]
        %v1155 = vld [vmem:[%s224 + $0xb80] sm:$0xff]
        %v1156 = vld [vmem:[%s224 + $0xb88] sm:$0xff]
        %v1157 = vld [vmem:[%s224 + $0xb90] sm:$0xff]
        %v1158 = vld [vmem:[%s224 + $0xb98] sm:$0xff]
        %v1159 = vld [vmem:[%s224 + $0xba0] sm:$0xff]
        %v1160 = vld [vmem:[%s224 + $0xba8] sm:$0xff]
        %v1161 = vld [vmem:[%s224 + $0xbb0] sm:$0xff]
        %v1162 = vld [vmem:[%s224 + $0xbb8] sm:$0xff]
        %v1163 = vld [vmem:[%s224 + $0xbc0] sm:$0xff]
        %v1164 = vld [vmem:[%s224 + $0xbc8] sm:$0xff]
        %v1165 = vld [vmem:[%s224 + $0xbd0] sm:$0xff]
        %v1166 = vld [vmem:[%s224 + $0xbd8] sm:$0xff]
        %v1167 = vld [vmem:[%s224 + $0xbe0] sm:$0xff]
        %v1168 = vld [vmem:[%s224 + $0xbe8] sm:$0xff]
        %v1169 = vld [vmem:[%s224 + $0xbf0] sm:$0xff]
        %v1170 = vld [vmem:[%s224 + $0xbf8] sm:$0xff]
        %v1171 = vld [vmem:[%s224 + $0xc00] sm:$0xff]
        %v1172 = vld [vmem:[%s224 + $0xc08] sm:$0xff]
        %v1173 = vld [vmem:[%s224 + $0xc10] sm:$0xff]
        %v1174 = vld [vmem:[%s224 + $0xc18] sm:$0xff]
        %v1175 = vld [vmem:[%s224 + $0xc20] sm:$0xff]
        %v1176 = vld [vmem:[%s224 + $0xc28] sm:$0xff]
        %v1177 = vld [vmem:[%s224 + $0xc30] sm:$0xff]
        %v1178 = vld [vmem:[%s224 + $0xc38] sm:$0xff]
        %v1179 = vld [vmem:[%s224 + $0xc40] sm:$0xff]
        %v1180 = vld [vmem:[%s224 + $0xc48] sm:$0xff]
        %v1181 = vld [vmem:[%s224 + $0xc50] sm:$0xff]
        %v1182 = vld [vmem:[%s224 + $0xc58] sm:$0xff]
        %v1183 = vld [vmem:[%s224 + $0xc60] sm:$0xff]
        %v1184 = vld [vmem:[%s224 + $0xc68] sm:$0xff]
        %v1185 = vld [vmem:[%s224 + $0xc70] sm:$0xff]
        %v1186 = vld [vmem:[%s224 + $0xc78] sm:$0xff]
        %v1187 = vld [vmem:[%s224 + $0xc80] sm:$0xff]
        %v1188 = vld [vmem:[%s224 + $0xc88] sm:$0xff]
        %v1189 = vld [vmem:[%s224 + $0xc90] sm:$0xff]
        %v1190 = vld [vmem:[%s224 + $0xc98] sm:$0xff]
        %v1191 = vld [vmem:[%s224 + $0xca0] sm:$0xff]
        %v1192 = vld [vmem:[%s224 + $0xca8] sm:$0xff]
        %v1193 = vld [vmem:[%s224 + $0xcb0] sm:$0xff]
        %v1194 = vld [vmem:[%s224 + $0xcb8] sm:$0xff]
        %v1195 = vld [vmem:[%s224 + $0xcc0] sm:$0xff]
        %v1196 = vld [vmem:[%s224 + $0xcc8] sm:$0xff]
        %v1197 = vld [vmem:[%s224 + $0xcd0] sm:$0xff]
        %v1198 = vld [vmem:[%s224 + $0xcd8] sm:$0xff]
        %v1199 = vld [vmem:[%s224 + $0xce0] sm:$0xff]
        %v1200 = vld [vmem:[%s224 + $0xce8] sm:$0xff]
        %v1201 = vld [vmem:[%s224 + $0xcf0] sm:$0xff]
        %v1202 = vld [vmem:[%s224 + $0xcf8] sm:$0xff]
        %v1203 = vld [vmem:[%s224 + $0xd00] sm:$0xff]
        %v1204 = vld [vmem:[%s224 + $0xd08] sm:$0xff]
        %v1205 = vld [vmem:[%s224 + $0xd10] sm:$0xff]
        %v1206 = vld [vmem:[%s224 + $0xd18] sm:$0xff]
        %v1207 = vld [vmem:[%s224 + $0xd20] sm:$0xff]
        %v1208 = vld [vmem:[%s224 + $0xd28] sm:$0xff]
        %v1209 = vld [vmem:[%s224 + $0xd30] sm:$0xff]
        %v1210 = vld [vmem:[%s224 + $0xd38] sm:$0xff]
        %v1211 = vld [vmem:[%s224 + $0xd40] sm:$0xff]
        %v1212 = vld [vmem:[%s224 + $0xd48] sm:$0xff]
        %v1213 = vld [vmem:[%s224 + $0xd50] sm:$0xff]
        %v1214 = vld [vmem:[%s224 + $0xd58] sm:$0xff]
        %v1215 = vld [vmem:[%s224 + $0xd60] sm:$0xff]
        %v1216 = vld [vmem:[%s224 + $0xd68] sm:$0xff]
        %v1217 = vld [vmem:[%s224 + $0xd70] sm:$0xff]
        %v1218 = vld [vmem:[%s224 + $0xd78] sm:$0xff]
        %v1219 = vld [vmem:[%s224 + $0xd80] sm:$0xff]
        %v1220 = vld [vmem:[%s224 + $0xd88] sm:$0xff]
        %v1221 = vld [vmem:[%s224 + $0xd90] sm:$0xff]
        %v1222 = vld [vmem:[%s224 + $0xd98] sm:$0xff]
        %v1223 = vld [vmem:[%s224 + $0xda0] sm:$0xff]
        %v1224 = vld [vmem:[%s224 + $0xda8] sm:$0xff]
        %v1225 = vld [vmem:[%s224 + $0xdb0] sm:$0xff]
        %v1226 = vld [vmem:[%s224 + $0xdb8] sm:$0xff]
        %v1227 = vld [vmem:[%s224 + $0xdc0] sm:$0xff]
        %v1228 = vld [vmem:[%s224 + $0xdc8] sm:$0xff]
        %v1229 = vld [vmem:[%s224 + $0xdd0] sm:$0xff]
        %v1230 = vld [vmem:[%s224 + $0xdd8] sm:$0xff]
        %v1231 = vld [vmem:[%s224 + $0xde0] sm:$0xff]
        %v1232 = vld [vmem:[%s224 + $0xde8] sm:$0xff]
        %v1233 = vld [vmem:[%s224 + $0xdf0] sm:$0xff]
        %v1234 = vld [vmem:[%s224 + $0xdf8] sm:$0xff]
        %v1235 = vld [vmem:[%s224 + $0xe00] sm:$0xff]
        %v1236 = vld [vmem:[%s224 + $0xe08] sm:$0xff]
        %v1237 = vld [vmem:[%s224 + $0xe10] sm:$0xff]
        %v1238 = vld [vmem:[%s224 + $0xe18] sm:$0xff]
        %v1239 = vld [vmem:[%s224 + $0xe20] sm:$0xff]
        %v1240 = vld [vmem:[%s224 + $0xe28] sm:$0xff]
        %v1241 = vld [vmem:[%s224 + $0xe30] sm:$0xff]
        %v1242 = vld [vmem:[%s224 + $0xe38] sm:$0xff]
        %v1243 = vld [vmem:[%s224 + $0xe40] sm:$0xff]
        %v1244 = vld [vmem:[%s224 + $0xe48] sm:$0xff]
        %v1245 = vld [vmem:[%s224 + $0xe50] sm:$0xff]
        %v1246 = vld [vmem:[%s224 + $0xe58] sm:$0xff]
        %v1247 = vld [vmem:[%s224 + $0xe60] sm:$0xff]
        %v1248 = vld [vmem:[%s224 + $0xe68] sm:$0xff]
        %v1249 = vld [vmem:[%s224 + $0xe70] sm:$0xff]
        %v1250 = vld [vmem:[%s224 + $0xe78] sm:$0xff]
        %v1251 = vld [vmem:[%s224 + $0xe80] sm:$0xff]
        %v1252 = vld [vmem:[%s224 + $0xe88] sm:$0xff]
        %v1253 = vld [vmem:[%s224 + $0xe90] sm:$0xff]
        %v1254 = vld [vmem:[%s224 + $0xe98] sm:$0xff]
        %v1255 = vld [vmem:[%s224 + $0xea0] sm:$0xff]
        %v1256 = vld [vmem:[%s224 + $0xea8] sm:$0xff]
        %v1257 = vld [vmem:[%s224 + $0xeb0] sm:$0xff]
        %v1258 = vld [vmem:[%s224 + $0xeb8] sm:$0xff]
        %v1259 = vld [vmem:[%s224 + $0xec0] sm:$0xff]
        %v1260 = vld [vmem:[%s224 + $0xec8] sm:$0xff]
        %v1261 = vld [vmem:[%s224 + $0xed0] sm:$0xff]
        %v1262 = vld [vmem:[%s224 + $0xed8] sm:$0xff]
        %v1263 = vld [vmem:[%s224 + $0xee0] sm:$0xff]
        %v1264 = vld [vmem:[%s224 + $0xee8] sm:$0xff]
        %v1265 = vld [vmem:[%s224 + $0xef0] sm:$0xff]
        %v1266 = vld [vmem:[%s224 + $0xef8] sm:$0xff]
        %v1267 = vld [vmem:[%s224 + $0xf00] sm:$0xff]
        %v1268 = vld [vmem:[%s224 + $0xf08] sm:$0xff]
        %v1269 = vld [vmem:[%s224 + $0xf10] sm:$0xff]
        %v1270 = vld [vmem:[%s224 + $0xf18] sm:$0xff]
        %v1271 = vld [vmem:[%s224 + $0xf20] sm:$0xff]
        %v1272 = vld [vmem:[%s224 + $0xf28] sm:$0xff]
        %v1273 = vld [vmem:[%s224 + $0xf30] sm:$0xff]
        %v1274 = vld [vmem:[%s224 + $0xf38] sm:$0xff]
        %v1275 = vld [vmem:[%s224 + $0xf40] sm:$0xff]
        %v1276 = vld [vmem:[%s224 + $0xf48] sm:$0xff]
        %v1277 = vld [vmem:[%s224 + $0xf50] sm:$0xff]
        %v1278 = vld [vmem:[%s224 + $0xf58] sm:$0xff]
        %v1279 = vld [vmem:[%s224 + $0xf60] sm:$0xff]
        %v1280 = vld [vmem:[%s224 + $0xf68] sm:$0xff]
        %v1281 = vld [vmem:[%s224 + $0xf70] sm:$0xff]
        %v1282 = vld [vmem:[%s224 + $0xf78] sm:$0xff]
        %v1283 = vld [vmem:[%s224 + $0xf80] sm:$0xff]
        %v1284 = vld [vmem:[%s224 + $0xf88] sm:$0xff]
        %v1285 = vld [vmem:[%s224 + $0xf90] sm:$0xff]
        %v1286 = vld [vmem:[%s224 + $0xf98] sm:$0xff]
        %v1287 = vld [vmem:[%s224 + $0xfa0] sm:$0xff]
        %v1288 = vld [vmem:[%s224 + $0xfa8] sm:$0xff]
        %v1289 = vld [vmem:[%s224 + $0xfb0] sm:$0xff]
        %v1290 = vld [vmem:[%s224 + $0xfb8] sm:$0xff]
        %v1291 = vld [vmem:[%s224 + $0xfc0] sm:$0xff]
        %v1292 = vld [vmem:[%s224 + $0xfc8] sm:$0xff]
        %v1293 = vld [vmem:[%s224 + $0xfd0] sm:$0xff]
        %v1294 = vld [vmem:[%s224 + $0xfd8] sm:$0xff]
        %v1295 = vld [vmem:[%s224 + $0xfe0] sm:$0xff]
        %v1296 = vld [vmem:[%s224 + $0xfe8] sm:$0xff]
        %v1297 = vld [vmem:[%s224 + $0xff0] sm:$0xff]
        %v1298 = vld [vmem:[%s224 + $0xff8] sm:$0xff]
        %v1299 = vlog2.pop %v275
        %v1300 = vmul.f32 %v1299, 0.6931472
        %v1301 = vlog2.pop %v276
        %v1302 = vmul.f32 %v1301, 0.6931472
        %v1303 = vlog2.pop %v277
        %v1304 = vmul.f32 %v1303, 0.6931472
        %v1305 = vlog2.pop %v278
        %v1306 = vmul.f32 %v1305, 0.6931472
        %v1307 = vlog2.pop %v279
        %v1308 = vmul.f32 %v1307, 0.6931472
        %v1309 = vlog2.pop %v280
        %v1310 = vmul.f32 %v1309, 0.6931472
        %v1311 = vlog2.pop %v281
        %v1312 = vmul.f32 %v1311, 0.6931472
        %v1313 = vlog2.pop %v282
        %v1314 = vmul.f32 %v1313, 0.6931472
        %v1315 = vlog2.pop %v283
        %v1316 = vmul.f32 %v1315, 0.6931472
        %v1317 = vlog2.pop %v284
        %v1318 = vmul.f32 %v1317, 0.6931472
        %v1319 = vlog2.pop %v285
        %v1320 = vmul.f32 %v1319, 0.6931472
        %v1321 = vlog2.pop %v286
        %v1322 = vmul.f32 %v1321, 0.6931472
        %v1323 = vlog2.pop %v287
        %v1324 = vmul.f32 %v1323, 0.6931472
        %v1325 = vlog2.pop %v288
        %v1326 = vmul.f32 %v1325, 0.6931472
        %v1327 = vlog2.pop %v289
        %v1328 = vmul.f32 %v1327, 0.6931472
        %v1329 = vlog2.pop %v290
        %v1330 = vmul.f32 %v1329, 0.6931472
        %v1331 = vlog2.pop %v291
        %v1332 = vmul.f32 %v1331, 0.6931472
        %v1333 = vlog2.pop %v292
        %v1334 = vmul.f32 %v1333, 0.6931472
        %v1335 = vlog2.pop %v293
        %v1336 = vmul.f32 %v1335, 0.6931472
        %v1337 = vlog2.pop %v294
        %v1338 = vmul.f32 %v1337, 0.6931472
        %v1339 = vlog2.pop %v295
        %v1340 = vmul.f32 %v1339, 0.6931472
        %v1341 = vlog2.pop %v296
        %v1342 = vmul.f32 %v1341, 0.6931472
        %v1343 = vlog2.pop %v297
        %v1344 = vmul.f32 %v1343, 0.6931472
        %v1345 = vlog2.pop %v298
        %v1346 = vmul.f32 %v1345, 0.6931472
        %v1347 = vlog2.pop %v299
        %v1348 = vmul.f32 %v1347, 0.6931472
        %v1349 = vlog2.pop %v300
        %v1350 = vmul.f32 %v1349, 0.6931472
        %v1351 = vlog2.pop %v301
        %v1352 = vmul.f32 %v1351, 0.6931472
        %v1353 = vlog2.pop %v302
        %v1354 = vmul.f32 %v1353, 0.6931472
        %v1355 = vlog2.pop %v303
        %v1356 = vmul.f32 %v1355, 0.6931472
        %v1357 = vlog2.pop %v304
        %v1358 = vmul.f32 %v1357, 0.6931472
        %v1359 = vlog2.pop %v305
        %v1360 = vmul.f32 %v1359, 0.6931472
        %v1361 = vlog2.pop %v306
        %v1362 = vmul.f32 %v1361, 0.6931472
        %v1363 = vlog2.pop %v307
        %v1364 = vmul.f32 %v1363, 0.6931472
        %v1365 = vlog2.pop %v308
        %v1366 = vmul.f32 %v1365, 0.6931472
        %v1367 = vlog2.pop %v309
        %v1368 = vmul.f32 %v1367, 0.6931472
        %v1369 = vlog2.pop %v310
        %v1370 = vmul.f32 %v1369, 0.6931472
        %v1371 = vlog2.pop %v311
        %v1372 = vmul.f32 %v1371, 0.6931472
        %v1373 = vlog2.pop %v312
        %v1374 = vmul.f32 %v1373, 0.6931472
        %v1375 = vlog2.pop %v313
        %v1376 = vmul.f32 %v1375, 0.6931472
        %v1377 = vlog2.pop %v314
        %v1378 = vmul.f32 %v1377, 0.6931472
        %v1379 = vlog2.pop %v315
        %v1380 = vmul.f32 %v1379, 0.6931472
        %v1381 = vlog2.pop %v316
        %v1382 = vmul.f32 %v1381, 0.6931472
        %v1383 = vlog2.pop %v317
        %v1384 = vmul.f32 %v1383, 0.6931472
        %v1385 = vlog2.pop %v318
        %v1386 = vmul.f32 %v1385, 0.6931472
        %v1387 = vlog2.pop %v319
        %v1388 = vmul.f32 %v1387, 0.6931472
        %v1389 = vlog2.pop %v320
        %v1390 = vmul.f32 %v1389, 0.6931472
        %v1391 = vlog2.pop %v321
        %v1392 = vmul.f32 %v1391, 0.6931472
        %v1393 = vlog2.pop %v322
        %v1394 = vmul.f32 %v1393, 0.6931472
        %v1395 = vlog2.pop %v323
        %v1396 = vmul.f32 %v1395, 0.6931472
        %v1397 = vlog2.pop %v324
        %v1398 = vmul.f32 %v1397, 0.6931472
        %v1399 = vlog2.pop %v325
        %v1400 = vmul.f32 %v1399, 0.6931472
        %v1401 = vlog2.pop %v326
        %v1402 = vmul.f32 %v1401, 0.6931472
        %v1403 = vlog2.pop %v327
        %v1404 = vmul.f32 %v1403, 0.6931472
        %v1405 = vlog2.pop %v328
        %v1406 = vmul.f32 %v1405, 0.6931472
        %v1407 = vlog2.pop %v329
        %v1408 = vmul.f32 %v1407, 0.6931472
        %v1409 = vlog2.pop %v330
        %v1410 = vmul.f32 %v1409, 0.6931472
        %v1411 = vlog2.pop %v331
        %v1412 = vmul.f32 %v1411, 0.6931472
        %v1413 = vlog2.pop %v332
        %v1414 = vmul.f32 %v1413, 0.6931472
        %v1415 = vlog2.pop %v333
        %v1416 = vmul.f32 %v1415, 0.6931472
        %v1417 = vlog2.pop %v334
        %v1418 = vmul.f32 %v1417, 0.6931472
        %v1419 = vlog2.pop %v335
        %v1420 = vmul.f32 %v1419, 0.6931472
        %v1421 = vlog2.pop %v336
        %v1422 = vmul.f32 %v1421, 0.6931472
        %v1423 = vlog2.pop %v337
        %v1424 = vmul.f32 %v1423, 0.6931472
        %v1425 = vlog2.pop %v338
        %v1426 = vmul.f32 %v1425, 0.6931472
        %v1427 = vlog2.pop %v339
        %v1428 = vmul.f32 %v1427, 0.6931472
        %v1429 = vlog2.pop %v340
        %v1430 = vmul.f32 %v1429, 0.6931472
        %v1431 = vlog2.pop %v341
        %v1432 = vmul.f32 %v1431, 0.6931472
        %v1433 = vlog2.pop %v342
        %v1434 = vmul.f32 %v1433, 0.6931472
        %v1435 = vlog2.pop %v343
        %v1436 = vmul.f32 %v1435, 0.6931472
        %v1437 = vlog2.pop %v344
        %v1438 = vmul.f32 %v1437, 0.6931472
        %v1439 = vlog2.pop %v345
        %v1440 = vmul.f32 %v1439, 0.6931472
        %v1441 = vlog2.pop %v346
        %v1442 = vmul.f32 %v1441, 0.6931472
        %v1443 = vlog2.pop %v347
        %v1444 = vmul.f32 %v1443, 0.6931472
        %v1445 = vlog2.pop %v348
        %v1446 = vmul.f32 %v1445, 0.6931472
        %v1447 = vlog2.pop %v349
        %v1448 = vmul.f32 %v1447, 0.6931472
        %v1449 = vlog2.pop %v350
        %v1450 = vmul.f32 %v1449, 0.6931472
        %v1451 = vlog2.pop %v351
        %v1452 = vmul.f32 %v1451, 0.6931472
        %v1453 = vlog2.pop %v352
        %v1454 = vmul.f32 %v1453, 0.6931472
        %v1455 = vlog2.pop %v353
        %v1456 = vmul.f32 %v1455, 0.6931472
        %v1457 = vlog2.pop %v354
        %v1458 = vmul.f32 %v1457, 0.6931472
        %v1459 = vlog2.pop %v355
        %v1460 = vmul.f32 %v1459, 0.6931472
        %v1461 = vlog2.pop %v356
        %v1462 = vmul.f32 %v1461, 0.6931472
        %v1463 = vlog2.pop %v357
        %v1464 = vmul.f32 %v1463, 0.6931472
        %v1465 = vlog2.pop %v358
        %v1466 = vmul.f32 %v1465, 0.6931472
        %v1467 = vlog2.pop %v359
        %v1468 = vmul.f32 %v1467, 0.6931472
        %v1469 = vlog2.pop %v360
        %v1470 = vmul.f32 %v1469, 0.6931472
        %v1471 = vlog2.pop %v361
        %v1472 = vmul.f32 %v1471, 0.6931472
        %v1473 = vlog2.pop %v362
        %v1474 = vmul.f32 %v1473, 0.6931472
        %v1475 = vlog2.pop %v363
        %v1476 = vmul.f32 %v1475, 0.6931472
        %v1477 = vlog2.pop %v364
        %v1478 = vmul.f32 %v1477, 0.6931472
        %v1479 = vlog2.pop %v365
        %v1480 = vmul.f32 %v1479, 0.6931472
        %v1481 = vlog2.pop %v366
        %v1482 = vmul.f32 %v1481, 0.6931472
        %v1483 = vlog2.pop %v367
        %v1484 = vmul.f32 %v1483, 0.6931472
        %v1485 = vlog2.pop %v368
        %v1486 = vmul.f32 %v1485, 0.6931472
        %v1487 = vlog2.pop %v369
        %v1488 = vmul.f32 %v1487, 0.6931472
        %v1489 = vlog2.pop %v370
        %v1490 = vmul.f32 %v1489, 0.6931472
        %v1491 = vlog2.pop %v371
        %v1492 = vmul.f32 %v1491, 0.6931472
        %v1493 = vlog2.pop %v372
        %v1494 = vmul.f32 %v1493, 0.6931472
        %v1495 = vlog2.pop %v373
        %v1496 = vmul.f32 %v1495, 0.6931472
        %v1497 = vlog2.pop %v374
        %v1498 = vmul.f32 %v1497, 0.6931472
        %v1499 = vlog2.pop %v375
        %v1500 = vmul.f32 %v1499, 0.6931472
        %v1501 = vlog2.pop %v376
        %v1502 = vmul.f32 %v1501, 0.6931472
        %v1503 = vlog2.pop %v377
        %v1504 = vmul.f32 %v1503, 0.6931472
        %v1505 = vlog2.pop %v378
        %v1506 = vmul.f32 %v1505, 0.6931472
        %v1507 = vlog2.pop %v379
        %v1508 = vmul.f32 %v1507, 0.6931472
        %v1509 = vlog2.pop %v380
        %v1510 = vmul.f32 %v1509, 0.6931472
        %v1511 = vlog2.pop %v381
        %v1512 = vmul.f32 %v1511, 0.6931472
        %v1513 = vlog2.pop %v382
        %v1514 = vmul.f32 %v1513, 0.6931472
        %v1515 = vlog2.pop %v383
        %v1516 = vmul.f32 %v1515, 0.6931472
        %v1517 = vlog2.pop %v384
        %v1518 = vmul.f32 %v1517, 0.6931472
        %v1519 = vlog2.pop %v385
        %v1520 = vmul.f32 %v1519, 0.6931472
        %v1521 = vlog2.pop %v386
        %v1522 = vmul.f32 %v1521, 0.6931472
        %v1523 = vlog2.pop %v387
        %v1524 = vmul.f32 %v1523, 0.6931472
        %v1525 = vlog2.pop %v388
        %v1526 = vmul.f32 %v1525, 0.6931472
        %v1527 = vlog2.pop %v389
        %v1528 = vmul.f32 %v1527, 0.6931472
        %v1529 = vlog2.pop %v390
        %v1530 = vmul.f32 %v1529, 0.6931472
        %v1531 = vlog2.pop %v391
        %v1532 = vmul.f32 %v1531, 0.6931472
        %v1533 = vlog2.pop %v392
        %v1534 = vmul.f32 %v1533, 0.6931472
        %v1535 = vlog2.pop %v393
        %v1536 = vmul.f32 %v1535, 0.6931472
        %v1537 = vlog2.pop %v394
        %v1538 = vmul.f32 %v1537, 0.6931472
        %v1539 = vlog2.pop %v395
        %v1540 = vmul.f32 %v1539, 0.6931472
        %v1541 = vlog2.pop %v396
        %v1542 = vmul.f32 %v1541, 0.6931472
        %v1543 = vlog2.pop %v397
        %v1544 = vmul.f32 %v1543, 0.6931472
        %v1545 = vlog2.pop %v398
        %v1546 = vmul.f32 %v1545, 0.6931472
        %v1547 = vlog2.pop %v399
        %v1548 = vmul.f32 %v1547, 0.6931472
        %v1549 = vlog2.pop %v400
        %v1550 = vmul.f32 %v1549, 0.6931472
        %v1551 = vlog2.pop %v401
        %v1552 = vmul.f32 %v1551, 0.6931472
        %v1553 = vlog2.pop %v402
        %v1554 = vmul.f32 %v1553, 0.6931472
        %v1555 = vlog2.pop %v403
        %v1556 = vmul.f32 %v1555, 0.6931472
        %v1557 = vlog2.pop %v404
        %v1558 = vmul.f32 %v1557, 0.6931472
        %v1559 = vlog2.pop %v405
        %v1560 = vmul.f32 %v1559, 0.6931472
        %v1561 = vlog2.pop %v406
        %v1562 = vmul.f32 %v1561, 0.6931472
        %v1563 = vlog2.pop %v407
        %v1564 = vmul.f32 %v1563, 0.6931472
        %v1565 = vlog2.pop %v408
        %v1566 = vmul.f32 %v1565, 0.6931472
        %v1567 = vlog2.pop %v409
        %v1568 = vmul.f32 %v1567, 0.6931472
        %v1569 = vlog2.pop %v410
        %v1570 = vmul.f32 %v1569, 0.6931472
        %v1571 = vlog2.pop %v411
        %v1572 = vmul.f32 %v1571, 0.6931472
        %v1573 = vlog2.pop %v412
        %v1574 = vmul.f32 %v1573, 0.6931472
        %v1575 = vlog2.pop %v413
        %v1576 = vmul.f32 %v1575, 0.6931472
        %v1577 = vlog2.pop %v414
        %v1578 = vmul.f32 %v1577, 0.6931472
        %v1579 = vlog2.pop %v415
        %v1580 = vmul.f32 %v1579, 0.6931472
        %v1581 = vlog2.pop %v416
        %v1582 = vmul.f32 %v1581, 0.6931472
        %v1583 = vlog2.pop %v417
        %v1584 = vmul.f32 %v1583, 0.6931472
        %v1585 = vlog2.pop %v418
        %v1586 = vmul.f32 %v1585, 0.6931472
        %v1587 = vlog2.pop %v419
        %v1588 = vmul.f32 %v1587, 0.6931472
        %v1589 = vlog2.pop %v420
        %v1590 = vmul.f32 %v1589, 0.6931472
        %v1591 = vlog2.pop %v421
        %v1592 = vmul.f32 %v1591, 0.6931472
        %v1593 = vlog2.pop %v422
        %v1594 = vmul.f32 %v1593, 0.6931472
        %v1595 = vlog2.pop %v423
        %v1596 = vmul.f32 %v1595, 0.6931472
        %v1597 = vlog2.pop %v424
        %v1598 = vmul.f32 %v1597, 0.6931472
        %v1599 = vlog2.pop %v425
        %v1600 = vmul.f32 %v1599, 0.6931472
        %v1601 = vlog2.pop %v426
        %v1602 = vmul.f32 %v1601, 0.6931472
        %v1603 = vlog2.pop %v427
        %v1604 = vmul.f32 %v1603, 0.6931472
        %v1605 = vlog2.pop %v428
        %v1606 = vmul.f32 %v1605, 0.6931472
        %v1607 = vlog2.pop %v429
        %v1608 = vmul.f32 %v1607, 0.6931472
        %v1609 = vlog2.pop %v430
        %v1610 = vmul.f32 %v1609, 0.6931472
        %v1611 = vlog2.pop %v431
        %v1612 = vmul.f32 %v1611, 0.6931472
        %v1613 = vlog2.pop %v432
        %v1614 = vmul.f32 %v1613, 0.6931472
        %v1615 = vlog2.pop %v433
        %v1616 = vmul.f32 %v1615, 0.6931472
        %v1617 = vlog2.pop %v434
        %v1618 = vmul.f32 %v1617, 0.6931472
        %v1619 = vlog2.pop %v435
        %v1620 = vmul.f32 %v1619, 0.6931472
        %v1621 = vlog2.pop %v436
        %v1622 = vmul.f32 %v1621, 0.6931472
        %v1623 = vlog2.pop %v437
        %v1624 = vmul.f32 %v1623, 0.6931472
        %v1625 = vlog2.pop %v438
        %v1626 = vmul.f32 %v1625, 0.6931472
        %v1627 = vlog2.pop %v439
        %v1628 = vmul.f32 %v1627, 0.6931472
        %v1629 = vlog2.pop %v440
        %v1630 = vmul.f32 %v1629, 0.6931472
        %v1631 = vlog2.pop %v441
        %v1632 = vmul.f32 %v1631, 0.6931472
        %v1633 = vlog2.pop %v442
        %v1634 = vmul.f32 %v1633, 0.6931472
        %v1635 = vlog2.pop %v443
        %v1636 = vmul.f32 %v1635, 0.6931472
        %v1637 = vlog2.pop %v444
        %v1638 = vmul.f32 %v1637, 0.6931472
        %v1639 = vlog2.pop %v445
        %v1640 = vmul.f32 %v1639, 0.6931472
        %v1641 = vlog2.pop %v446
        %v1642 = vmul.f32 %v1641, 0.6931472
        %v1643 = vlog2.pop %v447
        %v1644 = vmul.f32 %v1643, 0.6931472
        %v1645 = vlog2.pop %v448
        %v1646 = vmul.f32 %v1645, 0.6931472
        %v1647 = vlog2.pop %v449
        %v1648 = vmul.f32 %v1647, 0.6931472
        %v1649 = vlog2.pop %v450
        %v1650 = vmul.f32 %v1649, 0.6931472
        %v1651 = vlog2.pop %v451
        %v1652 = vmul.f32 %v1651, 0.6931472
        %v1653 = vlog2.pop %v452
        %v1654 = vmul.f32 %v1653, 0.6931472
        %v1655 = vlog2.pop %v453
        %v1656 = vmul.f32 %v1655, 0.6931472
        %v1657 = vlog2.pop %v454
        %v1658 = vmul.f32 %v1657, 0.6931472
        %v1659 = vlog2.pop %v455
        %v1660 = vmul.f32 %v1659, 0.6931472
        %v1661 = vlog2.pop %v456
        %v1662 = vmul.f32 %v1661, 0.6931472
        %v1663 = vlog2.pop %v457
        %v1664 = vmul.f32 %v1663, 0.6931472
        %v1665 = vlog2.pop %v458
        %v1666 = vmul.f32 %v1665, 0.6931472
        %v1667 = vlog2.pop %v459
        %v1668 = vmul.f32 %v1667, 0.6931472
        %v1669 = vlog2.pop %v460
        %v1670 = vmul.f32 %v1669, 0.6931472
        %v1671 = vlog2.pop %v461
        %v1672 = vmul.f32 %v1671, 0.6931472
        %v1673 = vlog2.pop %v462
        %v1674 = vmul.f32 %v1673, 0.6931472
        %v1675 = vlog2.pop %v463
        %v1676 = vmul.f32 %v1675, 0.6931472
        %v1677 = vlog2.pop %v464
        %v1678 = vmul.f32 %v1677, 0.6931472
        %v1679 = vlog2.pop %v465
        %v1680 = vmul.f32 %v1679, 0.6931472
        %v1681 = vlog2.pop %v466
        %v1682 = vmul.f32 %v1681, 0.6931472
        %v1683 = vlog2.pop %v467
        %v1684 = vmul.f32 %v1683, 0.6931472
        %v1685 = vlog2.pop %v468
        %v1686 = vmul.f32 %v1685, 0.6931472
        %v1687 = vlog2.pop %v469
        %v1688 = vmul.f32 %v1687, 0.6931472
        %v1689 = vlog2.pop %v470
        %v1690 = vmul.f32 %v1689, 0.6931472
        %v1691 = vlog2.pop %v471
        %v1692 = vmul.f32 %v1691, 0.6931472
        %v1693 = vlog2.pop %v472
        %v1694 = vmul.f32 %v1693, 0.6931472
        %v1695 = vlog2.pop %v473
        %v1696 = vmul.f32 %v1695, 0.6931472
        %v1697 = vlog2.pop %v474
        %v1698 = vmul.f32 %v1697, 0.6931472
        %v1699 = vlog2.pop %v475
        %v1700 = vmul.f32 %v1699, 0.6931472
        %v1701 = vlog2.pop %v476
        %v1702 = vmul.f32 %v1701, 0.6931472
        %v1703 = vlog2.pop %v477
        %v1704 = vmul.f32 %v1703, 0.6931472
        %v1705 = vlog2.pop %v478
        %v1706 = vmul.f32 %v1705, 0.6931472
        %v1707 = vlog2.pop %v479
        %v1708 = vmul.f32 %v1707, 0.6931472
        %v1709 = vlog2.pop %v480
        %v1710 = vmul.f32 %v1709, 0.6931472
        %v1711 = vlog2.pop %v481
        %v1712 = vmul.f32 %v1711, 0.6931472
        %v1713 = vlog2.pop %v482
        %v1714 = vmul.f32 %v1713, 0.6931472
        %v1715 = vlog2.pop %v483
        %v1716 = vmul.f32 %v1715, 0.6931472
        %v1717 = vlog2.pop %v484
        %v1718 = vmul.f32 %v1717, 0.6931472
        %v1719 = vlog2.pop %v485
        %v1720 = vmul.f32 %v1719, 0.6931472
        %v1721 = vlog2.pop %v486
        %v1722 = vmul.f32 %v1721, 0.6931472
        %v1723 = vlog2.pop %v487
        %v1724 = vmul.f32 %v1723, 0.6931472
        %v1725 = vlog2.pop %v488
        %v1726 = vmul.f32 %v1725, 0.6931472
        %v1727 = vlog2.pop %v489
        %v1728 = vmul.f32 %v1727, 0.6931472
        %v1729 = vlog2.pop %v490
        %v1730 = vmul.f32 %v1729, 0.6931472
        %v1731 = vlog2.pop %v491
        %v1732 = vmul.f32 %v1731, 0.6931472
        %v1733 = vlog2.pop %v492
        %v1734 = vmul.f32 %v1733, 0.6931472
        %v1735 = vlog2.pop %v493
        %v1736 = vmul.f32 %v1735, 0.6931472
        %v1737 = vlog2.pop %v494
        %v1738 = vmul.f32 %v1737, 0.6931472
        %v1739 = vlog2.pop %v495
        %v1740 = vmul.f32 %v1739, 0.6931472
        %v1741 = vlog2.pop %v496
        %v1742 = vmul.f32 %v1741, 0.6931472
        %v1743 = vlog2.pop %v497
        %v1744 = vmul.f32 %v1743, 0.6931472
        %v1745 = vlog2.pop %v498
        %v1746 = vmul.f32 %v1745, 0.6931472
        %v1747 = vlog2.pop %v499
        %v1748 = vmul.f32 %v1747, 0.6931472
        %v1749 = vlog2.pop %v500
        %v1750 = vmul.f32 %v1749, 0.6931472
        %v1751 = vlog2.pop %v501
        %v1752 = vmul.f32 %v1751, 0.6931472
        %v1753 = vlog2.pop %v502
        %v1754 = vmul.f32 %v1753, 0.6931472
        %v1755 = vlog2.pop %v503
        %v1756 = vmul.f32 %v1755, 0.6931472
        %v1757 = vlog2.pop %v504
        %v1758 = vmul.f32 %v1757, 0.6931472
        %v1759 = vlog2.pop %v505
        %v1760 = vmul.f32 %v1759, 0.6931472
        %v1761 = vlog2.pop %v506
        %v1762 = vmul.f32 %v1761, 0.6931472
        %v1763 = vlog2.pop %v507
        %v1764 = vmul.f32 %v1763, 0.6931472
        %v1765 = vlog2.pop %v508
        %v1766 = vmul.f32 %v1765, 0.6931472
        %v1767 = vlog2.pop %v509
        %v1768 = vmul.f32 %v1767, 0.6931472
        %v1769 = vlog2.pop %v510
        %v1770 = vmul.f32 %v1769, 0.6931472
        %v1771 = vlog2.pop %v511
        %v1772 = vmul.f32 %v1771, 0.6931472
        %v1773 = vlog2.pop %v512
        %v1774 = vmul.f32 %v1773, 0.6931472
        %v1775 = vlog2.pop %v513
        %v1776 = vmul.f32 %v1775, 0.6931472
        %v1777 = vlog2.pop %v514
        %v1778 = vmul.f32 %v1777, 0.6931472
        %v1779 = vlog2.pop %v515
        %v1780 = vmul.f32 %v1779, 0.6931472
        %v1781 = vlog2.pop %v516
        %v1782 = vmul.f32 %v1781, 0.6931472
        %v1783 = vlog2.pop %v517
        %v1784 = vmul.f32 %v1783, 0.6931472
        %v1785 = vlog2.pop %v518
        %v1786 = vmul.f32 %v1785, 0.6931472
        %v1787 = vlog2.pop %v519
        %v1788 = vmul.f32 %v1787, 0.6931472
        %v1789 = vlog2.pop %v520
        %v1790 = vmul.f32 %v1789, 0.6931472
        %v1791 = vlog2.pop %v521
        %v1792 = vmul.f32 %v1791, 0.6931472
        %v1793 = vlog2.pop %v522
        %v1794 = vmul.f32 %v1793, 0.6931472
        %v1795 = vlog2.pop %v523
        %v1796 = vmul.f32 %v1795, 0.6931472
        %v1797 = vlog2.pop %v524
        %v1798 = vmul.f32 %v1797, 0.6931472
        %v1799 = vlog2.pop %v525
        %v1800 = vmul.f32 %v1799, 0.6931472
        %v1801 = vlog2.pop %v526
        %v1802 = vmul.f32 %v1801, 0.6931472
        %v1803 = vlog2.pop %v527
        %v1804 = vmul.f32 %v1803, 0.6931472
        %v1805 = vlog2.pop %v528
        %v1806 = vmul.f32 %v1805, 0.6931472
        %v1807 = vlog2.pop %v529
        %v1808 = vmul.f32 %v1807, 0.6931472
        %v1809 = vlog2.pop %v530
        %v1810 = vmul.f32 %v1809, 0.6931472
        %v1811 = vlog2.pop %v531
        %v1812 = vmul.f32 %v1811, 0.6931472
        %v1813 = vlog2.pop %v532
        %v1814 = vmul.f32 %v1813, 0.6931472
        %v1815 = vlog2.pop %v533
        %v1816 = vmul.f32 %v1815, 0.6931472
        %v1817 = vlog2.pop %v534
        %v1818 = vmul.f32 %v1817, 0.6931472
        %v1819 = vlog2.pop %v535
        %v1820 = vmul.f32 %v1819, 0.6931472
        %v1821 = vlog2.pop %v536
        %v1822 = vmul.f32 %v1821, 0.6931472
        %v1823 = vlog2.pop %v537
        %v1824 = vmul.f32 %v1823, 0.6931472
        %v1825 = vlog2.pop %v538
        %v1826 = vmul.f32 %v1825, 0.6931472
        %v1827 = vlog2.pop %v539
        %v1828 = vmul.f32 %v1827, 0.6931472
        %v1829 = vlog2.pop %v540
        %v1830 = vmul.f32 %v1829, 0.6931472
        %v1831 = vlog2.pop %v541
        %v1832 = vmul.f32 %v1831, 0.6931472
        %v1833 = vlog2.pop %v542
        %v1834 = vmul.f32 %v1833, 0.6931472
        %v1835 = vlog2.pop %v543
        %v1836 = vmul.f32 %v1835, 0.6931472
        %v1837 = vlog2.pop %v544
        %v1838 = vmul.f32 %v1837, 0.6931472
        %v1839 = vlog2.pop %v545
        %v1840 = vmul.f32 %v1839, 0.6931472
        %v1841 = vlog2.pop %v546
        %v1842 = vmul.f32 %v1841, 0.6931472
        %v1843 = vlog2.pop %v547
        %v1844 = vmul.f32 %v1843, 0.6931472
        %v1845 = vlog2.pop %v548
        %v1846 = vmul.f32 %v1845, 0.6931472
        %v1847 = vlog2.pop %v549
        %v1848 = vmul.f32 %v1847, 0.6931472
        %v1849 = vlog2.pop %v550
        %v1850 = vmul.f32 %v1849, 0.6931472
        %v1851 = vlog2.pop %v551
        %v1852 = vmul.f32 %v1851, 0.6931472
        %v1853 = vlog2.pop %v552
        %v1854 = vmul.f32 %v1853, 0.6931472
        %v1855 = vlog2.pop %v553
        %v1856 = vmul.f32 %v1855, 0.6931472
        %v1857 = vlog2.pop %v554
        %v1858 = vmul.f32 %v1857, 0.6931472
        %v1859 = vlog2.pop %v555
        %v1860 = vmul.f32 %v1859, 0.6931472
        %v1861 = vlog2.pop %v556
        %v1862 = vmul.f32 %v1861, 0.6931472
        %v1863 = vlog2.pop %v557
        %v1864 = vmul.f32 %v1863, 0.6931472
        %v1865 = vlog2.pop %v558
        %v1866 = vmul.f32 %v1865, 0.6931472
        %v1867 = vlog2.pop %v559
        %v1868 = vmul.f32 %v1867, 0.6931472
        %v1869 = vlog2.pop %v560
        %v1870 = vmul.f32 %v1869, 0.6931472
        %v1871 = vlog2.pop %v561
        %v1872 = vmul.f32 %v1871, 0.6931472
        %v1873 = vlog2.pop %v562
        %v1874 = vmul.f32 %v1873, 0.6931472
        %v1875 = vlog2.pop %v563
        %v1876 = vmul.f32 %v1875, 0.6931472
        %v1877 = vlog2.pop %v564
        %v1878 = vmul.f32 %v1877, 0.6931472
        %v1879 = vlog2.pop %v565
        %v1880 = vmul.f32 %v1879, 0.6931472
        %v1881 = vlog2.pop %v566
        %v1882 = vmul.f32 %v1881, 0.6931472
        %v1883 = vlog2.pop %v567
        %v1884 = vmul.f32 %v1883, 0.6931472
        %v1885 = vlog2.pop %v568
        %v1886 = vmul.f32 %v1885, 0.6931472
        %v1887 = vlog2.pop %v569
        %v1888 = vmul.f32 %v1887, 0.6931472
        %v1889 = vlog2.pop %v570
        %v1890 = vmul.f32 %v1889, 0.6931472
        %v1891 = vlog2.pop %v571
        %v1892 = vmul.f32 %v1891, 0.6931472
        %v1893 = vlog2.pop %v572
        %v1894 = vmul.f32 %v1893, 0.6931472
        %v1895 = vlog2.pop %v573
        %v1896 = vmul.f32 %v1895, 0.6931472
        %v1897 = vlog2.pop %v574
        %v1898 = vmul.f32 %v1897, 0.6931472
        %v1899 = vlog2.pop %v575
        %v1900 = vmul.f32 %v1899, 0.6931472
        %v1901 = vlog2.pop %v576
        %v1902 = vmul.f32 %v1901, 0.6931472
        %v1903 = vlog2.pop %v577
        %v1904 = vmul.f32 %v1903, 0.6931472
        %v1905 = vlog2.pop %v578
        %v1906 = vmul.f32 %v1905, 0.6931472
        %v1907 = vlog2.pop %v579
        %v1908 = vmul.f32 %v1907, 0.6931472
        %v1909 = vlog2.pop %v580
        %v1910 = vmul.f32 %v1909, 0.6931472
        %v1911 = vlog2.pop %v581
        %v1912 = vmul.f32 %v1911, 0.6931472
        %v1913 = vlog2.pop %v582
        %v1914 = vmul.f32 %v1913, 0.6931472
        %v1915 = vlog2.pop %v583
        %v1916 = vmul.f32 %v1915, 0.6931472
        %v1917 = vlog2.pop %v584
        %v1918 = vmul.f32 %v1917, 0.6931472
        %v1919 = vlog2.pop %v585
        %v1920 = vmul.f32 %v1919, 0.6931472
        %v1921 = vlog2.pop %v586
        %v1922 = vmul.f32 %v1921, 0.6931472
        %v1923 = vlog2.pop %v587
        %v1924 = vmul.f32 %v1923, 0.6931472
        %v1925 = vlog2.pop %v588
        %v1926 = vmul.f32 %v1925, 0.6931472
        %v1927 = vlog2.pop %v589
        %v1928 = vmul.f32 %v1927, 0.6931472
        %v1929 = vlog2.pop %v590
        %v1930 = vmul.f32 %v1929, 0.6931472
        %v1931 = vlog2.pop %v591
        %v1932 = vmul.f32 %v1931, 0.6931472
        %v1933 = vlog2.pop %v592
        %v1934 = vmul.f32 %v1933, 0.6931472
        %v1935 = vlog2.pop %v593
        %v1936 = vmul.f32 %v1935, 0.6931472
        %v1937 = vlog2.pop %v594
        %v1938 = vmul.f32 %v1937, 0.6931472
        %v1939 = vlog2.pop %v595
        %v1940 = vmul.f32 %v1939, 0.6931472
        %v1941 = vlog2.pop %v596
        %v1942 = vmul.f32 %v1941, 0.6931472
        %v1943 = vlog2.pop %v597
        %v1944 = vmul.f32 %v1943, 0.6931472
        %v1945 = vlog2.pop %v598
        %v1946 = vmul.f32 %v1945, 0.6931472
        %v1947 = vlog2.pop %v599
        %v1948 = vmul.f32 %v1947, 0.6931472
        %v1949 = vlog2.pop %v600
        %v1950 = vmul.f32 %v1949, 0.6931472
        %v1951 = vlog2.pop %v601
        %v1952 = vmul.f32 %v1951, 0.6931472
        %v1953 = vlog2.pop %v602
        %v1954 = vmul.f32 %v1953, 0.6931472
        %v1955 = vlog2.pop %v603
        %v1956 = vmul.f32 %v1955, 0.6931472
        %v1957 = vlog2.pop %v604
        %v1958 = vmul.f32 %v1957, 0.6931472
        %v1959 = vlog2.pop %v605
        %v1960 = vmul.f32 %v1959, 0.6931472
        %v1961 = vlog2.pop %v606
        %v1962 = vmul.f32 %v1961, 0.6931472
        %v1963 = vlog2.pop %v607
        %v1964 = vmul.f32 %v1963, 0.6931472
        %v1965 = vlog2.pop %v608
        %v1966 = vmul.f32 %v1965, 0.6931472
        %v1967 = vlog2.pop %v609
        %v1968 = vmul.f32 %v1967, 0.6931472
        %v1969 = vlog2.pop %v610
        %v1970 = vmul.f32 %v1969, 0.6931472
        %v1971 = vlog2.pop %v611
        %v1972 = vmul.f32 %v1971, 0.6931472
        %v1973 = vlog2.pop %v612
        %v1974 = vmul.f32 %v1973, 0.6931472
        %v1975 = vlog2.pop %v613
        %v1976 = vmul.f32 %v1975, 0.6931472
        %v1977 = vlog2.pop %v614
        %v1978 = vmul.f32 %v1977, 0.6931472
        %v1979 = vlog2.pop %v615
        %v1980 = vmul.f32 %v1979, 0.6931472
        %v1981 = vlog2.pop %v616
        %v1982 = vmul.f32 %v1981, 0.6931472
        %v1983 = vlog2.pop %v617
        %v1984 = vmul.f32 %v1983, 0.6931472
        %v1985 = vlog2.pop %v618
        %v1986 = vmul.f32 %v1985, 0.6931472
        %v1987 = vlog2.pop %v619
        %v1988 = vmul.f32 %v1987, 0.6931472
        %v1989 = vlog2.pop %v620
        %v1990 = vmul.f32 %v1989, 0.6931472
        %v1991 = vlog2.pop %v621
        %v1992 = vmul.f32 %v1991, 0.6931472
        %v1993 = vlog2.pop %v622
        %v1994 = vmul.f32 %v1993, 0.6931472
        %v1995 = vlog2.pop %v623
        %v1996 = vmul.f32 %v1995, 0.6931472
        %v1997 = vlog2.pop %v624
        %v1998 = vmul.f32 %v1997, 0.6931472
        %v1999 = vlog2.pop %v625
        %v2000 = vmul.f32 %v1999, 0.6931472
        %v2001 = vlog2.pop %v626
        %v2002 = vmul.f32 %v2001, 0.6931472
        %v2003 = vlog2.pop %v627
        %v2004 = vmul.f32 %v2003, 0.6931472
        %v2005 = vlog2.pop %v628
        %v2006 = vmul.f32 %v2005, 0.6931472
        %v2007 = vlog2.pop %v629
        %v2008 = vmul.f32 %v2007, 0.6931472
        %v2009 = vlog2.pop %v630
        %v2010 = vmul.f32 %v2009, 0.6931472
        %v2011 = vlog2.pop %v631
        %v2012 = vmul.f32 %v2011, 0.6931472
        %v2013 = vlog2.pop %v632
        %v2014 = vmul.f32 %v2013, 0.6931472
        %v2015 = vlog2.pop %v633
        %v2016 = vmul.f32 %v2015, 0.6931472
        %v2017 = vlog2.pop %v634
        %v2018 = vmul.f32 %v2017, 0.6931472
        %v2019 = vlog2.pop %v635
        %v2020 = vmul.f32 %v2019, 0.6931472
        %v2021 = vlog2.pop %v636
        %v2022 = vmul.f32 %v2021, 0.6931472
        %v2023 = vlog2.pop %v637
        %v2024 = vmul.f32 %v2023, 0.6931472
        %v2025 = vlog2.pop %v638
        %v2026 = vmul.f32 %v2025, 0.6931472
        %v2027 = vlog2.pop %v639
        %v2028 = vmul.f32 %v2027, 0.6931472
        %v2029 = vlog2.pop %v640
        %v2030 = vmul.f32 %v2029, 0.6931472
        %v2031 = vlog2.pop %v641
        %v2032 = vmul.f32 %v2031, 0.6931472
        %v2033 = vlog2.pop %v642
        %v2034 = vmul.f32 %v2033, 0.6931472
        %v2035 = vlog2.pop %v643
        %v2036 = vmul.f32 %v2035, 0.6931472
        %v2037 = vlog2.pop %v644
        %v2038 = vmul.f32 %v2037, 0.6931472
        %v2039 = vlog2.pop %v645
        %v2040 = vmul.f32 %v2039, 0.6931472
        %v2041 = vlog2.pop %v646
        %v2042 = vmul.f32 %v2041, 0.6931472
        %v2043 = vlog2.pop %v647
        %v2044 = vmul.f32 %v2043, 0.6931472
        %v2045 = vlog2.pop %v648
        %v2046 = vmul.f32 %v2045, 0.6931472
        %v2047 = vlog2.pop %v649
        %v2048 = vmul.f32 %v2047, 0.6931472
        %v2049 = vlog2.pop %v650
        %v2050 = vmul.f32 %v2049, 0.6931472
        %v2051 = vlog2.pop %v651
        %v2052 = vmul.f32 %v2051, 0.6931472
        %v2053 = vlog2.pop %v652
        %v2054 = vmul.f32 %v2053, 0.6931472
        %v2055 = vlog2.pop %v653
        %v2056 = vmul.f32 %v2055, 0.6931472
        %v2057 = vlog2.pop %v654
        %v2058 = vmul.f32 %v2057, 0.6931472
        %v2059 = vlog2.pop %v655
        %v2060 = vmul.f32 %v2059, 0.6931472
        %v2061 = vlog2.pop %v656
        %v2062 = vmul.f32 %v2061, 0.6931472
        %v2063 = vlog2.pop %v657
        %v2064 = vmul.f32 %v2063, 0.6931472
        %v2065 = vlog2.pop %v658
        %v2066 = vmul.f32 %v2065, 0.6931472
        %v2067 = vlog2.pop %v659
        %v2068 = vmul.f32 %v2067, 0.6931472
        %v2069 = vlog2.pop %v660
        %v2070 = vmul.f32 %v2069, 0.6931472
        %v2071 = vlog2.pop %v661
        %v2072 = vmul.f32 %v2071, 0.6931472
        %v2073 = vlog2.pop %v662
        %v2074 = vmul.f32 %v2073, 0.6931472
        %v2075 = vlog2.pop %v663
        %v2076 = vmul.f32 %v2075, 0.6931472
        %v2077 = vlog2.pop %v664
        %v2078 = vmul.f32 %v2077, 0.6931472
        %v2079 = vlog2.pop %v665
        %v2080 = vmul.f32 %v2079, 0.6931472
        %v2081 = vlog2.pop %v666
        %v2082 = vmul.f32 %v2081, 0.6931472
        %v2083 = vlog2.pop %v667
        %v2084 = vmul.f32 %v2083, 0.6931472
        %v2085 = vlog2.pop %v668
        %v2086 = vmul.f32 %v2085, 0.6931472
        %v2087 = vlog2.pop %v669
        %v2088 = vmul.f32 %v2087, 0.6931472
        %v2089 = vlog2.pop %v670
        %v2090 = vmul.f32 %v2089, 0.6931472
        %v2091 = vlog2.pop %v671
        %v2092 = vmul.f32 %v2091, 0.6931472
        %v2093 = vlog2.pop %v672
        %v2094 = vmul.f32 %v2093, 0.6931472
        %v2095 = vlog2.pop %v673
        %v2096 = vmul.f32 %v2095, 0.6931472
        %v2097 = vlog2.pop %v674
        %v2098 = vmul.f32 %v2097, 0.6931472
        %v2099 = vlog2.pop %v675
        %v2100 = vmul.f32 %v2099, 0.6931472
        %v2101 = vlog2.pop %v676
        %v2102 = vmul.f32 %v2101, 0.6931472
        %v2103 = vlog2.pop %v677
        %v2104 = vmul.f32 %v2103, 0.6931472
        %v2105 = vlog2.pop %v678
        %v2106 = vmul.f32 %v2105, 0.6931472
        %v2107 = vlog2.pop %v679
        %v2108 = vmul.f32 %v2107, 0.6931472
        %v2109 = vlog2.pop %v680
        %v2110 = vmul.f32 %v2109, 0.6931472
        %v2111 = vlog2.pop %v681
        %v2112 = vmul.f32 %v2111, 0.6931472
        %v2113 = vlog2.pop %v682
        %v2114 = vmul.f32 %v2113, 0.6931472
        %v2115 = vlog2.pop %v683
        %v2116 = vmul.f32 %v2115, 0.6931472
        %v2117 = vlog2.pop %v684
        %v2118 = vmul.f32 %v2117, 0.6931472
        %v2119 = vlog2.pop %v685
        %v2120 = vmul.f32 %v2119, 0.6931472
        %v2121 = vlog2.pop %v686
        %v2122 = vmul.f32 %v2121, 0.6931472
        %v2123 = vlog2.pop %v687
        %v2124 = vmul.f32 %v2123, 0.6931472
        %v2125 = vlog2.pop %v688
        %v2126 = vmul.f32 %v2125, 0.6931472
        %v2127 = vlog2.pop %v689
        %v2128 = vmul.f32 %v2127, 0.6931472
        %v2129 = vlog2.pop %v690
        %v2130 = vmul.f32 %v2129, 0.6931472
        %v2131 = vlog2.pop %v691
        %v2132 = vmul.f32 %v2131, 0.6931472
        %v2133 = vlog2.pop %v692
        %v2134 = vmul.f32 %v2133, 0.6931472
        %v2135 = vlog2.pop %v693
        %v2136 = vmul.f32 %v2135, 0.6931472
        %v2137 = vlog2.pop %v694
        %v2138 = vmul.f32 %v2137, 0.6931472
        %v2139 = vlog2.pop %v695
        %v2140 = vmul.f32 %v2139, 0.6931472
        %v2141 = vlog2.pop %v696
        %v2142 = vmul.f32 %v2141, 0.6931472
        %v2143 = vlog2.pop %v697
        %v2144 = vmul.f32 %v2143, 0.6931472
        %v2145 = vlog2.pop %v698
        %v2146 = vmul.f32 %v2145, 0.6931472
        %v2147 = vlog2.pop %v699
        %v2148 = vmul.f32 %v2147, 0.6931472
        %v2149 = vlog2.pop %v700
        %v2150 = vmul.f32 %v2149, 0.6931472
        %v2151 = vlog2.pop %v701
        %v2152 = vmul.f32 %v2151, 0.6931472
        %v2153 = vlog2.pop %v702
        %v2154 = vmul.f32 %v2153, 0.6931472
        %v2155 = vlog2.pop %v703
        %v2156 = vmul.f32 %v2155, 0.6931472
        %v2157 = vlog2.pop %v704
        %v2158 = vmul.f32 %v2157, 0.6931472
        %v2159 = vlog2.pop %v705
        %v2160 = vmul.f32 %v2159, 0.6931472
        %v2161 = vlog2.pop %v706
        %v2162 = vmul.f32 %v2161, 0.6931472
        %v2163 = vlog2.pop %v707
        %v2164 = vmul.f32 %v2163, 0.6931472
        %v2165 = vlog2.pop %v708
        %v2166 = vmul.f32 %v2165, 0.6931472
        %v2167 = vlog2.pop %v709
        %v2168 = vmul.f32 %v2167, 0.6931472
        %v2169 = vlog2.pop %v710
        %v2170 = vmul.f32 %v2169, 0.6931472
        %v2171 = vlog2.pop %v711
        %v2172 = vmul.f32 %v2171, 0.6931472
        %v2173 = vlog2.pop %v712
        %v2174 = vmul.f32 %v2173, 0.6931472
        %v2175 = vlog2.pop %v713
        %v2176 = vmul.f32 %v2175, 0.6931472
        %v2177 = vlog2.pop %v714
        %v2178 = vmul.f32 %v2177, 0.6931472
        %v2179 = vlog2.pop %v715
        %v2180 = vmul.f32 %v2179, 0.6931472
        %v2181 = vlog2.pop %v716
        %v2182 = vmul.f32 %v2181, 0.6931472
        %v2183 = vlog2.pop %v717
        %v2184 = vmul.f32 %v2183, 0.6931472
        %v2185 = vlog2.pop %v718
        %v2186 = vmul.f32 %v2185, 0.6931472
        %v2187 = vlog2.pop %v719
        %v2188 = vmul.f32 %v2187, 0.6931472
        %v2189 = vlog2.pop %v720
        %v2190 = vmul.f32 %v2189, 0.6931472
        %v2191 = vlog2.pop %v721
        %v2192 = vmul.f32 %v2191, 0.6931472
        %v2193 = vlog2.pop %v722
        %v2194 = vmul.f32 %v2193, 0.6931472
        %v2195 = vlog2.pop %v723
        %v2196 = vmul.f32 %v2195, 0.6931472
        %v2197 = vlog2.pop %v724
        %v2198 = vmul.f32 %v2197, 0.6931472
        %v2199 = vlog2.pop %v725
        %v2200 = vmul.f32 %v2199, 0.6931472
        %v2201 = vlog2.pop %v726
        %v2202 = vmul.f32 %v2201, 0.6931472
        %v2203 = vlog2.pop %v727
        %v2204 = vmul.f32 %v2203, 0.6931472
        %v2205 = vlog2.pop %v728
        %v2206 = vmul.f32 %v2205, 0.6931472
        %v2207 = vlog2.pop %v729
        %v2208 = vmul.f32 %v2207, 0.6931472
        %v2209 = vlog2.pop %v730
        %v2210 = vmul.f32 %v2209, 0.6931472
        %v2211 = vlog2.pop %v731
        %v2212 = vmul.f32 %v2211, 0.6931472
        %v2213 = vlog2.pop %v732
        %v2214 = vmul.f32 %v2213, 0.6931472
        %v2215 = vlog2.pop %v733
        %v2216 = vmul.f32 %v2215, 0.6931472
        %v2217 = vlog2.pop %v734
        %v2218 = vmul.f32 %v2217, 0.6931472
        %v2219 = vlog2.pop %v735
        %v2220 = vmul.f32 %v2219, 0.6931472
        %v2221 = vlog2.pop %v736
        %v2222 = vmul.f32 %v2221, 0.6931472
        %v2223 = vlog2.pop %v737
        %v2224 = vmul.f32 %v2223, 0.6931472
        %v2225 = vlog2.pop %v738
        %v2226 = vmul.f32 %v2225, 0.6931472
        %v2227 = vlog2.pop %v739
        %v2228 = vmul.f32 %v2227, 0.6931472
        %v2229 = vlog2.pop %v740
        %v2230 = vmul.f32 %v2229, 0.6931472
        %v2231 = vlog2.pop %v741
        %v2232 = vmul.f32 %v2231, 0.6931472
        %v2233 = vlog2.pop %v742
        %v2234 = vmul.f32 %v2233, 0.6931472
        %v2235 = vlog2.pop %v743
        %v2236 = vmul.f32 %v2235, 0.6931472
        %v2237 = vlog2.pop %v744
        %v2238 = vmul.f32 %v2237, 0.6931472
        %v2239 = vlog2.pop %v745
        %v2240 = vmul.f32 %v2239, 0.6931472
        %v2241 = vlog2.pop %v746
        %v2242 = vmul.f32 %v2241, 0.6931472
        %v2243 = vlog2.pop %v747
        %v2244 = vmul.f32 %v2243, 0.6931472
        %v2245 = vlog2.pop %v748
        %v2246 = vmul.f32 %v2245, 0.6931472
        %v2247 = vlog2.pop %v749
        %v2248 = vmul.f32 %v2247, 0.6931472
        %v2249 = vlog2.pop %v750
        %v2250 = vmul.f32 %v2249, 0.6931472
        %v2251 = vlog2.pop %v751
        %v2252 = vmul.f32 %v2251, 0.6931472
        %v2253 = vlog2.pop %v752
        %v2254 = vmul.f32 %v2253, 0.6931472
        %v2255 = vlog2.pop %v753
        %v2256 = vmul.f32 %v2255, 0.6931472
        %v2257 = vlog2.pop %v754
        %v2258 = vmul.f32 %v2257, 0.6931472
        %v2259 = vlog2.pop %v755
        %v2260 = vmul.f32 %v2259, 0.6931472
        %v2261 = vlog2.pop %v756
        %v2262 = vmul.f32 %v2261, 0.6931472
        %v2263 = vlog2.pop %v757
        %v2264 = vmul.f32 %v2263, 0.6931472
        %v2265 = vlog2.pop %v758
        %v2266 = vmul.f32 %v2265, 0.6931472
        %v2267 = vlog2.pop %v759
        %v2268 = vmul.f32 %v2267, 0.6931472
        %v2269 = vlog2.pop %v760
        %v2270 = vmul.f32 %v2269, 0.6931472
        %v2271 = vlog2.pop %v761
        %v2272 = vmul.f32 %v2271, 0.6931472
        %v2273 = vlog2.pop %v762
        %v2274 = vmul.f32 %v2273, 0.6931472
        %v2275 = vlog2.pop %v763
        %v2276 = vmul.f32 %v2275, 0.6931472
        %v2277 = vlog2.pop %v764
        %v2278 = vmul.f32 %v2277, 0.6931472
        %v2279 = vlog2.pop %v765
        %v2280 = vmul.f32 %v2279, 0.6931472
        %v2281 = vlog2.pop %v766
        %v2282 = vmul.f32 %v2281, 0.6931472
        %v2283 = vlog2.pop %v767
        %v2284 = vmul.f32 %v2283, 0.6931472
        %v2285 = vlog2.pop %v768
        %v2286 = vmul.f32 %v2285, 0.6931472
        %v2287 = vlog2.pop %v769
        %v2288 = vmul.f32 %v2287, 0.6931472
        %v2289 = vlog2.pop %v770
        %v2290 = vmul.f32 %v2289, 0.6931472
        %v2291 = vlog2.pop %v771
        %v2292 = vmul.f32 %v2291, 0.6931472
        %v2293 = vlog2.pop %v772
        %v2294 = vmul.f32 %v2293, 0.6931472
        %v2295 = vlog2.pop %v773
        %v2296 = vmul.f32 %v2295, 0.6931472
        %v2297 = vlog2.pop %v774
        %v2298 = vmul.f32 %v2297, 0.6931472
        %v2299 = vlog2.pop %v775
        %v2300 = vmul.f32 %v2299, 0.6931472
        %v2301 = vlog2.pop %v776
        %v2302 = vmul.f32 %v2301, 0.6931472
        %v2303 = vlog2.pop %v777
        %v2304 = vmul.f32 %v2303, 0.6931472
        %v2305 = vlog2.pop %v778
        %v2306 = vmul.f32 %v2305, 0.6931472
        %v2307 = vlog2.pop %v779
        %v2308 = vmul.f32 %v2307, 0.6931472
        %v2309 = vlog2.pop %v780
        %v2310 = vmul.f32 %v2309, 0.6931472
        %v2311 = vlog2.pop %v781
        %v2312 = vmul.f32 %v2311, 0.6931472
        %v2313 = vlog2.pop %v782
        %v2314 = vmul.f32 %v2313, 0.6931472
        %v2315 = vlog2.pop %v783
        %v2316 = vmul.f32 %v2315, 0.6931472
        %v2317 = vlog2.pop %v784
        %v2318 = vmul.f32 %v2317, 0.6931472
        %v2319 = vlog2.pop %v785
        %v2320 = vmul.f32 %v2319, 0.6931472
        %v2321 = vlog2.pop %v786
        %v2322 = vmul.f32 %v2321, 0.6931472
        %v2323 = vmax.f32 %v1300, -100.0
        %v2324 = vmax.f32 %v1302, -100.0
        %v2325 = vmax.f32 %v1304, -100.0
        %v2326 = vmax.f32 %v1306, -100.0
        %v2327 = vmax.f32 %v1308, -100.0
        %v2328 = vmax.f32 %v1310, -100.0
        %v2329 = vmax.f32 %v1312, -100.0
        %v2330 = vmax.f32 %v1314, -100.0
        %v2331 = vmax.f32 %v1316, -100.0
        %v2332 = vmax.f32 %v1318, -100.0
        %v2333 = vmax.f32 %v1320, -100.0
        %v2334 = vmax.f32 %v1322, -100.0
        %v2335 = vmax.f32 %v1324, -100.0
        %v2336 = vmax.f32 %v1326, -100.0
        %v2337 = vmax.f32 %v1328, -100.0
        %v2338 = vmax.f32 %v1330, -100.0
        %v2339 = vmax.f32 %v1332, -100.0
        %v2340 = vmax.f32 %v1334, -100.0
        %v2341 = vmax.f32 %v1336, -100.0
        %v2342 = vmax.f32 %v1338, -100.0
        %v2343 = vmax.f32 %v1340, -100.0
        %v2344 = vmax.f32 %v1342, -100.0
        %v2345 = vmax.f32 %v1344, -100.0
        %v2346 = vmax.f32 %v1346, -100.0
        %v2347 = vmax.f32 %v1348, -100.0
        %v2348 = vmax.f32 %v1350, -100.0
        %v2349 = vmax.f32 %v1352, -100.0
        %v2350 = vmax.f32 %v1354, -100.0
        %v2351 = vmax.f32 %v1356, -100.0
        %v2352 = vmax.f32 %v1358, -100.0
        %v2353 = vmax.f32 %v1360, -100.0
        %v2354 = vmax.f32 %v1362, -100.0
        %v2355 = vmax.f32 %v1364, -100.0
        %v2356 = vmax.f32 %v1366, -100.0
        %v2357 = vmax.f32 %v1368, -100.0
        %v2358 = vmax.f32 %v1370, -100.0
        %v2359 = vmax.f32 %v1372, -100.0
        %v2360 = vmax.f32 %v1374, -100.0
        %v2361 = vmax.f32 %v1376, -100.0
        %v2362 = vmax.f32 %v1378, -100.0
        %v2363 = vmax.f32 %v1380, -100.0
        %v2364 = vmax.f32 %v1382, -100.0
        %v2365 = vmax.f32 %v1384, -100.0
        %v2366 = vmax.f32 %v1386, -100.0
        %v2367 = vmax.f32 %v1388, -100.0
        %v2368 = vmax.f32 %v1390, -100.0
        %v2369 = vmax.f32 %v1392, -100.0
        %v2370 = vmax.f32 %v1394, -100.0
        %v2371 = vmax.f32 %v1396, -100.0
        %v2372 = vmax.f32 %v1398, -100.0
        %v2373 = vmax.f32 %v1400, -100.0
        %v2374 = vmax.f32 %v1402, -100.0
        %v2375 = vmax.f32 %v1404, -100.0
        %v2376 = vmax.f32 %v1406, -100.0
        %v2377 = vmax.f32 %v1408, -100.0
        %v2378 = vmax.f32 %v1410, -100.0
        %v2379 = vmax.f32 %v1412, -100.0
        %v2380 = vmax.f32 %v1414, -100.0
        %v2381 = vmax.f32 %v1416, -100.0
        %v2382 = vmax.f32 %v1418, -100.0
        %v2383 = vmax.f32 %v1420, -100.0
        %v2384 = vmax.f32 %v1422, -100.0
        %v2385 = vmax.f32 %v1424, -100.0
        %v2386 = vmax.f32 %v1426, -100.0
        %v2387 = vmax.f32 %v1428, -100.0
        %v2388 = vmax.f32 %v1430, -100.0
        %v2389 = vmax.f32 %v1432, -100.0
        %v2390 = vmax.f32 %v1434, -100.0
        %v2391 = vmax.f32 %v1436, -100.0
        %v2392 = vmax.f32 %v1438, -100.0
        %v2393 = vmax.f32 %v1440, -100.0
        %v2394 = vmax.f32 %v1442, -100.0
        %v2395 = vmax.f32 %v1444, -100.0
        %v2396 = vmax.f32 %v1446, -100.0
        %v2397 = vmax.f32 %v1448, -100.0
        %v2398 = vmax.f32 %v1450, -100.0
        %v2399 = vmax.f32 %v1452, -100.0
        %v2400 = vmax.f32 %v1454, -100.0
        %v2401 = vmax.f32 %v1456, -100.0
        %v2402 = vmax.f32 %v1458, -100.0
        %v2403 = vmax.f32 %v1460, -100.0
        %v2404 = vmax.f32 %v1462, -100.0
        %v2405 = vmax.f32 %v1464, -100.0
        %v2406 = vmax.f32 %v1466, -100.0
        %v2407 = vmax.f32 %v1468, -100.0
        %v2408 = vmax.f32 %v1470, -100.0
        %v2409 = vmax.f32 %v1472, -100.0
        %v2410 = vmax.f32 %v1474, -100.0
        %v2411 = vmax.f32 %v1476, -100.0
        %v2412 = vmax.f32 %v1478, -100.0
        %v2413 = vmax.f32 %v1480, -100.0
        %v2414 = vmax.f32 %v1482, -100.0
        %v2415 = vmax.f32 %v1484, -100.0
        %v2416 = vmax.f32 %v1486, -100.0
        %v2417 = vmax.f32 %v1488, -100.0
        %v2418 = vmax.f32 %v1490, -100.0
        %v2419 = vmax.f32 %v1492, -100.0
        %v2420 = vmax.f32 %v1494, -100.0
        %v2421 = vmax.f32 %v1496, -100.0
        %v2422 = vmax.f32 %v1498, -100.0
        %v2423 = vmax.f32 %v1500, -100.0
        %v2424 = vmax.f32 %v1502, -100.0
        %v2425 = vmax.f32 %v1504, -100.0
        %v2426 = vmax.f32 %v1506, -100.0
        %v2427 = vmax.f32 %v1508, -100.0
        %v2428 = vmax.f32 %v1510, -100.0
        %v2429 = vmax.f32 %v1512, -100.0
        %v2430 = vmax.f32 %v1514, -100.0
        %v2431 = vmax.f32 %v1516, -100.0
        %v2432 = vmax.f32 %v1518, -100.0
        %v2433 = vmax.f32 %v1520, -100.0
        %v2434 = vmax.f32 %v1522, -100.0
        %v2435 = vmax.f32 %v1524, -100.0
        %v2436 = vmax.f32 %v1526, -100.0
        %v2437 = vmax.f32 %v1528, -100.0
        %v2438 = vmax.f32 %v1530, -100.0
        %v2439 = vmax.f32 %v1532, -100.0
        %v2440 = vmax.f32 %v1534, -100.0
        %v2441 = vmax.f32 %v1536, -100.0
        %v2442 = vmax.f32 %v1538, -100.0
        %v2443 = vmax.f32 %v1540, -100.0
        %v2444 = vmax.f32 %v1542, -100.0
        %v2445 = vmax.f32 %v1544, -100.0
        %v2446 = vmax.f32 %v1546, -100.0
        %v2447 = vmax.f32 %v1548, -100.0
        %v2448 = vmax.f32 %v1550, -100.0
        %v2449 = vmax.f32 %v1552, -100.0
        %v2450 = vmax.f32 %v1554, -100.0
        %v2451 = vmax.f32 %v1556, -100.0
        %v2452 = vmax.f32 %v1558, -100.0
        %v2453 = vmax.f32 %v1560, -100.0
        %v2454 = vmax.f32 %v1562, -100.0
        %v2455 = vmax.f32 %v1564, -100.0
        %v2456 = vmax.f32 %v1566, -100.0
        %v2457 = vmax.f32 %v1568, -100.0
        %v2458 = vmax.f32 %v1570, -100.0
        %v2459 = vmax.f32 %v1572, -100.0
        %v2460 = vmax.f32 %v1574, -100.0
        %v2461 = vmax.f32 %v1576, -100.0
        %v2462 = vmax.f32 %v1578, -100.0
        %v2463 = vmax.f32 %v1580, -100.0
        %v2464 = vmax.f32 %v1582, -100.0
        %v2465 = vmax.f32 %v1584, -100.0
        %v2466 = vmax.f32 %v1586, -100.0
        %v2467 = vmax.f32 %v1588, -100.0
        %v2468 = vmax.f32 %v1590, -100.0
        %v2469 = vmax.f32 %v1592, -100.0
        %v2470 = vmax.f32 %v1594, -100.0
        %v2471 = vmax.f32 %v1596, -100.0
        %v2472 = vmax.f32 %v1598, -100.0
        %v2473 = vmax.f32 %v1600, -100.0
        %v2474 = vmax.f32 %v1602, -100.0
        %v2475 = vmax.f32 %v1604, -100.0
        %v2476 = vmax.f32 %v1606, -100.0
        %v2477 = vmax.f32 %v1608, -100.0
        %v2478 = vmax.f32 %v1610, -100.0
        %v2479 = vmax.f32 %v1612, -100.0
        %v2480 = vmax.f32 %v1614, -100.0
        %v2481 = vmax.f32 %v1616, -100.0
        %v2482 = vmax.f32 %v1618, -100.0
        %v2483 = vmax.f32 %v1620, -100.0
        %v2484 = vmax.f32 %v1622, -100.0
        %v2485 = vmax.f32 %v1624, -100.0
        %v2486 = vmax.f32 %v1626, -100.0
        %v2487 = vmax.f32 %v1628, -100.0
        %v2488 = vmax.f32 %v1630, -100.0
        %v2489 = vmax.f32 %v1632, -100.0
        %v2490 = vmax.f32 %v1634, -100.0
        %v2491 = vmax.f32 %v1636, -100.0
        %v2492 = vmax.f32 %v1638, -100.0
        %v2493 = vmax.f32 %v1640, -100.0
        %v2494 = vmax.f32 %v1642, -100.0
        %v2495 = vmax.f32 %v1644, -100.0
        %v2496 = vmax.f32 %v1646, -100.0
        %v2497 = vmax.f32 %v1648, -100.0
        %v2498 = vmax.f32 %v1650, -100.0
        %v2499 = vmax.f32 %v1652, -100.0
        %v2500 = vmax.f32 %v1654, -100.0
        %v2501 = vmax.f32 %v1656, -100.0
        %v2502 = vmax.f32 %v1658, -100.0
        %v2503 = vmax.f32 %v1660, -100.0
        %v2504 = vmax.f32 %v1662, -100.0
        %v2505 = vmax.f32 %v1664, -100.0
        %v2506 = vmax.f32 %v1666, -100.0
        %v2507 = vmax.f32 %v1668, -100.0
        %v2508 = vmax.f32 %v1670, -100.0
        %v2509 = vmax.f32 %v1672, -100.0
        %v2510 = vmax.f32 %v1674, -100.0
        %v2511 = vmax.f32 %v1676, -100.0
        %v2512 = vmax.f32 %v1678, -100.0
        %v2513 = vmax.f32 %v1680, -100.0
        %v2514 = vmax.f32 %v1682, -100.0
        %v2515 = vmax.f32 %v1684, -100.0
        %v2516 = vmax.f32 %v1686, -100.0
        %v2517 = vmax.f32 %v1688, -100.0
        %v2518 = vmax.f32 %v1690, -100.0
        %v2519 = vmax.f32 %v1692, -100.0
        %v2520 = vmax.f32 %v1694, -100.0
        %v2521 = vmax.f32 %v1696, -100.0
        %v2522 = vmax.f32 %v1698, -100.0
        %v2523 = vmax.f32 %v1700, -100.0
        %v2524 = vmax.f32 %v1702, -100.0
        %v2525 = vmax.f32 %v1704, -100.0
        %v2526 = vmax.f32 %v1706, -100.0
        %v2527 = vmax.f32 %v1708, -100.0
        %v2528 = vmax.f32 %v1710, -100.0
        %v2529 = vmax.f32 %v1712, -100.0
        %v2530 = vmax.f32 %v1714, -100.0
        %v2531 = vmax.f32 %v1716, -100.0
        %v2532 = vmax.f32 %v1718, -100.0
        %v2533 = vmax.f32 %v1720, -100.0
        %v2534 = vmax.f32 %v1722, -100.0
        %v2535 = vmax.f32 %v1724, -100.0
        %v2536 = vmax.f32 %v1726, -100.0
        %v2537 = vmax.f32 %v1728, -100.0
        %v2538 = vmax.f32 %v1730, -100.0
        %v2539 = vmax.f32 %v1732, -100.0
        %v2540 = vmax.f32 %v1734, -100.0
        %v2541 = vmax.f32 %v1736, -100.0
        %v2542 = vmax.f32 %v1738, -100.0
        %v2543 = vmax.f32 %v1740, -100.0
        %v2544 = vmax.f32 %v1742, -100.0
        %v2545 = vmax.f32 %v1744, -100.0
        %v2546 = vmax.f32 %v1746, -100.0
        %v2547 = vmax.f32 %v1748, -100.0
        %v2548 = vmax.f32 %v1750, -100.0
        %v2549 = vmax.f32 %v1752, -100.0
        %v2550 = vmax.f32 %v1754, -100.0
        %v2551 = vmax.f32 %v1756, -100.0
        %v2552 = vmax.f32 %v1758, -100.0
        %v2553 = vmax.f32 %v1760, -100.0
        %v2554 = vmax.f32 %v1762, -100.0
        %v2555 = vmax.f32 %v1764, -100.0
        %v2556 = vmax.f32 %v1766, -100.0
        %v2557 = vmax.f32 %v1768, -100.0
        %v2558 = vmax.f32 %v1770, -100.0
        %v2559 = vmax.f32 %v1772, -100.0
        %v2560 = vmax.f32 %v1774, -100.0
        %v2561 = vmax.f32 %v1776, -100.0
        %v2562 = vmax.f32 %v1778, -100.0
        %v2563 = vmax.f32 %v1780, -100.0
        %v2564 = vmax.f32 %v1782, -100.0
        %v2565 = vmax.f32 %v1784, -100.0
        %v2566 = vmax.f32 %v1786, -100.0
        %v2567 = vmax.f32 %v1788, -100.0
        %v2568 = vmax.f32 %v1790, -100.0
        %v2569 = vmax.f32 %v1792, -100.0
        %v2570 = vmax.f32 %v1794, -100.0
        %v2571 = vmax.f32 %v1796, -100.0
        %v2572 = vmax.f32 %v1798, -100.0
        %v2573 = vmax.f32 %v1800, -100.0
        %v2574 = vmax.f32 %v1802, -100.0
        %v2575 = vmax.f32 %v1804, -100.0
        %v2576 = vmax.f32 %v1806, -100.0
        %v2577 = vmax.f32 %v1808, -100.0
        %v2578 = vmax.f32 %v1810, -100.0
        %v2579 = vmax.f32 %v1812, -100.0
        %v2580 = vmax.f32 %v1814, -100.0
        %v2581 = vmax.f32 %v1816, -100.0
        %v2582 = vmax.f32 %v1818, -100.0
        %v2583 = vmax.f32 %v1820, -100.0
        %v2584 = vmax.f32 %v1822, -100.0
        %v2585 = vmax.f32 %v1824, -100.0
        %v2586 = vmax.f32 %v1826, -100.0
        %v2587 = vmax.f32 %v1828, -100.0
        %v2588 = vmax.f32 %v1830, -100.0
        %v2589 = vmax.f32 %v1832, -100.0
        %v2590 = vmax.f32 %v1834, -100.0
        %v2591 = vmax.f32 %v1836, -100.0
        %v2592 = vmax.f32 %v1838, -100.0
        %v2593 = vmax.f32 %v1840, -100.0
        %v2594 = vmax.f32 %v1842, -100.0
        %v2595 = vmax.f32 %v1844, -100.0
        %v2596 = vmax.f32 %v1846, -100.0
        %v2597 = vmax.f32 %v1848, -100.0
        %v2598 = vmax.f32 %v1850, -100.0
        %v2599 = vmax.f32 %v1852, -100.0
        %v2600 = vmax.f32 %v1854, -100.0
        %v2601 = vmax.f32 %v1856, -100.0
        %v2602 = vmax.f32 %v1858, -100.0
        %v2603 = vmax.f32 %v1860, -100.0
        %v2604 = vmax.f32 %v1862, -100.0
        %v2605 = vmax.f32 %v1864, -100.0
        %v2606 = vmax.f32 %v1866, -100.0
        %v2607 = vmax.f32 %v1868, -100.0
        %v2608 = vmax.f32 %v1870, -100.0
        %v2609 = vmax.f32 %v1872, -100.0
        %v2610 = vmax.f32 %v1874, -100.0
        %v2611 = vmax.f32 %v1876, -100.0
        %v2612 = vmax.f32 %v1878, -100.0
        %v2613 = vmax.f32 %v1880, -100.0
        %v2614 = vmax.f32 %v1882, -100.0
        %v2615 = vmax.f32 %v1884, -100.0
        %v2616 = vmax.f32 %v1886, -100.0
        %v2617 = vmax.f32 %v1888, -100.0
        %v2618 = vmax.f32 %v1890, -100.0
        %v2619 = vmax.f32 %v1892, -100.0
        %v2620 = vmax.f32 %v1894, -100.0
        %v2621 = vmax.f32 %v1896, -100.0
        %v2622 = vmax.f32 %v1898, -100.0
        %v2623 = vmax.f32 %v1900, -100.0
        %v2624 = vmax.f32 %v1902, -100.0
        %v2625 = vmax.f32 %v1904, -100.0
        %v2626 = vmax.f32 %v1906, -100.0
        %v2627 = vmax.f32 %v1908, -100.0
        %v2628 = vmax.f32 %v1910, -100.0
        %v2629 = vmax.f32 %v1912, -100.0
        %v2630 = vmax.f32 %v1914, -100.0
        %v2631 = vmax.f32 %v1916, -100.0
        %v2632 = vmax.f32 %v1918, -100.0
        %v2633 = vmax.f32 %v1920, -100.0
        %v2634 = vmax.f32 %v1922, -100.0
        %v2635 = vmax.f32 %v1924, -100.0
        %v2636 = vmax.f32 %v1926, -100.0
        %v2637 = vmax.f32 %v1928, -100.0
        %v2638 = vmax.f32 %v1930, -100.0
        %v2639 = vmax.f32 %v1932, -100.0
        %v2640 = vmax.f32 %v1934, -100.0
        %v2641 = vmax.f32 %v1936, -100.0
        %v2642 = vmax.f32 %v1938, -100.0
        %v2643 = vmax.f32 %v1940, -100.0
        %v2644 = vmax.f32 %v1942, -100.0
        %v2645 = vmax.f32 %v1944, -100.0
        %v2646 = vmax.f32 %v1946, -100.0
        %v2647 = vmax.f32 %v1948, -100.0
        %v2648 = vmax.f32 %v1950, -100.0
        %v2649 = vmax.f32 %v1952, -100.0
        %v2650 = vmax.f32 %v1954, -100.0
        %v2651 = vmax.f32 %v1956, -100.0
        %v2652 = vmax.f32 %v1958, -100.0
        %v2653 = vmax.f32 %v1960, -100.0
        %v2654 = vmax.f32 %v1962, -100.0
        %v2655 = vmax.f32 %v1964, -100.0
        %v2656 = vmax.f32 %v1966, -100.0
        %v2657 = vmax.f32 %v1968, -100.0
        %v2658 = vmax.f32 %v1970, -100.0
        %v2659 = vmax.f32 %v1972, -100.0
        %v2660 = vmax.f32 %v1974, -100.0
        %v2661 = vmax.f32 %v1976, -100.0
        %v2662 = vmax.f32 %v1978, -100.0
        %v2663 = vmax.f32 %v1980, -100.0
        %v2664 = vmax.f32 %v1982, -100.0
        %v2665 = vmax.f32 %v1984, -100.0
        %v2666 = vmax.f32 %v1986, -100.0
        %v2667 = vmax.f32 %v1988, -100.0
        %v2668 = vmax.f32 %v1990, -100.0
        %v2669 = vmax.f32 %v1992, -100.0
        %v2670 = vmax.f32 %v1994, -100.0
        %v2671 = vmax.f32 %v1996, -100.0
        %v2672 = vmax.f32 %v1998, -100.0
        %v2673 = vmax.f32 %v2000, -100.0
        %v2674 = vmax.f32 %v2002, -100.0
        %v2675 = vmax.f32 %v2004, -100.0
        %v2676 = vmax.f32 %v2006, -100.0
        %v2677 = vmax.f32 %v2008, -100.0
        %v2678 = vmax.f32 %v2010, -100.0
        %v2679 = vmax.f32 %v2012, -100.0
        %v2680 = vmax.f32 %v2014, -100.0
        %v2681 = vmax.f32 %v2016, -100.0
        %v2682 = vmax.f32 %v2018, -100.0
        %v2683 = vmax.f32 %v2020, -100.0
        %v2684 = vmax.f32 %v2022, -100.0
        %v2685 = vmax.f32 %v2024, -100.0
        %v2686 = vmax.f32 %v2026, -100.0
        %v2687 = vmax.f32 %v2028, -100.0
        %v2688 = vmax.f32 %v2030, -100.0
        %v2689 = vmax.f32 %v2032, -100.0
        %v2690 = vmax.f32 %v2034, -100.0
        %v2691 = vmax.f32 %v2036, -100.0
        %v2692 = vmax.f32 %v2038, -100.0
        %v2693 = vmax.f32 %v2040, -100.0
        %v2694 = vmax.f32 %v2042, -100.0
        %v2695 = vmax.f32 %v2044, -100.0
        %v2696 = vmax.f32 %v2046, -100.0
        %v2697 = vmax.f32 %v2048, -100.0
        %v2698 = vmax.f32 %v2050, -100.0
        %v2699 = vmax.f32 %v2052, -100.0
        %v2700 = vmax.f32 %v2054, -100.0
        %v2701 = vmax.f32 %v2056, -100.0
        %v2702 = vmax.f32 %v2058, -100.0
        %v2703 = vmax.f32 %v2060, -100.0
        %v2704 = vmax.f32 %v2062, -100.0
        %v2705 = vmax.f32 %v2064, -100.0
        %v2706 = vmax.f32 %v2066, -100.0
        %v2707 = vmax.f32 %v2068, -100.0
        %v2708 = vmax.f32 %v2070, -100.0
        %v2709 = vmax.f32 %v2072, -100.0
        %v2710 = vmax.f32 %v2074, -100.0
        %v2711 = vmax.f32 %v2076, -100.0
        %v2712 = vmax.f32 %v2078, -100.0
        %v2713 = vmax.f32 %v2080, -100.0
        %v2714 = vmax.f32 %v2082, -100.0
        %v2715 = vmax.f32 %v2084, -100.0
        %v2716 = vmax.f32 %v2086, -100.0
        %v2717 = vmax.f32 %v2088, -100.0
        %v2718 = vmax.f32 %v2090, -100.0
        %v2719 = vmax.f32 %v2092, -100.0
        %v2720 = vmax.f32 %v2094, -100.0
        %v2721 = vmax.f32 %v2096, -100.0
        %v2722 = vmax.f32 %v2098, -100.0
        %v2723 = vmax.f32 %v2100, -100.0
        %v2724 = vmax.f32 %v2102, -100.0
        %v2725 = vmax.f32 %v2104, -100.0
        %v2726 = vmax.f32 %v2106, -100.0
        %v2727 = vmax.f32 %v2108, -100.0
        %v2728 = vmax.f32 %v2110, -100.0
        %v2729 = vmax.f32 %v2112, -100.0
        %v2730 = vmax.f32 %v2114, -100.0
        %v2731 = vmax.f32 %v2116, -100.0
        %v2732 = vmax.f32 %v2118, -100.0
        %v2733 = vmax.f32 %v2120, -100.0
        %v2734 = vmax.f32 %v2122, -100.0
        %v2735 = vmax.f32 %v2124, -100.0
        %v2736 = vmax.f32 %v2126, -100.0
        %v2737 = vmax.f32 %v2128, -100.0
        %v2738 = vmax.f32 %v2130, -100.0
        %v2739 = vmax.f32 %v2132, -100.0
        %v2740 = vmax.f32 %v2134, -100.0
        %v2741 = vmax.f32 %v2136, -100.0
        %v2742 = vmax.f32 %v2138, -100.0
        %v2743 = vmax.f32 %v2140, -100.0
        %v2744 = vmax.f32 %v2142, -100.0
        %v2745 = vmax.f32 %v2144, -100.0
        %v2746 = vmax.f32 %v2146, -100.0
        %v2747 = vmax.f32 %v2148, -100.0
        %v2748 = vmax.f32 %v2150, -100.0
        %v2749 = vmax.f32 %v2152, -100.0
        %v2750 = vmax.f32 %v2154, -100.0
        %v2751 = vmax.f32 %v2156, -100.0
        %v2752 = vmax.f32 %v2158, -100.0
        %v2753 = vmax.f32 %v2160, -100.0
        %v2754 = vmax.f32 %v2162, -100.0
        %v2755 = vmax.f32 %v2164, -100.0
        %v2756 = vmax.f32 %v2166, -100.0
        %v2757 = vmax.f32 %v2168, -100.0
        %v2758 = vmax.f32 %v2170, -100.0
        %v2759 = vmax.f32 %v2172, -100.0
        %v2760 = vmax.f32 %v2174, -100.0
        %v2761 = vmax.f32 %v2176, -100.0
        %v2762 = vmax.f32 %v2178, -100.0
        %v2763 = vmax.f32 %v2180, -100.0
        %v2764 = vmax.f32 %v2182, -100.0
        %v2765 = vmax.f32 %v2184, -100.0
        %v2766 = vmax.f32 %v2186, -100.0
        %v2767 = vmax.f32 %v2188, -100.0
        %v2768 = vmax.f32 %v2190, -100.0
        %v2769 = vmax.f32 %v2192, -100.0
        %v2770 = vmax.f32 %v2194, -100.0
        %v2771 = vmax.f32 %v2196, -100.0
        %v2772 = vmax.f32 %v2198, -100.0
        %v2773 = vmax.f32 %v2200, -100.0
        %v2774 = vmax.f32 %v2202, -100.0
        %v2775 = vmax.f32 %v2204, -100.0
        %v2776 = vmax.f32 %v2206, -100.0
        %v2777 = vmax.f32 %v2208, -100.0
        %v2778 = vmax.f32 %v2210, -100.0
        %v2779 = vmax.f32 %v2212, -100.0
        %v2780 = vmax.f32 %v2214, -100.0
        %v2781 = vmax.f32 %v2216, -100.0
        %v2782 = vmax.f32 %v2218, -100.0
        %v2783 = vmax.f32 %v2220, -100.0
        %v2784 = vmax.f32 %v2222, -100.0
        %v2785 = vmax.f32 %v2224, -100.0
        %v2786 = vmax.f32 %v2226, -100.0
        %v2787 = vmax.f32 %v2228, -100.0
        %v2788 = vmax.f32 %v2230, -100.0
        %v2789 = vmax.f32 %v2232, -100.0
        %v2790 = vmax.f32 %v2234, -100.0
        %v2791 = vmax.f32 %v2236, -100.0
        %v2792 = vmax.f32 %v2238, -100.0
        %v2793 = vmax.f32 %v2240, -100.0
        %v2794 = vmax.f32 %v2242, -100.0
        %v2795 = vmax.f32 %v2244, -100.0
        %v2796 = vmax.f32 %v2246, -100.0
        %v2797 = vmax.f32 %v2248, -100.0
        %v2798 = vmax.f32 %v2250, -100.0
        %v2799 = vmax.f32 %v2252, -100.0
        %v2800 = vmax.f32 %v2254, -100.0
        %v2801 = vmax.f32 %v2256, -100.0
        %v2802 = vmax.f32 %v2258, -100.0
        %v2803 = vmax.f32 %v2260, -100.0
        %v2804 = vmax.f32 %v2262, -100.0
        %v2805 = vmax.f32 %v2264, -100.0
        %v2806 = vmax.f32 %v2266, -100.0
        %v2807 = vmax.f32 %v2268, -100.0
        %v2808 = vmax.f32 %v2270, -100.0
        %v2809 = vmax.f32 %v2272, -100.0
        %v2810 = vmax.f32 %v2274, -100.0
        %v2811 = vmax.f32 %v2276, -100.0
        %v2812 = vmax.f32 %v2278, -100.0
        %v2813 = vmax.f32 %v2280, -100.0
        %v2814 = vmax.f32 %v2282, -100.0
        %v2815 = vmax.f32 %v2284, -100.0
        %v2816 = vmax.f32 %v2286, -100.0
        %v2817 = vmax.f32 %v2288, -100.0
        %v2818 = vmax.f32 %v2290, -100.0
        %v2819 = vmax.f32 %v2292, -100.0
        %v2820 = vmax.f32 %v2294, -100.0
        %v2821 = vmax.f32 %v2296, -100.0
        %v2822 = vmax.f32 %v2298, -100.0
        %v2823 = vmax.f32 %v2300, -100.0
        %v2824 = vmax.f32 %v2302, -100.0
        %v2825 = vmax.f32 %v2304, -100.0
        %v2826 = vmax.f32 %v2306, -100.0
        %v2827 = vmax.f32 %v2308, -100.0
        %v2828 = vmax.f32 %v2310, -100.0
        %v2829 = vmax.f32 %v2312, -100.0
        %v2830 = vmax.f32 %v2314, -100.0
        %v2831 = vmax.f32 %v2316, -100.0
        %v2832 = vmax.f32 %v2318, -100.0
        %v2833 = vmax.f32 %v2320, -100.0
        %v2834 = vmax.f32 %v2322, -100.0
        %v2835 = vsub.f32 1.0, %v275
        %v2836 = vsub.f32 1.0, %v276
        %v2837 = vsub.f32 1.0, %v277
        %v2838 = vsub.f32 1.0, %v278
        %v2839 = vsub.f32 1.0, %v279
        %v2840 = vsub.f32 1.0, %v280
        %v2841 = vsub.f32 1.0, %v281
        %v2842 = vsub.f32 1.0, %v282
        %v2843 = vsub.f32 1.0, %v283
        %v2844 = vsub.f32 1.0, %v284
        %v2845 = vsub.f32 1.0, %v285
        %v2846 = vsub.f32 1.0, %v286
        %v2847 = vsub.f32 1.0, %v287
        %v2848 = vsub.f32 1.0, %v288
        %v2849 = vsub.f32 1.0, %v289
        %v2850 = vsub.f32 1.0, %v290
        %v2851 = vsub.f32 1.0, %v291
        %v2852 = vsub.f32 1.0, %v292
        %v2853 = vsub.f32 1.0, %v293
        %v2854 = vsub.f32 1.0, %v294
        %v2855 = vsub.f32 1.0, %v295
        %v2856 = vsub.f32 1.0, %v296
        %v2857 = vsub.f32 1.0, %v297
        %v2858 = vsub.f32 1.0, %v298
        %v2859 = vsub.f32 1.0, %v299
        %v2860 = vsub.f32 1.0, %v300
        %v2861 = vsub.f32 1.0, %v301
        %v2862 = vsub.f32 1.0, %v302
        %v2863 = vsub.f32 1.0, %v303
        %v2864 = vsub.f32 1.0, %v304
        %v2865 = vsub.f32 1.0, %v305
        %v2866 = vsub.f32 1.0, %v306
        %v2867 = vsub.f32 1.0, %v307
        %v2868 = vsub.f32 1.0, %v308
        %v2869 = vsub.f32 1.0, %v309
        %v2870 = vsub.f32 1.0, %v310
        %v2871 = vsub.f32 1.0, %v311
        %v2872 = vsub.f32 1.0, %v312
        %v2873 = vsub.f32 1.0, %v313
        %v2874 = vsub.f32 1.0, %v314
        %v2875 = vsub.f32 1.0, %v315
        %v2876 = vsub.f32 1.0, %v316
        %v2877 = vsub.f32 1.0, %v317
        %v2878 = vsub.f32 1.0, %v318
        %v2879 = vsub.f32 1.0, %v319
        %v2880 = vsub.f32 1.0, %v320
        %v2881 = vsub.f32 1.0, %v321
        %v2882 = vsub.f32 1.0, %v322
        %v2883 = vsub.f32 1.0, %v323
        %v2884 = vsub.f32 1.0, %v324
        %v2885 = vsub.f32 1.0, %v325
        %v2886 = vsub.f32 1.0, %v326
        %v2887 = vsub.f32 1.0, %v327
        %v2888 = vsub.f32 1.0, %v328
        %v2889 = vsub.f32 1.0, %v329
        %v2890 = vsub.f32 1.0, %v330
        %v2891 = vsub.f32 1.0, %v331
        %v2892 = vsub.f32 1.0, %v332
        %v2893 = vsub.f32 1.0, %v333
        %v2894 = vsub.f32 1.0, %v334
        %v2895 = vsub.f32 1.0, %v335
        %v2896 = vsub.f32 1.0, %v336
        %v2897 = vsub.f32 1.0, %v337
        %v2898 = vsub.f32 1.0, %v338
        %v2899 = vsub.f32 1.0, %v339
        %v2900 = vsub.f32 1.0, %v340
        %v2901 = vsub.f32 1.0, %v341
        %v2902 = vsub.f32 1.0, %v342
        %v2903 = vsub.f32 1.0, %v343
        %v2904 = vsub.f32 1.0, %v344
        %v2905 = vsub.f32 1.0, %v345
        %v2906 = vsub.f32 1.0, %v346
        %v2907 = vsub.f32 1.0, %v347
        %v2908 = vsub.f32 1.0, %v348
        %v2909 = vsub.f32 1.0, %v349
        %v2910 = vsub.f32 1.0, %v350
        %v2911 = vsub.f32 1.0, %v351
        %v2912 = vsub.f32 1.0, %v352
        %v2913 = vsub.f32 1.0, %v353
        %v2914 = vsub.f32 1.0, %v354
        %v2915 = vsub.f32 1.0, %v355
        %v2916 = vsub.f32 1.0, %v356
        %v2917 = vsub.f32 1.0, %v357
        %v2918 = vsub.f32 1.0, %v358
        %v2919 = vsub.f32 1.0, %v359
        %v2920 = vsub.f32 1.0, %v360
        %v2921 = vsub.f32 1.0, %v361
        %v2922 = vsub.f32 1.0, %v362
        %v2923 = vsub.f32 1.0, %v363
        %v2924 = vsub.f32 1.0, %v364
        %v2925 = vsub.f32 1.0, %v365
        %v2926 = vsub.f32 1.0, %v366
        %v2927 = vsub.f32 1.0, %v367
        %v2928 = vsub.f32 1.0, %v368
        %v2929 = vsub.f32 1.0, %v369
        %v2930 = vsub.f32 1.0, %v370
        %v2931 = vsub.f32 1.0, %v371
        %v2932 = vsub.f32 1.0, %v372
        %v2933 = vsub.f32 1.0, %v373
        %v2934 = vsub.f32 1.0, %v374
        %v2935 = vsub.f32 1.0, %v375
        %v2936 = vsub.f32 1.0, %v376
        %v2937 = vsub.f32 1.0, %v377
        %v2938 = vsub.f32 1.0, %v378
        %v2939 = vsub.f32 1.0, %v379
        %v2940 = vsub.f32 1.0, %v380
        %v2941 = vsub.f32 1.0, %v381
        %v2942 = vsub.f32 1.0, %v382
        %v2943 = vsub.f32 1.0, %v383
        %v2944 = vsub.f32 1.0, %v384
        %v2945 = vsub.f32 1.0, %v385
        %v2946 = vsub.f32 1.0, %v386
        %v2947 = vsub.f32 1.0, %v387
        %v2948 = vsub.f32 1.0, %v388
        %v2949 = vsub.f32 1.0, %v389
        %v2950 = vsub.f32 1.0, %v390
        %v2951 = vsub.f32 1.0, %v391
        %v2952 = vsub.f32 1.0, %v392
        %v2953 = vsub.f32 1.0, %v393
        %v2954 = vsub.f32 1.0, %v394
        %v2955 = vsub.f32 1.0, %v395
        %v2956 = vsub.f32 1.0, %v396
        %v2957 = vsub.f32 1.0, %v397
        %v2958 = vsub.f32 1.0, %v398
        %v2959 = vsub.f32 1.0, %v399
        %v2960 = vsub.f32 1.0, %v400
        %v2961 = vsub.f32 1.0, %v401
        %v2962 = vsub.f32 1.0, %v402
        %v2963 = vsub.f32 1.0, %v403
        %v2964 = vsub.f32 1.0, %v404
        %v2965 = vsub.f32 1.0, %v405
        %v2966 = vsub.f32 1.0, %v406
        %v2967 = vsub.f32 1.0, %v407
        %v2968 = vsub.f32 1.0, %v408
        %v2969 = vsub.f32 1.0, %v409
        %v2970 = vsub.f32 1.0, %v410
        %v2971 = vsub.f32 1.0, %v411
        %v2972 = vsub.f32 1.0, %v412
        %v2973 = vsub.f32 1.0, %v413
        %v2974 = vsub.f32 1.0, %v414
        %v2975 = vsub.f32 1.0, %v415
        %v2976 = vsub.f32 1.0, %v416
        %v2977 = vsub.f32 1.0, %v417
        %v2978 = vsub.f32 1.0, %v418
        %v2979 = vsub.f32 1.0, %v419
        %v2980 = vsub.f32 1.0, %v420
        %v2981 = vsub.f32 1.0, %v421
        %v2982 = vsub.f32 1.0, %v422
        %v2983 = vsub.f32 1.0, %v423
        %v2984 = vsub.f32 1.0, %v424
        %v2985 = vsub.f32 1.0, %v425
        %v2986 = vsub.f32 1.0, %v426
        %v2987 = vsub.f32 1.0, %v427
        %v2988 = vsub.f32 1.0, %v428
        %v2989 = vsub.f32 1.0, %v429
        %v2990 = vsub.f32 1.0, %v430
        %v2991 = vsub.f32 1.0, %v431
        %v2992 = vsub.f32 1.0, %v432
        %v2993 = vsub.f32 1.0, %v433
        %v2994 = vsub.f32 1.0, %v434
        %v2995 = vsub.f32 1.0, %v435
        %v2996 = vsub.f32 1.0, %v436
        %v2997 = vsub.f32 1.0, %v437
        %v2998 = vsub.f32 1.0, %v438
        %v2999 = vsub.f32 1.0, %v439
        %v3000 = vsub.f32 1.0, %v440
        %v3001 = vsub.f32 1.0, %v441
        %v3002 = vsub.f32 1.0, %v442
        %v3003 = vsub.f32 1.0, %v443
        %v3004 = vsub.f32 1.0, %v444
        %v3005 = vsub.f32 1.0, %v445
        %v3006 = vsub.f32 1.0, %v446
        %v3007 = vsub.f32 1.0, %v447
        %v3008 = vsub.f32 1.0, %v448
        %v3009 = vsub.f32 1.0, %v449
        %v3010 = vsub.f32 1.0, %v450
        %v3011 = vsub.f32 1.0, %v451
        %v3012 = vsub.f32 1.0, %v452
        %v3013 = vsub.f32 1.0, %v453
        %v3014 = vsub.f32 1.0, %v454
        %v3015 = vsub.f32 1.0, %v455
        %v3016 = vsub.f32 1.0, %v456
        %v3017 = vsub.f32 1.0, %v457
        %v3018 = vsub.f32 1.0, %v458
        %v3019 = vsub.f32 1.0, %v459
        %v3020 = vsub.f32 1.0, %v460
        %v3021 = vsub.f32 1.0, %v461
        %v3022 = vsub.f32 1.0, %v462
        %v3023 = vsub.f32 1.0, %v463
        %v3024 = vsub.f32 1.0, %v464
        %v3025 = vsub.f32 1.0, %v465
        %v3026 = vsub.f32 1.0, %v466
        %v3027 = vsub.f32 1.0, %v467
        %v3028 = vsub.f32 1.0, %v468
        %v3029 = vsub.f32 1.0, %v469
        %v3030 = vsub.f32 1.0, %v470
        %v3031 = vsub.f32 1.0, %v471
        %v3032 = vsub.f32 1.0, %v472
        %v3033 = vsub.f32 1.0, %v473
        %v3034 = vsub.f32 1.0, %v474
        %v3035 = vsub.f32 1.0, %v475
        %v3036 = vsub.f32 1.0, %v476
        %v3037 = vsub.f32 1.0, %v477
        %v3038 = vsub.f32 1.0, %v478
        %v3039 = vsub.f32 1.0, %v479
        %v3040 = vsub.f32 1.0, %v480
        %v3041 = vsub.f32 1.0, %v481
        %v3042 = vsub.f32 1.0, %v482
        %v3043 = vsub.f32 1.0, %v483
        %v3044 = vsub.f32 1.0, %v484
        %v3045 = vsub.f32 1.0, %v485
        %v3046 = vsub.f32 1.0, %v486
        %v3047 = vsub.f32 1.0, %v487
        %v3048 = vsub.f32 1.0, %v488
        %v3049 = vsub.f32 1.0, %v489
        %v3050 = vsub.f32 1.0, %v490
        %v3051 = vsub.f32 1.0, %v491
        %v3052 = vsub.f32 1.0, %v492
        %v3053 = vsub.f32 1.0, %v493
        %v3054 = vsub.f32 1.0, %v494
        %v3055 = vsub.f32 1.0, %v495
        %v3056 = vsub.f32 1.0, %v496
        %v3057 = vsub.f32 1.0, %v497
        %v3058 = vsub.f32 1.0, %v498
        %v3059 = vsub.f32 1.0, %v499
        %v3060 = vsub.f32 1.0, %v500
        %v3061 = vsub.f32 1.0, %v501
        %v3062 = vsub.f32 1.0, %v502
        %v3063 = vsub.f32 1.0, %v503
        %v3064 = vsub.f32 1.0, %v504
        %v3065 = vsub.f32 1.0, %v505
        %v3066 = vsub.f32 1.0, %v506
        %v3067 = vsub.f32 1.0, %v507
        %v3068 = vsub.f32 1.0, %v508
        %v3069 = vsub.f32 1.0, %v509
        %v3070 = vsub.f32 1.0, %v510
        %v3071 = vsub.f32 1.0, %v511
        %v3072 = vsub.f32 1.0, %v512
        %v3073 = vsub.f32 1.0, %v513
        %v3074 = vsub.f32 1.0, %v514
        %v3075 = vsub.f32 1.0, %v515
        %v3076 = vsub.f32 1.0, %v516
        %v3077 = vsub.f32 1.0, %v517
        %v3078 = vsub.f32 1.0, %v518
        %v3079 = vsub.f32 1.0, %v519
        %v3080 = vsub.f32 1.0, %v520
        %v3081 = vsub.f32 1.0, %v521
        %v3082 = vsub.f32 1.0, %v522
        %v3083 = vsub.f32 1.0, %v523
        %v3084 = vsub.f32 1.0, %v524
        %v3085 = vsub.f32 1.0, %v525
        %v3086 = vsub.f32 1.0, %v526
        %v3087 = vsub.f32 1.0, %v527
        %v3088 = vsub.f32 1.0, %v528
        %v3089 = vsub.f32 1.0, %v529
        %v3090 = vsub.f32 1.0, %v530
        %v3091 = vsub.f32 1.0, %v531
        %v3092 = vsub.f32 1.0, %v532
        %v3093 = vsub.f32 1.0, %v533
        %v3094 = vsub.f32 1.0, %v534
        %v3095 = vsub.f32 1.0, %v535
        %v3096 = vsub.f32 1.0, %v536
        %v3097 = vsub.f32 1.0, %v537
        %v3098 = vsub.f32 1.0, %v538
        %v3099 = vsub.f32 1.0, %v539
        %v3100 = vsub.f32 1.0, %v540
        %v3101 = vsub.f32 1.0, %v541
        %v3102 = vsub.f32 1.0, %v542
        %v3103 = vsub.f32 1.0, %v543
        %v3104 = vsub.f32 1.0, %v544
        %v3105 = vsub.f32 1.0, %v545
        %v3106 = vsub.f32 1.0, %v546
        %v3107 = vsub.f32 1.0, %v547
        %v3108 = vsub.f32 1.0, %v548
        %v3109 = vsub.f32 1.0, %v549
        %v3110 = vsub.f32 1.0, %v550
        %v3111 = vsub.f32 1.0, %v551
        %v3112 = vsub.f32 1.0, %v552
        %v3113 = vsub.f32 1.0, %v553
        %v3114 = vsub.f32 1.0, %v554
        %v3115 = vsub.f32 1.0, %v555
        %v3116 = vsub.f32 1.0, %v556
        %v3117 = vsub.f32 1.0, %v557
        %v3118 = vsub.f32 1.0, %v558
        %v3119 = vsub.f32 1.0, %v559
        %v3120 = vsub.f32 1.0, %v560
        %v3121 = vsub.f32 1.0, %v561
        %v3122 = vsub.f32 1.0, %v562
        %v3123 = vsub.f32 1.0, %v563
        %v3124 = vsub.f32 1.0, %v564
        %v3125 = vsub.f32 1.0, %v565
        %v3126 = vsub.f32 1.0, %v566
        %v3127 = vsub.f32 1.0, %v567
        %v3128 = vsub.f32 1.0, %v568
        %v3129 = vsub.f32 1.0, %v569
        %v3130 = vsub.f32 1.0, %v570
        %v3131 = vsub.f32 1.0, %v571
        %v3132 = vsub.f32 1.0, %v572
        %v3133 = vsub.f32 1.0, %v573
        %v3134 = vsub.f32 1.0, %v574
        %v3135 = vsub.f32 1.0, %v575
        %v3136 = vsub.f32 1.0, %v576
        %v3137 = vsub.f32 1.0, %v577
        %v3138 = vsub.f32 1.0, %v578
        %v3139 = vsub.f32 1.0, %v579
        %v3140 = vsub.f32 1.0, %v580
        %v3141 = vsub.f32 1.0, %v581
        %v3142 = vsub.f32 1.0, %v582
        %v3143 = vsub.f32 1.0, %v583
        %v3144 = vsub.f32 1.0, %v584
        %v3145 = vsub.f32 1.0, %v585
        %v3146 = vsub.f32 1.0, %v586
        %v3147 = vsub.f32 1.0, %v587
        %v3148 = vsub.f32 1.0, %v588
        %v3149 = vsub.f32 1.0, %v589
        %v3150 = vsub.f32 1.0, %v590
        %v3151 = vsub.f32 1.0, %v591
        %v3152 = vsub.f32 1.0, %v592
        %v3153 = vsub.f32 1.0, %v593
        %v3154 = vsub.f32 1.0, %v594
        %v3155 = vsub.f32 1.0, %v595
        %v3156 = vsub.f32 1.0, %v596
        %v3157 = vsub.f32 1.0, %v597
        %v3158 = vsub.f32 1.0, %v598
        %v3159 = vsub.f32 1.0, %v599
        %v3160 = vsub.f32 1.0, %v600
        %v3161 = vsub.f32 1.0, %v601
        %v3162 = vsub.f32 1.0, %v602
        %v3163 = vsub.f32 1.0, %v603
        %v3164 = vsub.f32 1.0, %v604
        %v3165 = vsub.f32 1.0, %v605
        %v3166 = vsub.f32 1.0, %v606
        %v3167 = vsub.f32 1.0, %v607
        %v3168 = vsub.f32 1.0, %v608
        %v3169 = vsub.f32 1.0, %v609
        %v3170 = vsub.f32 1.0, %v610
        %v3171 = vsub.f32 1.0, %v611
        %v3172 = vsub.f32 1.0, %v612
        %v3173 = vsub.f32 1.0, %v613
        %v3174 = vsub.f32 1.0, %v614
        %v3175 = vsub.f32 1.0, %v615
        %v3176 = vsub.f32 1.0, %v616
        %v3177 = vsub.f32 1.0, %v617
        %v3178 = vsub.f32 1.0, %v618
        %v3179 = vsub.f32 1.0, %v619
        %v3180 = vsub.f32 1.0, %v620
        %v3181 = vsub.f32 1.0, %v621
        %v3182 = vsub.f32 1.0, %v622
        %v3183 = vsub.f32 1.0, %v623
        %v3184 = vsub.f32 1.0, %v624
        %v3185 = vsub.f32 1.0, %v625
        %v3186 = vsub.f32 1.0, %v626
        %v3187 = vsub.f32 1.0, %v627
        %v3188 = vsub.f32 1.0, %v628
        %v3189 = vsub.f32 1.0, %v629
        %v3190 = vsub.f32 1.0, %v630
        %v3191 = vsub.f32 1.0, %v631
        %v3192 = vsub.f32 1.0, %v632
        %v3193 = vsub.f32 1.0, %v633
        %v3194 = vsub.f32 1.0, %v634
        %v3195 = vsub.f32 1.0, %v635
        %v3196 = vsub.f32 1.0, %v636
        %v3197 = vsub.f32 1.0, %v637
        %v3198 = vsub.f32 1.0, %v638
        %v3199 = vsub.f32 1.0, %v639
        %v3200 = vsub.f32 1.0, %v640
        %v3201 = vsub.f32 1.0, %v641
        %v3202 = vsub.f32 1.0, %v642
        %v3203 = vsub.f32 1.0, %v643
        %v3204 = vsub.f32 1.0, %v644
        %v3205 = vsub.f32 1.0, %v645
        %v3206 = vsub.f32 1.0, %v646
        %v3207 = vsub.f32 1.0, %v647
        %v3208 = vsub.f32 1.0, %v648
        %v3209 = vsub.f32 1.0, %v649
        %v3210 = vsub.f32 1.0, %v650
        %v3211 = vsub.f32 1.0, %v651
        %v3212 = vsub.f32 1.0, %v652
        %v3213 = vsub.f32 1.0, %v653
        %v3214 = vsub.f32 1.0, %v654
        %v3215 = vsub.f32 1.0, %v655
        %v3216 = vsub.f32 1.0, %v656
        %v3217 = vsub.f32 1.0, %v657
        %v3218 = vsub.f32 1.0, %v658
        %v3219 = vsub.f32 1.0, %v659
        %v3220 = vsub.f32 1.0, %v660
        %v3221 = vsub.f32 1.0, %v661
        %v3222 = vsub.f32 1.0, %v662
        %v3223 = vsub.f32 1.0, %v663
        %v3224 = vsub.f32 1.0, %v664
        %v3225 = vsub.f32 1.0, %v665
        %v3226 = vsub.f32 1.0, %v666
        %v3227 = vsub.f32 1.0, %v667
        %v3228 = vsub.f32 1.0, %v668
        %v3229 = vsub.f32 1.0, %v669
        %v3230 = vsub.f32 1.0, %v670
        %v3231 = vsub.f32 1.0, %v671
        %v3232 = vsub.f32 1.0, %v672
        %v3233 = vsub.f32 1.0, %v673
        %v3234 = vsub.f32 1.0, %v674
        %v3235 = vsub.f32 1.0, %v675
        %v3236 = vsub.f32 1.0, %v676
        %v3237 = vsub.f32 1.0, %v677
        %v3238 = vsub.f32 1.0, %v678
        %v3239 = vsub.f32 1.0, %v679
        %v3240 = vsub.f32 1.0, %v680
        %v3241 = vsub.f32 1.0, %v681
        %v3242 = vsub.f32 1.0, %v682
        %v3243 = vsub.f32 1.0, %v683
        %v3244 = vsub.f32 1.0, %v684
        %v3245 = vsub.f32 1.0, %v685
        %v3246 = vsub.f32 1.0, %v686
        %v3247 = vsub.f32 1.0, %v687
        %v3248 = vsub.f32 1.0, %v688
        %v3249 = vsub.f32 1.0, %v689
        %v3250 = vsub.f32 1.0, %v690
        %v3251 = vsub.f32 1.0, %v691
        %v3252 = vsub.f32 1.0, %v692
        %v3253 = vsub.f32 1.0, %v693
        %v3254 = vsub.f32 1.0, %v694
        %v3255 = vsub.f32 1.0, %v695
        %v3256 = vsub.f32 1.0, %v696
        %v3257 = vsub.f32 1.0, %v697
        %v3258 = vsub.f32 1.0, %v698
        %v3259 = vsub.f32 1.0, %v699
        %v3260 = vsub.f32 1.0, %v700
        %v3261 = vsub.f32 1.0, %v701
        %v3262 = vsub.f32 1.0, %v702
        %v3263 = vsub.f32 1.0, %v703
        %v3264 = vsub.f32 1.0, %v704
        %v3265 = vsub.f32 1.0, %v705
        %v3266 = vsub.f32 1.0, %v706
        %v3267 = vsub.f32 1.0, %v707
        %v3268 = vsub.f32 1.0, %v708
        %v3269 = vsub.f32 1.0, %v709
        %v3270 = vsub.f32 1.0, %v710
        %v3271 = vsub.f32 1.0, %v711
        %v3272 = vsub.f32 1.0, %v712
        %v3273 = vsub.f32 1.0, %v713
        %v3274 = vsub.f32 1.0, %v714
        %v3275 = vsub.f32 1.0, %v715
        %v3276 = vsub.f32 1.0, %v716
        %v3277 = vsub.f32 1.0, %v717
        %v3278 = vsub.f32 1.0, %v718
        %v3279 = vsub.f32 1.0, %v719
        %v3280 = vsub.f32 1.0, %v720
        %v3281 = vsub.f32 1.0, %v721
        %v3282 = vsub.f32 1.0, %v722
        %v3283 = vsub.f32 1.0, %v723
        %v3284 = vsub.f32 1.0, %v724
        %v3285 = vsub.f32 1.0, %v725
        %v3286 = vsub.f32 1.0, %v726
        %v3287 = vsub.f32 1.0, %v727
        %v3288 = vsub.f32 1.0, %v728
        %v3289 = vsub.f32 1.0, %v729
        %v3290 = vsub.f32 1.0, %v730
        %v3291 = vsub.f32 1.0, %v731
        %v3292 = vsub.f32 1.0, %v732
        %v3293 = vsub.f32 1.0, %v733
        %v3294 = vsub.f32 1.0, %v734
        %v3295 = vsub.f32 1.0, %v735
        %v3296 = vsub.f32 1.0, %v736
        %v3297 = vsub.f32 1.0, %v737
        %v3298 = vsub.f32 1.0, %v738
        %v3299 = vsub.f32 1.0, %v739
        %v3300 = vsub.f32 1.0, %v740
        %v3301 = vsub.f32 1.0, %v741
        %v3302 = vsub.f32 1.0, %v742
        %v3303 = vsub.f32 1.0, %v743
        %v3304 = vsub.f32 1.0, %v744
        %v3305 = vsub.f32 1.0, %v745
        %v3306 = vsub.f32 1.0, %v746
        %v3307 = vsub.f32 1.0, %v747
        %v3308 = vsub.f32 1.0, %v748
        %v3309 = vsub.f32 1.0, %v749
        %v3310 = vsub.f32 1.0, %v750
        %v3311 = vsub.f32 1.0, %v751
        %v3312 = vsub.f32 1.0, %v752
        %v3313 = vsub.f32 1.0, %v753
        %v3314 = vsub.f32 1.0, %v754
        %v3315 = vsub.f32 1.0, %v755
        %v3316 = vsub.f32 1.0, %v756
        %v3317 = vsub.f32 1.0, %v757
        %v3318 = vsub.f32 1.0, %v758
        %v3319 = vsub.f32 1.0, %v759
        %v3320 = vsub.f32 1.0, %v760
        %v3321 = vsub.f32 1.0, %v761
        %v3322 = vsub.f32 1.0, %v762
        %v3323 = vsub.f32 1.0, %v763
        %v3324 = vsub.f32 1.0, %v764
        %v3325 = vsub.f32 1.0, %v765
        %v3326 = vsub.f32 1.0, %v766
        %v3327 = vsub.f32 1.0, %v767
        %v3328 = vsub.f32 1.0, %v768
        %v3329 = vsub.f32 1.0, %v769
        %v3330 = vsub.f32 1.0, %v770
        %v3331 = vsub.f32 1.0, %v771
        %v3332 = vsub.f32 1.0, %v772
        %v3333 = vsub.f32 1.0, %v773
        %v3334 = vsub.f32 1.0, %v774
        %v3335 = vsub.f32 1.0, %v775
        %v3336 = vsub.f32 1.0, %v776
        %v3337 = vsub.f32 1.0, %v777
        %v3338 = vsub.f32 1.0, %v778
        %v3339 = vsub.f32 1.0, %v779
        %v3340 = vsub.f32 1.0, %v780
        %v3341 = vsub.f32 1.0, %v781
        %v3342 = vsub.f32 1.0, %v782
        %v3343 = vsub.f32 1.0, %v783
        %v3344 = vsub.f32 1.0, %v784
        %v3345 = vsub.f32 1.0, %v785
        %v3346 = vsub.f32 1.0, %v786
        %v3347 = vlog2.pop %v2835
        %v3348 = vmul.f32 %v3347, 0.6931472
        %v3349 = vlog2.pop %v2836
        %v3350 = vmul.f32 %v3349, 0.6931472
        %v3351 = vlog2.pop %v2837
        %v3352 = vmul.f32 %v3351, 0.6931472
        %v3353 = vlog2.pop %v2838
        %v3354 = vmul.f32 %v3353, 0.6931472
        %v3355 = vlog2.pop %v2839
        %v3356 = vmul.f32 %v3355, 0.6931472
        %v3357 = vlog2.pop %v2840
        %v3358 = vmul.f32 %v3357, 0.6931472
        %v3359 = vlog2.pop %v2841
        %v3360 = vmul.f32 %v3359, 0.6931472
        %v3361 = vlog2.pop %v2842
        %v3362 = vmul.f32 %v3361, 0.6931472
        %v3363 = vlog2.pop %v2843
        %v3364 = vmul.f32 %v3363, 0.6931472
        %v3365 = vlog2.pop %v2844
        %v3366 = vmul.f32 %v3365, 0.6931472
        %v3367 = vlog2.pop %v2845
        %v3368 = vmul.f32 %v3367, 0.6931472
        %v3369 = vlog2.pop %v2846
        %v3370 = vmul.f32 %v3369, 0.6931472
        %v3371 = vlog2.pop %v2847
        %v3372 = vmul.f32 %v3371, 0.6931472
        %v3373 = vlog2.pop %v2848
        %v3374 = vmul.f32 %v3373, 0.6931472
        %v3375 = vlog2.pop %v2849
        %v3376 = vmul.f32 %v3375, 0.6931472
        %v3377 = vlog2.pop %v2850
        %v3378 = vmul.f32 %v3377, 0.6931472
        %v3379 = vlog2.pop %v2851
        %v3380 = vmul.f32 %v3379, 0.6931472
        %v3381 = vlog2.pop %v2852
        %v3382 = vmul.f32 %v3381, 0.6931472
        %v3383 = vlog2.pop %v2853
        %v3384 = vmul.f32 %v3383, 0.6931472
        %v3385 = vlog2.pop %v2854
        %v3386 = vmul.f32 %v3385, 0.6931472
        %v3387 = vlog2.pop %v2855
        %v3388 = vmul.f32 %v3387, 0.6931472
        %v3389 = vlog2.pop %v2856
        %v3390 = vmul.f32 %v3389, 0.6931472
        %v3391 = vlog2.pop %v2857
        %v3392 = vmul.f32 %v3391, 0.6931472
        %v3393 = vlog2.pop %v2858
        %v3394 = vmul.f32 %v3393, 0.6931472
        %v3395 = vlog2.pop %v2859
        %v3396 = vmul.f32 %v3395, 0.6931472
        %v3397 = vlog2.pop %v2860
        %v3398 = vmul.f32 %v3397, 0.6931472
        %v3399 = vlog2.pop %v2861
        %v3400 = vmul.f32 %v3399, 0.6931472
        %v3401 = vlog2.pop %v2862
        %v3402 = vmul.f32 %v3401, 0.6931472
        %v3403 = vlog2.pop %v2863
        %v3404 = vmul.f32 %v3403, 0.6931472
        %v3405 = vlog2.pop %v2864
        %v3406 = vmul.f32 %v3405, 0.6931472
        %v3407 = vlog2.pop %v2865
        %v3408 = vmul.f32 %v3407, 0.6931472
        %v3409 = vlog2.pop %v2866
        %v3410 = vmul.f32 %v3409, 0.6931472
        %v3411 = vlog2.pop %v2867
        %v3412 = vmul.f32 %v3411, 0.6931472
        %v3413 = vlog2.pop %v2868
        %v3414 = vmul.f32 %v3413, 0.6931472
        %v3415 = vlog2.pop %v2869
        %v3416 = vmul.f32 %v3415, 0.6931472
        %v3417 = vlog2.pop %v2870
        %v3418 = vmul.f32 %v3417, 0.6931472
        %v3419 = vlog2.pop %v2871
        %v3420 = vmul.f32 %v3419, 0.6931472
        %v3421 = vlog2.pop %v2872
        %v3422 = vmul.f32 %v3421, 0.6931472
        %v3423 = vlog2.pop %v2873
        %v3424 = vmul.f32 %v3423, 0.6931472
        %v3425 = vlog2.pop %v2874
        %v3426 = vmul.f32 %v3425, 0.6931472
        %v3427 = vlog2.pop %v2875
        %v3428 = vmul.f32 %v3427, 0.6931472
        %v3429 = vlog2.pop %v2876
        %v3430 = vmul.f32 %v3429, 0.6931472
        %v3431 = vlog2.pop %v2877
        %v3432 = vmul.f32 %v3431, 0.6931472
        %v3433 = vlog2.pop %v2878
        %v3434 = vmul.f32 %v3433, 0.6931472
        %v3435 = vlog2.pop %v2879
        %v3436 = vmul.f32 %v3435, 0.6931472
        %v3437 = vlog2.pop %v2880
        %v3438 = vmul.f32 %v3437, 0.6931472
        %v3439 = vlog2.pop %v2881
        %v3440 = vmul.f32 %v3439, 0.6931472
        %v3441 = vlog2.pop %v2882
        %v3442 = vmul.f32 %v3441, 0.6931472
        %v3443 = vlog2.pop %v2883
        %v3444 = vmul.f32 %v3443, 0.6931472
        %v3445 = vlog2.pop %v2884
        %v3446 = vmul.f32 %v3445, 0.6931472
        %v3447 = vlog2.pop %v2885
        %v3448 = vmul.f32 %v3447, 0.6931472
        %v3449 = vlog2.pop %v2886
        %v3450 = vmul.f32 %v3449, 0.6931472
        %v3451 = vlog2.pop %v2887
        %v3452 = vmul.f32 %v3451, 0.6931472
        %v3453 = vlog2.pop %v2888
        %v3454 = vmul.f32 %v3453, 0.6931472
        %v3455 = vlog2.pop %v2889
        %v3456 = vmul.f32 %v3455, 0.6931472
        %v3457 = vlog2.pop %v2890
        %v3458 = vmul.f32 %v3457, 0.6931472
        %v3459 = vlog2.pop %v2891
        %v3460 = vmul.f32 %v3459, 0.6931472
        %v3461 = vlog2.pop %v2892
        %v3462 = vmul.f32 %v3461, 0.6931472
        %v3463 = vlog2.pop %v2893
        %v3464 = vmul.f32 %v3463, 0.6931472
        %v3465 = vlog2.pop %v2894
        %v3466 = vmul.f32 %v3465, 0.6931472
        %v3467 = vlog2.pop %v2895
        %v3468 = vmul.f32 %v3467, 0.6931472
        %v3469 = vlog2.pop %v2896
        %v3470 = vmul.f32 %v3469, 0.6931472
        %v3471 = vlog2.pop %v2897
        %v3472 = vmul.f32 %v3471, 0.6931472
        %v3473 = vlog2.pop %v2898
        %v3474 = vmul.f32 %v3473, 0.6931472
        %v3475 = vlog2.pop %v2899
        %v3476 = vmul.f32 %v3475, 0.6931472
        %v3477 = vlog2.pop %v2900
        %v3478 = vmul.f32 %v3477, 0.6931472
        %v3479 = vlog2.pop %v2901
        %v3480 = vmul.f32 %v3479, 0.6931472
        %v3481 = vlog2.pop %v2902
        %v3482 = vmul.f32 %v3481, 0.6931472
        %v3483 = vlog2.pop %v2903
        %v3484 = vmul.f32 %v3483, 0.6931472
        %v3485 = vlog2.pop %v2904
        %v3486 = vmul.f32 %v3485, 0.6931472
        %v3487 = vlog2.pop %v2905
        %v3488 = vmul.f32 %v3487, 0.6931472
        %v3489 = vlog2.pop %v2906
        %v3490 = vmul.f32 %v3489, 0.6931472
        %v3491 = vlog2.pop %v2907
        %v3492 = vmul.f32 %v3491, 0.6931472
        %v3493 = vlog2.pop %v2908
        %v3494 = vmul.f32 %v3493, 0.6931472
        %v3495 = vlog2.pop %v2909
        %v3496 = vmul.f32 %v3495, 0.6931472
        %v3497 = vlog2.pop %v2910
        %v3498 = vmul.f32 %v3497, 0.6931472
        %v3499 = vlog2.pop %v2911
        %v3500 = vmul.f32 %v3499, 0.6931472
        %v3501 = vlog2.pop %v2912
        %v3502 = vmul.f32 %v3501, 0.6931472
        %v3503 = vlog2.pop %v2913
        %v3504 = vmul.f32 %v3503, 0.6931472
        %v3505 = vlog2.pop %v2914
        %v3506 = vmul.f32 %v3505, 0.6931472
        %v3507 = vlog2.pop %v2915
        %v3508 = vmul.f32 %v3507, 0.6931472
        %v3509 = vlog2.pop %v2916
        %v3510 = vmul.f32 %v3509, 0.6931472
        %v3511 = vlog2.pop %v2917
        %v3512 = vmul.f32 %v3511, 0.6931472
        %v3513 = vlog2.pop %v2918
        %v3514 = vmul.f32 %v3513, 0.6931472
        %v3515 = vlog2.pop %v2919
        %v3516 = vmul.f32 %v3515, 0.6931472
        %v3517 = vlog2.pop %v2920
        %v3518 = vmul.f32 %v3517, 0.6931472
        %v3519 = vlog2.pop %v2921
        %v3520 = vmul.f32 %v3519, 0.6931472
        %v3521 = vlog2.pop %v2922
        %v3522 = vmul.f32 %v3521, 0.6931472
        %v3523 = vlog2.pop %v2923
        %v3524 = vmul.f32 %v3523, 0.6931472
        %v3525 = vlog2.pop %v2924
        %v3526 = vmul.f32 %v3525, 0.6931472
        %v3527 = vlog2.pop %v2925
        %v3528 = vmul.f32 %v3527, 0.6931472
        %v3529 = vlog2.pop %v2926
        %v3530 = vmul.f32 %v3529, 0.6931472
        %v3531 = vlog2.pop %v2927
        %v3532 = vmul.f32 %v3531, 0.6931472
        %v3533 = vlog2.pop %v2928
        %v3534 = vmul.f32 %v3533, 0.6931472
        %v3535 = vlog2.pop %v2929
        %v3536 = vmul.f32 %v3535, 0.6931472
        %v3537 = vlog2.pop %v2930
        %v3538 = vmul.f32 %v3537, 0.6931472
        %v3539 = vlog2.pop %v2931
        %v3540 = vmul.f32 %v3539, 0.6931472
        %v3541 = vlog2.pop %v2932
        %v3542 = vmul.f32 %v3541, 0.6931472
        %v3543 = vlog2.pop %v2933
        %v3544 = vmul.f32 %v3543, 0.6931472
        %v3545 = vlog2.pop %v2934
        %v3546 = vmul.f32 %v3545, 0.6931472
        %v3547 = vlog2.pop %v2935
        %v3548 = vmul.f32 %v3547, 0.6931472
        %v3549 = vlog2.pop %v2936
        %v3550 = vmul.f32 %v3549, 0.6931472
        %v3551 = vlog2.pop %v2937
        %v3552 = vmul.f32 %v3551, 0.6931472
        %v3553 = vlog2.pop %v2938
        %v3554 = vmul.f32 %v3553, 0.6931472
        %v3555 = vlog2.pop %v2939
        %v3556 = vmul.f32 %v3555, 0.6931472
        %v3557 = vlog2.pop %v2940
        %v3558 = vmul.f32 %v3557, 0.6931472
        %v3559 = vlog2.pop %v2941
        %v3560 = vmul.f32 %v3559, 0.6931472
        %v3561 = vlog2.pop %v2942
        %v3562 = vmul.f32 %v3561, 0.6931472
        %v3563 = vlog2.pop %v2943
        %v3564 = vmul.f32 %v3563, 0.6931472
        %v3565 = vlog2.pop %v2944
        %v3566 = vmul.f32 %v3565, 0.6931472
        %v3567 = vlog2.pop %v2945
        %v3568 = vmul.f32 %v3567, 0.6931472
        %v3569 = vlog2.pop %v2946
        %v3570 = vmul.f32 %v3569, 0.6931472
        %v3571 = vlog2.pop %v2947
        %v3572 = vmul.f32 %v3571, 0.6931472
        %v3573 = vlog2.pop %v2948
        %v3574 = vmul.f32 %v3573, 0.6931472
        %v3575 = vlog2.pop %v2949
        %v3576 = vmul.f32 %v3575, 0.6931472
        %v3577 = vlog2.pop %v2950
        %v3578 = vmul.f32 %v3577, 0.6931472
        %v3579 = vlog2.pop %v2951
        %v3580 = vmul.f32 %v3579, 0.6931472
        %v3581 = vlog2.pop %v2952
        %v3582 = vmul.f32 %v3581, 0.6931472
        %v3583 = vlog2.pop %v2953
        %v3584 = vmul.f32 %v3583, 0.6931472
        %v3585 = vlog2.pop %v2954
        %v3586 = vmul.f32 %v3585, 0.6931472
        %v3587 = vlog2.pop %v2955
        %v3588 = vmul.f32 %v3587, 0.6931472
        %v3589 = vlog2.pop %v2956
        %v3590 = vmul.f32 %v3589, 0.6931472
        %v3591 = vlog2.pop %v2957
        %v3592 = vmul.f32 %v3591, 0.6931472
        %v3593 = vlog2.pop %v2958
        %v3594 = vmul.f32 %v3593, 0.6931472
        %v3595 = vlog2.pop %v2959
        %v3596 = vmul.f32 %v3595, 0.6931472
        %v3597 = vlog2.pop %v2960
        %v3598 = vmul.f32 %v3597, 0.6931472
        %v3599 = vlog2.pop %v2961
        %v3600 = vmul.f32 %v3599, 0.6931472
        %v3601 = vlog2.pop %v2962
        %v3602 = vmul.f32 %v3601, 0.6931472
        %v3603 = vlog2.pop %v2963
        %v3604 = vmul.f32 %v3603, 0.6931472
        %v3605 = vlog2.pop %v2964
        %v3606 = vmul.f32 %v3605, 0.6931472
        %v3607 = vlog2.pop %v2965
        %v3608 = vmul.f32 %v3607, 0.6931472
        %v3609 = vlog2.pop %v2966
        %v3610 = vmul.f32 %v3609, 0.6931472
        %v3611 = vlog2.pop %v2967
        %v3612 = vmul.f32 %v3611, 0.6931472
        %v3613 = vlog2.pop %v2968
        %v3614 = vmul.f32 %v3613, 0.6931472
        %v3615 = vlog2.pop %v2969
        %v3616 = vmul.f32 %v3615, 0.6931472
        %v3617 = vlog2.pop %v2970
        %v3618 = vmul.f32 %v3617, 0.6931472
        %v3619 = vlog2.pop %v2971
        %v3620 = vmul.f32 %v3619, 0.6931472
        %v3621 = vlog2.pop %v2972
        %v3622 = vmul.f32 %v3621, 0.6931472
        %v3623 = vlog2.pop %v2973
        %v3624 = vmul.f32 %v3623, 0.6931472
        %v3625 = vlog2.pop %v2974
        %v3626 = vmul.f32 %v3625, 0.6931472
        %v3627 = vlog2.pop %v2975
        %v3628 = vmul.f32 %v3627, 0.6931472
        %v3629 = vlog2.pop %v2976
        %v3630 = vmul.f32 %v3629, 0.6931472
        %v3631 = vlog2.pop %v2977
        %v3632 = vmul.f32 %v3631, 0.6931472
        %v3633 = vlog2.pop %v2978
        %v3634 = vmul.f32 %v3633, 0.6931472
        %v3635 = vlog2.pop %v2979
        %v3636 = vmul.f32 %v3635, 0.6931472
        %v3637 = vlog2.pop %v2980
        %v3638 = vmul.f32 %v3637, 0.6931472
        %v3639 = vlog2.pop %v2981
        %v3640 = vmul.f32 %v3639, 0.6931472
        %v3641 = vlog2.pop %v2982
        %v3642 = vmul.f32 %v3641, 0.6931472
        %v3643 = vlog2.pop %v2983
        %v3644 = vmul.f32 %v3643, 0.6931472
        %v3645 = vlog2.pop %v2984
        %v3646 = vmul.f32 %v3645, 0.6931472
        %v3647 = vlog2.pop %v2985
        %v3648 = vmul.f32 %v3647, 0.6931472
        %v3649 = vlog2.pop %v2986
        %v3650 = vmul.f32 %v3649, 0.6931472
        %v3651 = vlog2.pop %v2987
        %v3652 = vmul.f32 %v3651, 0.6931472
        %v3653 = vlog2.pop %v2988
        %v3654 = vmul.f32 %v3653, 0.6931472
        %v3655 = vlog2.pop %v2989
        %v3656 = vmul.f32 %v3655, 0.6931472
        %v3657 = vlog2.pop %v2990
        %v3658 = vmul.f32 %v3657, 0.6931472
        %v3659 = vlog2.pop %v2991
        %v3660 = vmul.f32 %v3659, 0.6931472
        %v3661 = vlog2.pop %v2992
        %v3662 = vmul.f32 %v3661, 0.6931472
        %v3663 = vlog2.pop %v2993
        %v3664 = vmul.f32 %v3663, 0.6931472
        %v3665 = vlog2.pop %v2994
        %v3666 = vmul.f32 %v3665, 0.6931472
        %v3667 = vlog2.pop %v2995
        %v3668 = vmul.f32 %v3667, 0.6931472
        %v3669 = vlog2.pop %v2996
        %v3670 = vmul.f32 %v3669, 0.6931472
        %v3671 = vlog2.pop %v2997
        %v3672 = vmul.f32 %v3671, 0.6931472
        %v3673 = vlog2.pop %v2998
        %v3674 = vmul.f32 %v3673, 0.6931472
        %v3675 = vlog2.pop %v2999
        %v3676 = vmul.f32 %v3675, 0.6931472
        %v3677 = vlog2.pop %v3000
        %v3678 = vmul.f32 %v3677, 0.6931472
        %v3679 = vlog2.pop %v3001
        %v3680 = vmul.f32 %v3679, 0.6931472
        %v3681 = vlog2.pop %v3002
        %v3682 = vmul.f32 %v3681, 0.6931472
        %v3683 = vlog2.pop %v3003
        %v3684 = vmul.f32 %v3683, 0.6931472
        %v3685 = vlog2.pop %v3004
        %v3686 = vmul.f32 %v3685, 0.6931472
        %v3687 = vlog2.pop %v3005
        %v3688 = vmul.f32 %v3687, 0.6931472
        %v3689 = vlog2.pop %v3006
        %v3690 = vmul.f32 %v3689, 0.6931472
        %v3691 = vlog2.pop %v3007
        %v3692 = vmul.f32 %v3691, 0.6931472
        %v3693 = vlog2.pop %v3008
        %v3694 = vmul.f32 %v3693, 0.6931472
        %v3695 = vlog2.pop %v3009
        %v3696 = vmul.f32 %v3695, 0.6931472
        %v3697 = vlog2.pop %v3010
        %v3698 = vmul.f32 %v3697, 0.6931472
        %v3699 = vlog2.pop %v3011
        %v3700 = vmul.f32 %v3699, 0.6931472
        %v3701 = vlog2.pop %v3012
        %v3702 = vmul.f32 %v3701, 0.6931472
        %v3703 = vlog2.pop %v3013
        %v3704 = vmul.f32 %v3703, 0.6931472
        %v3705 = vlog2.pop %v3014
        %v3706 = vmul.f32 %v3705, 0.6931472
        %v3707 = vlog2.pop %v3015
        %v3708 = vmul.f32 %v3707, 0.6931472
        %v3709 = vlog2.pop %v3016
        %v3710 = vmul.f32 %v3709, 0.6931472
        %v3711 = vlog2.pop %v3017
        %v3712 = vmul.f32 %v3711, 0.6931472
        %v3713 = vlog2.pop %v3018
        %v3714 = vmul.f32 %v3713, 0.6931472
        %v3715 = vlog2.pop %v3019
        %v3716 = vmul.f32 %v3715, 0.6931472
        %v3717 = vlog2.pop %v3020
        %v3718 = vmul.f32 %v3717, 0.6931472
        %v3719 = vlog2.pop %v3021
        %v3720 = vmul.f32 %v3719, 0.6931472
        %v3721 = vlog2.pop %v3022
        %v3722 = vmul.f32 %v3721, 0.6931472
        %v3723 = vlog2.pop %v3023
        %v3724 = vmul.f32 %v3723, 0.6931472
        %v3725 = vlog2.pop %v3024
        %v3726 = vmul.f32 %v3725, 0.6931472
        %v3727 = vlog2.pop %v3025
        %v3728 = vmul.f32 %v3727, 0.6931472
        %v3729 = vlog2.pop %v3026
        %v3730 = vmul.f32 %v3729, 0.6931472
        %v3731 = vlog2.pop %v3027
        %v3732 = vmul.f32 %v3731, 0.6931472
        %v3733 = vlog2.pop %v3028
        %v3734 = vmul.f32 %v3733, 0.6931472
        %v3735 = vlog2.pop %v3029
        %v3736 = vmul.f32 %v3735, 0.6931472
        %v3737 = vlog2.pop %v3030
        %v3738 = vmul.f32 %v3737, 0.6931472
        %v3739 = vlog2.pop %v3031
        %v3740 = vmul.f32 %v3739, 0.6931472
        %v3741 = vlog2.pop %v3032
        %v3742 = vmul.f32 %v3741, 0.6931472
        %v3743 = vlog2.pop %v3033
        %v3744 = vmul.f32 %v3743, 0.6931472
        %v3745 = vlog2.pop %v3034
        %v3746 = vmul.f32 %v3745, 0.6931472
        %v3747 = vlog2.pop %v3035
        %v3748 = vmul.f32 %v3747, 0.6931472
        %v3749 = vlog2.pop %v3036
        %v3750 = vmul.f32 %v3749, 0.6931472
        %v3751 = vlog2.pop %v3037
        %v3752 = vmul.f32 %v3751, 0.6931472
        %v3753 = vlog2.pop %v3038
        %v3754 = vmul.f32 %v3753, 0.6931472
        %v3755 = vlog2.pop %v3039
        %v3756 = vmul.f32 %v3755, 0.6931472
        %v3757 = vlog2.pop %v3040
        %v3758 = vmul.f32 %v3757, 0.6931472
        %v3759 = vlog2.pop %v3041
        %v3760 = vmul.f32 %v3759, 0.6931472
        %v3761 = vlog2.pop %v3042
        %v3762 = vmul.f32 %v3761, 0.6931472
        %v3763 = vlog2.pop %v3043
        %v3764 = vmul.f32 %v3763, 0.6931472
        %v3765 = vlog2.pop %v3044
        %v3766 = vmul.f32 %v3765, 0.6931472
        %v3767 = vlog2.pop %v3045
        %v3768 = vmul.f32 %v3767, 0.6931472
        %v3769 = vlog2.pop %v3046
        %v3770 = vmul.f32 %v3769, 0.6931472
        %v3771 = vlog2.pop %v3047
        %v3772 = vmul.f32 %v3771, 0.6931472
        %v3773 = vlog2.pop %v3048
        %v3774 = vmul.f32 %v3773, 0.6931472
        %v3775 = vlog2.pop %v3049
        %v3776 = vmul.f32 %v3775, 0.6931472
        %v3777 = vlog2.pop %v3050
        %v3778 = vmul.f32 %v3777, 0.6931472
        %v3779 = vlog2.pop %v3051
        %v3780 = vmul.f32 %v3779, 0.6931472
        %v3781 = vlog2.pop %v3052
        %v3782 = vmul.f32 %v3781, 0.6931472
        %v3783 = vlog2.pop %v3053
        %v3784 = vmul.f32 %v3783, 0.6931472
        %v3785 = vlog2.pop %v3054
        %v3786 = vmul.f32 %v3785, 0.6931472
        %v3787 = vlog2.pop %v3055
        %v3788 = vmul.f32 %v3787, 0.6931472
        %v3789 = vlog2.pop %v3056
        %v3790 = vmul.f32 %v3789, 0.6931472
        %v3791 = vlog2.pop %v3057
        %v3792 = vmul.f32 %v3791, 0.6931472
        %v3793 = vlog2.pop %v3058
        %v3794 = vmul.f32 %v3793, 0.6931472
        %v3795 = vlog2.pop %v3059
        %v3796 = vmul.f32 %v3795, 0.6931472
        %v3797 = vlog2.pop %v3060
        %v3798 = vmul.f32 %v3797, 0.6931472
        %v3799 = vlog2.pop %v3061
        %v3800 = vmul.f32 %v3799, 0.6931472
        %v3801 = vlog2.pop %v3062
        %v3802 = vmul.f32 %v3801, 0.6931472
        %v3803 = vlog2.pop %v3063
        %v3804 = vmul.f32 %v3803, 0.6931472
        %v3805 = vlog2.pop %v3064
        %v3806 = vmul.f32 %v3805, 0.6931472
        %v3807 = vlog2.pop %v3065
        %v3808 = vmul.f32 %v3807, 0.6931472
        %v3809 = vlog2.pop %v3066
        %v3810 = vmul.f32 %v3809, 0.6931472
        %v3811 = vlog2.pop %v3067
        %v3812 = vmul.f32 %v3811, 0.6931472
        %v3813 = vlog2.pop %v3068
        %v3814 = vmul.f32 %v3813, 0.6931472
        %v3815 = vlog2.pop %v3069
        %v3816 = vmul.f32 %v3815, 0.6931472
        %v3817 = vlog2.pop %v3070
        %v3818 = vmul.f32 %v3817, 0.6931472
        %v3819 = vlog2.pop %v3071
        %v3820 = vmul.f32 %v3819, 0.6931472
        %v3821 = vlog2.pop %v3072
        %v3822 = vmul.f32 %v3821, 0.6931472
        %v3823 = vlog2.pop %v3073
        %v3824 = vmul.f32 %v3823, 0.6931472
        %v3825 = vlog2.pop %v3074
        %v3826 = vmul.f32 %v3825, 0.6931472
        %v3827 = vlog2.pop %v3075
        %v3828 = vmul.f32 %v3827, 0.6931472
        %v3829 = vlog2.pop %v3076
        %v3830 = vmul.f32 %v3829, 0.6931472
        %v3831 = vlog2.pop %v3077
        %v3832 = vmul.f32 %v3831, 0.6931472
        %v3833 = vlog2.pop %v3078
        %v3834 = vmul.f32 %v3833, 0.6931472
        %v3835 = vlog2.pop %v3079
        %v3836 = vmul.f32 %v3835, 0.6931472
        %v3837 = vlog2.pop %v3080
        %v3838 = vmul.f32 %v3837, 0.6931472
        %v3839 = vlog2.pop %v3081
        %v3840 = vmul.f32 %v3839, 0.6931472
        %v3841 = vlog2.pop %v3082
        %v3842 = vmul.f32 %v3841, 0.6931472
        %v3843 = vlog2.pop %v3083
        %v3844 = vmul.f32 %v3843, 0.6931472
        %v3845 = vlog2.pop %v3084
        %v3846 = vmul.f32 %v3845, 0.6931472
        %v3847 = vlog2.pop %v3085
        %v3848 = vmul.f32 %v3847, 0.6931472
        %v3849 = vlog2.pop %v3086
        %v3850 = vmul.f32 %v3849, 0.6931472
        %v3851 = vlog2.pop %v3087
        %v3852 = vmul.f32 %v3851, 0.6931472
        %v3853 = vlog2.pop %v3088
        %v3854 = vmul.f32 %v3853, 0.6931472
        %v3855 = vlog2.pop %v3089
        %v3856 = vmul.f32 %v3855, 0.6931472
        %v3857 = vlog2.pop %v3090
        %v3858 = vmul.f32 %v3857, 0.6931472
        %v3859 = vlog2.pop %v3091
        %v3860 = vmul.f32 %v3859, 0.6931472
        %v3861 = vlog2.pop %v3092
        %v3862 = vmul.f32 %v3861, 0.6931472
        %v3863 = vlog2.pop %v3093
        %v3864 = vmul.f32 %v3863, 0.6931472
        %v3865 = vlog2.pop %v3094
        %v3866 = vmul.f32 %v3865, 0.6931472
        %v3867 = vlog2.pop %v3095
        %v3868 = vmul.f32 %v3867, 0.6931472
        %v3869 = vlog2.pop %v3096
        %v3870 = vmul.f32 %v3869, 0.6931472
        %v3871 = vlog2.pop %v3097
        %v3872 = vmul.f32 %v3871, 0.6931472
        %v3873 = vlog2.pop %v3098
        %v3874 = vmul.f32 %v3873, 0.6931472
        %v3875 = vlog2.pop %v3099
        %v3876 = vmul.f32 %v3875, 0.6931472
        %v3877 = vlog2.pop %v3100
        %v3878 = vmul.f32 %v3877, 0.6931472
        %v3879 = vlog2.pop %v3101
        %v3880 = vmul.f32 %v3879, 0.6931472
        %v3881 = vlog2.pop %v3102
        %v3882 = vmul.f32 %v3881, 0.6931472
        %v3883 = vlog2.pop %v3103
        %v3884 = vmul.f32 %v3883, 0.6931472
        %v3885 = vlog2.pop %v3104
        %v3886 = vmul.f32 %v3885, 0.6931472
        %v3887 = vlog2.pop %v3105
        %v3888 = vmul.f32 %v3887, 0.6931472
        %v3889 = vlog2.pop %v3106
        %v3890 = vmul.f32 %v3889, 0.6931472
        %v3891 = vlog2.pop %v3107
        %v3892 = vmul.f32 %v3891, 0.6931472
        %v3893 = vlog2.pop %v3108
        %v3894 = vmul.f32 %v3893, 0.6931472
        %v3895 = vlog2.pop %v3109
        %v3896 = vmul.f32 %v3895, 0.6931472
        %v3897 = vlog2.pop %v3110
        %v3898 = vmul.f32 %v3897, 0.6931472
        %v3899 = vlog2.pop %v3111
        %v3900 = vmul.f32 %v3899, 0.6931472
        %v3901 = vlog2.pop %v3112
        %v3902 = vmul.f32 %v3901, 0.6931472
        %v3903 = vlog2.pop %v3113
        %v3904 = vmul.f32 %v3903, 0.6931472
        %v3905 = vlog2.pop %v3114
        %v3906 = vmul.f32 %v3905, 0.6931472
        %v3907 = vlog2.pop %v3115
        %v3908 = vmul.f32 %v3907, 0.6931472
        %v3909 = vlog2.pop %v3116
        %v3910 = vmul.f32 %v3909, 0.6931472
        %v3911 = vlog2.pop %v3117
        %v3912 = vmul.f32 %v3911, 0.6931472
        %v3913 = vlog2.pop %v3118
        %v3914 = vmul.f32 %v3913, 0.6931472
        %v3915 = vlog2.pop %v3119
        %v3916 = vmul.f32 %v3915, 0.6931472
        %v3917 = vlog2.pop %v3120
        %v3918 = vmul.f32 %v3917, 0.6931472
        %v3919 = vlog2.pop %v3121
        %v3920 = vmul.f32 %v3919, 0.6931472
        %v3921 = vlog2.pop %v3122
        %v3922 = vmul.f32 %v3921, 0.6931472
        %v3923 = vlog2.pop %v3123
        %v3924 = vmul.f32 %v3923, 0.6931472
        %v3925 = vlog2.pop %v3124
        %v3926 = vmul.f32 %v3925, 0.6931472
        %v3927 = vlog2.pop %v3125
        %v3928 = vmul.f32 %v3927, 0.6931472
        %v3929 = vlog2.pop %v3126
        %v3930 = vmul.f32 %v3929, 0.6931472
        %v3931 = vlog2.pop %v3127
        %v3932 = vmul.f32 %v3931, 0.6931472
        %v3933 = vlog2.pop %v3128
        %v3934 = vmul.f32 %v3933, 0.6931472
        %v3935 = vlog2.pop %v3129
        %v3936 = vmul.f32 %v3935, 0.6931472
        %v3937 = vlog2.pop %v3130
        %v3938 = vmul.f32 %v3937, 0.6931472
        %v3939 = vlog2.pop %v3131
        %v3940 = vmul.f32 %v3939, 0.6931472
        %v3941 = vlog2.pop %v3132
        %v3942 = vmul.f32 %v3941, 0.6931472
        %v3943 = vlog2.pop %v3133
        %v3944 = vmul.f32 %v3943, 0.6931472
        %v3945 = vlog2.pop %v3134
        %v3946 = vmul.f32 %v3945, 0.6931472
        %v3947 = vlog2.pop %v3135
        %v3948 = vmul.f32 %v3947, 0.6931472
        %v3949 = vlog2.pop %v3136
        %v3950 = vmul.f32 %v3949, 0.6931472
        %v3951 = vlog2.pop %v3137
        %v3952 = vmul.f32 %v3951, 0.6931472
        %v3953 = vlog2.pop %v3138
        %v3954 = vmul.f32 %v3953, 0.6931472
        %v3955 = vlog2.pop %v3139
        %v3956 = vmul.f32 %v3955, 0.6931472
        %v3957 = vlog2.pop %v3140
        %v3958 = vmul.f32 %v3957, 0.6931472
        %v3959 = vlog2.pop %v3141
        %v3960 = vmul.f32 %v3959, 0.6931472
        %v3961 = vlog2.pop %v3142
        %v3962 = vmul.f32 %v3961, 0.6931472
        %v3963 = vlog2.pop %v3143
        %v3964 = vmul.f32 %v3963, 0.6931472
        %v3965 = vlog2.pop %v3144
        %v3966 = vmul.f32 %v3965, 0.6931472
        %v3967 = vlog2.pop %v3145
        %v3968 = vmul.f32 %v3967, 0.6931472
        %v3969 = vlog2.pop %v3146
        %v3970 = vmul.f32 %v3969, 0.6931472
        %v3971 = vlog2.pop %v3147
        %v3972 = vmul.f32 %v3971, 0.6931472
        %v3973 = vlog2.pop %v3148
        %v3974 = vmul.f32 %v3973, 0.6931472
        %v3975 = vlog2.pop %v3149
        %v3976 = vmul.f32 %v3975, 0.6931472
        %v3977 = vlog2.pop %v3150
        %v3978 = vmul.f32 %v3977, 0.6931472
        %v3979 = vlog2.pop %v3151
        %v3980 = vmul.f32 %v3979, 0.6931472
        %v3981 = vlog2.pop %v3152
        %v3982 = vmul.f32 %v3981, 0.6931472
        %v3983 = vlog2.pop %v3153
        %v3984 = vmul.f32 %v3983, 0.6931472
        %v3985 = vlog2.pop %v3154
        %v3986 = vmul.f32 %v3985, 0.6931472
        %v3987 = vlog2.pop %v3155
        %v3988 = vmul.f32 %v3987, 0.6931472
        %v3989 = vlog2.pop %v3156
        %v3990 = vmul.f32 %v3989, 0.6931472
        %v3991 = vlog2.pop %v3157
        %v3992 = vmul.f32 %v3991, 0.6931472
        %v3993 = vlog2.pop %v3158
        %v3994 = vmul.f32 %v3993, 0.6931472
        %v3995 = vlog2.pop %v3159
        %v3996 = vmul.f32 %v3995, 0.6931472
        %v3997 = vlog2.pop %v3160
        %v3998 = vmul.f32 %v3997, 0.6931472
        %v3999 = vlog2.pop %v3161
        %v4000 = vmul.f32 %v3999, 0.6931472
        %v4001 = vlog2.pop %v3162
        %v4002 = vmul.f32 %v4001, 0.6931472
        %v4003 = vlog2.pop %v3163
        %v4004 = vmul.f32 %v4003, 0.6931472
        %v4005 = vlog2.pop %v3164
        %v4006 = vmul.f32 %v4005, 0.6931472
        %v4007 = vlog2.pop %v3165
        %v4008 = vmul.f32 %v4007, 0.6931472
        %v4009 = vlog2.pop %v3166
        %v4010 = vmul.f32 %v4009, 0.6931472
        %v4011 = vlog2.pop %v3167
        %v4012 = vmul.f32 %v4011, 0.6931472
        %v4013 = vlog2.pop %v3168
        %v4014 = vmul.f32 %v4013, 0.6931472
        %v4015 = vlog2.pop %v3169
        %v4016 = vmul.f32 %v4015, 0.6931472
        %v4017 = vlog2.pop %v3170
        %v4018 = vmul.f32 %v4017, 0.6931472
        %v4019 = vlog2.pop %v3171
        %v4020 = vmul.f32 %v4019, 0.6931472
        %v4021 = vlog2.pop %v3172
        %v4022 = vmul.f32 %v4021, 0.6931472
        %v4023 = vlog2.pop %v3173
        %v4024 = vmul.f32 %v4023, 0.6931472
        %v4025 = vlog2.pop %v3174
        %v4026 = vmul.f32 %v4025, 0.6931472
        %v4027 = vlog2.pop %v3175
        %v4028 = vmul.f32 %v4027, 0.6931472
        %v4029 = vlog2.pop %v3176
        %v4030 = vmul.f32 %v4029, 0.6931472
        %v4031 = vlog2.pop %v3177
        %v4032 = vmul.f32 %v4031, 0.6931472
        %v4033 = vlog2.pop %v3178
        %v4034 = vmul.f32 %v4033, 0.6931472
        %v4035 = vlog2.pop %v3179
        %v4036 = vmul.f32 %v4035, 0.6931472
        %v4037 = vlog2.pop %v3180
        %v4038 = vmul.f32 %v4037, 0.6931472
        %v4039 = vlog2.pop %v3181
        %v4040 = vmul.f32 %v4039, 0.6931472
        %v4041 = vlog2.pop %v3182
        %v4042 = vmul.f32 %v4041, 0.6931472
        %v4043 = vlog2.pop %v3183
        %v4044 = vmul.f32 %v4043, 0.6931472
        %v4045 = vlog2.pop %v3184
        %v4046 = vmul.f32 %v4045, 0.6931472
        %v4047 = vlog2.pop %v3185
        %v4048 = vmul.f32 %v4047, 0.6931472
        %v4049 = vlog2.pop %v3186
        %v4050 = vmul.f32 %v4049, 0.6931472
        %v4051 = vlog2.pop %v3187
        %v4052 = vmul.f32 %v4051, 0.6931472
        %v4053 = vlog2.pop %v3188
        %v4054 = vmul.f32 %v4053, 0.6931472
        %v4055 = vlog2.pop %v3189
        %v4056 = vmul.f32 %v4055, 0.6931472
        %v4057 = vlog2.pop %v3190
        %v4058 = vmul.f32 %v4057, 0.6931472
        %v4059 = vlog2.pop %v3191
        %v4060 = vmul.f32 %v4059, 0.6931472
        %v4061 = vlog2.pop %v3192
        %v4062 = vmul.f32 %v4061, 0.6931472
        %v4063 = vlog2.pop %v3193
        %v4064 = vmul.f32 %v4063, 0.6931472
        %v4065 = vlog2.pop %v3194
        %v4066 = vmul.f32 %v4065, 0.6931472
        %v4067 = vlog2.pop %v3195
        %v4068 = vmul.f32 %v4067, 0.6931472
        %v4069 = vlog2.pop %v3196
        %v4070 = vmul.f32 %v4069, 0.6931472
        %v4071 = vlog2.pop %v3197
        %v4072 = vmul.f32 %v4071, 0.6931472
        %v4073 = vlog2.pop %v3198
        %v4074 = vmul.f32 %v4073, 0.6931472
        %v4075 = vlog2.pop %v3199
        %v4076 = vmul.f32 %v4075, 0.6931472
        %v4077 = vlog2.pop %v3200
        %v4078 = vmul.f32 %v4077, 0.6931472
        %v4079 = vlog2.pop %v3201
        %v4080 = vmul.f32 %v4079, 0.6931472
        %v4081 = vlog2.pop %v3202
        %v4082 = vmul.f32 %v4081, 0.6931472
        %v4083 = vlog2.pop %v3203
        %v4084 = vmul.f32 %v4083, 0.6931472
        %v4085 = vlog2.pop %v3204
        %v4086 = vmul.f32 %v4085, 0.6931472
        %v4087 = vlog2.pop %v3205
        %v4088 = vmul.f32 %v4087, 0.6931472
        %v4089 = vlog2.pop %v3206
        %v4090 = vmul.f32 %v4089, 0.6931472
        %v4091 = vlog2.pop %v3207
        %v4092 = vmul.f32 %v4091, 0.6931472
        %v4093 = vlog2.pop %v3208
        %v4094 = vmul.f32 %v4093, 0.6931472
        %v4095 = vlog2.pop %v3209
        %v4096 = vmul.f32 %v4095, 0.6931472
        %v4097 = vlog2.pop %v3210
        %v4098 = vmul.f32 %v4097, 0.6931472
        %v4099 = vlog2.pop %v3211
        %v4100 = vmul.f32 %v4099, 0.6931472
        %v4101 = vlog2.pop %v3212
        %v4102 = vmul.f32 %v4101, 0.6931472
        %v4103 = vlog2.pop %v3213
        %v4104 = vmul.f32 %v4103, 0.6931472
        %v4105 = vlog2.pop %v3214
        %v4106 = vmul.f32 %v4105, 0.6931472
        %v4107 = vlog2.pop %v3215
        %v4108 = vmul.f32 %v4107, 0.6931472
        %v4109 = vlog2.pop %v3216
        %v4110 = vmul.f32 %v4109, 0.6931472
        %v4111 = vlog2.pop %v3217
        %v4112 = vmul.f32 %v4111, 0.6931472
        %v4113 = vlog2.pop %v3218
        %v4114 = vmul.f32 %v4113, 0.6931472
        %v4115 = vlog2.pop %v3219
        %v4116 = vmul.f32 %v4115, 0.6931472
        %v4117 = vlog2.pop %v3220
        %v4118 = vmul.f32 %v4117, 0.6931472
        %v4119 = vlog2.pop %v3221
        %v4120 = vmul.f32 %v4119, 0.6931472
        %v4121 = vlog2.pop %v3222
        %v4122 = vmul.f32 %v4121, 0.6931472
        %v4123 = vlog2.pop %v3223
        %v4124 = vmul.f32 %v4123, 0.6931472
        %v4125 = vlog2.pop %v3224
        %v4126 = vmul.f32 %v4125, 0.6931472
        %v4127 = vlog2.pop %v3225
        %v4128 = vmul.f32 %v4127, 0.6931472
        %v4129 = vlog2.pop %v3226
        %v4130 = vmul.f32 %v4129, 0.6931472
        %v4131 = vlog2.pop %v3227
        %v4132 = vmul.f32 %v4131, 0.6931472
        %v4133 = vlog2.pop %v3228
        %v4134 = vmul.f32 %v4133, 0.6931472
        %v4135 = vlog2.pop %v3229
        %v4136 = vmul.f32 %v4135, 0.6931472
        %v4137 = vlog2.pop %v3230
        %v4138 = vmul.f32 %v4137, 0.6931472
        %v4139 = vlog2.pop %v3231
        %v4140 = vmul.f32 %v4139, 0.6931472
        %v4141 = vlog2.pop %v3232
        %v4142 = vmul.f32 %v4141, 0.6931472
        %v4143 = vlog2.pop %v3233
        %v4144 = vmul.f32 %v4143, 0.6931472
        %v4145 = vlog2.pop %v3234
        %v4146 = vmul.f32 %v4145, 0.6931472
        %v4147 = vlog2.pop %v3235
        %v4148 = vmul.f32 %v4147, 0.6931472
        %v4149 = vlog2.pop %v3236
        %v4150 = vmul.f32 %v4149, 0.6931472
        %v4151 = vlog2.pop %v3237
        %v4152 = vmul.f32 %v4151, 0.6931472
        %v4153 = vlog2.pop %v3238
        %v4154 = vmul.f32 %v4153, 0.6931472
        %v4155 = vlog2.pop %v3239
        %v4156 = vmul.f32 %v4155, 0.6931472
        %v4157 = vlog2.pop %v3240
        %v4158 = vmul.f32 %v4157, 0.6931472
        %v4159 = vlog2.pop %v3241
        %v4160 = vmul.f32 %v4159, 0.6931472
        %v4161 = vlog2.pop %v3242
        %v4162 = vmul.f32 %v4161, 0.6931472
        %v4163 = vlog2.pop %v3243
        %v4164 = vmul.f32 %v4163, 0.6931472
        %v4165 = vlog2.pop %v3244
        %v4166 = vmul.f32 %v4165, 0.6931472
        %v4167 = vlog2.pop %v3245
        %v4168 = vmul.f32 %v4167, 0.6931472
        %v4169 = vlog2.pop %v3246
        %v4170 = vmul.f32 %v4169, 0.6931472
        %v4171 = vlog2.pop %v3247
        %v4172 = vmul.f32 %v4171, 0.6931472
        %v4173 = vlog2.pop %v3248
        %v4174 = vmul.f32 %v4173, 0.6931472
        %v4175 = vlog2.pop %v3249
        %v4176 = vmul.f32 %v4175, 0.6931472
        %v4177 = vlog2.pop %v3250
        %v4178 = vmul.f32 %v4177, 0.6931472
        %v4179 = vlog2.pop %v3251
        %v4180 = vmul.f32 %v4179, 0.6931472
        %v4181 = vlog2.pop %v3252
        %v4182 = vmul.f32 %v4181, 0.6931472
        %v4183 = vlog2.pop %v3253
        %v4184 = vmul.f32 %v4183, 0.6931472
        %v4185 = vlog2.pop %v3254
        %v4186 = vmul.f32 %v4185, 0.6931472
        %v4187 = vlog2.pop %v3255
        %v4188 = vmul.f32 %v4187, 0.6931472
        %v4189 = vlog2.pop %v3256
        %v4190 = vmul.f32 %v4189, 0.6931472
        %v4191 = vlog2.pop %v3257
        %v4192 = vmul.f32 %v4191, 0.6931472
        %v4193 = vlog2.pop %v3258
        %v4194 = vmul.f32 %v4193, 0.6931472
        %v4195 = vlog2.pop %v3259
        %v4196 = vmul.f32 %v4195, 0.6931472
        %v4197 = vlog2.pop %v3260
        %v4198 = vmul.f32 %v4197, 0.6931472
        %v4199 = vlog2.pop %v3261
        %v4200 = vmul.f32 %v4199, 0.6931472
        %v4201 = vlog2.pop %v3262
        %v4202 = vmul.f32 %v4201, 0.6931472
        %v4203 = vlog2.pop %v3263
        %v4204 = vmul.f32 %v4203, 0.6931472
        %v4205 = vlog2.pop %v3264
        %v4206 = vmul.f32 %v4205, 0.6931472
        %v4207 = vlog2.pop %v3265
        %v4208 = vmul.f32 %v4207, 0.6931472
        %v4209 = vlog2.pop %v3266
        %v4210 = vmul.f32 %v4209, 0.6931472
        %v4211 = vlog2.pop %v3267
        %v4212 = vmul.f32 %v4211, 0.6931472
        %v4213 = vlog2.pop %v3268
        %v4214 = vmul.f32 %v4213, 0.6931472
        %v4215 = vlog2.pop %v3269
        %v4216 = vmul.f32 %v4215, 0.6931472
        %v4217 = vlog2.pop %v3270
        %v4218 = vmul.f32 %v4217, 0.6931472
        %v4219 = vlog2.pop %v3271
        %v4220 = vmul.f32 %v4219, 0.6931472
        %v4221 = vlog2.pop %v3272
        %v4222 = vmul.f32 %v4221, 0.6931472
        %v4223 = vlog2.pop %v3273
        %v4224 = vmul.f32 %v4223, 0.6931472
        %v4225 = vlog2.pop %v3274
        %v4226 = vmul.f32 %v4225, 0.6931472
        %v4227 = vlog2.pop %v3275
        %v4228 = vmul.f32 %v4227, 0.6931472
        %v4229 = vlog2.pop %v3276
        %v4230 = vmul.f32 %v4229, 0.6931472
        %v4231 = vlog2.pop %v3277
        %v4232 = vmul.f32 %v4231, 0.6931472
        %v4233 = vlog2.pop %v3278
        %v4234 = vmul.f32 %v4233, 0.6931472
        %v4235 = vlog2.pop %v3279
        %v4236 = vmul.f32 %v4235, 0.6931472
        %v4237 = vlog2.pop %v3280
        %v4238 = vmul.f32 %v4237, 0.6931472
        %v4239 = vlog2.pop %v3281
        %v4240 = vmul.f32 %v4239, 0.6931472
        %v4241 = vlog2.pop %v3282
        %v4242 = vmul.f32 %v4241, 0.6931472
        %v4243 = vlog2.pop %v3283
        %v4244 = vmul.f32 %v4243, 0.6931472
        %v4245 = vlog2.pop %v3284
        %v4246 = vmul.f32 %v4245, 0.6931472
        %v4247 = vlog2.pop %v3285
        %v4248 = vmul.f32 %v4247, 0.6931472
        %v4249 = vlog2.pop %v3286
        %v4250 = vmul.f32 %v4249, 0.6931472
        %v4251 = vlog2.pop %v3287
        %v4252 = vmul.f32 %v4251, 0.6931472
        %v4253 = vlog2.pop %v3288
        %v4254 = vmul.f32 %v4253, 0.6931472
        %v4255 = vlog2.pop %v3289
        %v4256 = vmul.f32 %v4255, 0.6931472
        %v4257 = vlog2.pop %v3290
        %v4258 = vmul.f32 %v4257, 0.6931472
        %v4259 = vlog2.pop %v3291
        %v4260 = vmul.f32 %v4259, 0.6931472
        %v4261 = vlog2.pop %v3292
        %v4262 = vmul.f32 %v4261, 0.6931472
        %v4263 = vlog2.pop %v3293
        %v4264 = vmul.f32 %v4263, 0.6931472
        %v4265 = vlog2.pop %v3294
        %v4266 = vmul.f32 %v4265, 0.6931472
        %v4267 = vlog2.pop %v3295
        %v4268 = vmul.f32 %v4267, 0.6931472
        %v4269 = vlog2.pop %v3296
        %v4270 = vmul.f32 %v4269, 0.6931472
        %v4271 = vlog2.pop %v3297
        %v4272 = vmul.f32 %v4271, 0.6931472
        %v4273 = vlog2.pop %v3298
        %v4274 = vmul.f32 %v4273, 0.6931472
        %v4275 = vlog2.pop %v3299
        %v4276 = vmul.f32 %v4275, 0.6931472
        %v4277 = vlog2.pop %v3300
        %v4278 = vmul.f32 %v4277, 0.6931472
        %v4279 = vlog2.pop %v3301
        %v4280 = vmul.f32 %v4279, 0.6931472
        %v4281 = vlog2.pop %v3302
        %v4282 = vmul.f32 %v4281, 0.6931472
        %v4283 = vlog2.pop %v3303
        %v4284 = vmul.f32 %v4283, 0.6931472
        %v4285 = vlog2.pop %v3304
        %v4286 = vmul.f32 %v4285, 0.6931472
        %v4287 = vlog2.pop %v3305
        %v4288 = vmul.f32 %v4287, 0.6931472
        %v4289 = vlog2.pop %v3306
        %v4290 = vmul.f32 %v4289, 0.6931472
        %v4291 = vlog2.pop %v3307
        %v4292 = vmul.f32 %v4291, 0.6931472
        %v4293 = vlog2.pop %v3308
        %v4294 = vmul.f32 %v4293, 0.6931472
        %v4295 = vlog2.pop %v3309
        %v4296 = vmul.f32 %v4295, 0.6931472
        %v4297 = vlog2.pop %v3310
        %v4298 = vmul.f32 %v4297, 0.6931472
        %v4299 = vlog2.pop %v3311
        %v4300 = vmul.f32 %v4299, 0.6931472
        %v4301 = vlog2.pop %v3312
        %v4302 = vmul.f32 %v4301, 0.6931472
        %v4303 = vlog2.pop %v3313
        %v4304 = vmul.f32 %v4303, 0.6931472
        %v4305 = vlog2.pop %v3314
        %v4306 = vmul.f32 %v4305, 0.6931472
        %v4307 = vlog2.pop %v3315
        %v4308 = vmul.f32 %v4307, 0.6931472
        %v4309 = vlog2.pop %v3316
        %v4310 = vmul.f32 %v4309, 0.6931472
        %v4311 = vlog2.pop %v3317
        %v4312 = vmul.f32 %v4311, 0.6931472
        %v4313 = vlog2.pop %v3318
        %v4314 = vmul.f32 %v4313, 0.6931472
        %v4315 = vlog2.pop %v3319
        %v4316 = vmul.f32 %v4315, 0.6931472
        %v4317 = vlog2.pop %v3320
        %v4318 = vmul.f32 %v4317, 0.6931472
        %v4319 = vlog2.pop %v3321
        %v4320 = vmul.f32 %v4319, 0.6931472
        %v4321 = vlog2.pop %v3322
        %v4322 = vmul.f32 %v4321, 0.6931472
        %v4323 = vlog2.pop %v3323
        %v4324 = vmul.f32 %v4323, 0.6931472
        %v4325 = vlog2.pop %v3324
        %v4326 = vmul.f32 %v4325, 0.6931472
        %v4327 = vlog2.pop %v3325
        %v4328 = vmul.f32 %v4327, 0.6931472
        %v4329 = vlog2.pop %v3326
        %v4330 = vmul.f32 %v4329, 0.6931472
        %v4331 = vlog2.pop %v3327
        %v4332 = vmul.f32 %v4331, 0.6931472
        %v4333 = vlog2.pop %v3328
        %v4334 = vmul.f32 %v4333, 0.6931472
        %v4335 = vlog2.pop %v3329
        %v4336 = vmul.f32 %v4335, 0.6931472
        %v4337 = vlog2.pop %v3330
        %v4338 = vmul.f32 %v4337, 0.6931472
        %v4339 = vlog2.pop %v3331
        %v4340 = vmul.f32 %v4339, 0.6931472
        %v4341 = vlog2.pop %v3332
        %v4342 = vmul.f32 %v4341, 0.6931472
        %v4343 = vlog2.pop %v3333
        %v4344 = vmul.f32 %v4343, 0.6931472
        %v4345 = vlog2.pop %v3334
        %v4346 = vmul.f32 %v4345, 0.6931472
        %v4347 = vlog2.pop %v3335
        %v4348 = vmul.f32 %v4347, 0.6931472
        %v4349 = vlog2.pop %v3336
        %v4350 = vmul.f32 %v4349, 0.6931472
        %v4351 = vlog2.pop %v3337
        %v4352 = vmul.f32 %v4351, 0.6931472
        %v4353 = vlog2.pop %v3338
        %v4354 = vmul.f32 %v4353, 0.6931472
        %v4355 = vlog2.pop %v3339
        %v4356 = vmul.f32 %v4355, 0.6931472
        %v4357 = vlog2.pop %v3340
        %v4358 = vmul.f32 %v4357, 0.6931472
        %v4359 = vlog2.pop %v3341
        %v4360 = vmul.f32 %v4359, 0.6931472
        %v4361 = vlog2.pop %v3342
        %v4362 = vmul.f32 %v4361, 0.6931472
        %v4363 = vlog2.pop %v3343
        %v4364 = vmul.f32 %v4363, 0.6931472
        %v4365 = vlog2.pop %v3344
        %v4366 = vmul.f32 %v4365, 0.6931472
        %v4367 = vlog2.pop %v3345
        %v4368 = vmul.f32 %v4367, 0.6931472
        %v4369 = vlog2.pop %v3346
        %v4370 = vmul.f32 %v4369, 0.6931472
        %v4371 = vmax.f32 %v3348, -100.0
        %v4372 = vmax.f32 %v3350, -100.0
        %v4373 = vmax.f32 %v3352, -100.0
        %v4374 = vmax.f32 %v3354, -100.0
        %v4375 = vmax.f32 %v3356, -100.0
        %v4376 = vmax.f32 %v3358, -100.0
        %v4377 = vmax.f32 %v3360, -100.0
        %v4378 = vmax.f32 %v3362, -100.0
        %v4379 = vmax.f32 %v3364, -100.0
        %v4380 = vmax.f32 %v3366, -100.0
        %v4381 = vmax.f32 %v3368, -100.0
        %v4382 = vmax.f32 %v3370, -100.0
        %v4383 = vmax.f32 %v3372, -100.0
        %v4384 = vmax.f32 %v3374, -100.0
        %v4385 = vmax.f32 %v3376, -100.0
        %v4386 = vmax.f32 %v3378, -100.0
        %v4387 = vmax.f32 %v3380, -100.0
        %v4388 = vmax.f32 %v3382, -100.0
        %v4389 = vmax.f32 %v3384, -100.0
        %v4390 = vmax.f32 %v3386, -100.0
        %v4391 = vmax.f32 %v3388, -100.0
        %v4392 = vmax.f32 %v3390, -100.0
        %v4393 = vmax.f32 %v3392, -100.0
        %v4394 = vmax.f32 %v3394, -100.0
        %v4395 = vmax.f32 %v3396, -100.0
        %v4396 = vmax.f32 %v3398, -100.0
        %v4397 = vmax.f32 %v3400, -100.0
        %v4398 = vmax.f32 %v3402, -100.0
        %v4399 = vmax.f32 %v3404, -100.0
        %v4400 = vmax.f32 %v3406, -100.0
        %v4401 = vmax.f32 %v3408, -100.0
        %v4402 = vmax.f32 %v3410, -100.0
        %v4403 = vmax.f32 %v3412, -100.0
        %v4404 = vmax.f32 %v3414, -100.0
        %v4405 = vmax.f32 %v3416, -100.0
        %v4406 = vmax.f32 %v3418, -100.0
        %v4407 = vmax.f32 %v3420, -100.0
        %v4408 = vmax.f32 %v3422, -100.0
        %v4409 = vmax.f32 %v3424, -100.0
        %v4410 = vmax.f32 %v3426, -100.0
        %v4411 = vmax.f32 %v3428, -100.0
        %v4412 = vmax.f32 %v3430, -100.0
        %v4413 = vmax.f32 %v3432, -100.0
        %v4414 = vmax.f32 %v3434, -100.0
        %v4415 = vmax.f32 %v3436, -100.0
        %v4416 = vmax.f32 %v3438, -100.0
        %v4417 = vmax.f32 %v3440, -100.0
        %v4418 = vmax.f32 %v3442, -100.0
        %v4419 = vmax.f32 %v3444, -100.0
        %v4420 = vmax.f32 %v3446, -100.0
        %v4421 = vmax.f32 %v3448, -100.0
        %v4422 = vmax.f32 %v3450, -100.0
        %v4423 = vmax.f32 %v3452, -100.0
        %v4424 = vmax.f32 %v3454, -100.0
        %v4425 = vmax.f32 %v3456, -100.0
        %v4426 = vmax.f32 %v3458, -100.0
        %v4427 = vmax.f32 %v3460, -100.0
        %v4428 = vmax.f32 %v3462, -100.0
        %v4429 = vmax.f32 %v3464, -100.0
        %v4430 = vmax.f32 %v3466, -100.0
        %v4431 = vmax.f32 %v3468, -100.0
        %v4432 = vmax.f32 %v3470, -100.0
        %v4433 = vmax.f32 %v3472, -100.0
        %v4434 = vmax.f32 %v3474, -100.0
        %v4435 = vmax.f32 %v3476, -100.0
        %v4436 = vmax.f32 %v3478, -100.0
        %v4437 = vmax.f32 %v3480, -100.0
        %v4438 = vmax.f32 %v3482, -100.0
        %v4439 = vmax.f32 %v3484, -100.0
        %v4440 = vmax.f32 %v3486, -100.0
        %v4441 = vmax.f32 %v3488, -100.0
        %v4442 = vmax.f32 %v3490, -100.0
        %v4443 = vmax.f32 %v3492, -100.0
        %v4444 = vmax.f32 %v3494, -100.0
        %v4445 = vmax.f32 %v3496, -100.0
        %v4446 = vmax.f32 %v3498, -100.0
        %v4447 = vmax.f32 %v3500, -100.0
        %v4448 = vmax.f32 %v3502, -100.0
        %v4449 = vmax.f32 %v3504, -100.0
        %v4450 = vmax.f32 %v3506, -100.0
        %v4451 = vmax.f32 %v3508, -100.0
        %v4452 = vmax.f32 %v3510, -100.0
        %v4453 = vmax.f32 %v3512, -100.0
        %v4454 = vmax.f32 %v3514, -100.0
        %v4455 = vmax.f32 %v3516, -100.0
        %v4456 = vmax.f32 %v3518, -100.0
        %v4457 = vmax.f32 %v3520, -100.0
        %v4458 = vmax.f32 %v3522, -100.0
        %v4459 = vmax.f32 %v3524, -100.0
        %v4460 = vmax.f32 %v3526, -100.0
        %v4461 = vmax.f32 %v3528, -100.0
        %v4462 = vmax.f32 %v3530, -100.0
        %v4463 = vmax.f32 %v3532, -100.0
        %v4464 = vmax.f32 %v3534, -100.0
        %v4465 = vmax.f32 %v3536, -100.0
        %v4466 = vmax.f32 %v3538, -100.0
        %v4467 = vmax.f32 %v3540, -100.0
        %v4468 = vmax.f32 %v3542, -100.0
        %v4469 = vmax.f32 %v3544, -100.0
        %v4470 = vmax.f32 %v3546, -100.0
        %v4471 = vmax.f32 %v3548, -100.0
        %v4472 = vmax.f32 %v3550, -100.0
        %v4473 = vmax.f32 %v3552, -100.0
        %v4474 = vmax.f32 %v3554, -100.0
        %v4475 = vmax.f32 %v3556, -100.0
        %v4476 = vmax.f32 %v3558, -100.0
        %v4477 = vmax.f32 %v3560, -100.0
        %v4478 = vmax.f32 %v3562, -100.0
        %v4479 = vmax.f32 %v3564, -100.0
        %v4480 = vmax.f32 %v3566, -100.0
        %v4481 = vmax.f32 %v3568, -100.0
        %v4482 = vmax.f32 %v3570, -100.0
        %v4483 = vmax.f32 %v3572, -100.0
        %v4484 = vmax.f32 %v3574, -100.0
        %v4485 = vmax.f32 %v3576, -100.0
        %v4486 = vmax.f32 %v3578, -100.0
        %v4487 = vmax.f32 %v3580, -100.0
        %v4488 = vmax.f32 %v3582, -100.0
        %v4489 = vmax.f32 %v3584, -100.0
        %v4490 = vmax.f32 %v3586, -100.0
        %v4491 = vmax.f32 %v3588, -100.0
        %v4492 = vmax.f32 %v3590, -100.0
        %v4493 = vmax.f32 %v3592, -100.0
        %v4494 = vmax.f32 %v3594, -100.0
        %v4495 = vmax.f32 %v3596, -100.0
        %v4496 = vmax.f32 %v3598, -100.0
        %v4497 = vmax.f32 %v3600, -100.0
        %v4498 = vmax.f32 %v3602, -100.0
        %v4499 = vmax.f32 %v3604, -100.0
        %v4500 = vmax.f32 %v3606, -100.0
        %v4501 = vmax.f32 %v3608, -100.0
        %v4502 = vmax.f32 %v3610, -100.0
        %v4503 = vmax.f32 %v3612, -100.0
        %v4504 = vmax.f32 %v3614, -100.0
        %v4505 = vmax.f32 %v3616, -100.0
        %v4506 = vmax.f32 %v3618, -100.0
        %v4507 = vmax.f32 %v3620, -100.0
        %v4508 = vmax.f32 %v3622, -100.0
        %v4509 = vmax.f32 %v3624, -100.0
        %v4510 = vmax.f32 %v3626, -100.0
        %v4511 = vmax.f32 %v3628, -100.0
        %v4512 = vmax.f32 %v3630, -100.0
        %v4513 = vmax.f32 %v3632, -100.0
        %v4514 = vmax.f32 %v3634, -100.0
        %v4515 = vmax.f32 %v3636, -100.0
        %v4516 = vmax.f32 %v3638, -100.0
        %v4517 = vmax.f32 %v3640, -100.0
        %v4518 = vmax.f32 %v3642, -100.0
        %v4519 = vmax.f32 %v3644, -100.0
        %v4520 = vmax.f32 %v3646, -100.0
        %v4521 = vmax.f32 %v3648, -100.0
        %v4522 = vmax.f32 %v3650, -100.0
        %v4523 = vmax.f32 %v3652, -100.0
        %v4524 = vmax.f32 %v3654, -100.0
        %v4525 = vmax.f32 %v3656, -100.0
        %v4526 = vmax.f32 %v3658, -100.0
        %v4527 = vmax.f32 %v3660, -100.0
        %v4528 = vmax.f32 %v3662, -100.0
        %v4529 = vmax.f32 %v3664, -100.0
        %v4530 = vmax.f32 %v3666, -100.0
        %v4531 = vmax.f32 %v3668, -100.0
        %v4532 = vmax.f32 %v3670, -100.0
        %v4533 = vmax.f32 %v3672, -100.0
        %v4534 = vmax.f32 %v3674, -100.0
        %v4535 = vmax.f32 %v3676, -100.0
        %v4536 = vmax.f32 %v3678, -100.0
        %v4537 = vmax.f32 %v3680, -100.0
        %v4538 = vmax.f32 %v3682, -100.0
        %v4539 = vmax.f32 %v3684, -100.0
        %v4540 = vmax.f32 %v3686, -100.0
        %v4541 = vmax.f32 %v3688, -100.0
        %v4542 = vmax.f32 %v3690, -100.0
        %v4543 = vmax.f32 %v3692, -100.0
        %v4544 = vmax.f32 %v3694, -100.0
        %v4545 = vmax.f32 %v3696, -100.0
        %v4546 = vmax.f32 %v3698, -100.0
        %v4547 = vmax.f32 %v3700, -100.0
        %v4548 = vmax.f32 %v3702, -100.0
        %v4549 = vmax.f32 %v3704, -100.0
        %v4550 = vmax.f32 %v3706, -100.0
        %v4551 = vmax.f32 %v3708, -100.0
        %v4552 = vmax.f32 %v3710, -100.0
        %v4553 = vmax.f32 %v3712, -100.0
        %v4554 = vmax.f32 %v3714, -100.0
        %v4555 = vmax.f32 %v3716, -100.0
        %v4556 = vmax.f32 %v3718, -100.0
        %v4557 = vmax.f32 %v3720, -100.0
        %v4558 = vmax.f32 %v3722, -100.0
        %v4559 = vmax.f32 %v3724, -100.0
        %v4560 = vmax.f32 %v3726, -100.0
        %v4561 = vmax.f32 %v3728, -100.0
        %v4562 = vmax.f32 %v3730, -100.0
        %v4563 = vmax.f32 %v3732, -100.0
        %v4564 = vmax.f32 %v3734, -100.0
        %v4565 = vmax.f32 %v3736, -100.0
        %v4566 = vmax.f32 %v3738, -100.0
        %v4567 = vmax.f32 %v3740, -100.0
        %v4568 = vmax.f32 %v3742, -100.0
        %v4569 = vmax.f32 %v3744, -100.0
        %v4570 = vmax.f32 %v3746, -100.0
        %v4571 = vmax.f32 %v3748, -100.0
        %v4572 = vmax.f32 %v3750, -100.0
        %v4573 = vmax.f32 %v3752, -100.0
        %v4574 = vmax.f32 %v3754, -100.0
        %v4575 = vmax.f32 %v3756, -100.0
        %v4576 = vmax.f32 %v3758, -100.0
        %v4577 = vmax.f32 %v3760, -100.0
        %v4578 = vmax.f32 %v3762, -100.0
        %v4579 = vmax.f32 %v3764, -100.0
        %v4580 = vmax.f32 %v3766, -100.0
        %v4581 = vmax.f32 %v3768, -100.0
        %v4582 = vmax.f32 %v3770, -100.0
        %v4583 = vmax.f32 %v3772, -100.0
        %v4584 = vmax.f32 %v3774, -100.0
        %v4585 = vmax.f32 %v3776, -100.0
        %v4586 = vmax.f32 %v3778, -100.0
        %v4587 = vmax.f32 %v3780, -100.0
        %v4588 = vmax.f32 %v3782, -100.0
        %v4589 = vmax.f32 %v3784, -100.0
        %v4590 = vmax.f32 %v3786, -100.0
        %v4591 = vmax.f32 %v3788, -100.0
        %v4592 = vmax.f32 %v3790, -100.0
        %v4593 = vmax.f32 %v3792, -100.0
        %v4594 = vmax.f32 %v3794, -100.0
        %v4595 = vmax.f32 %v3796, -100.0
        %v4596 = vmax.f32 %v3798, -100.0
        %v4597 = vmax.f32 %v3800, -100.0
        %v4598 = vmax.f32 %v3802, -100.0
        %v4599 = vmax.f32 %v3804, -100.0
        %v4600 = vmax.f32 %v3806, -100.0
        %v4601 = vmax.f32 %v3808, -100.0
        %v4602 = vmax.f32 %v3810, -100.0
        %v4603 = vmax.f32 %v3812, -100.0
        %v4604 = vmax.f32 %v3814, -100.0
        %v4605 = vmax.f32 %v3816, -100.0
        %v4606 = vmax.f32 %v3818, -100.0
        %v4607 = vmax.f32 %v3820, -100.0
        %v4608 = vmax.f32 %v3822, -100.0
        %v4609 = vmax.f32 %v3824, -100.0
        %v4610 = vmax.f32 %v3826, -100.0
        %v4611 = vmax.f32 %v3828, -100.0
        %v4612 = vmax.f32 %v3830, -100.0
        %v4613 = vmax.f32 %v3832, -100.0
        %v4614 = vmax.f32 %v3834, -100.0
        %v4615 = vmax.f32 %v3836, -100.0
        %v4616 = vmax.f32 %v3838, -100.0
        %v4617 = vmax.f32 %v3840, -100.0
        %v4618 = vmax.f32 %v3842, -100.0
        %v4619 = vmax.f32 %v3844, -100.0
        %v4620 = vmax.f32 %v3846, -100.0
        %v4621 = vmax.f32 %v3848, -100.0
        %v4622 = vmax.f32 %v3850, -100.0
        %v4623 = vmax.f32 %v3852, -100.0
        %v4624 = vmax.f32 %v3854, -100.0
        %v4625 = vmax.f32 %v3856, -100.0
        %v4626 = vmax.f32 %v3858, -100.0
        %v4627 = vmax.f32 %v3860, -100.0
        %v4628 = vmax.f32 %v3862, -100.0
        %v4629 = vmax.f32 %v3864, -100.0
        %v4630 = vmax.f32 %v3866, -100.0
        %v4631 = vmax.f32 %v3868, -100.0
        %v4632 = vmax.f32 %v3870, -100.0
        %v4633 = vmax.f32 %v3872, -100.0
        %v4634 = vmax.f32 %v3874, -100.0
        %v4635 = vmax.f32 %v3876, -100.0
        %v4636 = vmax.f32 %v3878, -100.0
        %v4637 = vmax.f32 %v3880, -100.0
        %v4638 = vmax.f32 %v3882, -100.0
        %v4639 = vmax.f32 %v3884, -100.0
        %v4640 = vmax.f32 %v3886, -100.0
        %v4641 = vmax.f32 %v3888, -100.0
        %v4642 = vmax.f32 %v3890, -100.0
        %v4643 = vmax.f32 %v3892, -100.0
        %v4644 = vmax.f32 %v3894, -100.0
        %v4645 = vmax.f32 %v3896, -100.0
        %v4646 = vmax.f32 %v3898, -100.0
        %v4647 = vmax.f32 %v3900, -100.0
        %v4648 = vmax.f32 %v3902, -100.0
        %v4649 = vmax.f32 %v3904, -100.0
        %v4650 = vmax.f32 %v3906, -100.0
        %v4651 = vmax.f32 %v3908, -100.0
        %v4652 = vmax.f32 %v3910, -100.0
        %v4653 = vmax.f32 %v3912, -100.0
        %v4654 = vmax.f32 %v3914, -100.0
        %v4655 = vmax.f32 %v3916, -100.0
        %v4656 = vmax.f32 %v3918, -100.0
        %v4657 = vmax.f32 %v3920, -100.0
        %v4658 = vmax.f32 %v3922, -100.0
        %v4659 = vmax.f32 %v3924, -100.0
        %v4660 = vmax.f32 %v3926, -100.0
        %v4661 = vmax.f32 %v3928, -100.0
        %v4662 = vmax.f32 %v3930, -100.0
        %v4663 = vmax.f32 %v3932, -100.0
        %v4664 = vmax.f32 %v3934, -100.0
        %v4665 = vmax.f32 %v3936, -100.0
        %v4666 = vmax.f32 %v3938, -100.0
        %v4667 = vmax.f32 %v3940, -100.0
        %v4668 = vmax.f32 %v3942, -100.0
        %v4669 = vmax.f32 %v3944, -100.0
        %v4670 = vmax.f32 %v3946, -100.0
        %v4671 = vmax.f32 %v3948, -100.0
        %v4672 = vmax.f32 %v3950, -100.0
        %v4673 = vmax.f32 %v3952, -100.0
        %v4674 = vmax.f32 %v3954, -100.0
        %v4675 = vmax.f32 %v3956, -100.0
        %v4676 = vmax.f32 %v3958, -100.0
        %v4677 = vmax.f32 %v3960, -100.0
        %v4678 = vmax.f32 %v3962, -100.0
        %v4679 = vmax.f32 %v3964, -100.0
        %v4680 = vmax.f32 %v3966, -100.0
        %v4681 = vmax.f32 %v3968, -100.0
        %v4682 = vmax.f32 %v3970, -100.0
        %v4683 = vmax.f32 %v3972, -100.0
        %v4684 = vmax.f32 %v3974, -100.0
        %v4685 = vmax.f32 %v3976, -100.0
        %v4686 = vmax.f32 %v3978, -100.0
        %v4687 = vmax.f32 %v3980, -100.0
        %v4688 = vmax.f32 %v3982, -100.0
        %v4689 = vmax.f32 %v3984, -100.0
        %v4690 = vmax.f32 %v3986, -100.0
        %v4691 = vmax.f32 %v3988, -100.0
        %v4692 = vmax.f32 %v3990, -100.0
        %v4693 = vmax.f32 %v3992, -100.0
        %v4694 = vmax.f32 %v3994, -100.0
        %v4695 = vmax.f32 %v3996, -100.0
        %v4696 = vmax.f32 %v3998, -100.0
        %v4697 = vmax.f32 %v4000, -100.0
        %v4698 = vmax.f32 %v4002, -100.0
        %v4699 = vmax.f32 %v4004, -100.0
        %v4700 = vmax.f32 %v4006, -100.0
        %v4701 = vmax.f32 %v4008, -100.0
        %v4702 = vmax.f32 %v4010, -100.0
        %v4703 = vmax.f32 %v4012, -100.0
        %v4704 = vmax.f32 %v4014, -100.0
        %v4705 = vmax.f32 %v4016, -100.0
        %v4706 = vmax.f32 %v4018, -100.0
        %v4707 = vmax.f32 %v4020, -100.0
        %v4708 = vmax.f32 %v4022, -100.0
        %v4709 = vmax.f32 %v4024, -100.0
        %v4710 = vmax.f32 %v4026, -100.0
        %v4711 = vmax.f32 %v4028, -100.0
        %v4712 = vmax.f32 %v4030, -100.0
        %v4713 = vmax.f32 %v4032, -100.0
        %v4714 = vmax.f32 %v4034, -100.0
        %v4715 = vmax.f32 %v4036, -100.0
        %v4716 = vmax.f32 %v4038, -100.0
        %v4717 = vmax.f32 %v4040, -100.0
        %v4718 = vmax.f32 %v4042, -100.0
        %v4719 = vmax.f32 %v4044, -100.0
        %v4720 = vmax.f32 %v4046, -100.0
        %v4721 = vmax.f32 %v4048, -100.0
        %v4722 = vmax.f32 %v4050, -100.0
        %v4723 = vmax.f32 %v4052, -100.0
        %v4724 = vmax.f32 %v4054, -100.0
        %v4725 = vmax.f32 %v4056, -100.0
        %v4726 = vmax.f32 %v4058, -100.0
        %v4727 = vmax.f32 %v4060, -100.0
        %v4728 = vmax.f32 %v4062, -100.0
        %v4729 = vmax.f32 %v4064, -100.0
        %v4730 = vmax.f32 %v4066, -100.0
        %v4731 = vmax.f32 %v4068, -100.0
        %v4732 = vmax.f32 %v4070, -100.0
        %v4733 = vmax.f32 %v4072, -100.0
        %v4734 = vmax.f32 %v4074, -100.0
        %v4735 = vmax.f32 %v4076, -100.0
        %v4736 = vmax.f32 %v4078, -100.0
        %v4737 = vmax.f32 %v4080, -100.0
        %v4738 = vmax.f32 %v4082, -100.0
        %v4739 = vmax.f32 %v4084, -100.0
        %v4740 = vmax.f32 %v4086, -100.0
        %v4741 = vmax.f32 %v4088, -100.0
        %v4742 = vmax.f32 %v4090, -100.0
        %v4743 = vmax.f32 %v4092, -100.0
        %v4744 = vmax.f32 %v4094, -100.0
        %v4745 = vmax.f32 %v4096, -100.0
        %v4746 = vmax.f32 %v4098, -100.0
        %v4747 = vmax.f32 %v4100, -100.0
        %v4748 = vmax.f32 %v4102, -100.0
        %v4749 = vmax.f32 %v4104, -100.0
        %v4750 = vmax.f32 %v4106, -100.0
        %v4751 = vmax.f32 %v4108, -100.0
        %v4752 = vmax.f32 %v4110, -100.0
        %v4753 = vmax.f32 %v4112, -100.0
        %v4754 = vmax.f32 %v4114, -100.0
        %v4755 = vmax.f32 %v4116, -100.0
        %v4756 = vmax.f32 %v4118, -100.0
        %v4757 = vmax.f32 %v4120, -100.0
        %v4758 = vmax.f32 %v4122, -100.0
        %v4759 = vmax.f32 %v4124, -100.0
        %v4760 = vmax.f32 %v4126, -100.0
        %v4761 = vmax.f32 %v4128, -100.0
        %v4762 = vmax.f32 %v4130, -100.0
        %v4763 = vmax.f32 %v4132, -100.0
        %v4764 = vmax.f32 %v4134, -100.0
        %v4765 = vmax.f32 %v4136, -100.0
        %v4766 = vmax.f32 %v4138, -100.0
        %v4767 = vmax.f32 %v4140, -100.0
        %v4768 = vmax.f32 %v4142, -100.0
        %v4769 = vmax.f32 %v4144, -100.0
        %v4770 = vmax.f32 %v4146, -100.0
        %v4771 = vmax.f32 %v4148, -100.0
        %v4772 = vmax.f32 %v4150, -100.0
        %v4773 = vmax.f32 %v4152, -100.0
        %v4774 = vmax.f32 %v4154, -100.0
        %v4775 = vmax.f32 %v4156, -100.0
        %v4776 = vmax.f32 %v4158, -100.0
        %v4777 = vmax.f32 %v4160, -100.0
        %v4778 = vmax.f32 %v4162, -100.0
        %v4779 = vmax.f32 %v4164, -100.0
        %v4780 = vmax.f32 %v4166, -100.0
        %v4781 = vmax.f32 %v4168, -100.0
        %v4782 = vmax.f32 %v4170, -100.0
        %v4783 = vmax.f32 %v4172, -100.0
        %v4784 = vmax.f32 %v4174, -100.0
        %v4785 = vmax.f32 %v4176, -100.0
        %v4786 = vmax.f32 %v4178, -100.0
        %v4787 = vmax.f32 %v4180, -100.0
        %v4788 = vmax.f32 %v4182, -100.0
        %v4789 = vmax.f32 %v4184, -100.0
        %v4790 = vmax.f32 %v4186, -100.0
        %v4791 = vmax.f32 %v4188, -100.0
        %v4792 = vmax.f32 %v4190, -100.0
        %v4793 = vmax.f32 %v4192, -100.0
        %v4794 = vmax.f32 %v4194, -100.0
        %v4795 = vmax.f32 %v4196, -100.0
        %v4796 = vmax.f32 %v4198, -100.0
        %v4797 = vmax.f32 %v4200, -100.0
        %v4798 = vmax.f32 %v4202, -100.0
        %v4799 = vmax.f32 %v4204, -100.0
        %v4800 = vmax.f32 %v4206, -100.0
        %v4801 = vmax.f32 %v4208, -100.0
        %v4802 = vmax.f32 %v4210, -100.0
        %v4803 = vmax.f32 %v4212, -100.0
        %v4804 = vmax.f32 %v4214, -100.0
        %v4805 = vmax.f32 %v4216, -100.0
        %v4806 = vmax.f32 %v4218, -100.0
        %v4807 = vmax.f32 %v4220, -100.0
        %v4808 = vmax.f32 %v4222, -100.0
        %v4809 = vmax.f32 %v4224, -100.0
        %v4810 = vmax.f32 %v4226, -100.0
        %v4811 = vmax.f32 %v4228, -100.0
        %v4812 = vmax.f32 %v4230, -100.0
        %v4813 = vmax.f32 %v4232, -100.0
        %v4814 = vmax.f32 %v4234, -100.0
        %v4815 = vmax.f32 %v4236, -100.0
        %v4816 = vmax.f32 %v4238, -100.0
        %v4817 = vmax.f32 %v4240, -100.0
        %v4818 = vmax.f32 %v4242, -100.0
        %v4819 = vmax.f32 %v4244, -100.0
        %v4820 = vmax.f32 %v4246, -100.0
        %v4821 = vmax.f32 %v4248, -100.0
        %v4822 = vmax.f32 %v4250, -100.0
        %v4823 = vmax.f32 %v4252, -100.0
        %v4824 = vmax.f32 %v4254, -100.0
        %v4825 = vmax.f32 %v4256, -100.0
        %v4826 = vmax.f32 %v4258, -100.0
        %v4827 = vmax.f32 %v4260, -100.0
        %v4828 = vmax.f32 %v4262, -100.0
        %v4829 = vmax.f32 %v4264, -100.0
        %v4830 = vmax.f32 %v4266, -100.0
        %v4831 = vmax.f32 %v4268, -100.0
        %v4832 = vmax.f32 %v4270, -100.0
        %v4833 = vmax.f32 %v4272, -100.0
        %v4834 = vmax.f32 %v4274, -100.0
        %v4835 = vmax.f32 %v4276, -100.0
        %v4836 = vmax.f32 %v4278, -100.0
        %v4837 = vmax.f32 %v4280, -100.0
        %v4838 = vmax.f32 %v4282, -100.0
        %v4839 = vmax.f32 %v4284, -100.0
        %v4840 = vmax.f32 %v4286, -100.0
        %v4841 = vmax.f32 %v4288, -100.0
        %v4842 = vmax.f32 %v4290, -100.0
        %v4843 = vmax.f32 %v4292, -100.0
        %v4844 = vmax.f32 %v4294, -100.0
        %v4845 = vmax.f32 %v4296, -100.0
        %v4846 = vmax.f32 %v4298, -100.0
        %v4847 = vmax.f32 %v4300, -100.0
        %v4848 = vmax.f32 %v4302, -100.0
        %v4849 = vmax.f32 %v4304, -100.0
        %v4850 = vmax.f32 %v4306, -100.0
        %v4851 = vmax.f32 %v4308, -100.0
        %v4852 = vmax.f32 %v4310, -100.0
        %v4853 = vmax.f32 %v4312, -100.0
        %v4854 = vmax.f32 %v4314, -100.0
        %v4855 = vmax.f32 %v4316, -100.0
        %v4856 = vmax.f32 %v4318, -100.0
        %v4857 = vmax.f32 %v4320, -100.0
        %v4858 = vmax.f32 %v4322, -100.0
        %v4859 = vmax.f32 %v4324, -100.0
        %v4860 = vmax.f32 %v4326, -100.0
        %v4861 = vmax.f32 %v4328, -100.0
        %v4862 = vmax.f32 %v4330, -100.0
        %v4863 = vmax.f32 %v4332, -100.0
        %v4864 = vmax.f32 %v4334, -100.0
        %v4865 = vmax.f32 %v4336, -100.0
        %v4866 = vmax.f32 %v4338, -100.0
        %v4867 = vmax.f32 %v4340, -100.0
        %v4868 = vmax.f32 %v4342, -100.0
        %v4869 = vmax.f32 %v4344, -100.0
        %v4870 = vmax.f32 %v4346, -100.0
        %v4871 = vmax.f32 %v4348, -100.0
        %v4872 = vmax.f32 %v4350, -100.0
        %v4873 = vmax.f32 %v4352, -100.0
        %v4874 = vmax.f32 %v4354, -100.0
        %v4875 = vmax.f32 %v4356, -100.0
        %v4876 = vmax.f32 %v4358, -100.0
        %v4877 = vmax.f32 %v4360, -100.0
        %v4878 = vmax.f32 %v4362, -100.0
        %v4879 = vmax.f32 %v4364, -100.0
        %v4880 = vmax.f32 %v4366, -100.0
        %v4881 = vmax.f32 %v4368, -100.0
        %v4882 = vmax.f32 %v4370, -100.0
        %v4883 = vsub.f32 %v2323, %v4371
        %v4884 = vsub.f32 %v2324, %v4372
        %v4885 = vsub.f32 %v2325, %v4373
        %v4886 = vsub.f32 %v2326, %v4374
        %v4887 = vsub.f32 %v2327, %v4375
        %v4888 = vsub.f32 %v2328, %v4376
        %v4889 = vsub.f32 %v2329, %v4377
        %v4890 = vsub.f32 %v2330, %v4378
        %v4891 = vsub.f32 %v2331, %v4379
        %v4892 = vsub.f32 %v2332, %v4380
        %v4893 = vsub.f32 %v2333, %v4381
        %v4894 = vsub.f32 %v2334, %v4382
        %v4895 = vsub.f32 %v2335, %v4383
        %v4896 = vsub.f32 %v2336, %v4384
        %v4897 = vsub.f32 %v2337, %v4385
        %v4898 = vsub.f32 %v2338, %v4386
        %v4899 = vsub.f32 %v2339, %v4387
        %v4900 = vsub.f32 %v2340, %v4388
        %v4901 = vsub.f32 %v2341, %v4389
        %v4902 = vsub.f32 %v2342, %v4390
        %v4903 = vsub.f32 %v2343, %v4391
        %v4904 = vsub.f32 %v2344, %v4392
        %v4905 = vsub.f32 %v2345, %v4393
        %v4906 = vsub.f32 %v2346, %v4394
        %v4907 = vsub.f32 %v2347, %v4395
        %v4908 = vsub.f32 %v2348, %v4396
        %v4909 = vsub.f32 %v2349, %v4397
        %v4910 = vsub.f32 %v2350, %v4398
        %v4911 = vsub.f32 %v2351, %v4399
        %v4912 = vsub.f32 %v2352, %v4400
        %v4913 = vsub.f32 %v2353, %v4401
        %v4914 = vsub.f32 %v2354, %v4402
        %v4915 = vsub.f32 %v2355, %v4403
        %v4916 = vsub.f32 %v2356, %v4404
        %v4917 = vsub.f32 %v2357, %v4405
        %v4918 = vsub.f32 %v2358, %v4406
        %v4919 = vsub.f32 %v2359, %v4407
        %v4920 = vsub.f32 %v2360, %v4408
        %v4921 = vsub.f32 %v2361, %v4409
        %v4922 = vsub.f32 %v2362, %v4410
        %v4923 = vsub.f32 %v2363, %v4411
        %v4924 = vsub.f32 %v2364, %v4412
        %v4925 = vsub.f32 %v2365, %v4413
        %v4926 = vsub.f32 %v2366, %v4414
        %v4927 = vsub.f32 %v2367, %v4415
        %v4928 = vsub.f32 %v2368, %v4416
        %v4929 = vsub.f32 %v2369, %v4417
        %v4930 = vsub.f32 %v2370, %v4418
        %v4931 = vsub.f32 %v2371, %v4419
        %v4932 = vsub.f32 %v2372, %v4420
        %v4933 = vsub.f32 %v2373, %v4421
        %v4934 = vsub.f32 %v2374, %v4422
        %v4935 = vsub.f32 %v2375, %v4423
        %v4936 = vsub.f32 %v2376, %v4424
        %v4937 = vsub.f32 %v2377, %v4425
        %v4938 = vsub.f32 %v2378, %v4426
        %v4939 = vsub.f32 %v2379, %v4427
        %v4940 = vsub.f32 %v2380, %v4428
        %v4941 = vsub.f32 %v2381, %v4429
        %v4942 = vsub.f32 %v2382, %v4430
        %v4943 = vsub.f32 %v2383, %v4431
        %v4944 = vsub.f32 %v2384, %v4432
        %v4945 = vsub.f32 %v2385, %v4433
        %v4946 = vsub.f32 %v2386, %v4434
        %v4947 = vsub.f32 %v2387, %v4435
        %v4948 = vsub.f32 %v2388, %v4436
        %v4949 = vsub.f32 %v2389, %v4437
        %v4950 = vsub.f32 %v2390, %v4438
        %v4951 = vsub.f32 %v2391, %v4439
        %v4952 = vsub.f32 %v2392, %v4440
        %v4953 = vsub.f32 %v2393, %v4441
        %v4954 = vsub.f32 %v2394, %v4442
        %v4955 = vsub.f32 %v2395, %v4443
        %v4956 = vsub.f32 %v2396, %v4444
        %v4957 = vsub.f32 %v2397, %v4445
        %v4958 = vsub.f32 %v2398, %v4446
        %v4959 = vsub.f32 %v2399, %v4447
        %v4960 = vsub.f32 %v2400, %v4448
        %v4961 = vsub.f32 %v2401, %v4449
        %v4962 = vsub.f32 %v2402, %v4450
        %v4963 = vsub.f32 %v2403, %v4451
        %v4964 = vsub.f32 %v2404, %v4452
        %v4965 = vsub.f32 %v2405, %v4453
        %v4966 = vsub.f32 %v2406, %v4454
        %v4967 = vsub.f32 %v2407, %v4455
        %v4968 = vsub.f32 %v2408, %v4456
        %v4969 = vsub.f32 %v2409, %v4457
        %v4970 = vsub.f32 %v2410, %v4458
        %v4971 = vsub.f32 %v2411, %v4459
        %v4972 = vsub.f32 %v2412, %v4460
        %v4973 = vsub.f32 %v2413, %v4461
        %v4974 = vsub.f32 %v2414, %v4462
        %v4975 = vsub.f32 %v2415, %v4463
        %v4976 = vsub.f32 %v2416, %v4464
        %v4977 = vsub.f32 %v2417, %v4465
        %v4978 = vsub.f32 %v2418, %v4466
        %v4979 = vsub.f32 %v2419, %v4467
        %v4980 = vsub.f32 %v2420, %v4468
        %v4981 = vsub.f32 %v2421, %v4469
        %v4982 = vsub.f32 %v2422, %v4470
        %v4983 = vsub.f32 %v2423, %v4471
        %v4984 = vsub.f32 %v2424, %v4472
        %v4985 = vsub.f32 %v2425, %v4473
        %v4986 = vsub.f32 %v2426, %v4474
        %v4987 = vsub.f32 %v2427, %v4475
        %v4988 = vsub.f32 %v2428, %v4476
        %v4989 = vsub.f32 %v2429, %v4477
        %v4990 = vsub.f32 %v2430, %v4478
        %v4991 = vsub.f32 %v2431, %v4479
        %v4992 = vsub.f32 %v2432, %v4480
        %v4993 = vsub.f32 %v2433, %v4481
        %v4994 = vsub.f32 %v2434, %v4482
        %v4995 = vsub.f32 %v2435, %v4483
        %v4996 = vsub.f32 %v2436, %v4484
        %v4997 = vsub.f32 %v2437, %v4485
        %v4998 = vsub.f32 %v2438, %v4486
        %v4999 = vsub.f32 %v2439, %v4487
        %v5000 = vsub.f32 %v2440, %v4488
        %v5001 = vsub.f32 %v2441, %v4489
        %v5002 = vsub.f32 %v2442, %v4490
        %v5003 = vsub.f32 %v2443, %v4491
        %v5004 = vsub.f32 %v2444, %v4492
        %v5005 = vsub.f32 %v2445, %v4493
        %v5006 = vsub.f32 %v2446, %v4494
        %v5007 = vsub.f32 %v2447, %v4495
        %v5008 = vsub.f32 %v2448, %v4496
        %v5009 = vsub.f32 %v2449, %v4497
        %v5010 = vsub.f32 %v2450, %v4498
        %v5011 = vsub.f32 %v2451, %v4499
        %v5012 = vsub.f32 %v2452, %v4500
        %v5013 = vsub.f32 %v2453, %v4501
        %v5014 = vsub.f32 %v2454, %v4502
        %v5015 = vsub.f32 %v2455, %v4503
        %v5016 = vsub.f32 %v2456, %v4504
        %v5017 = vsub.f32 %v2457, %v4505
        %v5018 = vsub.f32 %v2458, %v4506
        %v5019 = vsub.f32 %v2459, %v4507
        %v5020 = vsub.f32 %v2460, %v4508
        %v5021 = vsub.f32 %v2461, %v4509
        %v5022 = vsub.f32 %v2462, %v4510
        %v5023 = vsub.f32 %v2463, %v4511
        %v5024 = vsub.f32 %v2464, %v4512
        %v5025 = vsub.f32 %v2465, %v4513
        %v5026 = vsub.f32 %v2466, %v4514
        %v5027 = vsub.f32 %v2467, %v4515
        %v5028 = vsub.f32 %v2468, %v4516
        %v5029 = vsub.f32 %v2469, %v4517
        %v5030 = vsub.f32 %v2470, %v4518
        %v5031 = vsub.f32 %v2471, %v4519
        %v5032 = vsub.f32 %v2472, %v4520
        %v5033 = vsub.f32 %v2473, %v4521
        %v5034 = vsub.f32 %v2474, %v4522
        %v5035 = vsub.f32 %v2475, %v4523
        %v5036 = vsub.f32 %v2476, %v4524
        %v5037 = vsub.f32 %v2477, %v4525
        %v5038 = vsub.f32 %v2478, %v4526
        %v5039 = vsub.f32 %v2479, %v4527
        %v5040 = vsub.f32 %v2480, %v4528
        %v5041 = vsub.f32 %v2481, %v4529
        %v5042 = vsub.f32 %v2482, %v4530
        %v5043 = vsub.f32 %v2483, %v4531
        %v5044 = vsub.f32 %v2484, %v4532
        %v5045 = vsub.f32 %v2485, %v4533
        %v5046 = vsub.f32 %v2486, %v4534
        %v5047 = vsub.f32 %v2487, %v4535
        %v5048 = vsub.f32 %v2488, %v4536
        %v5049 = vsub.f32 %v2489, %v4537
        %v5050 = vsub.f32 %v2490, %v4538
        %v5051 = vsub.f32 %v2491, %v4539
        %v5052 = vsub.f32 %v2492, %v4540
        %v5053 = vsub.f32 %v2493, %v4541
        %v5054 = vsub.f32 %v2494, %v4542
        %v5055 = vsub.f32 %v2495, %v4543
        %v5056 = vsub.f32 %v2496, %v4544
        %v5057 = vsub.f32 %v2497, %v4545
        %v5058 = vsub.f32 %v2498, %v4546
        %v5059 = vsub.f32 %v2499, %v4547
        %v5060 = vsub.f32 %v2500, %v4548
        %v5061 = vsub.f32 %v2501, %v4549
        %v5062 = vsub.f32 %v2502, %v4550
        %v5063 = vsub.f32 %v2503, %v4551
        %v5064 = vsub.f32 %v2504, %v4552
        %v5065 = vsub.f32 %v2505, %v4553
        %v5066 = vsub.f32 %v2506, %v4554
        %v5067 = vsub.f32 %v2507, %v4555
        %v5068 = vsub.f32 %v2508, %v4556
        %v5069 = vsub.f32 %v2509, %v4557
        %v5070 = vsub.f32 %v2510, %v4558
        %v5071 = vsub.f32 %v2511, %v4559
        %v5072 = vsub.f32 %v2512, %v4560
        %v5073 = vsub.f32 %v2513, %v4561
        %v5074 = vsub.f32 %v2514, %v4562
        %v5075 = vsub.f32 %v2515, %v4563
        %v5076 = vsub.f32 %v2516, %v4564
        %v5077 = vsub.f32 %v2517, %v4565
        %v5078 = vsub.f32 %v2518, %v4566
        %v5079 = vsub.f32 %v2519, %v4567
        %v5080 = vsub.f32 %v2520, %v4568
        %v5081 = vsub.f32 %v2521, %v4569
        %v5082 = vsub.f32 %v2522, %v4570
        %v5083 = vsub.f32 %v2523, %v4571
        %v5084 = vsub.f32 %v2524, %v4572
        %v5085 = vsub.f32 %v2525, %v4573
        %v5086 = vsub.f32 %v2526, %v4574
        %v5087 = vsub.f32 %v2527, %v4575
        %v5088 = vsub.f32 %v2528, %v4576
        %v5089 = vsub.f32 %v2529, %v4577
        %v5090 = vsub.f32 %v2530, %v4578
        %v5091 = vsub.f32 %v2531, %v4579
        %v5092 = vsub.f32 %v2532, %v4580
        %v5093 = vsub.f32 %v2533, %v4581
        %v5094 = vsub.f32 %v2534, %v4582
        %v5095 = vsub.f32 %v2535, %v4583
        %v5096 = vsub.f32 %v2536, %v4584
        %v5097 = vsub.f32 %v2537, %v4585
        %v5098 = vsub.f32 %v2538, %v4586
        %v5099 = vsub.f32 %v2539, %v4587
        %v5100 = vsub.f32 %v2540, %v4588
        %v5101 = vsub.f32 %v2541, %v4589
        %v5102 = vsub.f32 %v2542, %v4590
        %v5103 = vsub.f32 %v2543, %v4591
        %v5104 = vsub.f32 %v2544, %v4592
        %v5105 = vsub.f32 %v2545, %v4593
        %v5106 = vsub.f32 %v2546, %v4594
        %v5107 = vsub.f32 %v2547, %v4595
        %v5108 = vsub.f32 %v2548, %v4596
        %v5109 = vsub.f32 %v2549, %v4597
        %v5110 = vsub.f32 %v2550, %v4598
        %v5111 = vsub.f32 %v2551, %v4599
        %v5112 = vsub.f32 %v2552, %v4600
        %v5113 = vsub.f32 %v2553, %v4601
        %v5114 = vsub.f32 %v2554, %v4602
        %v5115 = vsub.f32 %v2555, %v4603
        %v5116 = vsub.f32 %v2556, %v4604
        %v5117 = vsub.f32 %v2557, %v4605
        %v5118 = vsub.f32 %v2558, %v4606
        %v5119 = vsub.f32 %v2559, %v4607
        %v5120 = vsub.f32 %v2560, %v4608
        %v5121 = vsub.f32 %v2561, %v4609
        %v5122 = vsub.f32 %v2562, %v4610
        %v5123 = vsub.f32 %v2563, %v4611
        %v5124 = vsub.f32 %v2564, %v4612
        %v5125 = vsub.f32 %v2565, %v4613
        %v5126 = vsub.f32 %v2566, %v4614
        %v5127 = vsub.f32 %v2567, %v4615
        %v5128 = vsub.f32 %v2568, %v4616
        %v5129 = vsub.f32 %v2569, %v4617
        %v5130 = vsub.f32 %v2570, %v4618
        %v5131 = vsub.f32 %v2571, %v4619
        %v5132 = vsub.f32 %v2572, %v4620
        %v5133 = vsub.f32 %v2573, %v4621
        %v5134 = vsub.f32 %v2574, %v4622
        %v5135 = vsub.f32 %v2575, %v4623
        %v5136 = vsub.f32 %v2576, %v4624
        %v5137 = vsub.f32 %v2577, %v4625
        %v5138 = vsub.f32 %v2578, %v4626
        %v5139 = vsub.f32 %v2579, %v4627
        %v5140 = vsub.f32 %v2580, %v4628
        %v5141 = vsub.f32 %v2581, %v4629
        %v5142 = vsub.f32 %v2582, %v4630
        %v5143 = vsub.f32 %v2583, %v4631
        %v5144 = vsub.f32 %v2584, %v4632
        %v5145 = vsub.f32 %v2585, %v4633
        %v5146 = vsub.f32 %v2586, %v4634
        %v5147 = vsub.f32 %v2587, %v4635
        %v5148 = vsub.f32 %v2588, %v4636
        %v5149 = vsub.f32 %v2589, %v4637
        %v5150 = vsub.f32 %v2590, %v4638
        %v5151 = vsub.f32 %v2591, %v4639
        %v5152 = vsub.f32 %v2592, %v4640
        %v5153 = vsub.f32 %v2593, %v4641
        %v5154 = vsub.f32 %v2594, %v4642
        %v5155 = vsub.f32 %v2595, %v4643
        %v5156 = vsub.f32 %v2596, %v4644
        %v5157 = vsub.f32 %v2597, %v4645
        %v5158 = vsub.f32 %v2598, %v4646
        %v5159 = vsub.f32 %v2599, %v4647
        %v5160 = vsub.f32 %v2600, %v4648
        %v5161 = vsub.f32 %v2601, %v4649
        %v5162 = vsub.f32 %v2602, %v4650
        %v5163 = vsub.f32 %v2603, %v4651
        %v5164 = vsub.f32 %v2604, %v4652
        %v5165 = vsub.f32 %v2605, %v4653
        %v5166 = vsub.f32 %v2606, %v4654
        %v5167 = vsub.f32 %v2607, %v4655
        %v5168 = vsub.f32 %v2608, %v4656
        %v5169 = vsub.f32 %v2609, %v4657
        %v5170 = vsub.f32 %v2610, %v4658
        %v5171 = vsub.f32 %v2611, %v4659
        %v5172 = vsub.f32 %v2612, %v4660
        %v5173 = vsub.f32 %v2613, %v4661
        %v5174 = vsub.f32 %v2614, %v4662
        %v5175 = vsub.f32 %v2615, %v4663
        %v5176 = vsub.f32 %v2616, %v4664
        %v5177 = vsub.f32 %v2617, %v4665
        %v5178 = vsub.f32 %v2618, %v4666
        %v5179 = vsub.f32 %v2619, %v4667
        %v5180 = vsub.f32 %v2620, %v4668
        %v5181 = vsub.f32 %v2621, %v4669
        %v5182 = vsub.f32 %v2622, %v4670
        %v5183 = vsub.f32 %v2623, %v4671
        %v5184 = vsub.f32 %v2624, %v4672
        %v5185 = vsub.f32 %v2625, %v4673
        %v5186 = vsub.f32 %v2626, %v4674
        %v5187 = vsub.f32 %v2627, %v4675
        %v5188 = vsub.f32 %v2628, %v4676
        %v5189 = vsub.f32 %v2629, %v4677
        %v5190 = vsub.f32 %v2630, %v4678
        %v5191 = vsub.f32 %v2631, %v4679
        %v5192 = vsub.f32 %v2632, %v4680
        %v5193 = vsub.f32 %v2633, %v4681
        %v5194 = vsub.f32 %v2634, %v4682
        %v5195 = vsub.f32 %v2635, %v4683
        %v5196 = vsub.f32 %v2636, %v4684
        %v5197 = vsub.f32 %v2637, %v4685
        %v5198 = vsub.f32 %v2638, %v4686
        %v5199 = vsub.f32 %v2639, %v4687
        %v5200 = vsub.f32 %v2640, %v4688
        %v5201 = vsub.f32 %v2641, %v4689
        %v5202 = vsub.f32 %v2642, %v4690
        %v5203 = vsub.f32 %v2643, %v4691
        %v5204 = vsub.f32 %v2644, %v4692
        %v5205 = vsub.f32 %v2645, %v4693
        %v5206 = vsub.f32 %v2646, %v4694
        %v5207 = vsub.f32 %v2647, %v4695
        %v5208 = vsub.f32 %v2648, %v4696
        %v5209 = vsub.f32 %v2649, %v4697
        %v5210 = vsub.f32 %v2650, %v4698
        %v5211 = vsub.f32 %v2651, %v4699
        %v5212 = vsub.f32 %v2652, %v4700
        %v5213 = vsub.f32 %v2653, %v4701
        %v5214 = vsub.f32 %v2654, %v4702
        %v5215 = vsub.f32 %v2655, %v4703
        %v5216 = vsub.f32 %v2656, %v4704
        %v5217 = vsub.f32 %v2657, %v4705
        %v5218 = vsub.f32 %v2658, %v4706
        %v5219 = vsub.f32 %v2659, %v4707
        %v5220 = vsub.f32 %v2660, %v4708
        %v5221 = vsub.f32 %v2661, %v4709
        %v5222 = vsub.f32 %v2662, %v4710
        %v5223 = vsub.f32 %v2663, %v4711
        %v5224 = vsub.f32 %v2664, %v4712
        %v5225 = vsub.f32 %v2665, %v4713
        %v5226 = vsub.f32 %v2666, %v4714
        %v5227 = vsub.f32 %v2667, %v4715
        %v5228 = vsub.f32 %v2668, %v4716
        %v5229 = vsub.f32 %v2669, %v4717
        %v5230 = vsub.f32 %v2670, %v4718
        %v5231 = vsub.f32 %v2671, %v4719
        %v5232 = vsub.f32 %v2672, %v4720
        %v5233 = vsub.f32 %v2673, %v4721
        %v5234 = vsub.f32 %v2674, %v4722
        %v5235 = vsub.f32 %v2675, %v4723
        %v5236 = vsub.f32 %v2676, %v4724
        %v5237 = vsub.f32 %v2677, %v4725
        %v5238 = vsub.f32 %v2678, %v4726
        %v5239 = vsub.f32 %v2679, %v4727
        %v5240 = vsub.f32 %v2680, %v4728
        %v5241 = vsub.f32 %v2681, %v4729
        %v5242 = vsub.f32 %v2682, %v4730
        %v5243 = vsub.f32 %v2683, %v4731
        %v5244 = vsub.f32 %v2684, %v4732
        %v5245 = vsub.f32 %v2685, %v4733
        %v5246 = vsub.f32 %v2686, %v4734
        %v5247 = vsub.f32 %v2687, %v4735
        %v5248 = vsub.f32 %v2688, %v4736
        %v5249 = vsub.f32 %v2689, %v4737
        %v5250 = vsub.f32 %v2690, %v4738
        %v5251 = vsub.f32 %v2691, %v4739
        %v5252 = vsub.f32 %v2692, %v4740
        %v5253 = vsub.f32 %v2693, %v4741
        %v5254 = vsub.f32 %v2694, %v4742
        %v5255 = vsub.f32 %v2695, %v4743
        %v5256 = vsub.f32 %v2696, %v4744
        %v5257 = vsub.f32 %v2697, %v4745
        %v5258 = vsub.f32 %v2698, %v4746
        %v5259 = vsub.f32 %v2699, %v4747
        %v5260 = vsub.f32 %v2700, %v4748
        %v5261 = vsub.f32 %v2701, %v4749
        %v5262 = vsub.f32 %v2702, %v4750
        %v5263 = vsub.f32 %v2703, %v4751
        %v5264 = vsub.f32 %v2704, %v4752
        %v5265 = vsub.f32 %v2705, %v4753
        %v5266 = vsub.f32 %v2706, %v4754
        %v5267 = vsub.f32 %v2707, %v4755
        %v5268 = vsub.f32 %v2708, %v4756
        %v5269 = vsub.f32 %v2709, %v4757
        %v5270 = vsub.f32 %v2710, %v4758
        %v5271 = vsub.f32 %v2711, %v4759
        %v5272 = vsub.f32 %v2712, %v4760
        %v5273 = vsub.f32 %v2713, %v4761
        %v5274 = vsub.f32 %v2714, %v4762
        %v5275 = vsub.f32 %v2715, %v4763
        %v5276 = vsub.f32 %v2716, %v4764
        %v5277 = vsub.f32 %v2717, %v4765
        %v5278 = vsub.f32 %v2718, %v4766
        %v5279 = vsub.f32 %v2719, %v4767
        %v5280 = vsub.f32 %v2720, %v4768
        %v5281 = vsub.f32 %v2721, %v4769
        %v5282 = vsub.f32 %v2722, %v4770
        %v5283 = vsub.f32 %v2723, %v4771
        %v5284 = vsub.f32 %v2724, %v4772
        %v5285 = vsub.f32 %v2725, %v4773
        %v5286 = vsub.f32 %v2726, %v4774
        %v5287 = vsub.f32 %v2727, %v4775
        %v5288 = vsub.f32 %v2728, %v4776
        %v5289 = vsub.f32 %v2729, %v4777
        %v5290 = vsub.f32 %v2730, %v4778
        %v5291 = vsub.f32 %v2731, %v4779
        %v5292 = vsub.f32 %v2732, %v4780
        %v5293 = vsub.f32 %v2733, %v4781
        %v5294 = vsub.f32 %v2734, %v4782
        %v5295 = vsub.f32 %v2735, %v4783
        %v5296 = vsub.f32 %v2736, %v4784
        %v5297 = vsub.f32 %v2737, %v4785
        %v5298 = vsub.f32 %v2738, %v4786
        %v5299 = vsub.f32 %v2739, %v4787
        %v5300 = vsub.f32 %v2740, %v4788
        %v5301 = vsub.f32 %v2741, %v4789
        %v5302 = vsub.f32 %v2742, %v4790
        %v5303 = vsub.f32 %v2743, %v4791
        %v5304 = vsub.f32 %v2744, %v4792
        %v5305 = vsub.f32 %v2745, %v4793
        %v5306 = vsub.f32 %v2746, %v4794
        %v5307 = vsub.f32 %v2747, %v4795
        %v5308 = vsub.f32 %v2748, %v4796
        %v5309 = vsub.f32 %v2749, %v4797
        %v5310 = vsub.f32 %v2750, %v4798
        %v5311 = vsub.f32 %v2751, %v4799
        %v5312 = vsub.f32 %v2752, %v4800
        %v5313 = vsub.f32 %v2753, %v4801
        %v5314 = vsub.f32 %v2754, %v4802
        %v5315 = vsub.f32 %v2755, %v4803
        %v5316 = vsub.f32 %v2756, %v4804
        %v5317 = vsub.f32 %v2757, %v4805
        %v5318 = vsub.f32 %v2758, %v4806
        %v5319 = vsub.f32 %v2759, %v4807
        %v5320 = vsub.f32 %v2760, %v4808
        %v5321 = vsub.f32 %v2761, %v4809
        %v5322 = vsub.f32 %v2762, %v4810
        %v5323 = vsub.f32 %v2763, %v4811
        %v5324 = vsub.f32 %v2764, %v4812
        %v5325 = vsub.f32 %v2765, %v4813
        %v5326 = vsub.f32 %v2766, %v4814
        %v5327 = vsub.f32 %v2767, %v4815
        %v5328 = vsub.f32 %v2768, %v4816
        %v5329 = vsub.f32 %v2769, %v4817
        %v5330 = vsub.f32 %v2770, %v4818
        %v5331 = vsub.f32 %v2771, %v4819
        %v5332 = vsub.f32 %v2772, %v4820
        %v5333 = vsub.f32 %v2773, %v4821
        %v5334 = vsub.f32 %v2774, %v4822
        %v5335 = vsub.f32 %v2775, %v4823
        %v5336 = vsub.f32 %v2776, %v4824
        %v5337 = vsub.f32 %v2777, %v4825
        %v5338 = vsub.f32 %v2778, %v4826
        %v5339 = vsub.f32 %v2779, %v4827
        %v5340 = vsub.f32 %v2780, %v4828
        %v5341 = vsub.f32 %v2781, %v4829
        %v5342 = vsub.f32 %v2782, %v4830
        %v5343 = vsub.f32 %v2783, %v4831
        %v5344 = vsub.f32 %v2784, %v4832
        %v5345 = vsub.f32 %v2785, %v4833
        %v5346 = vsub.f32 %v2786, %v4834
        %v5347 = vsub.f32 %v2787, %v4835
        %v5348 = vsub.f32 %v2788, %v4836
        %v5349 = vsub.f32 %v2789, %v4837
        %v5350 = vsub.f32 %v2790, %v4838
        %v5351 = vsub.f32 %v2791, %v4839
        %v5352 = vsub.f32 %v2792, %v4840
        %v5353 = vsub.f32 %v2793, %v4841
        %v5354 = vsub.f32 %v2794, %v4842
        %v5355 = vsub.f32 %v2795, %v4843
        %v5356 = vsub.f32 %v2796, %v4844
        %v5357 = vsub.f32 %v2797, %v4845
        %v5358 = vsub.f32 %v2798, %v4846
        %v5359 = vsub.f32 %v2799, %v4847
        %v5360 = vsub.f32 %v2800, %v4848
        %v5361 = vsub.f32 %v2801, %v4849
        %v5362 = vsub.f32 %v2802, %v4850
        %v5363 = vsub.f32 %v2803, %v4851
        %v5364 = vsub.f32 %v2804, %v4852
        %v5365 = vsub.f32 %v2805, %v4853
        %v5366 = vsub.f32 %v2806, %v4854
        %v5367 = vsub.f32 %v2807, %v4855
        %v5368 = vsub.f32 %v2808, %v4856
        %v5369 = vsub.f32 %v2809, %v4857
        %v5370 = vsub.f32 %v2810, %v4858
        %v5371 = vsub.f32 %v2811, %v4859
        %v5372 = vsub.f32 %v2812, %v4860
        %v5373 = vsub.f32 %v2813, %v4861
        %v5374 = vsub.f32 %v2814, %v4862
        %v5375 = vsub.f32 %v2815, %v4863
        %v5376 = vsub.f32 %v2816, %v4864
        %v5377 = vsub.f32 %v2817, %v4865
        %v5378 = vsub.f32 %v2818, %v4866
        %v5379 = vsub.f32 %v2819, %v4867
        %v5380 = vsub.f32 %v2820, %v4868
        %v5381 = vsub.f32 %v2821, %v4869
        %v5382 = vsub.f32 %v2822, %v4870
        %v5383 = vsub.f32 %v2823, %v4871
        %v5384 = vsub.f32 %v2824, %v4872
        %v5385 = vsub.f32 %v2825, %v4873
        %v5386 = vsub.f32 %v2826, %v4874
        %v5387 = vsub.f32 %v2827, %v4875
        %v5388 = vsub.f32 %v2828, %v4876
        %v5389 = vsub.f32 %v2829, %v4877
        %v5390 = vsub.f32 %v2830, %v4878
        %v5391 = vsub.f32 %v2831, %v4879
        %v5392 = vsub.f32 %v2832, %v4880
        %v5393 = vsub.f32 %v2833, %v4881
        %v5394 = vsub.f32 %v2834, %v4882
        %v5395 = vmul.f32 %v787, %v4883
        %v5396 = vmul.f32 %v788, %v4884
        %v5397 = vmul.f32 %v789, %v4885
        %v5398 = vmul.f32 %v790, %v4886
        %v5399 = vmul.f32 %v791, %v4887
        %v5400 = vmul.f32 %v792, %v4888
        %v5401 = vmul.f32 %v793, %v4889
        %v5402 = vmul.f32 %v794, %v4890
        %v5403 = vmul.f32 %v795, %v4891
        %v5404 = vmul.f32 %v796, %v4892
        %v5405 = vmul.f32 %v797, %v4893
        %v5406 = vmul.f32 %v798, %v4894
        %v5407 = vmul.f32 %v799, %v4895
        %v5408 = vmul.f32 %v800, %v4896
        %v5409 = vmul.f32 %v801, %v4897
        %v5410 = vmul.f32 %v802, %v4898
        %v5411 = vmul.f32 %v803, %v4899
        %v5412 = vmul.f32 %v804, %v4900
        %v5413 = vmul.f32 %v805, %v4901
        %v5414 = vmul.f32 %v806, %v4902
        %v5415 = vmul.f32 %v807, %v4903
        %v5416 = vmul.f32 %v808, %v4904
        %v5417 = vmul.f32 %v809, %v4905
        %v5418 = vmul.f32 %v810, %v4906
        %v5419 = vmul.f32 %v811, %v4907
        %v5420 = vmul.f32 %v812, %v4908
        %v5421 = vmul.f32 %v813, %v4909
        %v5422 = vmul.f32 %v814, %v4910
        %v5423 = vmul.f32 %v815, %v4911
        %v5424 = vmul.f32 %v816, %v4912
        %v5425 = vmul.f32 %v817, %v4913
        %v5426 = vmul.f32 %v818, %v4914
        %v5427 = vmul.f32 %v819, %v4915
        %v5428 = vmul.f32 %v820, %v4916
        %v5429 = vmul.f32 %v821, %v4917
        %v5430 = vmul.f32 %v822, %v4918
        %v5431 = vmul.f32 %v823, %v4919
        %v5432 = vmul.f32 %v824, %v4920
        %v5433 = vmul.f32 %v825, %v4921
        %v5434 = vmul.f32 %v826, %v4922
        %v5435 = vmul.f32 %v827, %v4923
        %v5436 = vmul.f32 %v828, %v4924
        %v5437 = vmul.f32 %v829, %v4925
        %v5438 = vmul.f32 %v830, %v4926
        %v5439 = vmul.f32 %v831, %v4927
        %v5440 = vmul.f32 %v832, %v4928
        %v5441 = vmul.f32 %v833, %v4929
        %v5442 = vmul.f32 %v834, %v4930
        %v5443 = vmul.f32 %v835, %v4931
        %v5444 = vmul.f32 %v836, %v4932
        %v5445 = vmul.f32 %v837, %v4933
        %v5446 = vmul.f32 %v838, %v4934
        %v5447 = vmul.f32 %v839, %v4935
        %v5448 = vmul.f32 %v840, %v4936
        %v5449 = vmul.f32 %v841, %v4937
        %v5450 = vmul.f32 %v842, %v4938
        %v5451 = vmul.f32 %v843, %v4939
        %v5452 = vmul.f32 %v844, %v4940
        %v5453 = vmul.f32 %v845, %v4941
        %v5454 = vmul.f32 %v846, %v4942
        %v5455 = vmul.f32 %v847, %v4943
        %v5456 = vmul.f32 %v848, %v4944
        %v5457 = vmul.f32 %v849, %v4945
        %v5458 = vmul.f32 %v850, %v4946
        %v5459 = vmul.f32 %v851, %v4947
        %v5460 = vmul.f32 %v852, %v4948
        %v5461 = vmul.f32 %v853, %v4949
        %v5462 = vmul.f32 %v854, %v4950
        %v5463 = vmul.f32 %v855, %v4951
        %v5464 = vmul.f32 %v856, %v4952
        %v5465 = vmul.f32 %v857, %v4953
        %v5466 = vmul.f32 %v858, %v4954
        %v5467 = vmul.f32 %v859, %v4955
        %v5468 = vmul.f32 %v860, %v4956
        %v5469 = vmul.f32 %v861, %v4957
        %v5470 = vmul.f32 %v862, %v4958
        %v5471 = vmul.f32 %v863, %v4959
        %v5472 = vmul.f32 %v864, %v4960
        %v5473 = vmul.f32 %v865, %v4961
        %v5474 = vmul.f32 %v866, %v4962
        %v5475 = vmul.f32 %v867, %v4963
        %v5476 = vmul.f32 %v868, %v4964
        %v5477 = vmul.f32 %v869, %v4965
        %v5478 = vmul.f32 %v870, %v4966
        %v5479 = vmul.f32 %v871, %v4967
        %v5480 = vmul.f32 %v872, %v4968
        %v5481 = vmul.f32 %v873, %v4969
        %v5482 = vmul.f32 %v874, %v4970
        %v5483 = vmul.f32 %v875, %v4971
        %v5484 = vmul.f32 %v876, %v4972
        %v5485 = vmul.f32 %v877, %v4973
        %v5486 = vmul.f32 %v878, %v4974
        %v5487 = vmul.f32 %v879, %v4975
        %v5488 = vmul.f32 %v880, %v4976
        %v5489 = vmul.f32 %v881, %v4977
        %v5490 = vmul.f32 %v882, %v4978
        %v5491 = vmul.f32 %v883, %v4979
        %v5492 = vmul.f32 %v884, %v4980
        %v5493 = vmul.f32 %v885, %v4981
        %v5494 = vmul.f32 %v886, %v4982
        %v5495 = vmul.f32 %v887, %v4983
        %v5496 = vmul.f32 %v888, %v4984
        %v5497 = vmul.f32 %v889, %v4985
        %v5498 = vmul.f32 %v890, %v4986
        %v5499 = vmul.f32 %v891, %v4987
        %v5500 = vmul.f32 %v892, %v4988
        %v5501 = vmul.f32 %v893, %v4989
        %v5502 = vmul.f32 %v894, %v4990
        %v5503 = vmul.f32 %v895, %v4991
        %v5504 = vmul.f32 %v896, %v4992
        %v5505 = vmul.f32 %v897, %v4993
        %v5506 = vmul.f32 %v898, %v4994
        %v5507 = vmul.f32 %v899, %v4995
        %v5508 = vmul.f32 %v900, %v4996
        %v5509 = vmul.f32 %v901, %v4997
        %v5510 = vmul.f32 %v902, %v4998
        %v5511 = vmul.f32 %v903, %v4999
        %v5512 = vmul.f32 %v904, %v5000
        %v5513 = vmul.f32 %v905, %v5001
        %v5514 = vmul.f32 %v906, %v5002
        %v5515 = vmul.f32 %v907, %v5003
        %v5516 = vmul.f32 %v908, %v5004
        %v5517 = vmul.f32 %v909, %v5005
        %v5518 = vmul.f32 %v910, %v5006
        %v5519 = vmul.f32 %v911, %v5007
        %v5520 = vmul.f32 %v912, %v5008
        %v5521 = vmul.f32 %v913, %v5009
        %v5522 = vmul.f32 %v914, %v5010
        %v5523 = vmul.f32 %v915, %v5011
        %v5524 = vmul.f32 %v916, %v5012
        %v5525 = vmul.f32 %v917, %v5013
        %v5526 = vmul.f32 %v918, %v5014
        %v5527 = vmul.f32 %v919, %v5015
        %v5528 = vmul.f32 %v920, %v5016
        %v5529 = vmul.f32 %v921, %v5017
        %v5530 = vmul.f32 %v922, %v5018
        %v5531 = vmul.f32 %v923, %v5019
        %v5532 = vmul.f32 %v924, %v5020
        %v5533 = vmul.f32 %v925, %v5021
        %v5534 = vmul.f32 %v926, %v5022
        %v5535 = vmul.f32 %v927, %v5023
        %v5536 = vmul.f32 %v928, %v5024
        %v5537 = vmul.f32 %v929, %v5025
        %v5538 = vmul.f32 %v930, %v5026
        %v5539 = vmul.f32 %v931, %v5027
        %v5540 = vmul.f32 %v932, %v5028
        %v5541 = vmul.f32 %v933, %v5029
        %v5542 = vmul.f32 %v934, %v5030
        %v5543 = vmul.f32 %v935, %v5031
        %v5544 = vmul.f32 %v936, %v5032
        %v5545 = vmul.f32 %v937, %v5033
        %v5546 = vmul.f32 %v938, %v5034
        %v5547 = vmul.f32 %v939, %v5035
        %v5548 = vmul.f32 %v940, %v5036
        %v5549 = vmul.f32 %v941, %v5037
        %v5550 = vmul.f32 %v942, %v5038
        %v5551 = vmul.f32 %v943, %v5039
        %v5552 = vmul.f32 %v944, %v5040
        %v5553 = vmul.f32 %v945, %v5041
        %v5554 = vmul.f32 %v946, %v5042
        %v5555 = vmul.f32 %v947, %v5043
        %v5556 = vmul.f32 %v948, %v5044
        %v5557 = vmul.f32 %v949, %v5045
        %v5558 = vmul.f32 %v950, %v5046
        %v5559 = vmul.f32 %v951, %v5047
        %v5560 = vmul.f32 %v952, %v5048
        %v5561 = vmul.f32 %v953, %v5049
        %v5562 = vmul.f32 %v954, %v5050
        %v5563 = vmul.f32 %v955, %v5051
        %v5564 = vmul.f32 %v956, %v5052
        %v5565 = vmul.f32 %v957, %v5053
        %v5566 = vmul.f32 %v958, %v5054
        %v5567 = vmul.f32 %v959, %v5055
        %v5568 = vmul.f32 %v960, %v5056
        %v5569 = vmul.f32 %v961, %v5057
        %v5570 = vmul.f32 %v962, %v5058
        %v5571 = vmul.f32 %v963, %v5059
        %v5572 = vmul.f32 %v964, %v5060
        %v5573 = vmul.f32 %v965, %v5061
        %v5574 = vmul.f32 %v966, %v5062
        %v5575 = vmul.f32 %v967, %v5063
        %v5576 = vmul.f32 %v968, %v5064
        %v5577 = vmul.f32 %v969, %v5065
        %v5578 = vmul.f32 %v970, %v5066
        %v5579 = vmul.f32 %v971, %v5067
        %v5580 = vmul.f32 %v972, %v5068
        %v5581 = vmul.f32 %v973, %v5069
        %v5582 = vmul.f32 %v974, %v5070
        %v5583 = vmul.f32 %v975, %v5071
        %v5584 = vmul.f32 %v976, %v5072
        %v5585 = vmul.f32 %v977, %v5073
        %v5586 = vmul.f32 %v978, %v5074
        %v5587 = vmul.f32 %v979, %v5075
        %v5588 = vmul.f32 %v980, %v5076
        %v5589 = vmul.f32 %v981, %v5077
        %v5590 = vmul.f32 %v982, %v5078
        %v5591 = vmul.f32 %v983, %v5079
        %v5592 = vmul.f32 %v984, %v5080
        %v5593 = vmul.f32 %v985, %v5081
        %v5594 = vmul.f32 %v986, %v5082
        %v5595 = vmul.f32 %v987, %v5083
        %v5596 = vmul.f32 %v988, %v5084
        %v5597 = vmul.f32 %v989, %v5085
        %v5598 = vmul.f32 %v990, %v5086
        %v5599 = vmul.f32 %v991, %v5087
        %v5600 = vmul.f32 %v992, %v5088
        %v5601 = vmul.f32 %v993, %v5089
        %v5602 = vmul.f32 %v994, %v5090
        %v5603 = vmul.f32 %v995, %v5091
        %v5604 = vmul.f32 %v996, %v5092
        %v5605 = vmul.f32 %v997, %v5093
        %v5606 = vmul.f32 %v998, %v5094
        %v5607 = vmul.f32 %v999, %v5095
        %v5608 = vmul.f32 %v1000, %v5096
        %v5609 = vmul.f32 %v1001, %v5097
        %v5610 = vmul.f32 %v1002, %v5098
        %v5611 = vmul.f32 %v1003, %v5099
        %v5612 = vmul.f32 %v1004, %v5100
        %v5613 = vmul.f32 %v1005, %v5101
        %v5614 = vmul.f32 %v1006, %v5102
        %v5615 = vmul.f32 %v1007, %v5103
        %v5616 = vmul.f32 %v1008, %v5104
        %v5617 = vmul.f32 %v1009, %v5105
        %v5618 = vmul.f32 %v1010, %v5106
        %v5619 = vmul.f32 %v1011, %v5107
        %v5620 = vmul.f32 %v1012, %v5108
        %v5621 = vmul.f32 %v1013, %v5109
        %v5622 = vmul.f32 %v1014, %v5110
        %v5623 = vmul.f32 %v1015, %v5111
        %v5624 = vmul.f32 %v1016, %v5112
        %v5625 = vmul.f32 %v1017, %v5113
        %v5626 = vmul.f32 %v1018, %v5114
        %v5627 = vmul.f32 %v1019, %v5115
        %v5628 = vmul.f32 %v1020, %v5116
        %v5629 = vmul.f32 %v1021, %v5117
        %v5630 = vmul.f32 %v1022, %v5118
        %v5631 = vmul.f32 %v1023, %v5119
        %v5632 = vmul.f32 %v1024, %v5120
        %v5633 = vmul.f32 %v1025, %v5121
        %v5634 = vmul.f32 %v1026, %v5122
        %v5635 = vmul.f32 %v1027, %v5123
        %v5636 = vmul.f32 %v1028, %v5124
        %v5637 = vmul.f32 %v1029, %v5125
        %v5638 = vmul.f32 %v1030, %v5126
        %v5639 = vmul.f32 %v1031, %v5127
        %v5640 = vmul.f32 %v1032, %v5128
        %v5641 = vmul.f32 %v1033, %v5129
        %v5642 = vmul.f32 %v1034, %v5130
        %v5643 = vmul.f32 %v1035, %v5131
        %v5644 = vmul.f32 %v1036, %v5132
        %v5645 = vmul.f32 %v1037, %v5133
        %v5646 = vmul.f32 %v1038, %v5134
        %v5647 = vmul.f32 %v1039, %v5135
        %v5648 = vmul.f32 %v1040, %v5136
        %v5649 = vmul.f32 %v1041, %v5137
        %v5650 = vmul.f32 %v1042, %v5138
        %v5651 = vmul.f32 %v1043, %v5139
        %v5652 = vmul.f32 %v1044, %v5140
        %v5653 = vmul.f32 %v1045, %v5141
        %v5654 = vmul.f32 %v1046, %v5142
        %v5655 = vmul.f32 %v1047, %v5143
        %v5656 = vmul.f32 %v1048, %v5144
        %v5657 = vmul.f32 %v1049, %v5145
        %v5658 = vmul.f32 %v1050, %v5146
        %v5659 = vmul.f32 %v1051, %v5147
        %v5660 = vmul.f32 %v1052, %v5148
        %v5661 = vmul.f32 %v1053, %v5149
        %v5662 = vmul.f32 %v1054, %v5150
        %v5663 = vmul.f32 %v1055, %v5151
        %v5664 = vmul.f32 %v1056, %v5152
        %v5665 = vmul.f32 %v1057, %v5153
        %v5666 = vmul.f32 %v1058, %v5154
        %v5667 = vmul.f32 %v1059, %v5155
        %v5668 = vmul.f32 %v1060, %v5156
        %v5669 = vmul.f32 %v1061, %v5157
        %v5670 = vmul.f32 %v1062, %v5158
        %v5671 = vmul.f32 %v1063, %v5159
        %v5672 = vmul.f32 %v1064, %v5160
        %v5673 = vmul.f32 %v1065, %v5161
        %v5674 = vmul.f32 %v1066, %v5162
        %v5675 = vmul.f32 %v1067, %v5163
        %v5676 = vmul.f32 %v1068, %v5164
        %v5677 = vmul.f32 %v1069, %v5165
        %v5678 = vmul.f32 %v1070, %v5166
        %v5679 = vmul.f32 %v1071, %v5167
        %v5680 = vmul.f32 %v1072, %v5168
        %v5681 = vmul.f32 %v1073, %v5169
        %v5682 = vmul.f32 %v1074, %v5170
        %v5683 = vmul.f32 %v1075, %v5171
        %v5684 = vmul.f32 %v1076, %v5172
        %v5685 = vmul.f32 %v1077, %v5173
        %v5686 = vmul.f32 %v1078, %v5174
        %v5687 = vmul.f32 %v1079, %v5175
        %v5688 = vmul.f32 %v1080, %v5176
        %v5689 = vmul.f32 %v1081, %v5177
        %v5690 = vmul.f32 %v1082, %v5178
        %v5691 = vmul.f32 %v1083, %v5179
        %v5692 = vmul.f32 %v1084, %v5180
        %v5693 = vmul.f32 %v1085, %v5181
        %v5694 = vmul.f32 %v1086, %v5182
        %v5695 = vmul.f32 %v1087, %v5183
        %v5696 = vmul.f32 %v1088, %v5184
        %v5697 = vmul.f32 %v1089, %v5185
        %v5698 = vmul.f32 %v1090, %v5186
        %v5699 = vmul.f32 %v1091, %v5187
        %v5700 = vmul.f32 %v1092, %v5188
        %v5701 = vmul.f32 %v1093, %v5189
        %v5702 = vmul.f32 %v1094, %v5190
        %v5703 = vmul.f32 %v1095, %v5191
        %v5704 = vmul.f32 %v1096, %v5192
        %v5705 = vmul.f32 %v1097, %v5193
        %v5706 = vmul.f32 %v1098, %v5194
        %v5707 = vmul.f32 %v1099, %v5195
        %v5708 = vmul.f32 %v1100, %v5196
        %v5709 = vmul.f32 %v1101, %v5197
        %v5710 = vmul.f32 %v1102, %v5198
        %v5711 = vmul.f32 %v1103, %v5199
        %v5712 = vmul.f32 %v1104, %v5200
        %v5713 = vmul.f32 %v1105, %v5201
        %v5714 = vmul.f32 %v1106, %v5202
        %v5715 = vmul.f32 %v1107, %v5203
        %v5716 = vmul.f32 %v1108, %v5204
        %v5717 = vmul.f32 %v1109, %v5205
        %v5718 = vmul.f32 %v1110, %v5206
        %v5719 = vmul.f32 %v1111, %v5207
        %v5720 = vmul.f32 %v1112, %v5208
        %v5721 = vmul.f32 %v1113, %v5209
        %v5722 = vmul.f32 %v1114, %v5210
        %v5723 = vmul.f32 %v1115, %v5211
        %v5724 = vmul.f32 %v1116, %v5212
        %v5725 = vmul.f32 %v1117, %v5213
        %v5726 = vmul.f32 %v1118, %v5214
        %v5727 = vmul.f32 %v1119, %v5215
        %v5728 = vmul.f32 %v1120, %v5216
        %v5729 = vmul.f32 %v1121, %v5217
        %v5730 = vmul.f32 %v1122, %v5218
        %v5731 = vmul.f32 %v1123, %v5219
        %v5732 = vmul.f32 %v1124, %v5220
        %v5733 = vmul.f32 %v1125, %v5221
        %v5734 = vmul.f32 %v1126, %v5222
        %v5735 = vmul.f32 %v1127, %v5223
        %v5736 = vmul.f32 %v1128, %v5224
        %v5737 = vmul.f32 %v1129, %v5225
        %v5738 = vmul.f32 %v1130, %v5226
        %v5739 = vmul.f32 %v1131, %v5227
        %v5740 = vmul.f32 %v1132, %v5228
        %v5741 = vmul.f32 %v1133, %v5229
        %v5742 = vmul.f32 %v1134, %v5230
        %v5743 = vmul.f32 %v1135, %v5231
        %v5744 = vmul.f32 %v1136, %v5232
        %v5745 = vmul.f32 %v1137, %v5233
        %v5746 = vmul.f32 %v1138, %v5234
        %v5747 = vmul.f32 %v1139, %v5235
        %v5748 = vmul.f32 %v1140, %v5236
        %v5749 = vmul.f32 %v1141, %v5237
        %v5750 = vmul.f32 %v1142, %v5238
        %v5751 = vmul.f32 %v1143, %v5239
        %v5752 = vmul.f32 %v1144, %v5240
        %v5753 = vmul.f32 %v1145, %v5241
        %v5754 = vmul.f32 %v1146, %v5242
        %v5755 = vmul.f32 %v1147, %v5243
        %v5756 = vmul.f32 %v1148, %v5244
        %v5757 = vmul.f32 %v1149, %v5245
        %v5758 = vmul.f32 %v1150, %v5246
        %v5759 = vmul.f32 %v1151, %v5247
        %v5760 = vmul.f32 %v1152, %v5248
        %v5761 = vmul.f32 %v1153, %v5249
        %v5762 = vmul.f32 %v1154, %v5250
        %v5763 = vmul.f32 %v1155, %v5251
        %v5764 = vmul.f32 %v1156, %v5252
        %v5765 = vmul.f32 %v1157, %v5253
        %v5766 = vmul.f32 %v1158, %v5254
        %v5767 = vmul.f32 %v1159, %v5255
        %v5768 = vmul.f32 %v1160, %v5256
        %v5769 = vmul.f32 %v1161, %v5257
        %v5770 = vmul.f32 %v1162, %v5258
        %v5771 = vmul.f32 %v1163, %v5259
        %v5772 = vmul.f32 %v1164, %v5260
        %v5773 = vmul.f32 %v1165, %v5261
        %v5774 = vmul.f32 %v1166, %v5262
        %v5775 = vmul.f32 %v1167, %v5263
        %v5776 = vmul.f32 %v1168, %v5264
        %v5777 = vmul.f32 %v1169, %v5265
        %v5778 = vmul.f32 %v1170, %v5266
        %v5779 = vmul.f32 %v1171, %v5267
        %v5780 = vmul.f32 %v1172, %v5268
        %v5781 = vmul.f32 %v1173, %v5269
        %v5782 = vmul.f32 %v1174, %v5270
        %v5783 = vmul.f32 %v1175, %v5271
        %v5784 = vmul.f32 %v1176, %v5272
        %v5785 = vmul.f32 %v1177, %v5273
        %v5786 = vmul.f32 %v1178, %v5274
        %v5787 = vmul.f32 %v1179, %v5275
        %v5788 = vmul.f32 %v1180, %v5276
        %v5789 = vmul.f32 %v1181, %v5277
        %v5790 = vmul.f32 %v1182, %v5278
        %v5791 = vmul.f32 %v1183, %v5279
        %v5792 = vmul.f32 %v1184, %v5280
        %v5793 = vmul.f32 %v1185, %v5281
        %v5794 = vmul.f32 %v1186, %v5282
        %v5795 = vmul.f32 %v1187, %v5283
        %v5796 = vmul.f32 %v1188, %v5284
        %v5797 = vmul.f32 %v1189, %v5285
        %v5798 = vmul.f32 %v1190, %v5286
        %v5799 = vmul.f32 %v1191, %v5287
        %v5800 = vmul.f32 %v1192, %v5288
        %v5801 = vmul.f32 %v1193, %v5289
        %v5802 = vmul.f32 %v1194, %v5290
        %v5803 = vmul.f32 %v1195, %v5291
        %v5804 = vmul.f32 %v1196, %v5292
        %v5805 = vmul.f32 %v1197, %v5293
        %v5806 = vmul.f32 %v1198, %v5294
        %v5807 = vmul.f32 %v1199, %v5295
        %v5808 = vmul.f32 %v1200, %v5296
        %v5809 = vmul.f32 %v1201, %v5297
        %v5810 = vmul.f32 %v1202, %v5298
        %v5811 = vmul.f32 %v1203, %v5299
        %v5812 = vmul.f32 %v1204, %v5300
        %v5813 = vmul.f32 %v1205, %v5301
        %v5814 = vmul.f32 %v1206, %v5302
        %v5815 = vmul.f32 %v1207, %v5303
        %v5816 = vmul.f32 %v1208, %v5304
        %v5817 = vmul.f32 %v1209, %v5305
        %v5818 = vmul.f32 %v1210, %v5306
        %v5819 = vmul.f32 %v1211, %v5307
        %v5820 = vmul.f32 %v1212, %v5308
        %v5821 = vmul.f32 %v1213, %v5309
        %v5822 = vmul.f32 %v1214, %v5310
        %v5823 = vmul.f32 %v1215, %v5311
        %v5824 = vmul.f32 %v1216, %v5312
        %v5825 = vmul.f32 %v1217, %v5313
        %v5826 = vmul.f32 %v1218, %v5314
        %v5827 = vmul.f32 %v1219, %v5315
        %v5828 = vmul.f32 %v1220, %v5316
        %v5829 = vmul.f32 %v1221, %v5317
        %v5830 = vmul.f32 %v1222, %v5318
        %v5831 = vmul.f32 %v1223, %v5319
        %v5832 = vmul.f32 %v1224, %v5320
        %v5833 = vmul.f32 %v1225, %v5321
        %v5834 = vmul.f32 %v1226, %v5322
        %v5835 = vmul.f32 %v1227, %v5323
        %v5836 = vmul.f32 %v1228, %v5324
        %v5837 = vmul.f32 %v1229, %v5325
        %v5838 = vmul.f32 %v1230, %v5326
        %v5839 = vmul.f32 %v1231, %v5327
        %v5840 = vmul.f32 %v1232, %v5328
        %v5841 = vmul.f32 %v1233, %v5329
        %v5842 = vmul.f32 %v1234, %v5330
        %v5843 = vmul.f32 %v1235, %v5331
        %v5844 = vmul.f32 %v1236, %v5332
        %v5845 = vmul.f32 %v1237, %v5333
        %v5846 = vmul.f32 %v1238, %v5334
        %v5847 = vmul.f32 %v1239, %v5335
        %v5848 = vmul.f32 %v1240, %v5336
        %v5849 = vmul.f32 %v1241, %v5337
        %v5850 = vmul.f32 %v1242, %v5338
        %v5851 = vmul.f32 %v1243, %v5339
        %v5852 = vmul.f32 %v1244, %v5340
        %v5853 = vmul.f32 %v1245, %v5341
        %v5854 = vmul.f32 %v1246, %v5342
        %v5855 = vmul.f32 %v1247, %v5343
        %v5856 = vmul.f32 %v1248, %v5344
        %v5857 = vmul.f32 %v1249, %v5345
        %v5858 = vmul.f32 %v1250, %v5346
        %v5859 = vmul.f32 %v1251, %v5347
        %v5860 = vmul.f32 %v1252, %v5348
        %v5861 = vmul.f32 %v1253, %v5349
        %v5862 = vmul.f32 %v1254, %v5350
        %v5863 = vmul.f32 %v1255, %v5351
        %v5864 = vmul.f32 %v1256, %v5352
        %v5865 = vmul.f32 %v1257, %v5353
        %v5866 = vmul.f32 %v1258, %v5354
        %v5867 = vmul.f32 %v1259, %v5355
        %v5868 = vmul.f32 %v1260, %v5356
        %v5869 = vmul.f32 %v1261, %v5357
        %v5870 = vmul.f32 %v1262, %v5358
        %v5871 = vmul.f32 %v1263, %v5359
        %v5872 = vmul.f32 %v1264, %v5360
        %v5873 = vmul.f32 %v1265, %v5361
        %v5874 = vmul.f32 %v1266, %v5362
        %v5875 = vmul.f32 %v1267, %v5363
        %v5876 = vmul.f32 %v1268, %v5364
        %v5877 = vmul.f32 %v1269, %v5365
        %v5878 = vmul.f32 %v1270, %v5366
        %v5879 = vmul.f32 %v1271, %v5367
        %v5880 = vmul.f32 %v1272, %v5368
        %v5881 = vmul.f32 %v1273, %v5369
        %v5882 = vmul.f32 %v1274, %v5370
        %v5883 = vmul.f32 %v1275, %v5371
        %v5884 = vmul.f32 %v1276, %v5372
        %v5885 = vmul.f32 %v1277, %v5373
        %v5886 = vmul.f32 %v1278, %v5374
        %v5887 = vmul.f32 %v1279, %v5375
        %v5888 = vmul.f32 %v1280, %v5376
        %v5889 = vmul.f32 %v1281, %v5377
        %v5890 = vmul.f32 %v1282, %v5378
        %v5891 = vmul.f32 %v1283, %v5379
        %v5892 = vmul.f32 %v1284, %v5380
        %v5893 = vmul.f32 %v1285, %v5381
        %v5894 = vmul.f32 %v1286, %v5382
        %v5895 = vmul.f32 %v1287, %v5383
        %v5896 = vmul.f32 %v1288, %v5384
        %v5897 = vmul.f32 %v1289, %v5385
        %v5898 = vmul.f32 %v1290, %v5386
        %v5899 = vmul.f32 %v1291, %v5387
        %v5900 = vmul.f32 %v1292, %v5388
        %v5901 = vmul.f32 %v1293, %v5389
        %v5902 = vmul.f32 %v1294, %v5390
        %v5903 = vmul.f32 %v1295, %v5391
        %v5904 = vmul.f32 %v1296, %v5392
        %v5905 = vmul.f32 %v1297, %v5393
        %v5906 = vmul.f32 %v1298, %v5394
        %v5907 = vadd.f32 %v4371, %v5395
        %v5908 = vadd.f32 %v4372, %v5396
        %v5909 = vadd.f32 %v4373, %v5397
        %v5910 = vadd.f32 %v4374, %v5398
        %v5911 = vadd.f32 %v4375, %v5399
        %v5912 = vadd.f32 %v4376, %v5400
        %v5913 = vadd.f32 %v4377, %v5401
        %v5914 = vadd.f32 %v4378, %v5402
        %v5915 = vadd.f32 %v4379, %v5403
        %v5916 = vadd.f32 %v4380, %v5404
        %v5917 = vadd.f32 %v4381, %v5405
        %v5918 = vadd.f32 %v4382, %v5406
        %v5919 = vadd.f32 %v4383, %v5407
        %v5920 = vadd.f32 %v4384, %v5408
        %v5921 = vadd.f32 %v4385, %v5409
        %v5922 = vadd.f32 %v4386, %v5410
        %v5923 = vadd.f32 %v4387, %v5411
        %v5924 = vadd.f32 %v4388, %v5412
        %v5925 = vadd.f32 %v4389, %v5413
        %v5926 = vadd.f32 %v4390, %v5414
        %v5927 = vadd.f32 %v4391, %v5415
        %v5928 = vadd.f32 %v4392, %v5416
        %v5929 = vadd.f32 %v4393, %v5417
        %v5930 = vadd.f32 %v4394, %v5418
        %v5931 = vadd.f32 %v4395, %v5419
        %v5932 = vadd.f32 %v4396, %v5420
        %v5933 = vadd.f32 %v4397, %v5421
        %v5934 = vadd.f32 %v4398, %v5422
        %v5935 = vadd.f32 %v4399, %v5423
        %v5936 = vadd.f32 %v4400, %v5424
        %v5937 = vadd.f32 %v4401, %v5425
        %v5938 = vadd.f32 %v4402, %v5426
        %v5939 = vadd.f32 %v4403, %v5427
        %v5940 = vadd.f32 %v4404, %v5428
        %v5941 = vadd.f32 %v4405, %v5429
        %v5942 = vadd.f32 %v4406, %v5430
        %v5943 = vadd.f32 %v4407, %v5431
        %v5944 = vadd.f32 %v4408, %v5432
        %v5945 = vadd.f32 %v4409, %v5433
        %v5946 = vadd.f32 %v4410, %v5434
        %v5947 = vadd.f32 %v4411, %v5435
        %v5948 = vadd.f32 %v4412, %v5436
        %v5949 = vadd.f32 %v4413, %v5437
        %v5950 = vadd.f32 %v4414, %v5438
        %v5951 = vadd.f32 %v4415, %v5439
        %v5952 = vadd.f32 %v4416, %v5440
        %v5953 = vadd.f32 %v4417, %v5441
        %v5954 = vadd.f32 %v4418, %v5442
        %v5955 = vadd.f32 %v4419, %v5443
        %v5956 = vadd.f32 %v4420, %v5444
        %v5957 = vadd.f32 %v4421, %v5445
        %v5958 = vadd.f32 %v4422, %v5446
        %v5959 = vadd.f32 %v4423, %v5447
        %v5960 = vadd.f32 %v4424, %v5448
        %v5961 = vadd.f32 %v4425, %v5449
        %v5962 = vadd.f32 %v4426, %v5450
        %v5963 = vadd.f32 %v4427, %v5451
        %v5964 = vadd.f32 %v4428, %v5452
        %v5965 = vadd.f32 %v4429, %v5453
        %v5966 = vadd.f32 %v4430, %v5454
        %v5967 = vadd.f32 %v4431, %v5455
        %v5968 = vadd.f32 %v4432, %v5456
        %v5969 = vadd.f32 %v4433, %v5457
        %v5970 = vadd.f32 %v4434, %v5458
        %v5971 = vadd.f32 %v4435, %v5459
        %v5972 = vadd.f32 %v4436, %v5460
        %v5973 = vadd.f32 %v4437, %v5461
        %v5974 = vadd.f32 %v4438, %v5462
        %v5975 = vadd.f32 %v4439, %v5463
        %v5976 = vadd.f32 %v4440, %v5464
        %v5977 = vadd.f32 %v4441, %v5465
        %v5978 = vadd.f32 %v4442, %v5466
        %v5979 = vadd.f32 %v4443, %v5467
        %v5980 = vadd.f32 %v4444, %v5468
        %v5981 = vadd.f32 %v4445, %v5469
        %v5982 = vadd.f32 %v4446, %v5470
        %v5983 = vadd.f32 %v4447, %v5471
        %v5984 = vadd.f32 %v4448, %v5472
        %v5985 = vadd.f32 %v4449, %v5473
        %v5986 = vadd.f32 %v4450, %v5474
        %v5987 = vadd.f32 %v4451, %v5475
        %v5988 = vadd.f32 %v4452, %v5476
        %v5989 = vadd.f32 %v4453, %v5477
        %v5990 = vadd.f32 %v4454, %v5478
        %v5991 = vadd.f32 %v4455, %v5479
        %v5992 = vadd.f32 %v4456, %v5480
        %v5993 = vadd.f32 %v4457, %v5481
        %v5994 = vadd.f32 %v4458, %v5482
        %v5995 = vadd.f32 %v4459, %v5483
        %v5996 = vadd.f32 %v4460, %v5484
        %v5997 = vadd.f32 %v4461, %v5485
        %v5998 = vadd.f32 %v4462, %v5486
        %v5999 = vadd.f32 %v4463, %v5487
        %v6000 = vadd.f32 %v4464, %v5488
        %v6001 = vadd.f32 %v4465, %v5489
        %v6002 = vadd.f32 %v4466, %v5490
        %v6003 = vadd.f32 %v4467, %v5491
        %v6004 = vadd.f32 %v4468, %v5492
        %v6005 = vadd.f32 %v4469, %v5493
        %v6006 = vadd.f32 %v4470, %v5494
        %v6007 = vadd.f32 %v4471, %v5495
        %v6008 = vadd.f32 %v4472, %v5496
        %v6009 = vadd.f32 %v4473, %v5497
        %v6010 = vadd.f32 %v4474, %v5498
        %v6011 = vadd.f32 %v4475, %v5499
        %v6012 = vadd.f32 %v4476, %v5500
        %v6013 = vadd.f32 %v4477, %v5501
        %v6014 = vadd.f32 %v4478, %v5502
        %v6015 = vadd.f32 %v4479, %v5503
        %v6016 = vadd.f32 %v4480, %v5504
        %v6017 = vadd.f32 %v4481, %v5505
        %v6018 = vadd.f32 %v4482, %v5506
        %v6019 = vadd.f32 %v4483, %v5507
        %v6020 = vadd.f32 %v4484, %v5508
        %v6021 = vadd.f32 %v4485, %v5509
        %v6022 = vadd.f32 %v4486, %v5510
        %v6023 = vadd.f32 %v4487, %v5511
        %v6024 = vadd.f32 %v4488, %v5512
        %v6025 = vadd.f32 %v4489, %v5513
        %v6026 = vadd.f32 %v4490, %v5514
        %v6027 = vadd.f32 %v4491, %v5515
        %v6028 = vadd.f32 %v4492, %v5516
        %v6029 = vadd.f32 %v4493, %v5517
        %v6030 = vadd.f32 %v4494, %v5518
        %v6031 = vadd.f32 %v4495, %v5519
        %v6032 = vadd.f32 %v4496, %v5520
        %v6033 = vadd.f32 %v4497, %v5521
        %v6034 = vadd.f32 %v4498, %v5522
        %v6035 = vadd.f32 %v4499, %v5523
        %v6036 = vadd.f32 %v4500, %v5524
        %v6037 = vadd.f32 %v4501, %v5525
        %v6038 = vadd.f32 %v4502, %v5526
        %v6039 = vadd.f32 %v4503, %v5527
        %v6040 = vadd.f32 %v4504, %v5528
        %v6041 = vadd.f32 %v4505, %v5529
        %v6042 = vadd.f32 %v4506, %v5530
        %v6043 = vadd.f32 %v4507, %v5531
        %v6044 = vadd.f32 %v4508, %v5532
        %v6045 = vadd.f32 %v4509, %v5533
        %v6046 = vadd.f32 %v4510, %v5534
        %v6047 = vadd.f32 %v4511, %v5535
        %v6048 = vadd.f32 %v4512, %v5536
        %v6049 = vadd.f32 %v4513, %v5537
        %v6050 = vadd.f32 %v4514, %v5538
        %v6051 = vadd.f32 %v4515, %v5539
        %v6052 = vadd.f32 %v4516, %v5540
        %v6053 = vadd.f32 %v4517, %v5541
        %v6054 = vadd.f32 %v4518, %v5542
        %v6055 = vadd.f32 %v4519, %v5543
        %v6056 = vadd.f32 %v4520, %v5544
        %v6057 = vadd.f32 %v4521, %v5545
        %v6058 = vadd.f32 %v4522, %v5546
        %v6059 = vadd.f32 %v4523, %v5547
        %v6060 = vadd.f32 %v4524, %v5548
        %v6061 = vadd.f32 %v4525, %v5549
        %v6062 = vadd.f32 %v4526, %v5550
        %v6063 = vadd.f32 %v4527, %v5551
        %v6064 = vadd.f32 %v4528, %v5552
        %v6065 = vadd.f32 %v4529, %v5553
        %v6066 = vadd.f32 %v4530, %v5554
        %v6067 = vadd.f32 %v4531, %v5555
        %v6068 = vadd.f32 %v4532, %v5556
        %v6069 = vadd.f32 %v4533, %v5557
        %v6070 = vadd.f32 %v4534, %v5558
        %v6071 = vadd.f32 %v4535, %v5559
        %v6072 = vadd.f32 %v4536, %v5560
        %v6073 = vadd.f32 %v4537, %v5561
        %v6074 = vadd.f32 %v4538, %v5562
        %v6075 = vadd.f32 %v4539, %v5563
        %v6076 = vadd.f32 %v4540, %v5564
        %v6077 = vadd.f32 %v4541, %v5565
        %v6078 = vadd.f32 %v4542, %v5566
        %v6079 = vadd.f32 %v4543, %v5567
        %v6080 = vadd.f32 %v4544, %v5568
        %v6081 = vadd.f32 %v4545, %v5569
        %v6082 = vadd.f32 %v4546, %v5570
        %v6083 = vadd.f32 %v4547, %v5571
        %v6084 = vadd.f32 %v4548, %v5572
        %v6085 = vadd.f32 %v4549, %v5573
        %v6086 = vadd.f32 %v4550, %v5574
        %v6087 = vadd.f32 %v4551, %v5575
        %v6088 = vadd.f32 %v4552, %v5576
        %v6089 = vadd.f32 %v4553, %v5577
        %v6090 = vadd.f32 %v4554, %v5578
        %v6091 = vadd.f32 %v4555, %v5579
        %v6092 = vadd.f32 %v4556, %v5580
        %v6093 = vadd.f32 %v4557, %v5581
        %v6094 = vadd.f32 %v4558, %v5582
        %v6095 = vadd.f32 %v4559, %v5583
        %v6096 = vadd.f32 %v4560, %v5584
        %v6097 = vadd.f32 %v4561, %v5585
        %v6098 = vadd.f32 %v4562, %v5586
        %v6099 = vadd.f32 %v4563, %v5587
        %v6100 = vadd.f32 %v4564, %v5588
        %v6101 = vadd.f32 %v4565, %v5589
        %v6102 = vadd.f32 %v4566, %v5590
        %v6103 = vadd.f32 %v4567, %v5591
        %v6104 = vadd.f32 %v4568, %v5592
        %v6105 = vadd.f32 %v4569, %v5593
        %v6106 = vadd.f32 %v4570, %v5594
        %v6107 = vadd.f32 %v4571, %v5595
        %v6108 = vadd.f32 %v4572, %v5596
        %v6109 = vadd.f32 %v4573, %v5597
        %v6110 = vadd.f32 %v4574, %v5598
        %v6111 = vadd.f32 %v4575, %v5599
        %v6112 = vadd.f32 %v4576, %v5600
        %v6113 = vadd.f32 %v4577, %v5601
        %v6114 = vadd.f32 %v4578, %v5602
        %v6115 = vadd.f32 %v4579, %v5603
        %v6116 = vadd.f32 %v4580, %v5604
        %v6117 = vadd.f32 %v4581, %v5605
        %v6118 = vadd.f32 %v4582, %v5606
        %v6119 = vadd.f32 %v4583, %v5607
        %v6120 = vadd.f32 %v4584, %v5608
        %v6121 = vadd.f32 %v4585, %v5609
        %v6122 = vadd.f32 %v4586, %v5610
        %v6123 = vadd.f32 %v4587, %v5611
        %v6124 = vadd.f32 %v4588, %v5612
        %v6125 = vadd.f32 %v4589, %v5613
        %v6126 = vadd.f32 %v4590, %v5614
        %v6127 = vadd.f32 %v4591, %v5615
        %v6128 = vadd.f32 %v4592, %v5616
        %v6129 = vadd.f32 %v4593, %v5617
        %v6130 = vadd.f32 %v4594, %v5618
        %v6131 = vadd.f32 %v4595, %v5619
        %v6132 = vadd.f32 %v4596, %v5620
        %v6133 = vadd.f32 %v4597, %v5621
        %v6134 = vadd.f32 %v4598, %v5622
        %v6135 = vadd.f32 %v4599, %v5623
        %v6136 = vadd.f32 %v4600, %v5624
        %v6137 = vadd.f32 %v4601, %v5625
        %v6138 = vadd.f32 %v4602, %v5626
        %v6139 = vadd.f32 %v4603, %v5627
        %v6140 = vadd.f32 %v4604, %v5628
        %v6141 = vadd.f32 %v4605, %v5629
        %v6142 = vadd.f32 %v4606, %v5630
        %v6143 = vadd.f32 %v4607, %v5631
        %v6144 = vadd.f32 %v4608, %v5632
        %v6145 = vadd.f32 %v4609, %v5633
        %v6146 = vadd.f32 %v4610, %v5634
        %v6147 = vadd.f32 %v4611, %v5635
        %v6148 = vadd.f32 %v4612, %v5636
        %v6149 = vadd.f32 %v4613, %v5637
        %v6150 = vadd.f32 %v4614, %v5638
        %v6151 = vadd.f32 %v4615, %v5639
        %v6152 = vadd.f32 %v4616, %v5640
        %v6153 = vadd.f32 %v4617, %v5641
        %v6154 = vadd.f32 %v4618, %v5642
        %v6155 = vadd.f32 %v4619, %v5643
        %v6156 = vadd.f32 %v4620, %v5644
        %v6157 = vadd.f32 %v4621, %v5645
        %v6158 = vadd.f32 %v4622, %v5646
        %v6159 = vadd.f32 %v4623, %v5647
        %v6160 = vadd.f32 %v4624, %v5648
        %v6161 = vadd.f32 %v4625, %v5649
        %v6162 = vadd.f32 %v4626, %v5650
        %v6163 = vadd.f32 %v4627, %v5651
        %v6164 = vadd.f32 %v4628, %v5652
        %v6165 = vadd.f32 %v4629, %v5653
        %v6166 = vadd.f32 %v4630, %v5654
        %v6167 = vadd.f32 %v4631, %v5655
        %v6168 = vadd.f32 %v4632, %v5656
        %v6169 = vadd.f32 %v4633, %v5657
        %v6170 = vadd.f32 %v4634, %v5658
        %v6171 = vadd.f32 %v4635, %v5659
        %v6172 = vadd.f32 %v4636, %v5660
        %v6173 = vadd.f32 %v4637, %v5661
        %v6174 = vadd.f32 %v4638, %v5662
        %v6175 = vadd.f32 %v4639, %v5663
        %v6176 = vadd.f32 %v4640, %v5664
        %v6177 = vadd.f32 %v4641, %v5665
        %v6178 = vadd.f32 %v4642, %v5666
        %v6179 = vadd.f32 %v4643, %v5667
        %v6180 = vadd.f32 %v4644, %v5668
        %v6181 = vadd.f32 %v4645, %v5669
        %v6182 = vadd.f32 %v4646, %v5670
        %v6183 = vadd.f32 %v4647, %v5671
        %v6184 = vadd.f32 %v4648, %v5672
        %v6185 = vadd.f32 %v4649, %v5673
        %v6186 = vadd.f32 %v4650, %v5674
        %v6187 = vadd.f32 %v4651, %v5675
        %v6188 = vadd.f32 %v4652, %v5676
        %v6189 = vadd.f32 %v4653, %v5677
        %v6190 = vadd.f32 %v4654, %v5678
        %v6191 = vadd.f32 %v4655, %v5679
        %v6192 = vadd.f32 %v4656, %v5680
        %v6193 = vadd.f32 %v4657, %v5681
        %v6194 = vadd.f32 %v4658, %v5682
        %v6195 = vadd.f32 %v4659, %v5683
        %v6196 = vadd.f32 %v4660, %v5684
        %v6197 = vadd.f32 %v4661, %v5685
        %v6198 = vadd.f32 %v4662, %v5686
        %v6199 = vadd.f32 %v4663, %v5687
        %v6200 = vadd.f32 %v4664, %v5688
        %v6201 = vadd.f32 %v4665, %v5689
        %v6202 = vadd.f32 %v4666, %v5690
        %v6203 = vadd.f32 %v4667, %v5691
        %v6204 = vadd.f32 %v4668, %v5692
        %v6205 = vadd.f32 %v4669, %v5693
        %v6206 = vadd.f32 %v4670, %v5694
        %v6207 = vadd.f32 %v4671, %v5695
        %v6208 = vadd.f32 %v4672, %v5696
        %v6209 = vadd.f32 %v4673, %v5697
        %v6210 = vadd.f32 %v4674, %v5698
        %v6211 = vadd.f32 %v4675, %v5699
        %v6212 = vadd.f32 %v4676, %v5700
        %v6213 = vadd.f32 %v4677, %v5701
        %v6214 = vadd.f32 %v4678, %v5702
        %v6215 = vadd.f32 %v4679, %v5703
        %v6216 = vadd.f32 %v4680, %v5704
        %v6217 = vadd.f32 %v4681, %v5705
        %v6218 = vadd.f32 %v4682, %v5706
        %v6219 = vadd.f32 %v4683, %v5707
        %v6220 = vadd.f32 %v4684, %v5708
        %v6221 = vadd.f32 %v4685, %v5709
        %v6222 = vadd.f32 %v4686, %v5710
        %v6223 = vadd.f32 %v4687, %v5711
        %v6224 = vadd.f32 %v4688, %v5712
        %v6225 = vadd.f32 %v4689, %v5713
        %v6226 = vadd.f32 %v4690, %v5714
        %v6227 = vadd.f32 %v4691, %v5715
        %v6228 = vadd.f32 %v4692, %v5716
        %v6229 = vadd.f32 %v4693, %v5717
        %v6230 = vadd.f32 %v4694, %v5718
        %v6231 = vadd.f32 %v4695, %v5719
        %v6232 = vadd.f32 %v4696, %v5720
        %v6233 = vadd.f32 %v4697, %v5721
        %v6234 = vadd.f32 %v4698, %v5722
        %v6235 = vadd.f32 %v4699, %v5723
        %v6236 = vadd.f32 %v4700, %v5724
        %v6237 = vadd.f32 %v4701, %v5725
        %v6238 = vadd.f32 %v4702, %v5726
        %v6239 = vadd.f32 %v4703, %v5727
        %v6240 = vadd.f32 %v4704, %v5728
        %v6241 = vadd.f32 %v4705, %v5729
        %v6242 = vadd.f32 %v4706, %v5730
        %v6243 = vadd.f32 %v4707, %v5731
        %v6244 = vadd.f32 %v4708, %v5732
        %v6245 = vadd.f32 %v4709, %v5733
        %v6246 = vadd.f32 %v4710, %v5734
        %v6247 = vadd.f32 %v4711, %v5735
        %v6248 = vadd.f32 %v4712, %v5736
        %v6249 = vadd.f32 %v4713, %v5737
        %v6250 = vadd.f32 %v4714, %v5738
        %v6251 = vadd.f32 %v4715, %v5739
        %v6252 = vadd.f32 %v4716, %v5740
        %v6253 = vadd.f32 %v4717, %v5741
        %v6254 = vadd.f32 %v4718, %v5742
        %v6255 = vadd.f32 %v4719, %v5743
        %v6256 = vadd.f32 %v4720, %v5744
        %v6257 = vadd.f32 %v4721, %v5745
        %v6258 = vadd.f32 %v4722, %v5746
        %v6259 = vadd.f32 %v4723, %v5747
        %v6260 = vadd.f32 %v4724, %v5748
        %v6261 = vadd.f32 %v4725, %v5749
        %v6262 = vadd.f32 %v4726, %v5750
        %v6263 = vadd.f32 %v4727, %v5751
        %v6264 = vadd.f32 %v4728, %v5752
        %v6265 = vadd.f32 %v4729, %v5753
        %v6266 = vadd.f32 %v4730, %v5754
        %v6267 = vadd.f32 %v4731, %v5755
        %v6268 = vadd.f32 %v4732, %v5756
        %v6269 = vadd.f32 %v4733, %v5757
        %v6270 = vadd.f32 %v4734, %v5758
        %v6271 = vadd.f32 %v4735, %v5759
        %v6272 = vadd.f32 %v4736, %v5760
        %v6273 = vadd.f32 %v4737, %v5761
        %v6274 = vadd.f32 %v4738, %v5762
        %v6275 = vadd.f32 %v4739, %v5763
        %v6276 = vadd.f32 %v4740, %v5764
        %v6277 = vadd.f32 %v4741, %v5765
        %v6278 = vadd.f32 %v4742, %v5766
        %v6279 = vadd.f32 %v4743, %v5767
        %v6280 = vadd.f32 %v4744, %v5768
        %v6281 = vadd.f32 %v4745, %v5769
        %v6282 = vadd.f32 %v4746, %v5770
        %v6283 = vadd.f32 %v4747, %v5771
        %v6284 = vadd.f32 %v4748, %v5772
        %v6285 = vadd.f32 %v4749, %v5773
        %v6286 = vadd.f32 %v4750, %v5774
        %v6287 = vadd.f32 %v4751, %v5775
        %v6288 = vadd.f32 %v4752, %v5776
        %v6289 = vadd.f32 %v4753, %v5777
        %v6290 = vadd.f32 %v4754, %v5778
        %v6291 = vadd.f32 %v4755, %v5779
        %v6292 = vadd.f32 %v4756, %v5780
        %v6293 = vadd.f32 %v4757, %v5781
        %v6294 = vadd.f32 %v4758, %v5782
        %v6295 = vadd.f32 %v4759, %v5783
        %v6296 = vadd.f32 %v4760, %v5784
        %v6297 = vadd.f32 %v4761, %v5785
        %v6298 = vadd.f32 %v4762, %v5786
        %v6299 = vadd.f32 %v4763, %v5787
        %v6300 = vadd.f32 %v4764, %v5788
        %v6301 = vadd.f32 %v4765, %v5789
        %v6302 = vadd.f32 %v4766, %v5790
        %v6303 = vadd.f32 %v4767, %v5791
        %v6304 = vadd.f32 %v4768, %v5792
        %v6305 = vadd.f32 %v4769, %v5793
        %v6306 = vadd.f32 %v4770, %v5794
        %v6307 = vadd.f32 %v4771, %v5795
        %v6308 = vadd.f32 %v4772, %v5796
        %v6309 = vadd.f32 %v4773, %v5797
        %v6310 = vadd.f32 %v4774, %v5798
        %v6311 = vadd.f32 %v4775, %v5799
        %v6312 = vadd.f32 %v4776, %v5800
        %v6313 = vadd.f32 %v4777, %v5801
        %v6314 = vadd.f32 %v4778, %v5802
        %v6315 = vadd.f32 %v4779, %v5803
        %v6316 = vadd.f32 %v4780, %v5804
        %v6317 = vadd.f32 %v4781, %v5805
        %v6318 = vadd.f32 %v4782, %v5806
        %v6319 = vadd.f32 %v4783, %v5807
        %v6320 = vadd.f32 %v4784, %v5808
        %v6321 = vadd.f32 %v4785, %v5809
        %v6322 = vadd.f32 %v4786, %v5810
        %v6323 = vadd.f32 %v4787, %v5811
        %v6324 = vadd.f32 %v4788, %v5812
        %v6325 = vadd.f32 %v4789, %v5813
        %v6326 = vadd.f32 %v4790, %v5814
        %v6327 = vadd.f32 %v4791, %v5815
        %v6328 = vadd.f32 %v4792, %v5816
        %v6329 = vadd.f32 %v4793, %v5817
        %v6330 = vadd.f32 %v4794, %v5818
        %v6331 = vadd.f32 %v4795, %v5819
        %v6332 = vadd.f32 %v4796, %v5820
        %v6333 = vadd.f32 %v4797, %v5821
        %v6334 = vadd.f32 %v4798, %v5822
        %v6335 = vadd.f32 %v4799, %v5823
        %v6336 = vadd.f32 %v4800, %v5824
        %v6337 = vadd.f32 %v4801, %v5825
        %v6338 = vadd.f32 %v4802, %v5826
        %v6339 = vadd.f32 %v4803, %v5827
        %v6340 = vadd.f32 %v4804, %v5828
        %v6341 = vadd.f32 %v4805, %v5829
        %v6342 = vadd.f32 %v4806, %v5830
        %v6343 = vadd.f32 %v4807, %v5831
        %v6344 = vadd.f32 %v4808, %v5832
        %v6345 = vadd.f32 %v4809, %v5833
        %v6346 = vadd.f32 %v4810, %v5834
        %v6347 = vadd.f32 %v4811, %v5835
        %v6348 = vadd.f32 %v4812, %v5836
        %v6349 = vadd.f32 %v4813, %v5837
        %v6350 = vadd.f32 %v4814, %v5838
        %v6351 = vadd.f32 %v4815, %v5839
        %v6352 = vadd.f32 %v4816, %v5840
        %v6353 = vadd.f32 %v4817, %v5841
        %v6354 = vadd.f32 %v4818, %v5842
        %v6355 = vadd.f32 %v4819, %v5843
        %v6356 = vadd.f32 %v4820, %v5844
        %v6357 = vadd.f32 %v4821, %v5845
        %v6358 = vadd.f32 %v4822, %v5846
        %v6359 = vadd.f32 %v4823, %v5847
        %v6360 = vadd.f32 %v4824, %v5848
        %v6361 = vadd.f32 %v4825, %v5849
        %v6362 = vadd.f32 %v4826, %v5850
        %v6363 = vadd.f32 %v4827, %v5851
        %v6364 = vadd.f32 %v4828, %v5852
        %v6365 = vadd.f32 %v4829, %v5853
        %v6366 = vadd.f32 %v4830, %v5854
        %v6367 = vadd.f32 %v4831, %v5855
        %v6368 = vadd.f32 %v4832, %v5856
        %v6369 = vadd.f32 %v4833, %v5857
        %v6370 = vadd.f32 %v4834, %v5858
        %v6371 = vadd.f32 %v4835, %v5859
        %v6372 = vadd.f32 %v4836, %v5860
        %v6373 = vadd.f32 %v4837, %v5861
        %v6374 = vadd.f32 %v4838, %v5862
        %v6375 = vadd.f32 %v4839, %v5863
        %v6376 = vadd.f32 %v4840, %v5864
        %v6377 = vadd.f32 %v4841, %v5865
        %v6378 = vadd.f32 %v4842, %v5866
        %v6379 = vadd.f32 %v4843, %v5867
        %v6380 = vadd.f32 %v4844, %v5868
        %v6381 = vadd.f32 %v4845, %v5869
        %v6382 = vadd.f32 %v4846, %v5870
        %v6383 = vadd.f32 %v4847, %v5871
        %v6384 = vadd.f32 %v4848, %v5872
        %v6385 = vadd.f32 %v4849, %v5873
        %v6386 = vadd.f32 %v4850, %v5874
        %v6387 = vadd.f32 %v4851, %v5875
        %v6388 = vadd.f32 %v4852, %v5876
        %v6389 = vadd.f32 %v4853, %v5877
        %v6390 = vadd.f32 %v4854, %v5878
        %v6391 = vadd.f32 %v4855, %v5879
        %v6392 = vadd.f32 %v4856, %v5880
        %v6393 = vadd.f32 %v4857, %v5881
        %v6394 = vadd.f32 %v4858, %v5882
        %v6395 = vadd.f32 %v4859, %v5883
        %v6396 = vadd.f32 %v4860, %v5884
        %v6397 = vadd.f32 %v4861, %v5885
        %v6398 = vadd.f32 %v4862, %v5886
        %v6399 = vadd.f32 %v4863, %v5887
        %v6400 = vadd.f32 %v4864, %v5888
        %v6401 = vadd.f32 %v4865, %v5889
        %v6402 = vadd.f32 %v4866, %v5890
        %v6403 = vadd.f32 %v4867, %v5891
        %v6404 = vadd.f32 %v4868, %v5892
        %v6405 = vadd.f32 %v4869, %v5893
        %v6406 = vadd.f32 %v4870, %v5894
        %v6407 = vadd.f32 %v4871, %v5895
        %v6408 = vadd.f32 %v4872, %v5896
        %v6409 = vadd.f32 %v4873, %v5897
        %v6410 = vadd.f32 %v4874, %v5898
        %v6411 = vadd.f32 %v4875, %v5899
        %v6412 = vadd.f32 %v4876, %v5900
        %v6413 = vadd.f32 %v4877, %v5901
        %v6414 = vadd.f32 %v4878, %v5902
        %v6415 = vadd.f32 %v4879, %v5903
        %v6416 = vadd.f32 %v4880, %v5904
        %v6417 = vadd.f32 %v4881, %v5905
        %v6418 = vadd.f32 %v4882, %v5906
        %s6419 = sadd.s32 %s274, 1
        %s6420 = smul.u32 %s6419, 4096
        %p6421 = scmp.gt.s32.totalorder %s6420, 13000
        %p6422 = scmp.le.s32.totalorder %s6420, 13000
        // Predicated region
        $region41: #{tpu_custom_call.1} parent=27 // pred_check
          %p6423 = pneg %p6422
        $region42: #{tpu_custom_call.1} parent=27 // pred_check_branch
          %6425 = sbr.rel (%p6423) target = $region44
        $region43: #{tpu_custom_call.1} parent=27 // pred_region
          %v6426 = vld [vmem:[#allocation2] sm:$0xff]
          %v6427 = vadd.f32 %v5907, %v5908
          %v6428 = vadd.f32 %v6427, %v5909
          %v6429 = vadd.f32 %v6428, %v5910
          %v6430 = vadd.f32 %v6429, %v5911
          %v6431 = vadd.f32 %v6430, %v5912
          %v6432 = vadd.f32 %v6431, %v5913
          %v6433 = vadd.f32 %v6432, %v5914
          %v6434 = vadd.f32 %v6433, %v5915
          %v6435 = vadd.f32 %v6434, %v5916
          %v6436 = vadd.f32 %v6435, %v5917
          %v6437 = vadd.f32 %v6436, %v5918
          %v6438 = vadd.f32 %v6437, %v5919
          %v6439 = vadd.f32 %v6438, %v5920
          %v6440 = vadd.f32 %v6439, %v5921
          %v6441 = vadd.f32 %v6440, %v5922
          %v6442 = vadd.f32 %v6441, %v5923
          %v6443 = vadd.f32 %v6442, %v5924
          %v6444 = vadd.f32 %v6443, %v5925
          %v6445 = vadd.f32 %v6444, %v5926
          %v6446 = vadd.f32 %v6445, %v5927
          %v6447 = vadd.f32 %v6446, %v5928
          %v6448 = vadd.f32 %v6447, %v5929
          %v6449 = vadd.f32 %v6448, %v5930
          %v6450 = vadd.f32 %v6449, %v5931
          %v6451 = vadd.f32 %v6450, %v5932
          %v6452 = vadd.f32 %v6451, %v5933
          %v6453 = vadd.f32 %v6452, %v5934
          %v6454 = vadd.f32 %v6453, %v5935
          %v6455 = vadd.f32 %v6454, %v5936
          %v6456 = vadd.f32 %v6455, %v5937
          %v6457 = vadd.f32 %v6456, %v5938
          %v6458 = vadd.f32 %v6457, %v5939
          %v6459 = vadd.f32 %v6458, %v5940
          %v6460 = vadd.f32 %v6459, %v5941
          %v6461 = vadd.f32 %v6460, %v5942
          %v6462 = vadd.f32 %v6461, %v5943
          %v6463 = vadd.f32 %v6462, %v5944
          %v6464 = vadd.f32 %v6463, %v5945
          %v6465 = vadd.f32 %v6464, %v5946
          %v6466 = vadd.f32 %v6465, %v5947
          %v6467 = vadd.f32 %v6466, %v5948
          %v6468 = vadd.f32 %v6467, %v5949
          %v6469 = vadd.f32 %v6468, %v5950
          %v6470 = vadd.f32 %v6469, %v5951
          %v6471 = vadd.f32 %v6470, %v5952
          %v6472 = vadd.f32 %v6471, %v5953
          %v6473 = vadd.f32 %v6472, %v5954
          %v6474 = vadd.f32 %v6473, %v5955
          %v6475 = vadd.f32 %v6474, %v5956
          %v6476 = vadd.f32 %v6475, %v5957
          %v6477 = vadd.f32 %v6476, %v5958
          %v6478 = vadd.f32 %v6477, %v5959
          %v6479 = vadd.f32 %v6478, %v5960
          %v6480 = vadd.f32 %v6479, %v5961
          %v6481 = vadd.f32 %v6480, %v5962
          %v6482 = vadd.f32 %v6481, %v5963
          %v6483 = vadd.f32 %v6482, %v5964
          %v6484 = vadd.f32 %v6483, %v5965
          %v6485 = vadd.f32 %v6484, %v5966
          %v6486 = vadd.f32 %v6485, %v5967
          %v6487 = vadd.f32 %v6486, %v5968
          %v6488 = vadd.f32 %v6487, %v5969
          %v6489 = vadd.f32 %v6488, %v5970
          %v6490 = vadd.f32 %v6489, %v5971
          %v6491 = vadd.f32 %v6490, %v5972
          %v6492 = vadd.f32 %v6491, %v5973
          %v6493 = vadd.f32 %v6492, %v5974
          %v6494 = vadd.f32 %v6493, %v5975
          %v6495 = vadd.f32 %v6494, %v5976
          %v6496 = vadd.f32 %v6495, %v5977
          %v6497 = vadd.f32 %v6496, %v5978
          %v6498 = vadd.f32 %v6497, %v5979
          %v6499 = vadd.f32 %v6498, %v5980
          %v6500 = vadd.f32 %v6499, %v5981
          %v6501 = vadd.f32 %v6500, %v5982
          %v6502 = vadd.f32 %v6501, %v5983
          %v6503 = vadd.f32 %v6502, %v5984
          %v6504 = vadd.f32 %v6503, %v5985
          %v6505 = vadd.f32 %v6504, %v5986
          %v6506 = vadd.f32 %v6505, %v5987
          %v6507 = vadd.f32 %v6506, %v5988
          %v6508 = vadd.f32 %v6507, %v5989
          %v6509 = vadd.f32 %v6508, %v5990
          %v6510 = vadd.f32 %v6509, %v5991
          %v6511 = vadd.f32 %v6510, %v5992
          %v6512 = vadd.f32 %v6511, %v5993
          %v6513 = vadd.f32 %v6512, %v5994
          %v6514 = vadd.f32 %v6513, %v5995
          %v6515 = vadd.f32 %v6514, %v5996
          %v6516 = vadd.f32 %v6515, %v5997
          %v6517 = vadd.f32 %v6516, %v5998
          %v6518 = vadd.f32 %v6517, %v5999
          %v6519 = vadd.f32 %v6518, %v6000
          %v6520 = vadd.f32 %v6519, %v6001
          %v6521 = vadd.f32 %v6520, %v6002
          %v6522 = vadd.f32 %v6521, %v6003
          %v6523 = vadd.f32 %v6522, %v6004
          %v6524 = vadd.f32 %v6523, %v6005
          %v6525 = vadd.f32 %v6524, %v6006
          %v6526 = vadd.f32 %v6525, %v6007
          %v6527 = vadd.f32 %v6526, %v6008
          %v6528 = vadd.f32 %v6527, %v6009
          %v6529 = vadd.f32 %v6528, %v6010
          %v6530 = vadd.f32 %v6529, %v6011
          %v6531 = vadd.f32 %v6530, %v6012
          %v6532 = vadd.f32 %v6531, %v6013
          %v6533 = vadd.f32 %v6532, %v6014
          %v6534 = vadd.f32 %v6533, %v6015
          %v6535 = vadd.f32 %v6534, %v6016
          %v6536 = vadd.f32 %v6535, %v6017
          %v6537 = vadd.f32 %v6536, %v6018
          %v6538 = vadd.f32 %v6537, %v6019
          %v6539 = vadd.f32 %v6538, %v6020
          %v6540 = vadd.f32 %v6539, %v6021
          %v6541 = vadd.f32 %v6540, %v6022
          %v6542 = vadd.f32 %v6541, %v6023
          %v6543 = vadd.f32 %v6542, %v6024
          %v6544 = vadd.f32 %v6543, %v6025
          %v6545 = vadd.f32 %v6544, %v6026
          %v6546 = vadd.f32 %v6545, %v6027
          %v6547 = vadd.f32 %v6546, %v6028
          %v6548 = vadd.f32 %v6547, %v6029
          %v6549 = vadd.f32 %v6548, %v6030
          %v6550 = vadd.f32 %v6549, %v6031
          %v6551 = vadd.f32 %v6550, %v6032
          %v6552 = vadd.f32 %v6551, %v6033
          %v6553 = vadd.f32 %v6552, %v6034
          %v6554 = vadd.f32 %v6553, %v6035
          %v6555 = vadd.f32 %v6554, %v6036
          %v6556 = vadd.f32 %v6555, %v6037
          %v6557 = vadd.f32 %v6556, %v6038
          %v6558 = vadd.f32 %v6557, %v6039
          %v6559 = vadd.f32 %v6558, %v6040
          %v6560 = vadd.f32 %v6559, %v6041
          %v6561 = vadd.f32 %v6560, %v6042
          %v6562 = vadd.f32 %v6561, %v6043
          %v6563 = vadd.f32 %v6562, %v6044
          %v6564 = vadd.f32 %v6563, %v6045
          %v6565 = vadd.f32 %v6564, %v6046
          %v6566 = vadd.f32 %v6565, %v6047
          %v6567 = vadd.f32 %v6566, %v6048
          %v6568 = vadd.f32 %v6567, %v6049
          %v6569 = vadd.f32 %v6568, %v6050
          %v6570 = vadd.f32 %v6569, %v6051
          %v6571 = vadd.f32 %v6570, %v6052
          %v6572 = vadd.f32 %v6571, %v6053
          %v6573 = vadd.f32 %v6572, %v6054
          %v6574 = vadd.f32 %v6573, %v6055
          %v6575 = vadd.f32 %v6574, %v6056
          %v6576 = vadd.f32 %v6575, %v6057
          %v6577 = vadd.f32 %v6576, %v6058
          %v6578 = vadd.f32 %v6577, %v6059
          %v6579 = vadd.f32 %v6578, %v6060
          %v6580 = vadd.f32 %v6579, %v6061
          %v6581 = vadd.f32 %v6580, %v6062
          %v6582 = vadd.f32 %v6581, %v6063
          %v6583 = vadd.f32 %v6582, %v6064
          %v6584 = vadd.f32 %v6583, %v6065
          %v6585 = vadd.f32 %v6584, %v6066
          %v6586 = vadd.f32 %v6585, %v6067
          %v6587 = vadd.f32 %v6586, %v6068
          %v6588 = vadd.f32 %v6587, %v6069
          %v6589 = vadd.f32 %v6588, %v6070
          %v6590 = vadd.f32 %v6589, %v6071
          %v6591 = vadd.f32 %v6590, %v6072
          %v6592 = vadd.f32 %v6591, %v6073
          %v6593 = vadd.f32 %v6592, %v6074
          %v6594 = vadd.f32 %v6593, %v6075
          %v6595 = vadd.f32 %v6594, %v6076
          %v6596 = vadd.f32 %v6595, %v6077
          %v6597 = vadd.f32 %v6596, %v6078
          %v6598 = vadd.f32 %v6597, %v6079
          %v6599 = vadd.f32 %v6598, %v6080
          %v6600 = vadd.f32 %v6599, %v6081
          %v6601 = vadd.f32 %v6600, %v6082
          %v6602 = vadd.f32 %v6601, %v6083
          %v6603 = vadd.f32 %v6602, %v6084
          %v6604 = vadd.f32 %v6603, %v6085
          %v6605 = vadd.f32 %v6604, %v6086
          %v6606 = vadd.f32 %v6605, %v6087
          %v6607 = vadd.f32 %v6606, %v6088
          %v6608 = vadd.f32 %v6607, %v6089
          %v6609 = vadd.f32 %v6608, %v6090
          %v6610 = vadd.f32 %v6609, %v6091
          %v6611 = vadd.f32 %v6610, %v6092
          %v6612 = vadd.f32 %v6611, %v6093
          %v6613 = vadd.f32 %v6612, %v6094
          %v6614 = vadd.f32 %v6613, %v6095
          %v6615 = vadd.f32 %v6614, %v6096
          %v6616 = vadd.f32 %v6615, %v6097
          %v6617 = vadd.f32 %v6616, %v6098
          %v6618 = vadd.f32 %v6617, %v6099
          %v6619 = vadd.f32 %v6618, %v6100
          %v6620 = vadd.f32 %v6619, %v6101
          %v6621 = vadd.f32 %v6620, %v6102
          %v6622 = vadd.f32 %v6621, %v6103
          %v6623 = vadd.f32 %v6622, %v6104
          %v6624 = vadd.f32 %v6623, %v6105
          %v6625 = vadd.f32 %v6624, %v6106
          %v6626 = vadd.f32 %v6625, %v6107
          %v6627 = vadd.f32 %v6626, %v6108
          %v6628 = vadd.f32 %v6627, %v6109
          %v6629 = vadd.f32 %v6628, %v6110
          %v6630 = vadd.f32 %v6629, %v6111
          %v6631 = vadd.f32 %v6630, %v6112
          %v6632 = vadd.f32 %v6631, %v6113
          %v6633 = vadd.f32 %v6632, %v6114
          %v6634 = vadd.f32 %v6633, %v6115
          %v6635 = vadd.f32 %v6634, %v6116
          %v6636 = vadd.f32 %v6635, %v6117
          %v6637 = vadd.f32 %v6636, %v6118
          %v6638 = vadd.f32 %v6637, %v6119
          %v6639 = vadd.f32 %v6638, %v6120
          %v6640 = vadd.f32 %v6639, %v6121
          %v6641 = vadd.f32 %v6640, %v6122
          %v6642 = vadd.f32 %v6641, %v6123
          %v6643 = vadd.f32 %v6642, %v6124
          %v6644 = vadd.f32 %v6643, %v6125
          %v6645 = vadd.f32 %v6644, %v6126
          %v6646 = vadd.f32 %v6645, %v6127
          %v6647 = vadd.f32 %v6646, %v6128
          %v6648 = vadd.f32 %v6647, %v6129
          %v6649 = vadd.f32 %v6648, %v6130
          %v6650 = vadd.f32 %v6649, %v6131
          %v6651 = vadd.f32 %v6650, %v6132
          %v6652 = vadd.f32 %v6651, %v6133
          %v6653 = vadd.f32 %v6652, %v6134
          %v6654 = vadd.f32 %v6653, %v6135
          %v6655 = vadd.f32 %v6654, %v6136
          %v6656 = vadd.f32 %v6655, %v6137
          %v6657 = vadd.f32 %v6656, %v6138
          %v6658 = vadd.f32 %v6657, %v6139
          %v6659 = vadd.f32 %v6658, %v6140
          %v6660 = vadd.f32 %v6659, %v6141
          %v6661 = vadd.f32 %v6660, %v6142
          %v6662 = vadd.f32 %v6661, %v6143
          %v6663 = vadd.f32 %v6662, %v6144
          %v6664 = vadd.f32 %v6663, %v6145
          %v6665 = vadd.f32 %v6664, %v6146
          %v6666 = vadd.f32 %v6665, %v6147
          %v6667 = vadd.f32 %v6666, %v6148
          %v6668 = vadd.f32 %v6667, %v6149
          %v6669 = vadd.f32 %v6668, %v6150
          %v6670 = vadd.f32 %v6669, %v6151
          %v6671 = vadd.f32 %v6670, %v6152
          %v6672 = vadd.f32 %v6671, %v6153
          %v6673 = vadd.f32 %v6672, %v6154
          %v6674 = vadd.f32 %v6673, %v6155
          %v6675 = vadd.f32 %v6674, %v6156
          %v6676 = vadd.f32 %v6675, %v6157
          %v6677 = vadd.f32 %v6676, %v6158
          %v6678 = vadd.f32 %v6677, %v6159
          %v6679 = vadd.f32 %v6678, %v6160
          %v6680 = vadd.f32 %v6679, %v6161
          %v6681 = vadd.f32 %v6680, %v6162
          %v6682 = vadd.f32 %v6681, %v6163
          %v6683 = vadd.f32 %v6682, %v6164
          %v6684 = vadd.f32 %v6683, %v6165
          %v6685 = vadd.f32 %v6684, %v6166
          %v6686 = vadd.f32 %v6685, %v6167
          %v6687 = vadd.f32 %v6686, %v6168
          %v6688 = vadd.f32 %v6687, %v6169
          %v6689 = vadd.f32 %v6688, %v6170
          %v6690 = vadd.f32 %v6689, %v6171
          %v6691 = vadd.f32 %v6690, %v6172
          %v6692 = vadd.f32 %v6691, %v6173
          %v6693 = vadd.f32 %v6692, %v6174
          %v6694 = vadd.f32 %v6693, %v6175
          %v6695 = vadd.f32 %v6694, %v6176
          %v6696 = vadd.f32 %v6695, %v6177
          %v6697 = vadd.f32 %v6696, %v6178
          %v6698 = vadd.f32 %v6697, %v6179
          %v6699 = vadd.f32 %v6698, %v6180
          %v6700 = vadd.f32 %v6699, %v6181
          %v6701 = vadd.f32 %v6700, %v6182
          %v6702 = vadd.f32 %v6701, %v6183
          %v6703 = vadd.f32 %v6702, %v6184
          %v6704 = vadd.f32 %v6703, %v6185
          %v6705 = vadd.f32 %v6704, %v6186
          %v6706 = vadd.f32 %v6705, %v6187
          %v6707 = vadd.f32 %v6706, %v6188
          %v6708 = vadd.f32 %v6707, %v6189
          %v6709 = vadd.f32 %v6708, %v6190
          %v6710 = vadd.f32 %v6709, %v6191
          %v6711 = vadd.f32 %v6710, %v6192
          %v6712 = vadd.f32 %v6711, %v6193
          %v6713 = vadd.f32 %v6712, %v6194
          %v6714 = vadd.f32 %v6713, %v6195
          %v6715 = vadd.f32 %v6714, %v6196
          %v6716 = vadd.f32 %v6715, %v6197
          %v6717 = vadd.f32 %v6716, %v6198
          %v6718 = vadd.f32 %v6717, %v6199
          %v6719 = vadd.f32 %v6718, %v6200
          %v6720 = vadd.f32 %v6719, %v6201
          %v6721 = vadd.f32 %v6720, %v6202
          %v6722 = vadd.f32 %v6721, %v6203
          %v6723 = vadd.f32 %v6722, %v6204
          %v6724 = vadd.f32 %v6723, %v6205
          %v6725 = vadd.f32 %v6724, %v6206
          %v6726 = vadd.f32 %v6725, %v6207
          %v6727 = vadd.f32 %v6726, %v6208
          %v6728 = vadd.f32 %v6727, %v6209
          %v6729 = vadd.f32 %v6728, %v6210
          %v6730 = vadd.f32 %v6729, %v6211
          %v6731 = vadd.f32 %v6730, %v6212
          %v6732 = vadd.f32 %v6731, %v6213
          %v6733 = vadd.f32 %v6732, %v6214
          %v6734 = vadd.f32 %v6733, %v6215
          %v6735 = vadd.f32 %v6734, %v6216
          %v6736 = vadd.f32 %v6735, %v6217
          %v6737 = vadd.f32 %v6736, %v6218
          %v6738 = vadd.f32 %v6737, %v6219
          %v6739 = vadd.f32 %v6738, %v6220
          %v6740 = vadd.f32 %v6739, %v6221
          %v6741 = vadd.f32 %v6740, %v6222
          %v6742 = vadd.f32 %v6741, %v6223
          %v6743 = vadd.f32 %v6742, %v6224
          %v6744 = vadd.f32 %v6743, %v6225
          %v6745 = vadd.f32 %v6744, %v6226
          %v6746 = vadd.f32 %v6745, %v6227
          %v6747 = vadd.f32 %v6746, %v6228
          %v6748 = vadd.f32 %v6747, %v6229
          %v6749 = vadd.f32 %v6748, %v6230
          %v6750 = vadd.f32 %v6749, %v6231
          %v6751 = vadd.f32 %v6750, %v6232
          %v6752 = vadd.f32 %v6751, %v6233
          %v6753 = vadd.f32 %v6752, %v6234
          %v6754 = vadd.f32 %v6753, %v6235
          %v6755 = vadd.f32 %v6754, %v6236
          %v6756 = vadd.f32 %v6755, %v6237
          %v6757 = vadd.f32 %v6756, %v6238
          %v6758 = vadd.f32 %v6757, %v6239
          %v6759 = vadd.f32 %v6758, %v6240
          %v6760 = vadd.f32 %v6759, %v6241
          %v6761 = vadd.f32 %v6760, %v6242
          %v6762 = vadd.f32 %v6761, %v6243
          %v6763 = vadd.f32 %v6762, %v6244
          %v6764 = vadd.f32 %v6763, %v6245
          %v6765 = vadd.f32 %v6764, %v6246
          %v6766 = vadd.f32 %v6765, %v6247
          %v6767 = vadd.f32 %v6766, %v6248
          %v6768 = vadd.f32 %v6767, %v6249
          %v6769 = vadd.f32 %v6768, %v6250
          %v6770 = vadd.f32 %v6769, %v6251
          %v6771 = vadd.f32 %v6770, %v6252
          %v6772 = vadd.f32 %v6771, %v6253
          %v6773 = vadd.f32 %v6772, %v6254
          %v6774 = vadd.f32 %v6773, %v6255
          %v6775 = vadd.f32 %v6774, %v6256
          %v6776 = vadd.f32 %v6775, %v6257
          %v6777 = vadd.f32 %v6776, %v6258
          %v6778 = vadd.f32 %v6777, %v6259
          %v6779 = vadd.f32 %v6778, %v6260
          %v6780 = vadd.f32 %v6779, %v6261
          %v6781 = vadd.f32 %v6780, %v6262
          %v6782 = vadd.f32 %v6781, %v6263
          %v6783 = vadd.f32 %v6782, %v6264
          %v6784 = vadd.f32 %v6783, %v6265
          %v6785 = vadd.f32 %v6784, %v6266
          %v6786 = vadd.f32 %v6785, %v6267
          %v6787 = vadd.f32 %v6786, %v6268
          %v6788 = vadd.f32 %v6787, %v6269
          %v6789 = vadd.f32 %v6788, %v6270
          %v6790 = vadd.f32 %v6789, %v6271
          %v6791 = vadd.f32 %v6790, %v6272
          %v6792 = vadd.f32 %v6791, %v6273
          %v6793 = vadd.f32 %v6792, %v6274
          %v6794 = vadd.f32 %v6793, %v6275
          %v6795 = vadd.f32 %v6794, %v6276
          %v6796 = vadd.f32 %v6795, %v6277
          %v6797 = vadd.f32 %v6796, %v6278
          %v6798 = vadd.f32 %v6797, %v6279
          %v6799 = vadd.f32 %v6798, %v6280
          %v6800 = vadd.f32 %v6799, %v6281
          %v6801 = vadd.f32 %v6800, %v6282
          %v6802 = vadd.f32 %v6801, %v6283
          %v6803 = vadd.f32 %v6802, %v6284
          %v6804 = vadd.f32 %v6803, %v6285
          %v6805 = vadd.f32 %v6804, %v6286
          %v6806 = vadd.f32 %v6805, %v6287
          %v6807 = vadd.f32 %v6806, %v6288
          %v6808 = vadd.f32 %v6807, %v6289
          %v6809 = vadd.f32 %v6808, %v6290
          %v6810 = vadd.f32 %v6809, %v6291
          %v6811 = vadd.f32 %v6810, %v6292
          %v6812 = vadd.f32 %v6811, %v6293
          %v6813 = vadd.f32 %v6812, %v6294
          %v6814 = vadd.f32 %v6813, %v6295
          %v6815 = vadd.f32 %v6814, %v6296
          %v6816 = vadd.f32 %v6815, %v6297
          %v6817 = vadd.f32 %v6816, %v6298
          %v6818 = vadd.f32 %v6817, %v6299
          %v6819 = vadd.f32 %v6818, %v6300
          %v6820 = vadd.f32 %v6819, %v6301
          %v6821 = vadd.f32 %v6820, %v6302
          %v6822 = vadd.f32 %v6821, %v6303
          %v6823 = vadd.f32 %v6822, %v6304
          %v6824 = vadd.f32 %v6823, %v6305
          %v6825 = vadd.f32 %v6824, %v6306
          %v6826 = vadd.f32 %v6825, %v6307
          %v6827 = vadd.f32 %v6826, %v6308
          %v6828 = vadd.f32 %v6827, %v6309
          %v6829 = vadd.f32 %v6828, %v6310
          %v6830 = vadd.f32 %v6829, %v6311
          %v6831 = vadd.f32 %v6830, %v6312
          %v6832 = vadd.f32 %v6831, %v6313
          %v6833 = vadd.f32 %v6832, %v6314
          %v6834 = vadd.f32 %v6833, %v6315
          %v6835 = vadd.f32 %v6834, %v6316
          %v6836 = vadd.f32 %v6835, %v6317
          %v6837 = vadd.f32 %v6836, %v6318
          %v6838 = vadd.f32 %v6837, %v6319
          %v6839 = vadd.f32 %v6838, %v6320
          %v6840 = vadd.f32 %v6839, %v6321
          %v6841 = vadd.f32 %v6840, %v6322
          %v6842 = vadd.f32 %v6841, %v6323
          %v6843 = vadd.f32 %v6842, %v6324
          %v6844 = vadd.f32 %v6843, %v6325
          %v6845 = vadd.f32 %v6844, %v6326
          %v6846 = vadd.f32 %v6845, %v6327
          %v6847 = vadd.f32 %v6846, %v6328
          %v6848 = vadd.f32 %v6847, %v6329
          %v6849 = vadd.f32 %v6848, %v6330
          %v6850 = vadd.f32 %v6849, %v6331
          %v6851 = vadd.f32 %v6850, %v6332
          %v6852 = vadd.f32 %v6851, %v6333
          %v6853 = vadd.f32 %v6852, %v6334
          %v6854 = vadd.f32 %v6853, %v6335
          %v6855 = vadd.f32 %v6854, %v6336
          %v6856 = vadd.f32 %v6855, %v6337
          %v6857 = vadd.f32 %v6856, %v6338
          %v6858 = vadd.f32 %v6857, %v6339
          %v6859 = vadd.f32 %v6858, %v6340
          %v6860 = vadd.f32 %v6859, %v6341
          %v6861 = vadd.f32 %v6860, %v6342
          %v6862 = vadd.f32 %v6861, %v6343
          %v6863 = vadd.f32 %v6862, %v6344
          %v6864 = vadd.f32 %v6863, %v6345
          %v6865 = vadd.f32 %v6864, %v6346
          %v6866 = vadd.f32 %v6865, %v6347
          %v6867 = vadd.f32 %v6866, %v6348
          %v6868 = vadd.f32 %v6867, %v6349
          %v6869 = vadd.f32 %v6868, %v6350
          %v6870 = vadd.f32 %v6869, %v6351
          %v6871 = vadd.f32 %v6870, %v6352
          %v6872 = vadd.f32 %v6871, %v6353
          %v6873 = vadd.f32 %v6872, %v6354
          %v6874 = vadd.f32 %v6873, %v6355
          %v6875 = vadd.f32 %v6874, %v6356
          %v6876 = vadd.f32 %v6875, %v6357
          %v6877 = vadd.f32 %v6876, %v6358
          %v6878 = vadd.f32 %v6877, %v6359
          %v6879 = vadd.f32 %v6878, %v6360
          %v6880 = vadd.f32 %v6879, %v6361
          %v6881 = vadd.f32 %v6880, %v6362
          %v6882 = vadd.f32 %v6881, %v6363
          %v6883 = vadd.f32 %v6882, %v6364
          %v6884 = vadd.f32 %v6883, %v6365
          %v6885 = vadd.f32 %v6884, %v6366
          %v6886 = vadd.f32 %v6885, %v6367
          %v6887 = vadd.f32 %v6886, %v6368
          %v6888 = vadd.f32 %v6887, %v6369
          %v6889 = vadd.f32 %v6888, %v6370
          %v6890 = vadd.f32 %v6889, %v6371
          %v6891 = vadd.f32 %v6890, %v6372
          %v6892 = vadd.f32 %v6891, %v6373
          %v6893 = vadd.f32 %v6892, %v6374
          %v6894 = vadd.f32 %v6893, %v6375
          %v6895 = vadd.f32 %v6894, %v6376
          %v6896 = vadd.f32 %v6895, %v6377
          %v6897 = vadd.f32 %v6896, %v6378
          %v6898 = vadd.f32 %v6897, %v6379
          %v6899 = vadd.f32 %v6898, %v6380
          %v6900 = vadd.f32 %v6899, %v6381
          %v6901 = vadd.f32 %v6900, %v6382
          %v6902 = vadd.f32 %v6901, %v6383
          %v6903 = vadd.f32 %v6902, %v6384
          %v6904 = vadd.f32 %v6903, %v6385
          %v6905 = vadd.f32 %v6904, %v6386
          %v6906 = vadd.f32 %v6905, %v6387
          %v6907 = vadd.f32 %v6906, %v6388
          %v6908 = vadd.f32 %v6907, %v6389
          %v6909 = vadd.f32 %v6908, %v6390
          %v6910 = vadd.f32 %v6909, %v6391
          %v6911 = vadd.f32 %v6910, %v6392
          %v6912 = vadd.f32 %v6911, %v6393
          %v6913 = vadd.f32 %v6912, %v6394
          %v6914 = vadd.f32 %v6913, %v6395
          %v6915 = vadd.f32 %v6914, %v6396
          %v6916 = vadd.f32 %v6915, %v6397
          %v6917 = vadd.f32 %v6916, %v6398
          %v6918 = vadd.f32 %v6917, %v6399
          %v6919 = vadd.f32 %v6918, %v6400
          %v6920 = vadd.f32 %v6919, %v6401
          %v6921 = vadd.f32 %v6920, %v6402
          %v6922 = vadd.f32 %v6921, %v6403
          %v6923 = vadd.f32 %v6922, %v6404
          %v6924 = vadd.f32 %v6923, %v6405
          %v6925 = vadd.f32 %v6924, %v6406
          %v6926 = vadd.f32 %v6925, %v6407
          %v6927 = vadd.f32 %v6926, %v6408
          %v6928 = vadd.f32 %v6927, %v6409
          %v6929 = vadd.f32 %v6928, %v6410
          %v6930 = vadd.f32 %v6929, %v6411
          %v6931 = vadd.f32 %v6930, %v6412
          %v6932 = vadd.f32 %v6931, %v6413
          %v6933 = vadd.f32 %v6932, %v6414
          %v6934 = vadd.f32 %v6933, %v6415
          %v6935 = vadd.f32 %v6934, %v6416
          %v6936 = vadd.f32 %v6935, %v6417
          %v6937 = vadd.f32 %v6936, %v6418
          %v6938 = vadd.f32 %v6426, %v6937
          %6939 = vst [vmem:[#allocation2] sm:$0xff] %v6938
        $region44: #{tpu_custom_call.1} parent=27 // pred_fallthru
          _
        // Predicated region
        $region45: #{tpu_custom_call.1} parent=27 // pred_check
          %p6940 = pneg %p6421
        $region46: #{tpu_custom_call.1} parent=27 // pred_check_branch
          %6942 = sbr.rel (%p6940) target = $region48
        $region47: #{tpu_custom_call.1} parent=27 // pred_region
          %s6943 = smul.u32 %s274, 4096
          %v6944 = vlaneseq
          %v6945 = vshrl.u32 %v6944, 7
          %v6946 = vadd.s32 %v6945, 8
          %v6947 = vadd.s32 %v6945, 16
          %v6948 = vadd.s32 %v6945, 24
          %v6949 = vadd.s32 %v6945, 32
          %v6950 = vadd.s32 %v6945, 40
          %v6951 = vadd.s32 %v6945, 48
          %v6952 = vadd.s32 %v6945, 56
          %v6953 = vadd.s32 %v6945, 64
          %v6954 = vadd.s32 %v6945, 72
          %v6955 = vadd.s32 %v6945, 80
          %v6956 = vadd.s32 %v6945, 88
          %v6957 = vadd.s32 %v6945, 96
          %v6958 = vadd.s32 %v6945, 104
          %v6959 = vadd.s32 %v6945, 112
          %v6960 = vadd.s32 %v6945, 120
          %v6961 = vadd.s32 %v6945, 128
          %v6962 = vadd.s32 %v6945, 136
          %v6963 = vadd.s32 %v6945, 144
          %v6964 = vadd.s32 %v6945, 152
          %v6965 = vadd.s32 %v6945, 160
          %v6966 = vadd.s32 %v6945, 168
          %v6967 = vadd.s32 %v6945, 176
          %v6968 = vadd.s32 %v6945, 184
          %v6969 = vadd.s32 %v6945, 192
          %v6970 = vadd.s32 %v6945, 200
          %v6971 = vadd.s32 %v6945, 208
          %v6972 = vadd.s32 %v6945, 216
          %v6973 = vadd.s32 %v6945, 224
          %v6974 = vadd.s32 %v6945, 232
          %v6975 = vadd.s32 %v6945, 240
          %v6976 = vadd.s32 %v6945, 248
          %v6977 = vadd.s32 %v6945, 256
          %v6978 = vadd.s32 %v6945, 264
          %v6979 = vadd.s32 %v6945, 272
          %v6980 = vadd.s32 %v6945, 280
          %v6981 = vadd.s32 %v6945, 288
          %v6982 = vadd.s32 %v6945, 296
          %v6983 = vadd.s32 %v6945, 304
          %v6984 = vadd.s32 %v6945, 312
          %v6985 = vadd.s32 %v6945, 320
          %v6986 = vadd.s32 %v6945, 328
          %v6987 = vadd.s32 %v6945, 336
          %v6988 = vadd.s32 %v6945, 344
          %v6989 = vadd.s32 %v6945, 352
          %v6990 = vadd.s32 %v6945, 360
          %v6991 = vadd.s32 %v6945, 368
          %v6992 = vadd.s32 %v6945, 376
          %v6993 = vadd.s32 %v6945, 384
          %v6994 = vadd.s32 %v6945, 392
          %v6995 = vadd.s32 %v6945, 400
          %v6996 = vadd.s32 %v6945, 408
          %v6997 = vadd.s32 %v6945, 416
          %v6998 = vadd.s32 %v6945, 424
          %v6999 = vadd.s32 %v6945, 432
          %v7000 = vadd.s32 %v6945, 440
          %v7001 = vadd.s32 %v6945, 448
          %v7002 = vadd.s32 %v6945, 456
          %v7003 = vadd.s32 %v6945, 464
          %v7004 = vadd.s32 %v6945, 472
          %v7005 = vadd.s32 %v6945, 480
          %v7006 = vadd.s32 %v6945, 488
          %v7007 = vadd.s32 %v6945, 496
          %v7008 = vadd.s32 %v6945, 504
          %v7009 = vadd.s32 %v6945, 512
          %v7010 = vadd.s32 %v6945, 520
          %v7011 = vadd.s32 %v6945, 528
          %v7012 = vadd.s32 %v6945, 536
          %v7013 = vadd.s32 %v6945, 544
          %v7014 = vadd.s32 %v6945, 552
          %v7015 = vadd.s32 %v6945, 560
          %v7016 = vadd.s32 %v6945, 568
          %v7017 = vadd.s32 %v6945, 576
          %v7018 = vadd.s32 %v6945, 584
          %v7019 = vadd.s32 %v6945, 592
          %v7020 = vadd.s32 %v6945, 600
          %v7021 = vadd.s32 %v6945, 608
          %v7022 = vadd.s32 %v6945, 616
          %v7023 = vadd.s32 %v6945, 624
          %v7024 = vadd.s32 %v6945, 632
          %v7025 = vadd.s32 %v6945, 640
          %v7026 = vadd.s32 %v6945, 648
          %v7027 = vadd.s32 %v6945, 656
          %v7028 = vadd.s32 %v6945, 664
          %v7029 = vadd.s32 %v6945, 672
          %v7030 = vadd.s32 %v6945, 680
          %v7031 = vadd.s32 %v6945, 688
          %v7032 = vadd.s32 %v6945, 696
          %v7033 = vadd.s32 %v6945, 704
          %v7034 = vadd.s32 %v6945, 712
          %v7035 = vadd.s32 %v6945, 720
          %v7036 = vadd.s32 %v6945, 728
          %v7037 = vadd.s32 %v6945, 736
          %v7038 = vadd.s32 %v6945, 744
          %v7039 = vadd.s32 %v6945, 752
          %v7040 = vadd.s32 %v6945, 760
          %v7041 = vadd.s32 %v6945, 768
          %v7042 = vadd.s32 %v6945, 776
          %v7043 = vadd.s32 %v6945, 784
          %v7044 = vadd.s32 %v6945, 792
          %v7045 = vadd.s32 %v6945, 800
          %v7046 = vadd.s32 %v6945, 808
          %v7047 = vadd.s32 %v6945, 816
          %v7048 = vadd.s32 %v6945, 824
          %v7049 = vadd.s32 %v6945, 832
          %v7050 = vadd.s32 %v6945, 840
          %v7051 = vadd.s32 %v6945, 848
          %v7052 = vadd.s32 %v6945, 856
          %v7053 = vadd.s32 %v6945, 864
          %v7054 = vadd.s32 %v6945, 872
          %v7055 = vadd.s32 %v6945, 880
          %v7056 = vadd.s32 %v6945, 888
          %v7057 = vadd.s32 %v6945, 896
          %v7058 = vadd.s32 %v6945, 904
          %v7059 = vadd.s32 %v6945, 912
          %v7060 = vadd.s32 %v6945, 920
          %v7061 = vadd.s32 %v6945, 928
          %v7062 = vadd.s32 %v6945, 936
          %v7063 = vadd.s32 %v6945, 944
          %v7064 = vadd.s32 %v6945, 952
          %v7065 = vadd.s32 %v6945, 960
          %v7066 = vadd.s32 %v6945, 968
          %v7067 = vadd.s32 %v6945, 976
          %v7068 = vadd.s32 %v6945, 984
          %v7069 = vadd.s32 %v6945, 992
          %v7070 = vadd.s32 %v6945, 1000
          %v7071 = vadd.s32 %v6945, 1008
          %v7072 = vadd.s32 %v6945, 1016
          %v7073 = vadd.s32 %v6945, 1024
          %v7074 = vadd.s32 %v6945, 1032
          %v7075 = vadd.s32 %v6945, 1040
          %v7076 = vadd.s32 %v6945, 1048
          %v7077 = vadd.s32 %v6945, 1056
          %v7078 = vadd.s32 %v6945, 1064
          %v7079 = vadd.s32 %v6945, 1072
          %v7080 = vadd.s32 %v6945, 1080
          %v7081 = vadd.s32 %v6945, 1088
          %v7082 = vadd.s32 %v6945, 1096
          %v7083 = vadd.s32 %v6945, 1104
          %v7084 = vadd.s32 %v6945, 1112
          %v7085 = vadd.s32 %v6945, 1120
          %v7086 = vadd.s32 %v6945, 1128
          %v7087 = vadd.s32 %v6945, 1136
          %v7088 = vadd.s32 %v6945, 1144
          %v7089 = vadd.s32 %v6945, 1152
          %v7090 = vadd.s32 %v6945, 1160
          %v7091 = vadd.s32 %v6945, 1168
          %v7092 = vadd.s32 %v6945, 1176
          %v7093 = vadd.s32 %v6945, 1184
          %v7094 = vadd.s32 %v6945, 1192
          %v7095 = vadd.s32 %v6945, 1200
          %v7096 = vadd.s32 %v6945, 1208
          %v7097 = vadd.s32 %v6945, 1216
          %v7098 = vadd.s32 %v6945, 1224
          %v7099 = vadd.s32 %v6945, 1232
          %v7100 = vadd.s32 %v6945, 1240
          %v7101 = vadd.s32 %v6945, 1248
          %v7102 = vadd.s32 %v6945, 1256
          %v7103 = vadd.s32 %v6945, 1264
          %v7104 = vadd.s32 %v6945, 1272
          %v7105 = vadd.s32 %v6945, 1280
          %v7106 = vadd.s32 %v6945, 1288
          %v7107 = vadd.s32 %v6945, 1296
          %v7108 = vadd.s32 %v6945, 1304
          %v7109 = vadd.s32 %v6945, 1312
          %v7110 = vadd.s32 %v6945, 1320
          %v7111 = vadd.s32 %v6945, 1328
          %v7112 = vadd.s32 %v6945, 1336
          %v7113 = vadd.s32 %v6945, 1344
          %v7114 = vadd.s32 %v6945, 1352
          %v7115 = vadd.s32 %v6945, 1360
          %v7116 = vadd.s32 %v6945, 1368
          %v7117 = vadd.s32 %v6945, 1376
          %v7118 = vadd.s32 %v6945, 1384
          %v7119 = vadd.s32 %v6945, 1392
          %v7120 = vadd.s32 %v6945, 1400
          %v7121 = vadd.s32 %v6945, 1408
          %v7122 = vadd.s32 %v6945, 1416
          %v7123 = vadd.s32 %v6945, 1424
          %v7124 = vadd.s32 %v6945, 1432
          %v7125 = vadd.s32 %v6945, 1440
          %v7126 = vadd.s32 %v6945, 1448
          %v7127 = vadd.s32 %v6945, 1456
          %v7128 = vadd.s32 %v6945, 1464
          %v7129 = vadd.s32 %v6945, 1472
          %v7130 = vadd.s32 %v6945, 1480
          %v7131 = vadd.s32 %v6945, 1488
          %v7132 = vadd.s32 %v6945, 1496
          %v7133 = vadd.s32 %v6945, 1504
          %v7134 = vadd.s32 %v6945, 1512
          %v7135 = vadd.s32 %v6945, 1520
          %v7136 = vadd.s32 %v6945, 1528
          %v7137 = vadd.s32 %v6945, 1536
          %v7138 = vadd.s32 %v6945, 1544
          %v7139 = vadd.s32 %v6945, 1552
          %v7140 = vadd.s32 %v6945, 1560
          %v7141 = vadd.s32 %v6945, 1568
          %v7142 = vadd.s32 %v6945, 1576
          %v7143 = vadd.s32 %v6945, 1584
          %v7144 = vadd.s32 %v6945, 1592
          %v7145 = vadd.s32 %v6945, 1600
          %v7146 = vadd.s32 %v6945, 1608
          %v7147 = vadd.s32 %v6945, 1616
          %v7148 = vadd.s32 %v6945, 1624
          %v7149 = vadd.s32 %v6945, 1632
          %v7150 = vadd.s32 %v6945, 1640
          %v7151 = vadd.s32 %v6945, 1648
          %v7152 = vadd.s32 %v6945, 1656
          %v7153 = vadd.s32 %v6945, 1664
          %v7154 = vadd.s32 %v6945, 1672
          %v7155 = vadd.s32 %v6945, 1680
          %v7156 = vadd.s32 %v6945, 1688
          %v7157 = vadd.s32 %v6945, 1696
          %v7158 = vadd.s32 %v6945, 1704
          %v7159 = vadd.s32 %v6945, 1712
          %v7160 = vadd.s32 %v6945, 1720
          %v7161 = vadd.s32 %v6945, 1728
          %v7162 = vadd.s32 %v6945, 1736
          %v7163 = vadd.s32 %v6945, 1744
          %v7164 = vadd.s32 %v6945, 1752
          %v7165 = vadd.s32 %v6945, 1760
          %v7166 = vadd.s32 %v6945, 1768
          %v7167 = vadd.s32 %v6945, 1776
          %v7168 = vadd.s32 %v6945, 1784
          %v7169 = vadd.s32 %v6945, 1792
          %v7170 = vadd.s32 %v6945, 1800
          %v7171 = vadd.s32 %v6945, 1808
          %v7172 = vadd.s32 %v6945, 1816
          %v7173 = vadd.s32 %v6945, 1824
          %v7174 = vadd.s32 %v6945, 1832
          %v7175 = vadd.s32 %v6945, 1840
          %v7176 = vadd.s32 %v6945, 1848
          %v7177 = vadd.s32 %v6945, 1856
          %v7178 = vadd.s32 %v6945, 1864
          %v7179 = vadd.s32 %v6945, 1872
          %v7180 = vadd.s32 %v6945, 1880
          %v7181 = vadd.s32 %v6945, 1888
          %v7182 = vadd.s32 %v6945, 1896
          %v7183 = vadd.s32 %v6945, 1904
          %v7184 = vadd.s32 %v6945, 1912
          %v7185 = vadd.s32 %v6945, 1920
          %v7186 = vadd.s32 %v6945, 1928
          %v7187 = vadd.s32 %v6945, 1936
          %v7188 = vadd.s32 %v6945, 1944
          %v7189 = vadd.s32 %v6945, 1952
          %v7190 = vadd.s32 %v6945, 1960
          %v7191 = vadd.s32 %v6945, 1968
          %v7192 = vadd.s32 %v6945, 1976
          %v7193 = vadd.s32 %v6945, 1984
          %v7194 = vadd.s32 %v6945, 1992
          %v7195 = vadd.s32 %v6945, 2000
          %v7196 = vadd.s32 %v6945, 2008
          %v7197 = vadd.s32 %v6945, 2016
          %v7198 = vadd.s32 %v6945, 2024
          %v7199 = vadd.s32 %v6945, 2032
          %v7200 = vadd.s32 %v6945, 2040
          %v7201 = vadd.s32 %v6945, 2048
          %v7202 = vadd.s32 %v6945, 2056
          %v7203 = vadd.s32 %v6945, 2064
          %v7204 = vadd.s32 %v6945, 2072
          %v7205 = vadd.s32 %v6945, 2080
          %v7206 = vadd.s32 %v6945, 2088
          %v7207 = vadd.s32 %v6945, 2096
          %v7208 = vadd.s32 %v6945, 2104
          %v7209 = vadd.s32 %v6945, 2112
          %v7210 = vadd.s32 %v6945, 2120
          %v7211 = vadd.s32 %v6945, 2128
          %v7212 = vadd.s32 %v6945, 2136
          %v7213 = vadd.s32 %v6945, 2144
          %v7214 = vadd.s32 %v6945, 2152
          %v7215 = vadd.s32 %v6945, 2160
          %v7216 = vadd.s32 %v6945, 2168
          %v7217 = vadd.s32 %v6945, 2176
          %v7218 = vadd.s32 %v6945, 2184
          %v7219 = vadd.s32 %v6945, 2192
          %v7220 = vadd.s32 %v6945, 2200
          %v7221 = vadd.s32 %v6945, 2208
          %v7222 = vadd.s32 %v6945, 2216
          %v7223 = vadd.s32 %v6945, 2224
          %v7224 = vadd.s32 %v6945, 2232
          %v7225 = vadd.s32 %v6945, 2240
          %v7226 = vadd.s32 %v6945, 2248
          %v7227 = vadd.s32 %v6945, 2256
          %v7228 = vadd.s32 %v6945, 2264
          %v7229 = vadd.s32 %v6945, 2272
          %v7230 = vadd.s32 %v6945, 2280
          %v7231 = vadd.s32 %v6945, 2288
          %v7232 = vadd.s32 %v6945, 2296
          %v7233 = vadd.s32 %v6945, 2304
          %v7234 = vadd.s32 %v6945, 2312
          %v7235 = vadd.s32 %v6945, 2320
          %v7236 = vadd.s32 %v6945, 2328
          %v7237 = vadd.s32 %v6945, 2336
          %v7238 = vadd.s32 %v6945, 2344
          %v7239 = vadd.s32 %v6945, 2352
          %v7240 = vadd.s32 %v6945, 2360
          %v7241 = vadd.s32 %v6945, 2368
          %v7242 = vadd.s32 %v6945, 2376
          %v7243 = vadd.s32 %v6945, 2384
          %v7244 = vadd.s32 %v6945, 2392
          %v7245 = vadd.s32 %v6945, 2400
          %v7246 = vadd.s32 %v6945, 2408
          %v7247 = vadd.s32 %v6945, 2416
          %v7248 = vadd.s32 %v6945, 2424
          %v7249 = vadd.s32 %v6945, 2432
          %v7250 = vadd.s32 %v6945, 2440
          %v7251 = vadd.s32 %v6945, 2448
          %v7252 = vadd.s32 %v6945, 2456
          %v7253 = vadd.s32 %v6945, 2464
          %v7254 = vadd.s32 %v6945, 2472
          %v7255 = vadd.s32 %v6945, 2480
          %v7256 = vadd.s32 %v6945, 2488
          %v7257 = vadd.s32 %v6945, 2496
          %v7258 = vadd.s32 %v6945, 2504
          %v7259 = vadd.s32 %v6945, 2512
          %v7260 = vadd.s32 %v6945, 2520
          %v7261 = vadd.s32 %v6945, 2528
          %v7262 = vadd.s32 %v6945, 2536
          %v7263 = vadd.s32 %v6945, 2544
          %v7264 = vadd.s32 %v6945, 2552
          %v7265 = vadd.s32 %v6945, 2560
          %v7266 = vadd.s32 %v6945, 2568
          %v7267 = vadd.s32 %v6945, 2576
          %v7268 = vadd.s32 %v6945, 2584
          %v7269 = vadd.s32 %v6945, 2592
          %v7270 = vadd.s32 %v6945, 2600
          %v7271 = vadd.s32 %v6945, 2608
          %v7272 = vadd.s32 %v6945, 2616
          %v7273 = vadd.s32 %v6945, 2624
          %v7274 = vadd.s32 %v6945, 2632
          %v7275 = vadd.s32 %v6945, 2640
          %v7276 = vadd.s32 %v6945, 2648
          %v7277 = vadd.s32 %v6945, 2656
          %v7278 = vadd.s32 %v6945, 2664
          %v7279 = vadd.s32 %v6945, 2672
          %v7280 = vadd.s32 %v6945, 2680
          %v7281 = vadd.s32 %v6945, 2688
          %v7282 = vadd.s32 %v6945, 2696
          %v7283 = vadd.s32 %v6945, 2704
          %v7284 = vadd.s32 %v6945, 2712
          %v7285 = vadd.s32 %v6945, 2720
          %v7286 = vadd.s32 %v6945, 2728
          %v7287 = vadd.s32 %v6945, 2736
          %v7288 = vadd.s32 %v6945, 2744
          %v7289 = vadd.s32 %v6945, 2752
          %v7290 = vadd.s32 %v6945, 2760
          %v7291 = vadd.s32 %v6945, 2768
          %v7292 = vadd.s32 %v6945, 2776
          %v7293 = vadd.s32 %v6945, 2784
          %v7294 = vadd.s32 %v6945, 2792
          %v7295 = vadd.s32 %v6945, 2800
          %v7296 = vadd.s32 %v6945, 2808
          %v7297 = vadd.s32 %v6945, 2816
          %v7298 = vadd.s32 %v6945, 2824
          %v7299 = vadd.s32 %v6945, 2832
          %v7300 = vadd.s32 %v6945, 2840
          %v7301 = vadd.s32 %v6945, 2848
          %v7302 = vadd.s32 %v6945, 2856
          %v7303 = vadd.s32 %v6945, 2864
          %v7304 = vadd.s32 %v6945, 2872
          %v7305 = vadd.s32 %v6945, 2880
          %v7306 = vadd.s32 %v6945, 2888
          %v7307 = vadd.s32 %v6945, 2896
          %v7308 = vadd.s32 %v6945, 2904
          %v7309 = vadd.s32 %v6945, 2912
          %v7310 = vadd.s32 %v6945, 2920
          %v7311 = vadd.s32 %v6945, 2928
          %v7312 = vadd.s32 %v6945, 2936
          %v7313 = vadd.s32 %v6945, 2944
          %v7314 = vadd.s32 %v6945, 2952
          %v7315 = vadd.s32 %v6945, 2960
          %v7316 = vadd.s32 %v6945, 2968
          %v7317 = vadd.s32 %v6945, 2976
          %v7318 = vadd.s32 %v6945, 2984
          %v7319 = vadd.s32 %v6945, 2992
          %v7320 = vadd.s32 %v6945, 3000
          %v7321 = vadd.s32 %v6945, 3008
          %v7322 = vadd.s32 %v6945, 3016
          %v7323 = vadd.s32 %v6945, 3024
          %v7324 = vadd.s32 %v6945, 3032
          %v7325 = vadd.s32 %v6945, 3040
          %v7326 = vadd.s32 %v6945, 3048
          %v7327 = vadd.s32 %v6945, 3056
          %v7328 = vadd.s32 %v6945, 3064
          %v7329 = vadd.s32 %v6945, 3072
          %v7330 = vadd.s32 %v6945, 3080
          %v7331 = vadd.s32 %v6945, 3088
          %v7332 = vadd.s32 %v6945, 3096
          %v7333 = vadd.s32 %v6945, 3104
          %v7334 = vadd.s32 %v6945, 3112
          %v7335 = vadd.s32 %v6945, 3120
          %v7336 = vadd.s32 %v6945, 3128
          %v7337 = vadd.s32 %v6945, 3136
          %v7338 = vadd.s32 %v6945, 3144
          %v7339 = vadd.s32 %v6945, 3152
          %v7340 = vadd.s32 %v6945, 3160
          %v7341 = vadd.s32 %v6945, 3168
          %v7342 = vadd.s32 %v6945, 3176
          %v7343 = vadd.s32 %v6945, 3184
          %v7344 = vadd.s32 %v6945, 3192
          %v7345 = vadd.s32 %v6945, 3200
          %v7346 = vadd.s32 %v6945, 3208
          %v7347 = vadd.s32 %v6945, 3216
          %v7348 = vadd.s32 %v6945, 3224
          %v7349 = vadd.s32 %v6945, 3232
          %v7350 = vadd.s32 %v6945, 3240
          %v7351 = vadd.s32 %v6945, 3248
          %v7352 = vadd.s32 %v6945, 3256
          %v7353 = vadd.s32 %v6945, 3264
          %v7354 = vadd.s32 %v6945, 3272
          %v7355 = vadd.s32 %v6945, 3280
          %v7356 = vadd.s32 %v6945, 3288
          %v7357 = vadd.s32 %v6945, 3296
          %v7358 = vadd.s32 %v6945, 3304
          %v7359 = vadd.s32 %v6945, 3312
          %v7360 = vadd.s32 %v6945, 3320
          %v7361 = vadd.s32 %v6945, 3328
          %v7362 = vadd.s32 %v6945, 3336
          %v7363 = vadd.s32 %v6945, 3344
          %v7364 = vadd.s32 %v6945, 3352
          %v7365 = vadd.s32 %v6945, 3360
          %v7366 = vadd.s32 %v6945, 3368
          %v7367 = vadd.s32 %v6945, 3376
          %v7368 = vadd.s32 %v6945, 3384
          %v7369 = vadd.s32 %v6945, 3392
          %v7370 = vadd.s32 %v6945, 3400
          %v7371 = vadd.s32 %v6945, 3408
          %v7372 = vadd.s32 %v6945, 3416
          %v7373 = vadd.s32 %v6945, 3424
          %v7374 = vadd.s32 %v6945, 3432
          %v7375 = vadd.s32 %v6945, 3440
          %v7376 = vadd.s32 %v6945, 3448
          %v7377 = vadd.s32 %v6945, 3456
          %v7378 = vadd.s32 %v6945, 3464
          %v7379 = vadd.s32 %v6945, 3472
          %v7380 = vadd.s32 %v6945, 3480
          %v7381 = vadd.s32 %v6945, 3488
          %v7382 = vadd.s32 %v6945, 3496
          %v7383 = vadd.s32 %v6945, 3504
          %v7384 = vadd.s32 %v6945, 3512
          %v7385 = vadd.s32 %v6945, 3520
          %v7386 = vadd.s32 %v6945, 3528
          %v7387 = vadd.s32 %v6945, 3536
          %v7388 = vadd.s32 %v6945, 3544
          %v7389 = vadd.s32 %v6945, 3552
          %v7390 = vadd.s32 %v6945, 3560
          %v7391 = vadd.s32 %v6945, 3568
          %v7392 = vadd.s32 %v6945, 3576
          %v7393 = vadd.s32 %v6945, 3584
          %v7394 = vadd.s32 %v6945, 3592
          %v7395 = vadd.s32 %v6945, 3600
          %v7396 = vadd.s32 %v6945, 3608
          %v7397 = vadd.s32 %v6945, 3616
          %v7398 = vadd.s32 %v6945, 3624
          %v7399 = vadd.s32 %v6945, 3632
          %v7400 = vadd.s32 %v6945, 3640
          %v7401 = vadd.s32 %v6945, 3648
          %v7402 = vadd.s32 %v6945, 3656
          %v7403 = vadd.s32 %v6945, 3664
          %v7404 = vadd.s32 %v6945, 3672
          %v7405 = vadd.s32 %v6945, 3680
          %v7406 = vadd.s32 %v6945, 3688
          %v7407 = vadd.s32 %v6945, 3696
          %v7408 = vadd.s32 %v6945, 3704
          %v7409 = vadd.s32 %v6945, 3712
          %v7410 = vadd.s32 %v6945, 3720
          %v7411 = vadd.s32 %v6945, 3728
          %v7412 = vadd.s32 %v6945, 3736
          %v7413 = vadd.s32 %v6945, 3744
          %v7414 = vadd.s32 %v6945, 3752
          %v7415 = vadd.s32 %v6945, 3760
          %v7416 = vadd.s32 %v6945, 3768
          %v7417 = vadd.s32 %v6945, 3776
          %v7418 = vadd.s32 %v6945, 3784
          %v7419 = vadd.s32 %v6945, 3792
          %v7420 = vadd.s32 %v6945, 3800
          %v7421 = vadd.s32 %v6945, 3808
          %v7422 = vadd.s32 %v6945, 3816
          %v7423 = vadd.s32 %v6945, 3824
          %v7424 = vadd.s32 %v6945, 3832
          %v7425 = vadd.s32 %v6945, 3840
          %v7426 = vadd.s32 %v6945, 3848
          %v7427 = vadd.s32 %v6945, 3856
          %v7428 = vadd.s32 %v6945, 3864
          %v7429 = vadd.s32 %v6945, 3872
          %v7430 = vadd.s32 %v6945, 3880
          %v7431 = vadd.s32 %v6945, 3888
          %v7432 = vadd.s32 %v6945, 3896
          %v7433 = vadd.s32 %v6945, 3904
          %v7434 = vadd.s32 %v6945, 3912
          %v7435 = vadd.s32 %v6945, 3920
          %v7436 = vadd.s32 %v6945, 3928
          %v7437 = vadd.s32 %v6945, 3936
          %v7438 = vadd.s32 %v6945, 3944
          %v7439 = vadd.s32 %v6945, 3952
          %v7440 = vadd.s32 %v6945, 3960
          %v7441 = vadd.s32 %v6945, 3968
          %v7442 = vadd.s32 %v6945, 3976
          %v7443 = vadd.s32 %v6945, 3984
          %v7444 = vadd.s32 %v6945, 3992
          %v7445 = vadd.s32 %v6945, 4000
          %v7446 = vadd.s32 %v6945, 4008
          %v7447 = vadd.s32 %v6945, 4016
          %v7448 = vadd.s32 %v6945, 4024
          %v7449 = vadd.s32 %v6945, 4032
          %v7450 = vadd.s32 %v6945, 4040
          %v7451 = vadd.s32 %v6945, 4048
          %v7452 = vadd.s32 %v6945, 4056
          %v7453 = vadd.s32 %v6945, 4064
          %v7454 = vadd.s32 %v6945, 4072
          %v7455 = vadd.s32 %v6945, 4080
          %v7456 = vadd.s32 %v6945, 4088
          %v7457 = vstv %s6943
          %v7458 = vadd.s32 %v7457, %v6945
          %v7459 = vadd.s32 %v7457, %v6946
          %v7460 = vadd.s32 %v7457, %v6947
          %v7461 = vadd.s32 %v7457, %v6948
          %v7462 = vadd.s32 %v7457, %v6949
          %v7463 = vadd.s32 %v7457, %v6950
          %v7464 = vadd.s32 %v7457, %v6951
          %v7465 = vadd.s32 %v7457, %v6952
          %v7466 = vadd.s32 %v7457, %v6953
          %v7467 = vadd.s32 %v7457, %v6954
          %v7468 = vadd.s32 %v7457, %v6955
          %v7469 = vadd.s32 %v7457, %v6956
          %v7470 = vadd.s32 %v7457, %v6957
          %v7471 = vadd.s32 %v7457, %v6958
          %v7472 = vadd.s32 %v7457, %v6959
          %v7473 = vadd.s32 %v7457, %v6960
          %v7474 = vadd.s32 %v7457, %v6961
          %v7475 = vadd.s32 %v7457, %v6962
          %v7476 = vadd.s32 %v7457, %v6963
          %v7477 = vadd.s32 %v7457, %v6964
          %v7478 = vadd.s32 %v7457, %v6965
          %v7479 = vadd.s32 %v7457, %v6966
          %v7480 = vadd.s32 %v7457, %v6967
          %v7481 = vadd.s32 %v7457, %v6968
          %v7482 = vadd.s32 %v7457, %v6969
          %v7483 = vadd.s32 %v7457, %v6970
          %v7484 = vadd.s32 %v7457, %v6971
          %v7485 = vadd.s32 %v7457, %v6972
          %v7486 = vadd.s32 %v7457, %v6973
          %v7487 = vadd.s32 %v7457, %v6974
          %v7488 = vadd.s32 %v7457, %v6975
          %v7489 = vadd.s32 %v7457, %v6976
          %v7490 = vadd.s32 %v7457, %v6977
          %v7491 = vadd.s32 %v7457, %v6978
          %v7492 = vadd.s32 %v7457, %v6979
          %v7493 = vadd.s32 %v7457, %v6980
          %v7494 = vadd.s32 %v7457, %v6981
          %v7495 = vadd.s32 %v7457, %v6982
          %v7496 = vadd.s32 %v7457, %v6983
          %v7497 = vadd.s32 %v7457, %v6984
          %v7498 = vadd.s32 %v7457, %v6985
          %v7499 = vadd.s32 %v7457, %v6986
          %v7500 = vadd.s32 %v7457, %v6987
          %v7501 = vadd.s32 %v7457, %v6988
          %v7502 = vadd.s32 %v7457, %v6989
          %v7503 = vadd.s32 %v7457, %v6990
          %v7504 = vadd.s32 %v7457, %v6991
          %v7505 = vadd.s32 %v7457, %v6992
          %v7506 = vadd.s32 %v7457, %v6993
          %v7507 = vadd.s32 %v7457, %v6994
          %v7508 = vadd.s32 %v7457, %v6995
          %v7509 = vadd.s32 %v7457, %v6996
          %v7510 = vadd.s32 %v7457, %v6997
          %v7511 = vadd.s32 %v7457, %v6998
          %v7512 = vadd.s32 %v7457, %v6999
          %v7513 = vadd.s32 %v7457, %v7000
          %v7514 = vadd.s32 %v7457, %v7001
          %v7515 = vadd.s32 %v7457, %v7002
          %v7516 = vadd.s32 %v7457, %v7003
          %v7517 = vadd.s32 %v7457, %v7004
          %v7518 = vadd.s32 %v7457, %v7005
          %v7519 = vadd.s32 %v7457, %v7006
          %v7520 = vadd.s32 %v7457, %v7007
          %v7521 = vadd.s32 %v7457, %v7008
          %v7522 = vadd.s32 %v7457, %v7009
          %v7523 = vadd.s32 %v7457, %v7010
          %v7524 = vadd.s32 %v7457, %v7011
          %v7525 = vadd.s32 %v7457, %v7012
          %v7526 = vadd.s32 %v7457, %v7013
          %v7527 = vadd.s32 %v7457, %v7014
          %v7528 = vadd.s32 %v7457, %v7015
          %v7529 = vadd.s32 %v7457, %v7016
          %v7530 = vadd.s32 %v7457, %v7017
          %v7531 = vadd.s32 %v7457, %v7018
          %v7532 = vadd.s32 %v7457, %v7019
          %v7533 = vadd.s32 %v7457, %v7020
          %v7534 = vadd.s32 %v7457, %v7021
          %v7535 = vadd.s32 %v7457, %v7022
          %v7536 = vadd.s32 %v7457, %v7023
          %v7537 = vadd.s32 %v7457, %v7024
          %v7538 = vadd.s32 %v7457, %v7025
          %v7539 = vadd.s32 %v7457, %v7026
          %v7540 = vadd.s32 %v7457, %v7027
          %v7541 = vadd.s32 %v7457, %v7028
          %v7542 = vadd.s32 %v7457, %v7029
          %v7543 = vadd.s32 %v7457, %v7030
          %v7544 = vadd.s32 %v7457, %v7031
          %v7545 = vadd.s32 %v7457, %v7032
          %v7546 = vadd.s32 %v7457, %v7033
          %v7547 = vadd.s32 %v7457, %v7034
          %v7548 = vadd.s32 %v7457, %v7035
          %v7549 = vadd.s32 %v7457, %v7036
          %v7550 = vadd.s32 %v7457, %v7037
          %v7551 = vadd.s32 %v7457, %v7038
          %v7552 = vadd.s32 %v7457, %v7039
          %v7553 = vadd.s32 %v7457, %v7040
          %v7554 = vadd.s32 %v7457, %v7041
          %v7555 = vadd.s32 %v7457, %v7042
          %v7556 = vadd.s32 %v7457, %v7043
          %v7557 = vadd.s32 %v7457, %v7044
          %v7558 = vadd.s32 %v7457, %v7045
          %v7559 = vadd.s32 %v7457, %v7046
          %v7560 = vadd.s32 %v7457, %v7047
          %v7561 = vadd.s32 %v7457, %v7048
          %v7562 = vadd.s32 %v7457, %v7049
          %v7563 = vadd.s32 %v7457, %v7050
          %v7564 = vadd.s32 %v7457, %v7051
          %v7565 = vadd.s32 %v7457, %v7052
          %v7566 = vadd.s32 %v7457, %v7053
          %v7567 = vadd.s32 %v7457, %v7054
          %v7568 = vadd.s32 %v7457, %v7055
          %v7569 = vadd.s32 %v7457, %v7056
          %v7570 = vadd.s32 %v7457, %v7057
          %v7571 = vadd.s32 %v7457, %v7058
          %v7572 = vadd.s32 %v7457, %v7059
          %v7573 = vadd.s32 %v7457, %v7060
          %v7574 = vadd.s32 %v7457, %v7061
          %v7575 = vadd.s32 %v7457, %v7062
          %v7576 = vadd.s32 %v7457, %v7063
          %v7577 = vadd.s32 %v7457, %v7064
          %v7578 = vadd.s32 %v7457, %v7065
          %v7579 = vadd.s32 %v7457, %v7066
          %v7580 = vadd.s32 %v7457, %v7067
          %v7581 = vadd.s32 %v7457, %v7068
          %v7582 = vadd.s32 %v7457, %v7069
          %v7583 = vadd.s32 %v7457, %v7070
          %v7584 = vadd.s32 %v7457, %v7071
          %v7585 = vadd.s32 %v7457, %v7072
          %v7586 = vadd.s32 %v7457, %v7073
          %v7587 = vadd.s32 %v7457, %v7074
          %v7588 = vadd.s32 %v7457, %v7075
          %v7589 = vadd.s32 %v7457, %v7076
          %v7590 = vadd.s32 %v7457, %v7077
          %v7591 = vadd.s32 %v7457, %v7078
          %v7592 = vadd.s32 %v7457, %v7079
          %v7593 = vadd.s32 %v7457, %v7080
          %v7594 = vadd.s32 %v7457, %v7081
          %v7595 = vadd.s32 %v7457, %v7082
          %v7596 = vadd.s32 %v7457, %v7083
          %v7597 = vadd.s32 %v7457, %v7084
          %v7598 = vadd.s32 %v7457, %v7085
          %v7599 = vadd.s32 %v7457, %v7086
          %v7600 = vadd.s32 %v7457, %v7087
          %v7601 = vadd.s32 %v7457, %v7088
          %v7602 = vadd.s32 %v7457, %v7089
          %v7603 = vadd.s32 %v7457, %v7090
          %v7604 = vadd.s32 %v7457, %v7091
          %v7605 = vadd.s32 %v7457, %v7092
          %v7606 = vadd.s32 %v7457, %v7093
          %v7607 = vadd.s32 %v7457, %v7094
          %v7608 = vadd.s32 %v7457, %v7095
          %v7609 = vadd.s32 %v7457, %v7096
          %v7610 = vadd.s32 %v7457, %v7097
          %v7611 = vadd.s32 %v7457, %v7098
          %v7612 = vadd.s32 %v7457, %v7099
          %v7613 = vadd.s32 %v7457, %v7100
          %v7614 = vadd.s32 %v7457, %v7101
          %v7615 = vadd.s32 %v7457, %v7102
          %v7616 = vadd.s32 %v7457, %v7103
          %v7617 = vadd.s32 %v7457, %v7104
          %v7618 = vadd.s32 %v7457, %v7105
          %v7619 = vadd.s32 %v7457, %v7106
          %v7620 = vadd.s32 %v7457, %v7107
          %v7621 = vadd.s32 %v7457, %v7108
          %v7622 = vadd.s32 %v7457, %v7109
          %v7623 = vadd.s32 %v7457, %v7110
          %v7624 = vadd.s32 %v7457, %v7111
          %v7625 = vadd.s32 %v7457, %v7112
          %v7626 = vadd.s32 %v7457, %v7113
          %v7627 = vadd.s32 %v7457, %v7114
          %v7628 = vadd.s32 %v7457, %v7115
          %v7629 = vadd.s32 %v7457, %v7116
          %v7630 = vadd.s32 %v7457, %v7117
          %v7631 = vadd.s32 %v7457, %v7118
          %v7632 = vadd.s32 %v7457, %v7119
          %v7633 = vadd.s32 %v7457, %v7120
          %v7634 = vadd.s32 %v7457, %v7121
          %v7635 = vadd.s32 %v7457, %v7122
          %v7636 = vadd.s32 %v7457, %v7123
          %v7637 = vadd.s32 %v7457, %v7124
          %v7638 = vadd.s32 %v7457, %v7125
          %v7639 = vadd.s32 %v7457, %v7126
          %v7640 = vadd.s32 %v7457, %v7127
          %v7641 = vadd.s32 %v7457, %v7128
          %v7642 = vadd.s32 %v7457, %v7129
          %v7643 = vadd.s32 %v7457, %v7130
          %v7644 = vadd.s32 %v7457, %v7131
          %v7645 = vadd.s32 %v7457, %v7132
          %v7646 = vadd.s32 %v7457, %v7133
          %v7647 = vadd.s32 %v7457, %v7134
          %v7648 = vadd.s32 %v7457, %v7135
          %v7649 = vadd.s32 %v7457, %v7136
          %v7650 = vadd.s32 %v7457, %v7137
          %v7651 = vadd.s32 %v7457, %v7138
          %v7652 = vadd.s32 %v7457, %v7139
          %v7653 = vadd.s32 %v7457, %v7140
          %v7654 = vadd.s32 %v7457, %v7141
          %v7655 = vadd.s32 %v7457, %v7142
          %v7656 = vadd.s32 %v7457, %v7143
          %v7657 = vadd.s32 %v7457, %v7144
          %v7658 = vadd.s32 %v7457, %v7145
          %v7659 = vadd.s32 %v7457, %v7146
          %v7660 = vadd.s32 %v7457, %v7147
          %v7661 = vadd.s32 %v7457, %v7148
          %v7662 = vadd.s32 %v7457, %v7149
          %v7663 = vadd.s32 %v7457, %v7150
          %v7664 = vadd.s32 %v7457, %v7151
          %v7665 = vadd.s32 %v7457, %v7152
          %v7666 = vadd.s32 %v7457, %v7153
          %v7667 = vadd.s32 %v7457, %v7154
          %v7668 = vadd.s32 %v7457, %v7155
          %v7669 = vadd.s32 %v7457, %v7156
          %v7670 = vadd.s32 %v7457, %v7157
          %v7671 = vadd.s32 %v7457, %v7158
          %v7672 = vadd.s32 %v7457, %v7159
          %v7673 = vadd.s32 %v7457, %v7160
          %v7674 = vadd.s32 %v7457, %v7161
          %v7675 = vadd.s32 %v7457, %v7162
          %v7676 = vadd.s32 %v7457, %v7163
          %v7677 = vadd.s32 %v7457, %v7164
          %v7678 = vadd.s32 %v7457, %v7165
          %v7679 = vadd.s32 %v7457, %v7166
          %v7680 = vadd.s32 %v7457, %v7167
          %v7681 = vadd.s32 %v7457, %v7168
          %v7682 = vadd.s32 %v7457, %v7169
          %v7683 = vadd.s32 %v7457, %v7170
          %v7684 = vadd.s32 %v7457, %v7171
          %v7685 = vadd.s32 %v7457, %v7172
          %v7686 = vadd.s32 %v7457, %v7173
          %v7687 = vadd.s32 %v7457, %v7174
          %v7688 = vadd.s32 %v7457, %v7175
          %v7689 = vadd.s32 %v7457, %v7176
          %v7690 = vadd.s32 %v7457, %v7177
          %v7691 = vadd.s32 %v7457, %v7178
          %v7692 = vadd.s32 %v7457, %v7179
          %v7693 = vadd.s32 %v7457, %v7180
          %v7694 = vadd.s32 %v7457, %v7181
          %v7695 = vadd.s32 %v7457, %v7182
          %v7696 = vadd.s32 %v7457, %v7183
          %v7697 = vadd.s32 %v7457, %v7184
          %v7698 = vadd.s32 %v7457, %v7185
          %v7699 = vadd.s32 %v7457, %v7186
          %v7700 = vadd.s32 %v7457, %v7187
          %v7701 = vadd.s32 %v7457, %v7188
          %v7702 = vadd.s32 %v7457, %v7189
          %v7703 = vadd.s32 %v7457, %v7190
          %v7704 = vadd.s32 %v7457, %v7191
          %v7705 = vadd.s32 %v7457, %v7192
          %v7706 = vadd.s32 %v7457, %v7193
          %v7707 = vadd.s32 %v7457, %v7194
          %v7708 = vadd.s32 %v7457, %v7195
          %v7709 = vadd.s32 %v7457, %v7196
          %v7710 = vadd.s32 %v7457, %v7197
          %v7711 = vadd.s32 %v7457, %v7198
          %v7712 = vadd.s32 %v7457, %v7199
          %v7713 = vadd.s32 %v7457, %v7200
          %v7714 = vadd.s32 %v7457, %v7201
          %v7715 = vadd.s32 %v7457, %v7202
          %v7716 = vadd.s32 %v7457, %v7203
          %v7717 = vadd.s32 %v7457, %v7204
          %v7718 = vadd.s32 %v7457, %v7205
          %v7719 = vadd.s32 %v7457, %v7206
          %v7720 = vadd.s32 %v7457, %v7207
          %v7721 = vadd.s32 %v7457, %v7208
          %v7722 = vadd.s32 %v7457, %v7209
          %v7723 = vadd.s32 %v7457, %v7210
          %v7724 = vadd.s32 %v7457, %v7211
          %v7725 = vadd.s32 %v7457, %v7212
          %v7726 = vadd.s32 %v7457, %v7213
          %v7727 = vadd.s32 %v7457, %v7214
          %v7728 = vadd.s32 %v7457, %v7215
          %v7729 = vadd.s32 %v7457, %v7216
          %v7730 = vadd.s32 %v7457, %v7217
          %v7731 = vadd.s32 %v7457, %v7218
          %v7732 = vadd.s32 %v7457, %v7219
          %v7733 = vadd.s32 %v7457, %v7220
          %v7734 = vadd.s32 %v7457, %v7221
          %v7735 = vadd.s32 %v7457, %v7222
          %v7736 = vadd.s32 %v7457, %v7223
          %v7737 = vadd.s32 %v7457, %v7224
          %v7738 = vadd.s32 %v7457, %v7225
          %v7739 = vadd.s32 %v7457, %v7226
          %v7740 = vadd.s32 %v7457, %v7227
          %v7741 = vadd.s32 %v7457, %v7228
          %v7742 = vadd.s32 %v7457, %v7229
          %v7743 = vadd.s32 %v7457, %v7230
          %v7744 = vadd.s32 %v7457, %v7231
          %v7745 = vadd.s32 %v7457, %v7232
          %v7746 = vadd.s32 %v7457, %v7233
          %v7747 = vadd.s32 %v7457, %v7234
          %v7748 = vadd.s32 %v7457, %v7235
          %v7749 = vadd.s32 %v7457, %v7236
          %v7750 = vadd.s32 %v7457, %v7237
          %v7751 = vadd.s32 %v7457, %v7238
          %v7752 = vadd.s32 %v7457, %v7239
          %v7753 = vadd.s32 %v7457, %v7240
          %v7754 = vadd.s32 %v7457, %v7241
          %v7755 = vadd.s32 %v7457, %v7242
          %v7756 = vadd.s32 %v7457, %v7243
          %v7757 = vadd.s32 %v7457, %v7244
          %v7758 = vadd.s32 %v7457, %v7245
          %v7759 = vadd.s32 %v7457, %v7246
          %v7760 = vadd.s32 %v7457, %v7247
          %v7761 = vadd.s32 %v7457, %v7248
          %v7762 = vadd.s32 %v7457, %v7249
          %v7763 = vadd.s32 %v7457, %v7250
          %v7764 = vadd.s32 %v7457, %v7251
          %v7765 = vadd.s32 %v7457, %v7252
          %v7766 = vadd.s32 %v7457, %v7253
          %v7767 = vadd.s32 %v7457, %v7254
          %v7768 = vadd.s32 %v7457, %v7255
          %v7769 = vadd.s32 %v7457, %v7256
          %v7770 = vadd.s32 %v7457, %v7257
          %v7771 = vadd.s32 %v7457, %v7258
          %v7772 = vadd.s32 %v7457, %v7259
          %v7773 = vadd.s32 %v7457, %v7260
          %v7774 = vadd.s32 %v7457, %v7261
          %v7775 = vadd.s32 %v7457, %v7262
          %v7776 = vadd.s32 %v7457, %v7263
          %v7777 = vadd.s32 %v7457, %v7264
          %v7778 = vadd.s32 %v7457, %v7265
          %v7779 = vadd.s32 %v7457, %v7266
          %v7780 = vadd.s32 %v7457, %v7267
          %v7781 = vadd.s32 %v7457, %v7268
          %v7782 = vadd.s32 %v7457, %v7269
          %v7783 = vadd.s32 %v7457, %v7270
          %v7784 = vadd.s32 %v7457, %v7271
          %v7785 = vadd.s32 %v7457, %v7272
          %v7786 = vadd.s32 %v7457, %v7273
          %v7787 = vadd.s32 %v7457, %v7274
          %v7788 = vadd.s32 %v7457, %v7275
          %v7789 = vadd.s32 %v7457, %v7276
          %v7790 = vadd.s32 %v7457, %v7277
          %v7791 = vadd.s32 %v7457, %v7278
          %v7792 = vadd.s32 %v7457, %v7279
          %v7793 = vadd.s32 %v7457, %v7280
          %v7794 = vadd.s32 %v7457, %v7281
          %v7795 = vadd.s32 %v7457, %v7282
          %v7796 = vadd.s32 %v7457, %v7283
          %v7797 = vadd.s32 %v7457, %v7284
          %v7798 = vadd.s32 %v7457, %v7285
          %v7799 = vadd.s32 %v7457, %v7286
          %v7800 = vadd.s32 %v7457, %v7287
          %v7801 = vadd.s32 %v7457, %v7288
          %v7802 = vadd.s32 %v7457, %v7289
          %v7803 = vadd.s32 %v7457, %v7290
          %v7804 = vadd.s32 %v7457, %v7291
          %v7805 = vadd.s32 %v7457, %v7292
          %v7806 = vadd.s32 %v7457, %v7293
          %v7807 = vadd.s32 %v7457, %v7294
          %v7808 = vadd.s32 %v7457, %v7295
          %v7809 = vadd.s32 %v7457, %v7296
          %v7810 = vadd.s32 %v7457, %v7297
          %v7811 = vadd.s32 %v7457, %v7298
          %v7812 = vadd.s32 %v7457, %v7299
          %v7813 = vadd.s32 %v7457, %v7300
          %v7814 = vadd.s32 %v7457, %v7301
          %v7815 = vadd.s32 %v7457, %v7302
          %v7816 = vadd.s32 %v7457, %v7303
          %v7817 = vadd.s32 %v7457, %v7304
          %v7818 = vadd.s32 %v7457, %v7305
          %v7819 = vadd.s32 %v7457, %v7306
          %v7820 = vadd.s32 %v7457, %v7307
          %v7821 = vadd.s32 %v7457, %v7308
          %v7822 = vadd.s32 %v7457, %v7309
          %v7823 = vadd.s32 %v7457, %v7310
          %v7824 = vadd.s32 %v7457, %v7311
          %v7825 = vadd.s32 %v7457, %v7312
          %v7826 = vadd.s32 %v7457, %v7313
          %v7827 = vadd.s32 %v7457, %v7314
          %v7828 = vadd.s32 %v7457, %v7315
          %v7829 = vadd.s32 %v7457, %v7316
          %v7830 = vadd.s32 %v7457, %v7317
          %v7831 = vadd.s32 %v7457, %v7318
          %v7832 = vadd.s32 %v7457, %v7319
          %v7833 = vadd.s32 %v7457, %v7320
          %v7834 = vadd.s32 %v7457, %v7321
          %v7835 = vadd.s32 %v7457, %v7322
          %v7836 = vadd.s32 %v7457, %v7323
          %v7837 = vadd.s32 %v7457, %v7324
          %v7838 = vadd.s32 %v7457, %v7325
          %v7839 = vadd.s32 %v7457, %v7326
          %v7840 = vadd.s32 %v7457, %v7327
          %v7841 = vadd.s32 %v7457, %v7328
          %v7842 = vadd.s32 %v7457, %v7329
          %v7843 = vadd.s32 %v7457, %v7330
          %v7844 = vadd.s32 %v7457, %v7331
          %v7845 = vadd.s32 %v7457, %v7332
          %v7846 = vadd.s32 %v7457, %v7333
          %v7847 = vadd.s32 %v7457, %v7334
          %v7848 = vadd.s32 %v7457, %v7335
          %v7849 = vadd.s32 %v7457, %v7336
          %v7850 = vadd.s32 %v7457, %v7337
          %v7851 = vadd.s32 %v7457, %v7338
          %v7852 = vadd.s32 %v7457, %v7339
          %v7853 = vadd.s32 %v7457, %v7340
          %v7854 = vadd.s32 %v7457, %v7341
          %v7855 = vadd.s32 %v7457, %v7342
          %v7856 = vadd.s32 %v7457, %v7343
          %v7857 = vadd.s32 %v7457, %v7344
          %v7858 = vadd.s32 %v7457, %v7345
          %v7859 = vadd.s32 %v7457, %v7346
          %v7860 = vadd.s32 %v7457, %v7347
          %v7861 = vadd.s32 %v7457, %v7348
          %v7862 = vadd.s32 %v7457, %v7349
          %v7863 = vadd.s32 %v7457, %v7350
          %v7864 = vadd.s32 %v7457, %v7351
          %v7865 = vadd.s32 %v7457, %v7352
          %v7866 = vadd.s32 %v7457, %v7353
          %v7867 = vadd.s32 %v7457, %v7354
          %v7868 = vadd.s32 %v7457, %v7355
          %v7869 = vadd.s32 %v7457, %v7356
          %v7870 = vadd.s32 %v7457, %v7357
          %v7871 = vadd.s32 %v7457, %v7358
          %v7872 = vadd.s32 %v7457, %v7359
          %v7873 = vadd.s32 %v7457, %v7360
          %v7874 = vadd.s32 %v7457, %v7361
          %v7875 = vadd.s32 %v7457, %v7362
          %v7876 = vadd.s32 %v7457, %v7363
          %v7877 = vadd.s32 %v7457, %v7364
          %v7878 = vadd.s32 %v7457, %v7365
          %v7879 = vadd.s32 %v7457, %v7366
          %v7880 = vadd.s32 %v7457, %v7367
          %v7881 = vadd.s32 %v7457, %v7368
          %v7882 = vadd.s32 %v7457, %v7369
          %v7883 = vadd.s32 %v7457, %v7370
          %v7884 = vadd.s32 %v7457, %v7371
          %v7885 = vadd.s32 %v7457, %v7372
          %v7886 = vadd.s32 %v7457, %v7373
          %v7887 = vadd.s32 %v7457, %v7374
          %v7888 = vadd.s32 %v7457, %v7375
          %v7889 = vadd.s32 %v7457, %v7376
          %v7890 = vadd.s32 %v7457, %v7377
          %v7891 = vadd.s32 %v7457, %v7378
          %v7892 = vadd.s32 %v7457, %v7379
          %v7893 = vadd.s32 %v7457, %v7380
          %v7894 = vadd.s32 %v7457, %v7381
          %v7895 = vadd.s32 %v7457, %v7382
          %v7896 = vadd.s32 %v7457, %v7383
          %v7897 = vadd.s32 %v7457, %v7384
          %v7898 = vadd.s32 %v7457, %v7385
          %v7899 = vadd.s32 %v7457, %v7386
          %v7900 = vadd.s32 %v7457, %v7387
          %v7901 = vadd.s32 %v7457, %v7388
          %v7902 = vadd.s32 %v7457, %v7389
          %v7903 = vadd.s32 %v7457, %v7390
          %v7904 = vadd.s32 %v7457, %v7391
          %v7905 = vadd.s32 %v7457, %v7392
          %v7906 = vadd.s32 %v7457, %v7393
          %v7907 = vadd.s32 %v7457, %v7394
          %v7908 = vadd.s32 %v7457, %v7395
          %v7909 = vadd.s32 %v7457, %v7396
          %v7910 = vadd.s32 %v7457, %v7397
          %v7911 = vadd.s32 %v7457, %v7398
          %v7912 = vadd.s32 %v7457, %v7399
          %v7913 = vadd.s32 %v7457, %v7400
          %v7914 = vadd.s32 %v7457, %v7401
          %v7915 = vadd.s32 %v7457, %v7402
          %v7916 = vadd.s32 %v7457, %v7403
          %v7917 = vadd.s32 %v7457, %v7404
          %v7918 = vadd.s32 %v7457, %v7405
          %v7919 = vadd.s32 %v7457, %v7406
          %v7920 = vadd.s32 %v7457, %v7407
          %v7921 = vadd.s32 %v7457, %v7408
          %v7922 = vadd.s32 %v7457, %v7409
          %v7923 = vadd.s32 %v7457, %v7410
          %v7924 = vadd.s32 %v7457, %v7411
          %v7925 = vadd.s32 %v7457, %v7412
          %v7926 = vadd.s32 %v7457, %v7413
          %v7927 = vadd.s32 %v7457, %v7414
          %v7928 = vadd.s32 %v7457, %v7415
          %v7929 = vadd.s32 %v7457, %v7416
          %v7930 = vadd.s32 %v7457, %v7417
          %v7931 = vadd.s32 %v7457, %v7418
          %v7932 = vadd.s32 %v7457, %v7419
          %v7933 = vadd.s32 %v7457, %v7420
          %v7934 = vadd.s32 %v7457, %v7421
          %v7935 = vadd.s32 %v7457, %v7422
          %v7936 = vadd.s32 %v7457, %v7423
          %v7937 = vadd.s32 %v7457, %v7424
          %v7938 = vadd.s32 %v7457, %v7425
          %v7939 = vadd.s32 %v7457, %v7426
          %v7940 = vadd.s32 %v7457, %v7427
          %v7941 = vadd.s32 %v7457, %v7428
          %v7942 = vadd.s32 %v7457, %v7429
          %v7943 = vadd.s32 %v7457, %v7430
          %v7944 = vadd.s32 %v7457, %v7431
          %v7945 = vadd.s32 %v7457, %v7432
          %v7946 = vadd.s32 %v7457, %v7433
          %v7947 = vadd.s32 %v7457, %v7434
          %v7948 = vadd.s32 %v7457, %v7435
          %v7949 = vadd.s32 %v7457, %v7436
          %v7950 = vadd.s32 %v7457, %v7437
          %v7951 = vadd.s32 %v7457, %v7438
          %v7952 = vadd.s32 %v7457, %v7439
          %v7953 = vadd.s32 %v7457, %v7440
          %v7954 = vadd.s32 %v7457, %v7441
          %v7955 = vadd.s32 %v7457, %v7442
          %v7956 = vadd.s32 %v7457, %v7443
          %v7957 = vadd.s32 %v7457, %v7444
          %v7958 = vadd.s32 %v7457, %v7445
          %v7959 = vadd.s32 %v7457, %v7446
          %v7960 = vadd.s32 %v7457, %v7447
          %v7961 = vadd.s32 %v7457, %v7448
          %v7962 = vadd.s32 %v7457, %v7449
          %v7963 = vadd.s32 %v7457, %v7450
          %v7964 = vadd.s32 %v7457, %v7451
          %v7965 = vadd.s32 %v7457, %v7452
          %v7966 = vadd.s32 %v7457, %v7453
          %v7967 = vadd.s32 %v7457, %v7454
          %v7968 = vadd.s32 %v7457, %v7455
          %v7969 = vadd.s32 %v7457, %v7456
          %vm7970 = vcmp.lt.s32.totalorder %v7458, 13000
          %vm7971 = vcmp.lt.s32.totalorder %v7459, 13000
          %vm7972 = vcmp.lt.s32.totalorder %v7460, 13000
          %vm7973 = vcmp.lt.s32.totalorder %v7461, 13000
          %vm7974 = vcmp.lt.s32.totalorder %v7462, 13000
          %vm7975 = vcmp.lt.s32.totalorder %v7463, 13000
          %vm7976 = vcmp.lt.s32.totalorder %v7464, 13000
          %vm7977 = vcmp.lt.s32.totalorder %v7465, 13000
          %vm7978 = vcmp.lt.s32.totalorder %v7466, 13000
          %vm7979 = vcmp.lt.s32.totalorder %v7467, 13000
          %vm7980 = vcmp.lt.s32.totalorder %v7468, 13000
          %vm7981 = vcmp.lt.s32.totalorder %v7469, 13000
          %vm7982 = vcmp.lt.s32.totalorder %v7470, 13000
          %vm7983 = vcmp.lt.s32.totalorder %v7471, 13000
          %vm7984 = vcmp.lt.s32.totalorder %v7472, 13000
          %vm7985 = vcmp.lt.s32.totalorder %v7473, 13000
          %vm7986 = vcmp.lt.s32.totalorder %v7474, 13000
          %vm7987 = vcmp.lt.s32.totalorder %v7475, 13000
          %vm7988 = vcmp.lt.s32.totalorder %v7476, 13000
          %vm7989 = vcmp.lt.s32.totalorder %v7477, 13000
          %vm7990 = vcmp.lt.s32.totalorder %v7478, 13000
          %vm7991 = vcmp.lt.s32.totalorder %v7479, 13000
          %vm7992 = vcmp.lt.s32.totalorder %v7480, 13000
          %vm7993 = vcmp.lt.s32.totalorder %v7481, 13000
          %vm7994 = vcmp.lt.s32.totalorder %v7482, 13000
          %vm7995 = vcmp.lt.s32.totalorder %v7483, 13000
          %vm7996 = vcmp.lt.s32.totalorder %v7484, 13000
          %vm7997 = vcmp.lt.s32.totalorder %v7485, 13000
          %vm7998 = vcmp.lt.s32.totalorder %v7486, 13000
          %vm7999 = vcmp.lt.s32.totalorder %v7487, 13000
          %vm8000 = vcmp.lt.s32.totalorder %v7488, 13000
          %vm8001 = vcmp.lt.s32.totalorder %v7489, 13000
          %vm8002 = vcmp.lt.s32.totalorder %v7490, 13000
          %vm8003 = vcmp.lt.s32.totalorder %v7491, 13000
          %vm8004 = vcmp.lt.s32.totalorder %v7492, 13000
          %vm8005 = vcmp.lt.s32.totalorder %v7493, 13000
          %vm8006 = vcmp.lt.s32.totalorder %v7494, 13000
          %vm8007 = vcmp.lt.s32.totalorder %v7495, 13000
          %vm8008 = vcmp.lt.s32.totalorder %v7496, 13000
          %vm8009 = vcmp.lt.s32.totalorder %v7497, 13000
          %vm8010 = vcmp.lt.s32.totalorder %v7498, 13000
          %vm8011 = vcmp.lt.s32.totalorder %v7499, 13000
          %vm8012 = vcmp.lt.s32.totalorder %v7500, 13000
          %vm8013 = vcmp.lt.s32.totalorder %v7501, 13000
          %vm8014 = vcmp.lt.s32.totalorder %v7502, 13000
          %vm8015 = vcmp.lt.s32.totalorder %v7503, 13000
          %vm8016 = vcmp.lt.s32.totalorder %v7504, 13000
          %vm8017 = vcmp.lt.s32.totalorder %v7505, 13000
          %vm8018 = vcmp.lt.s32.totalorder %v7506, 13000
          %vm8019 = vcmp.lt.s32.totalorder %v7507, 13000
          %vm8020 = vcmp.lt.s32.totalorder %v7508, 13000
          %vm8021 = vcmp.lt.s32.totalorder %v7509, 13000
          %vm8022 = vcmp.lt.s32.totalorder %v7510, 13000
          %vm8023 = vcmp.lt.s32.totalorder %v7511, 13000
          %vm8024 = vcmp.lt.s32.totalorder %v7512, 13000
          %vm8025 = vcmp.lt.s32.totalorder %v7513, 13000
          %vm8026 = vcmp.lt.s32.totalorder %v7514, 13000
          %vm8027 = vcmp.lt.s32.totalorder %v7515, 13000
          %vm8028 = vcmp.lt.s32.totalorder %v7516, 13000
          %vm8029 = vcmp.lt.s32.totalorder %v7517, 13000
          %vm8030 = vcmp.lt.s32.totalorder %v7518, 13000
          %vm8031 = vcmp.lt.s32.totalorder %v7519, 13000
          %vm8032 = vcmp.lt.s32.totalorder %v7520, 13000
          %vm8033 = vcmp.lt.s32.totalorder %v7521, 13000
          %vm8034 = vcmp.lt.s32.totalorder %v7522, 13000
          %vm8035 = vcmp.lt.s32.totalorder %v7523, 13000
          %vm8036 = vcmp.lt.s32.totalorder %v7524, 13000
          %vm8037 = vcmp.lt.s32.totalorder %v7525, 13000
          %vm8038 = vcmp.lt.s32.totalorder %v7526, 13000
          %vm8039 = vcmp.lt.s32.totalorder %v7527, 13000
          %vm8040 = vcmp.lt.s32.totalorder %v7528, 13000
          %vm8041 = vcmp.lt.s32.totalorder %v7529, 13000
          %vm8042 = vcmp.lt.s32.totalorder %v7530, 13000
          %vm8043 = vcmp.lt.s32.totalorder %v7531, 13000
          %vm8044 = vcmp.lt.s32.totalorder %v7532, 13000
          %vm8045 = vcmp.lt.s32.totalorder %v7533, 13000
          %vm8046 = vcmp.lt.s32.totalorder %v7534, 13000
          %vm8047 = vcmp.lt.s32.totalorder %v7535, 13000
          %vm8048 = vcmp.lt.s32.totalorder %v7536, 13000
          %vm8049 = vcmp.lt.s32.totalorder %v7537, 13000
          %vm8050 = vcmp.lt.s32.totalorder %v7538, 13000
          %vm8051 = vcmp.lt.s32.totalorder %v7539, 13000
          %vm8052 = vcmp.lt.s32.totalorder %v7540, 13000
          %vm8053 = vcmp.lt.s32.totalorder %v7541, 13000
          %vm8054 = vcmp.lt.s32.totalorder %v7542, 13000
          %vm8055 = vcmp.lt.s32.totalorder %v7543, 13000
          %vm8056 = vcmp.lt.s32.totalorder %v7544, 13000
          %vm8057 = vcmp.lt.s32.totalorder %v7545, 13000
          %vm8058 = vcmp.lt.s32.totalorder %v7546, 13000
          %vm8059 = vcmp.lt.s32.totalorder %v7547, 13000
          %vm8060 = vcmp.lt.s32.totalorder %v7548, 13000
          %vm8061 = vcmp.lt.s32.totalorder %v7549, 13000
          %vm8062 = vcmp.lt.s32.totalorder %v7550, 13000
          %vm8063 = vcmp.lt.s32.totalorder %v7551, 13000
          %vm8064 = vcmp.lt.s32.totalorder %v7552, 13000
          %vm8065 = vcmp.lt.s32.totalorder %v7553, 13000
          %vm8066 = vcmp.lt.s32.totalorder %v7554, 13000
          %vm8067 = vcmp.lt.s32.totalorder %v7555, 13000
          %vm8068 = vcmp.lt.s32.totalorder %v7556, 13000
          %vm8069 = vcmp.lt.s32.totalorder %v7557, 13000
          %vm8070 = vcmp.lt.s32.totalorder %v7558, 13000
          %vm8071 = vcmp.lt.s32.totalorder %v7559, 13000
          %vm8072 = vcmp.lt.s32.totalorder %v7560, 13000
          %vm8073 = vcmp.lt.s32.totalorder %v7561, 13000
          %vm8074 = vcmp.lt.s32.totalorder %v7562, 13000
          %vm8075 = vcmp.lt.s32.totalorder %v7563, 13000
          %vm8076 = vcmp.lt.s32.totalorder %v7564, 13000
          %vm8077 = vcmp.lt.s32.totalorder %v7565, 13000
          %vm8078 = vcmp.lt.s32.totalorder %v7566, 13000
          %vm8079 = vcmp.lt.s32.totalorder %v7567, 13000
          %vm8080 = vcmp.lt.s32.totalorder %v7568, 13000
          %vm8081 = vcmp.lt.s32.totalorder %v7569, 13000
          %vm8082 = vcmp.lt.s32.totalorder %v7570, 13000
          %vm8083 = vcmp.lt.s32.totalorder %v7571, 13000
          %vm8084 = vcmp.lt.s32.totalorder %v7572, 13000
          %vm8085 = vcmp.lt.s32.totalorder %v7573, 13000
          %vm8086 = vcmp.lt.s32.totalorder %v7574, 13000
          %vm8087 = vcmp.lt.s32.totalorder %v7575, 13000
          %vm8088 = vcmp.lt.s32.totalorder %v7576, 13000
          %vm8089 = vcmp.lt.s32.totalorder %v7577, 13000
          %vm8090 = vcmp.lt.s32.totalorder %v7578, 13000
          %vm8091 = vcmp.lt.s32.totalorder %v7579, 13000
          %vm8092 = vcmp.lt.s32.totalorder %v7580, 13000
          %vm8093 = vcmp.lt.s32.totalorder %v7581, 13000
          %vm8094 = vcmp.lt.s32.totalorder %v7582, 13000
          %vm8095 = vcmp.lt.s32.totalorder %v7583, 13000
          %vm8096 = vcmp.lt.s32.totalorder %v7584, 13000
          %vm8097 = vcmp.lt.s32.totalorder %v7585, 13000
          %vm8098 = vcmp.lt.s32.totalorder %v7586, 13000
          %vm8099 = vcmp.lt.s32.totalorder %v7587, 13000
          %vm8100 = vcmp.lt.s32.totalorder %v7588, 13000
          %vm8101 = vcmp.lt.s32.totalorder %v7589, 13000
          %vm8102 = vcmp.lt.s32.totalorder %v7590, 13000
          %vm8103 = vcmp.lt.s32.totalorder %v7591, 13000
          %vm8104 = vcmp.lt.s32.totalorder %v7592, 13000
          %vm8105 = vcmp.lt.s32.totalorder %v7593, 13000
          %vm8106 = vcmp.lt.s32.totalorder %v7594, 13000
          %vm8107 = vcmp.lt.s32.totalorder %v7595, 13000
          %vm8108 = vcmp.lt.s32.totalorder %v7596, 13000
          %vm8109 = vcmp.lt.s32.totalorder %v7597, 13000
          %vm8110 = vcmp.lt.s32.totalorder %v7598, 13000
          %vm8111 = vcmp.lt.s32.totalorder %v7599, 13000
          %vm8112 = vcmp.lt.s32.totalorder %v7600, 13000
          %vm8113 = vcmp.lt.s32.totalorder %v7601, 13000
          %vm8114 = vcmp.lt.s32.totalorder %v7602, 13000
          %vm8115 = vcmp.lt.s32.totalorder %v7603, 13000
          %vm8116 = vcmp.lt.s32.totalorder %v7604, 13000
          %vm8117 = vcmp.lt.s32.totalorder %v7605, 13000
          %vm8118 = vcmp.lt.s32.totalorder %v7606, 13000
          %vm8119 = vcmp.lt.s32.totalorder %v7607, 13000
          %vm8120 = vcmp.lt.s32.totalorder %v7608, 13000
          %vm8121 = vcmp.lt.s32.totalorder %v7609, 13000
          %vm8122 = vcmp.lt.s32.totalorder %v7610, 13000
          %vm8123 = vcmp.lt.s32.totalorder %v7611, 13000
          %vm8124 = vcmp.lt.s32.totalorder %v7612, 13000
          %vm8125 = vcmp.lt.s32.totalorder %v7613, 13000
          %vm8126 = vcmp.lt.s32.totalorder %v7614, 13000
          %vm8127 = vcmp.lt.s32.totalorder %v7615, 13000
          %vm8128 = vcmp.lt.s32.totalorder %v7616, 13000
          %vm8129 = vcmp.lt.s32.totalorder %v7617, 13000
          %vm8130 = vcmp.lt.s32.totalorder %v7618, 13000
          %vm8131 = vcmp.lt.s32.totalorder %v7619, 13000
          %vm8132 = vcmp.lt.s32.totalorder %v7620, 13000
          %vm8133 = vcmp.lt.s32.totalorder %v7621, 13000
          %vm8134 = vcmp.lt.s32.totalorder %v7622, 13000
          %vm8135 = vcmp.lt.s32.totalorder %v7623, 13000
          %vm8136 = vcmp.lt.s32.totalorder %v7624, 13000
          %vm8137 = vcmp.lt.s32.totalorder %v7625, 13000
          %vm8138 = vcmp.lt.s32.totalorder %v7626, 13000
          %vm8139 = vcmp.lt.s32.totalorder %v7627, 13000
          %vm8140 = vcmp.lt.s32.totalorder %v7628, 13000
          %vm8141 = vcmp.lt.s32.totalorder %v7629, 13000
          %vm8142 = vcmp.lt.s32.totalorder %v7630, 13000
          %vm8143 = vcmp.lt.s32.totalorder %v7631, 13000
          %vm8144 = vcmp.lt.s32.totalorder %v7632, 13000
          %vm8145 = vcmp.lt.s32.totalorder %v7633, 13000
          %vm8146 = vcmp.lt.s32.totalorder %v7634, 13000
          %vm8147 = vcmp.lt.s32.totalorder %v7635, 13000
          %vm8148 = vcmp.lt.s32.totalorder %v7636, 13000
          %vm8149 = vcmp.lt.s32.totalorder %v7637, 13000
          %vm8150 = vcmp.lt.s32.totalorder %v7638, 13000
          %vm8151 = vcmp.lt.s32.totalorder %v7639, 13000
          %vm8152 = vcmp.lt.s32.totalorder %v7640, 13000
          %vm8153 = vcmp.lt.s32.totalorder %v7641, 13000
          %vm8154 = vcmp.lt.s32.totalorder %v7642, 13000
          %vm8155 = vcmp.lt.s32.totalorder %v7643, 13000
          %vm8156 = vcmp.lt.s32.totalorder %v7644, 13000
          %vm8157 = vcmp.lt.s32.totalorder %v7645, 13000
          %vm8158 = vcmp.lt.s32.totalorder %v7646, 13000
          %vm8159 = vcmp.lt.s32.totalorder %v7647, 13000
          %vm8160 = vcmp.lt.s32.totalorder %v7648, 13000
          %vm8161 = vcmp.lt.s32.totalorder %v7649, 13000
          %vm8162 = vcmp.lt.s32.totalorder %v7650, 13000
          %vm8163 = vcmp.lt.s32.totalorder %v7651, 13000
          %vm8164 = vcmp.lt.s32.totalorder %v7652, 13000
          %vm8165 = vcmp.lt.s32.totalorder %v7653, 13000
          %vm8166 = vcmp.lt.s32.totalorder %v7654, 13000
          %vm8167 = vcmp.lt.s32.totalorder %v7655, 13000
          %vm8168 = vcmp.lt.s32.totalorder %v7656, 13000
          %vm8169 = vcmp.lt.s32.totalorder %v7657, 13000
          %vm8170 = vcmp.lt.s32.totalorder %v7658, 13000
          %vm8171 = vcmp.lt.s32.totalorder %v7659, 13000
          %vm8172 = vcmp.lt.s32.totalorder %v7660, 13000
          %vm8173 = vcmp.lt.s32.totalorder %v7661, 13000
          %vm8174 = vcmp.lt.s32.totalorder %v7662, 13000
          %vm8175 = vcmp.lt.s32.totalorder %v7663, 13000
          %vm8176 = vcmp.lt.s32.totalorder %v7664, 13000
          %vm8177 = vcmp.lt.s32.totalorder %v7665, 13000
          %vm8178 = vcmp.lt.s32.totalorder %v7666, 13000
          %vm8179 = vcmp.lt.s32.totalorder %v7667, 13000
          %vm8180 = vcmp.lt.s32.totalorder %v7668, 13000
          %vm8181 = vcmp.lt.s32.totalorder %v7669, 13000
          %vm8182 = vcmp.lt.s32.totalorder %v7670, 13000
          %vm8183 = vcmp.lt.s32.totalorder %v7671, 13000
          %vm8184 = vcmp.lt.s32.totalorder %v7672, 13000
          %vm8185 = vcmp.lt.s32.totalorder %v7673, 13000
          %vm8186 = vcmp.lt.s32.totalorder %v7674, 13000
          %vm8187 = vcmp.lt.s32.totalorder %v7675, 13000
          %vm8188 = vcmp.lt.s32.totalorder %v7676, 13000
          %vm8189 = vcmp.lt.s32.totalorder %v7677, 13000
          %vm8190 = vcmp.lt.s32.totalorder %v7678, 13000
          %vm8191 = vcmp.lt.s32.totalorder %v7679, 13000
          %vm8192 = vcmp.lt.s32.totalorder %v7680, 13000
          %vm8193 = vcmp.lt.s32.totalorder %v7681, 13000
          %vm8194 = vcmp.lt.s32.totalorder %v7682, 13000
          %vm8195 = vcmp.lt.s32.totalorder %v7683, 13000
          %vm8196 = vcmp.lt.s32.totalorder %v7684, 13000
          %vm8197 = vcmp.lt.s32.totalorder %v7685, 13000
          %vm8198 = vcmp.lt.s32.totalorder %v7686, 13000
          %vm8199 = vcmp.lt.s32.totalorder %v7687, 13000
          %vm8200 = vcmp.lt.s32.totalorder %v7688, 13000
          %vm8201 = vcmp.lt.s32.totalorder %v7689, 13000
          %vm8202 = vcmp.lt.s32.totalorder %v7690, 13000
          %vm8203 = vcmp.lt.s32.totalorder %v7691, 13000
          %vm8204 = vcmp.lt.s32.totalorder %v7692, 13000
          %vm8205 = vcmp.lt.s32.totalorder %v7693, 13000
          %vm8206 = vcmp.lt.s32.totalorder %v7694, 13000
          %vm8207 = vcmp.lt.s32.totalorder %v7695, 13000
          %vm8208 = vcmp.lt.s32.totalorder %v7696, 13000
          %vm8209 = vcmp.lt.s32.totalorder %v7697, 13000
          %vm8210 = vcmp.lt.s32.totalorder %v7698, 13000
          %vm8211 = vcmp.lt.s32.totalorder %v7699, 13000
          %vm8212 = vcmp.lt.s32.totalorder %v7700, 13000
          %vm8213 = vcmp.lt.s32.totalorder %v7701, 13000
          %vm8214 = vcmp.lt.s32.totalorder %v7702, 13000
          %vm8215 = vcmp.lt.s32.totalorder %v7703, 13000
          %vm8216 = vcmp.lt.s32.totalorder %v7704, 13000
          %vm8217 = vcmp.lt.s32.totalorder %v7705, 13000
          %vm8218 = vcmp.lt.s32.totalorder %v7706, 13000
          %vm8219 = vcmp.lt.s32.totalorder %v7707, 13000
          %vm8220 = vcmp.lt.s32.totalorder %v7708, 13000
          %vm8221 = vcmp.lt.s32.totalorder %v7709, 13000
          %vm8222 = vcmp.lt.s32.totalorder %v7710, 13000
          %vm8223 = vcmp.lt.s32.totalorder %v7711, 13000
          %vm8224 = vcmp.lt.s32.totalorder %v7712, 13000
          %vm8225 = vcmp.lt.s32.totalorder %v7713, 13000
          %vm8226 = vcmp.lt.s32.totalorder %v7714, 13000
          %vm8227 = vcmp.lt.s32.totalorder %v7715, 13000
          %vm8228 = vcmp.lt.s32.totalorder %v7716, 13000
          %vm8229 = vcmp.lt.s32.totalorder %v7717, 13000
          %vm8230 = vcmp.lt.s32.totalorder %v7718, 13000
          %vm8231 = vcmp.lt.s32.totalorder %v7719, 13000
          %vm8232 = vcmp.lt.s32.totalorder %v7720, 13000
          %vm8233 = vcmp.lt.s32.totalorder %v7721, 13000
          %vm8234 = vcmp.lt.s32.totalorder %v7722, 13000
          %vm8235 = vcmp.lt.s32.totalorder %v7723, 13000
          %vm8236 = vcmp.lt.s32.totalorder %v7724, 13000
          %vm8237 = vcmp.lt.s32.totalorder %v7725, 13000
          %vm8238 = vcmp.lt.s32.totalorder %v7726, 13000
          %vm8239 = vcmp.lt.s32.totalorder %v7727, 13000
          %vm8240 = vcmp.lt.s32.totalorder %v7728, 13000
          %vm8241 = vcmp.lt.s32.totalorder %v7729, 13000
          %vm8242 = vcmp.lt.s32.totalorder %v7730, 13000
          %vm8243 = vcmp.lt.s32.totalorder %v7731, 13000
          %vm8244 = vcmp.lt.s32.totalorder %v7732, 13000
          %vm8245 = vcmp.lt.s32.totalorder %v7733, 13000
          %vm8246 = vcmp.lt.s32.totalorder %v7734, 13000
          %vm8247 = vcmp.lt.s32.totalorder %v7735, 13000
          %vm8248 = vcmp.lt.s32.totalorder %v7736, 13000
          %vm8249 = vcmp.lt.s32.totalorder %v7737, 13000
          %vm8250 = vcmp.lt.s32.totalorder %v7738, 13000
          %vm8251 = vcmp.lt.s32.totalorder %v7739, 13000
          %vm8252 = vcmp.lt.s32.totalorder %v7740, 13000
          %vm8253 = vcmp.lt.s32.totalorder %v7741, 13000
          %vm8254 = vcmp.lt.s32.totalorder %v7742, 13000
          %vm8255 = vcmp.lt.s32.totalorder %v7743, 13000
          %vm8256 = vcmp.lt.s32.totalorder %v7744, 13000
          %vm8257 = vcmp.lt.s32.totalorder %v7745, 13000
          %vm8258 = vcmp.lt.s32.totalorder %v7746, 13000
          %vm8259 = vcmp.lt.s32.totalorder %v7747, 13000
          %vm8260 = vcmp.lt.s32.totalorder %v7748, 13000
          %vm8261 = vcmp.lt.s32.totalorder %v7749, 13000
          %vm8262 = vcmp.lt.s32.totalorder %v7750, 13000
          %vm8263 = vcmp.lt.s32.totalorder %v7751, 13000
          %vm8264 = vcmp.lt.s32.totalorder %v7752, 13000
          %vm8265 = vcmp.lt.s32.totalorder %v7753, 13000
          %vm8266 = vcmp.lt.s32.totalorder %v7754, 13000
          %vm8267 = vcmp.lt.s32.totalorder %v7755, 13000
          %vm8268 = vcmp.lt.s32.totalorder %v7756, 13000
          %vm8269 = vcmp.lt.s32.totalorder %v7757, 13000
          %vm8270 = vcmp.lt.s32.totalorder %v7758, 13000
          %vm8271 = vcmp.lt.s32.totalorder %v7759, 13000
          %vm8272 = vcmp.lt.s32.totalorder %v7760, 13000
          %vm8273 = vcmp.lt.s32.totalorder %v7761, 13000
          %vm8274 = vcmp.lt.s32.totalorder %v7762, 13000
          %vm8275 = vcmp.lt.s32.totalorder %v7763, 13000
          %vm8276 = vcmp.lt.s32.totalorder %v7764, 13000
          %vm8277 = vcmp.lt.s32.totalorder %v7765, 13000
          %vm8278 = vcmp.lt.s32.totalorder %v7766, 13000
          %vm8279 = vcmp.lt.s32.totalorder %v7767, 13000
          %vm8280 = vcmp.lt.s32.totalorder %v7768, 13000
          %vm8281 = vcmp.lt.s32.totalorder %v7769, 13000
          %vm8282 = vcmp.lt.s32.totalorder %v7770, 13000
          %vm8283 = vcmp.lt.s32.totalorder %v7771, 13000
          %vm8284 = vcmp.lt.s32.totalorder %v7772, 13000
          %vm8285 = vcmp.lt.s32.totalorder %v7773, 13000
          %vm8286 = vcmp.lt.s32.totalorder %v7774, 13000
          %vm8287 = vcmp.lt.s32.totalorder %v7775, 13000
          %vm8288 = vcmp.lt.s32.totalorder %v7776, 13000
          %vm8289 = vcmp.lt.s32.totalorder %v7777, 13000
          %vm8290 = vcmp.lt.s32.totalorder %v7778, 13000
          %vm8291 = vcmp.lt.s32.totalorder %v7779, 13000
          %vm8292 = vcmp.lt.s32.totalorder %v7780, 13000
          %vm8293 = vcmp.lt.s32.totalorder %v7781, 13000
          %vm8294 = vcmp.lt.s32.totalorder %v7782, 13000
          %vm8295 = vcmp.lt.s32.totalorder %v7783, 13000
          %vm8296 = vcmp.lt.s32.totalorder %v7784, 13000
          %vm8297 = vcmp.lt.s32.totalorder %v7785, 13000
          %vm8298 = vcmp.lt.s32.totalorder %v7786, 13000
          %vm8299 = vcmp.lt.s32.totalorder %v7787, 13000
          %vm8300 = vcmp.lt.s32.totalorder %v7788, 13000
          %vm8301 = vcmp.lt.s32.totalorder %v7789, 13000
          %vm8302 = vcmp.lt.s32.totalorder %v7790, 13000
          %vm8303 = vcmp.lt.s32.totalorder %v7791, 13000
          %vm8304 = vcmp.lt.s32.totalorder %v7792, 13000
          %vm8305 = vcmp.lt.s32.totalorder %v7793, 13000
          %vm8306 = vcmp.lt.s32.totalorder %v7794, 13000
          %vm8307 = vcmp.lt.s32.totalorder %v7795, 13000
          %vm8308 = vcmp.lt.s32.totalorder %v7796, 13000
          %vm8309 = vcmp.lt.s32.totalorder %v7797, 13000
          %vm8310 = vcmp.lt.s32.totalorder %v7798, 13000
          %vm8311 = vcmp.lt.s32.totalorder %v7799, 13000
          %vm8312 = vcmp.lt.s32.totalorder %v7800, 13000
          %vm8313 = vcmp.lt.s32.totalorder %v7801, 13000
          %vm8314 = vcmp.lt.s32.totalorder %v7802, 13000
          %vm8315 = vcmp.lt.s32.totalorder %v7803, 13000
          %vm8316 = vcmp.lt.s32.totalorder %v7804, 13000
          %vm8317 = vcmp.lt.s32.totalorder %v7805, 13000
          %vm8318 = vcmp.lt.s32.totalorder %v7806, 13000
          %vm8319 = vcmp.lt.s32.totalorder %v7807, 13000
          %vm8320 = vcmp.lt.s32.totalorder %v7808, 13000
          %vm8321 = vcmp.lt.s32.totalorder %v7809, 13000
          %vm8322 = vcmp.lt.s32.totalorder %v7810, 13000
          %vm8323 = vcmp.lt.s32.totalorder %v7811, 13000
          %vm8324 = vcmp.lt.s32.totalorder %v7812, 13000
          %vm8325 = vcmp.lt.s32.totalorder %v7813, 13000
          %vm8326 = vcmp.lt.s32.totalorder %v7814, 13000
          %vm8327 = vcmp.lt.s32.totalorder %v7815, 13000
          %vm8328 = vcmp.lt.s32.totalorder %v7816, 13000
          %vm8329 = vcmp.lt.s32.totalorder %v7817, 13000
          %vm8330 = vcmp.lt.s32.totalorder %v7818, 13000
          %vm8331 = vcmp.lt.s32.totalorder %v7819, 13000
          %vm8332 = vcmp.lt.s32.totalorder %v7820, 13000
          %vm8333 = vcmp.lt.s32.totalorder %v7821, 13000
          %vm8334 = vcmp.lt.s32.totalorder %v7822, 13000
          %vm8335 = vcmp.lt.s32.totalorder %v7823, 13000
          %vm8336 = vcmp.lt.s32.totalorder %v7824, 13000
          %vm8337 = vcmp.lt.s32.totalorder %v7825, 13000
          %vm8338 = vcmp.lt.s32.totalorder %v7826, 13000
          %vm8339 = vcmp.lt.s32.totalorder %v7827, 13000
          %vm8340 = vcmp.lt.s32.totalorder %v7828, 13000
          %vm8341 = vcmp.lt.s32.totalorder %v7829, 13000
          %vm8342 = vcmp.lt.s32.totalorder %v7830, 13000
          %vm8343 = vcmp.lt.s32.totalorder %v7831, 13000
          %vm8344 = vcmp.lt.s32.totalorder %v7832, 13000
          %vm8345 = vcmp.lt.s32.totalorder %v7833, 13000
          %vm8346 = vcmp.lt.s32.totalorder %v7834, 13000
          %vm8347 = vcmp.lt.s32.totalorder %v7835, 13000
          %vm8348 = vcmp.lt.s32.totalorder %v7836, 13000
          %vm8349 = vcmp.lt.s32.totalorder %v7837, 13000
          %vm8350 = vcmp.lt.s32.totalorder %v7838, 13000
          %vm8351 = vcmp.lt.s32.totalorder %v7839, 13000
          %vm8352 = vcmp.lt.s32.totalorder %v7840, 13000
          %vm8353 = vcmp.lt.s32.totalorder %v7841, 13000
          %vm8354 = vcmp.lt.s32.totalorder %v7842, 13000
          %vm8355 = vcmp.lt.s32.totalorder %v7843, 13000
          %vm8356 = vcmp.lt.s32.totalorder %v7844, 13000
          %vm8357 = vcmp.lt.s32.totalorder %v7845, 13000
          %vm8358 = vcmp.lt.s32.totalorder %v7846, 13000
          %vm8359 = vcmp.lt.s32.totalorder %v7847, 13000
          %vm8360 = vcmp.lt.s32.totalorder %v7848, 13000
          %vm8361 = vcmp.lt.s32.totalorder %v7849, 13000
          %vm8362 = vcmp.lt.s32.totalorder %v7850, 13000
          %vm8363 = vcmp.lt.s32.totalorder %v7851, 13000
          %vm8364 = vcmp.lt.s32.totalorder %v7852, 13000
          %vm8365 = vcmp.lt.s32.totalorder %v7853, 13000
          %vm8366 = vcmp.lt.s32.totalorder %v7854, 13000
          %vm8367 = vcmp.lt.s32.totalorder %v7855, 13000
          %vm8368 = vcmp.lt.s32.totalorder %v7856, 13000
          %vm8369 = vcmp.lt.s32.totalorder %v7857, 13000
          %vm8370 = vcmp.lt.s32.totalorder %v7858, 13000
          %vm8371 = vcmp.lt.s32.totalorder %v7859, 13000
          %vm8372 = vcmp.lt.s32.totalorder %v7860, 13000
          %vm8373 = vcmp.lt.s32.totalorder %v7861, 13000
          %vm8374 = vcmp.lt.s32.totalorder %v7862, 13000
          %vm8375 = vcmp.lt.s32.totalorder %v7863, 13000
          %vm8376 = vcmp.lt.s32.totalorder %v7864, 13000
          %vm8377 = vcmp.lt.s32.totalorder %v7865, 13000
          %vm8378 = vcmp.lt.s32.totalorder %v7866, 13000
          %vm8379 = vcmp.lt.s32.totalorder %v7867, 13000
          %vm8380 = vcmp.lt.s32.totalorder %v7868, 13000
          %vm8381 = vcmp.lt.s32.totalorder %v7869, 13000
          %vm8382 = vcmp.lt.s32.totalorder %v7870, 13000
          %vm8383 = vcmp.lt.s32.totalorder %v7871, 13000
          %vm8384 = vcmp.lt.s32.totalorder %v7872, 13000
          %vm8385 = vcmp.lt.s32.totalorder %v7873, 13000
          %vm8386 = vcmp.lt.s32.totalorder %v7874, 13000
          %vm8387 = vcmp.lt.s32.totalorder %v7875, 13000
          %vm8388 = vcmp.lt.s32.totalorder %v7876, 13000
          %vm8389 = vcmp.lt.s32.totalorder %v7877, 13000
          %vm8390 = vcmp.lt.s32.totalorder %v7878, 13000
          %vm8391 = vcmp.lt.s32.totalorder %v7879, 13000
          %vm8392 = vcmp.lt.s32.totalorder %v7880, 13000
          %vm8393 = vcmp.lt.s32.totalorder %v7881, 13000
          %vm8394 = vcmp.lt.s32.totalorder %v7882, 13000
          %vm8395 = vcmp.lt.s32.totalorder %v7883, 13000
          %vm8396 = vcmp.lt.s32.totalorder %v7884, 13000
          %vm8397 = vcmp.lt.s32.totalorder %v7885, 13000
          %vm8398 = vcmp.lt.s32.totalorder %v7886, 13000
          %vm8399 = vcmp.lt.s32.totalorder %v7887, 13000
          %vm8400 = vcmp.lt.s32.totalorder %v7888, 13000
          %vm8401 = vcmp.lt.s32.totalorder %v7889, 13000
          %vm8402 = vcmp.lt.s32.totalorder %v7890, 13000
          %vm8403 = vcmp.lt.s32.totalorder %v7891, 13000
          %vm8404 = vcmp.lt.s32.totalorder %v7892, 13000
          %vm8405 = vcmp.lt.s32.totalorder %v7893, 13000
          %vm8406 = vcmp.lt.s32.totalorder %v7894, 13000
          %vm8407 = vcmp.lt.s32.totalorder %v7895, 13000
          %vm8408 = vcmp.lt.s32.totalorder %v7896, 13000
          %vm8409 = vcmp.lt.s32.totalorder %v7897, 13000
          %vm8410 = vcmp.lt.s32.totalorder %v7898, 13000
          %vm8411 = vcmp.lt.s32.totalorder %v7899, 13000
          %vm8412 = vcmp.lt.s32.totalorder %v7900, 13000
          %vm8413 = vcmp.lt.s32.totalorder %v7901, 13000
          %vm8414 = vcmp.lt.s32.totalorder %v7902, 13000
          %vm8415 = vcmp.lt.s32.totalorder %v7903, 13000
          %vm8416 = vcmp.lt.s32.totalorder %v7904, 13000
          %vm8417 = vcmp.lt.s32.totalorder %v7905, 13000
          %vm8418 = vcmp.lt.s32.totalorder %v7906, 13000
          %vm8419 = vcmp.lt.s32.totalorder %v7907, 13000
          %vm8420 = vcmp.lt.s32.totalorder %v7908, 13000
          %vm8421 = vcmp.lt.s32.totalorder %v7909, 13000
          %vm8422 = vcmp.lt.s32.totalorder %v7910, 13000
          %vm8423 = vcmp.lt.s32.totalorder %v7911, 13000
          %vm8424 = vcmp.lt.s32.totalorder %v7912, 13000
          %vm8425 = vcmp.lt.s32.totalorder %v7913, 13000
          %vm8426 = vcmp.lt.s32.totalorder %v7914, 13000
          %vm8427 = vcmp.lt.s32.totalorder %v7915, 13000
          %vm8428 = vcmp.lt.s32.totalorder %v7916, 13000
          %vm8429 = vcmp.lt.s32.totalorder %v7917, 13000
          %vm8430 = vcmp.lt.s32.totalorder %v7918, 13000
          %vm8431 = vcmp.lt.s32.totalorder %v7919, 13000
          %vm8432 = vcmp.lt.s32.totalorder %v7920, 13000
          %vm8433 = vcmp.lt.s32.totalorder %v7921, 13000
          %vm8434 = vcmp.lt.s32.totalorder %v7922, 13000
          %vm8435 = vcmp.lt.s32.totalorder %v7923, 13000
          %vm8436 = vcmp.lt.s32.totalorder %v7924, 13000
          %vm8437 = vcmp.lt.s32.totalorder %v7925, 13000
          %vm8438 = vcmp.lt.s32.totalorder %v7926, 13000
          %vm8439 = vcmp.lt.s32.totalorder %v7927, 13000
          %vm8440 = vcmp.lt.s32.totalorder %v7928, 13000
          %vm8441 = vcmp.lt.s32.totalorder %v7929, 13000
          %vm8442 = vcmp.lt.s32.totalorder %v7930, 13000
          %vm8443 = vcmp.lt.s32.totalorder %v7931, 13000
          %vm8444 = vcmp.lt.s32.totalorder %v7932, 13000
          %vm8445 = vcmp.lt.s32.totalorder %v7933, 13000
          %vm8446 = vcmp.lt.s32.totalorder %v7934, 13000
          %vm8447 = vcmp.lt.s32.totalorder %v7935, 13000
          %vm8448 = vcmp.lt.s32.totalorder %v7936, 13000
          %vm8449 = vcmp.lt.s32.totalorder %v7937, 13000
          %vm8450 = vcmp.lt.s32.totalorder %v7938, 13000
          %vm8451 = vcmp.lt.s32.totalorder %v7939, 13000
          %vm8452 = vcmp.lt.s32.totalorder %v7940, 13000
          %vm8453 = vcmp.lt.s32.totalorder %v7941, 13000
          %vm8454 = vcmp.lt.s32.totalorder %v7942, 13000
          %vm8455 = vcmp.lt.s32.totalorder %v7943, 13000
          %vm8456 = vcmp.lt.s32.totalorder %v7944, 13000
          %vm8457 = vcmp.lt.s32.totalorder %v7945, 13000
          %vm8458 = vcmp.lt.s32.totalorder %v7946, 13000
          %vm8459 = vcmp.lt.s32.totalorder %v7947, 13000
          %vm8460 = vcmp.lt.s32.totalorder %v7948, 13000
          %vm8461 = vcmp.lt.s32.totalorder %v7949, 13000
          %vm8462 = vcmp.lt.s32.totalorder %v7950, 13000
          %vm8463 = vcmp.lt.s32.totalorder %v7951, 13000
          %vm8464 = vcmp.lt.s32.totalorder %v7952, 13000
          %vm8465 = vcmp.lt.s32.totalorder %v7953, 13000
          %vm8466 = vcmp.lt.s32.totalorder %v7954, 13000
          %vm8467 = vcmp.lt.s32.totalorder %v7955, 13000
          %vm8468 = vcmp.lt.s32.totalorder %v7956, 13000
          %vm8469 = vcmp.lt.s32.totalorder %v7957, 13000
          %vm8470 = vcmp.lt.s32.totalorder %v7958, 13000
          %vm8471 = vcmp.lt.s32.totalorder %v7959, 13000
          %vm8472 = vcmp.lt.s32.totalorder %v7960, 13000
          %vm8473 = vcmp.lt.s32.totalorder %v7961, 13000
          %vm8474 = vcmp.lt.s32.totalorder %v7962, 13000
          %vm8475 = vcmp.lt.s32.totalorder %v7963, 13000
          %vm8476 = vcmp.lt.s32.totalorder %v7964, 13000
          %vm8477 = vcmp.lt.s32.totalorder %v7965, 13000
          %vm8478 = vcmp.lt.s32.totalorder %v7966, 13000
          %vm8479 = vcmp.lt.s32.totalorder %v7967, 13000
          %vm8480 = vcmp.lt.s32.totalorder %v7968, 13000
          %vm8481 = vcmp.lt.s32.totalorder %v7969, 13000
          %v8482 = vsel %vm7970, %v5907, 0.0
          %v8483 = vsel %vm7971, %v5908, 0.0
          %v8484 = vsel %vm7972, %v5909, 0.0
          %v8485 = vsel %vm7973, %v5910, 0.0
          %v8486 = vsel %vm7974, %v5911, 0.0
          %v8487 = vsel %vm7975, %v5912, 0.0
          %v8488 = vsel %vm7976, %v5913, 0.0
          %v8489 = vsel %vm7977, %v5914, 0.0
          %v8490 = vsel %vm7978, %v5915, 0.0
          %v8491 = vsel %vm7979, %v5916, 0.0
          %v8492 = vsel %vm7980, %v5917, 0.0
          %v8493 = vsel %vm7981, %v5918, 0.0
          %v8494 = vsel %vm7982, %v5919, 0.0
          %v8495 = vsel %vm7983, %v5920, 0.0
          %v8496 = vsel %vm7984, %v5921, 0.0
          %v8497 = vsel %vm7985, %v5922, 0.0
          %v8498 = vsel %vm7986, %v5923, 0.0
          %v8499 = vsel %vm7987, %v5924, 0.0
          %v8500 = vsel %vm7988, %v5925, 0.0
          %v8501 = vsel %vm7989, %v5926, 0.0
          %v8502 = vsel %vm7990, %v5927, 0.0
          %v8503 = vsel %vm7991, %v5928, 0.0
          %v8504 = vsel %vm7992, %v5929, 0.0
          %v8505 = vsel %vm7993, %v5930, 0.0
          %v8506 = vsel %vm7994, %v5931, 0.0
          %v8507 = vsel %vm7995, %v5932, 0.0
          %v8508 = vsel %vm7996, %v5933, 0.0
          %v8509 = vsel %vm7997, %v5934, 0.0
          %v8510 = vsel %vm7998, %v5935, 0.0
          %v8511 = vsel %vm7999, %v5936, 0.0
          %v8512 = vsel %vm8000, %v5937, 0.0
          %v8513 = vsel %vm8001, %v5938, 0.0
          %v8514 = vsel %vm8002, %v5939, 0.0
          %v8515 = vsel %vm8003, %v5940, 0.0
          %v8516 = vsel %vm8004, %v5941, 0.0
          %v8517 = vsel %vm8005, %v5942, 0.0
          %v8518 = vsel %vm8006, %v5943, 0.0
          %v8519 = vsel %vm8007, %v5944, 0.0
          %v8520 = vsel %vm8008, %v5945, 0.0
          %v8521 = vsel %vm8009, %v5946, 0.0
          %v8522 = vsel %vm8010, %v5947, 0.0
          %v8523 = vsel %vm8011, %v5948, 0.0
          %v8524 = vsel %vm8012, %v5949, 0.0
          %v8525 = vsel %vm8013, %v5950, 0.0
          %v8526 = vsel %vm8014, %v5951, 0.0
          %v8527 = vsel %vm8015, %v5952, 0.0
          %v8528 = vsel %vm8016, %v5953, 0.0
          %v8529 = vsel %vm8017, %v5954, 0.0
          %v8530 = vsel %vm8018, %v5955, 0.0
          %v8531 = vsel %vm8019, %v5956, 0.0
          %v8532 = vsel %vm8020, %v5957, 0.0
          %v8533 = vsel %vm8021, %v5958, 0.0
          %v8534 = vsel %vm8022, %v5959, 0.0
          %v8535 = vsel %vm8023, %v5960, 0.0
          %v8536 = vsel %vm8024, %v5961, 0.0
          %v8537 = vsel %vm8025, %v5962, 0.0
          %v8538 = vsel %vm8026, %v5963, 0.0
          %v8539 = vsel %vm8027, %v5964, 0.0
          %v8540 = vsel %vm8028, %v5965, 0.0
          %v8541 = vsel %vm8029, %v5966, 0.0
          %v8542 = vsel %vm8030, %v5967, 0.0
          %v8543 = vsel %vm8031, %v5968, 0.0
          %v8544 = vsel %vm8032, %v5969, 0.0
          %v8545 = vsel %vm8033, %v5970, 0.0
          %v8546 = vsel %vm8034, %v5971, 0.0
          %v8547 = vsel %vm8035, %v5972, 0.0
          %v8548 = vsel %vm8036, %v5973, 0.0
          %v8549 = vsel %vm8037, %v5974, 0.0
          %v8550 = vsel %vm8038, %v5975, 0.0
          %v8551 = vsel %vm8039, %v5976, 0.0
          %v8552 = vsel %vm8040, %v5977, 0.0
          %v8553 = vsel %vm8041, %v5978, 0.0
          %v8554 = vsel %vm8042, %v5979, 0.0
          %v8555 = vsel %vm8043, %v5980, 0.0
          %v8556 = vsel %vm8044, %v5981, 0.0
          %v8557 = vsel %vm8045, %v5982, 0.0
          %v8558 = vsel %vm8046, %v5983, 0.0
          %v8559 = vsel %vm8047, %v5984, 0.0
          %v8560 = vsel %vm8048, %v5985, 0.0
          %v8561 = vsel %vm8049, %v5986, 0.0
          %v8562 = vsel %vm8050, %v5987, 0.0
          %v8563 = vsel %vm8051, %v5988, 0.0
          %v8564 = vsel %vm8052, %v5989, 0.0
          %v8565 = vsel %vm8053, %v5990, 0.0
          %v8566 = vsel %vm8054, %v5991, 0.0
          %v8567 = vsel %vm8055, %v5992, 0.0
          %v8568 = vsel %vm8056, %v5993, 0.0
          %v8569 = vsel %vm8057, %v5994, 0.0
          %v8570 = vsel %vm8058, %v5995, 0.0
          %v8571 = vsel %vm8059, %v5996, 0.0
          %v8572 = vsel %vm8060, %v5997, 0.0
          %v8573 = vsel %vm8061, %v5998, 0.0
          %v8574 = vsel %vm8062, %v5999, 0.0
          %v8575 = vsel %vm8063, %v6000, 0.0
          %v8576 = vsel %vm8064, %v6001, 0.0
          %v8577 = vsel %vm8065, %v6002, 0.0
          %v8578 = vsel %vm8066, %v6003, 0.0
          %v8579 = vsel %vm8067, %v6004, 0.0
          %v8580 = vsel %vm8068, %v6005, 0.0
          %v8581 = vsel %vm8069, %v6006, 0.0
          %v8582 = vsel %vm8070, %v6007, 0.0
          %v8583 = vsel %vm8071, %v6008, 0.0
          %v8584 = vsel %vm8072, %v6009, 0.0
          %v8585 = vsel %vm8073, %v6010, 0.0
          %v8586 = vsel %vm8074, %v6011, 0.0
          %v8587 = vsel %vm8075, %v6012, 0.0
          %v8588 = vsel %vm8076, %v6013, 0.0
          %v8589 = vsel %vm8077, %v6014, 0.0
          %v8590 = vsel %vm8078, %v6015, 0.0
          %v8591 = vsel %vm8079, %v6016, 0.0
          %v8592 = vsel %vm8080, %v6017, 0.0
          %v8593 = vsel %vm8081, %v6018, 0.0
          %v8594 = vsel %vm8082, %v6019, 0.0
          %v8595 = vsel %vm8083, %v6020, 0.0
          %v8596 = vsel %vm8084, %v6021, 0.0
          %v8597 = vsel %vm8085, %v6022, 0.0
          %v8598 = vsel %vm8086, %v6023, 0.0
          %v8599 = vsel %vm8087, %v6024, 0.0
          %v8600 = vsel %vm8088, %v6025, 0.0
          %v8601 = vsel %vm8089, %v6026, 0.0
          %v8602 = vsel %vm8090, %v6027, 0.0
          %v8603 = vsel %vm8091, %v6028, 0.0
          %v8604 = vsel %vm8092, %v6029, 0.0
          %v8605 = vsel %vm8093, %v6030, 0.0
          %v8606 = vsel %vm8094, %v6031, 0.0
          %v8607 = vsel %vm8095, %v6032, 0.0
          %v8608 = vsel %vm8096, %v6033, 0.0
          %v8609 = vsel %vm8097, %v6034, 0.0
          %v8610 = vsel %vm8098, %v6035, 0.0
          %v8611 = vsel %vm8099, %v6036, 0.0
          %v8612 = vsel %vm8100, %v6037, 0.0
          %v8613 = vsel %vm8101, %v6038, 0.0
          %v8614 = vsel %vm8102, %v6039, 0.0
          %v8615 = vsel %vm8103, %v6040, 0.0
          %v8616 = vsel %vm8104, %v6041, 0.0
          %v8617 = vsel %vm8105, %v6042, 0.0
          %v8618 = vsel %vm8106, %v6043, 0.0
          %v8619 = vsel %vm8107, %v6044, 0.0
          %v8620 = vsel %vm8108, %v6045, 0.0
          %v8621 = vsel %vm8109, %v6046, 0.0
          %v8622 = vsel %vm8110, %v6047, 0.0
          %v8623 = vsel %vm8111, %v6048, 0.0
          %v8624 = vsel %vm8112, %v6049, 0.0
          %v8625 = vsel %vm8113, %v6050, 0.0
          %v8626 = vsel %vm8114, %v6051, 0.0
          %v8627 = vsel %vm8115, %v6052, 0.0
          %v8628 = vsel %vm8116, %v6053, 0.0
          %v8629 = vsel %vm8117, %v6054, 0.0
          %v8630 = vsel %vm8118, %v6055, 0.0
          %v8631 = vsel %vm8119, %v6056, 0.0
          %v8632 = vsel %vm8120, %v6057, 0.0
          %v8633 = vsel %vm8121, %v6058, 0.0
          %v8634 = vsel %vm8122, %v6059, 0.0
          %v8635 = vsel %vm8123, %v6060, 0.0
          %v8636 = vsel %vm8124, %v6061, 0.0
          %v8637 = vsel %vm8125, %v6062, 0.0
          %v8638 = vsel %vm8126, %v6063, 0.0
          %v8639 = vsel %vm8127, %v6064, 0.0
          %v8640 = vsel %vm8128, %v6065, 0.0
          %v8641 = vsel %vm8129, %v6066, 0.0
          %v8642 = vsel %vm8130, %v6067, 0.0
          %v8643 = vsel %vm8131, %v6068, 0.0
          %v8644 = vsel %vm8132, %v6069, 0.0
          %v8645 = vsel %vm8133, %v6070, 0.0
          %v8646 = vsel %vm8134, %v6071, 0.0
          %v8647 = vsel %vm8135, %v6072, 0.0
          %v8648 = vsel %vm8136, %v6073, 0.0
          %v8649 = vsel %vm8137, %v6074, 0.0
          %v8650 = vsel %vm8138, %v6075, 0.0
          %v8651 = vsel %vm8139, %v6076, 0.0
          %v8652 = vsel %vm8140, %v6077, 0.0
          %v8653 = vsel %vm8141, %v6078, 0.0
          %v8654 = vsel %vm8142, %v6079, 0.0
          %v8655 = vsel %vm8143, %v6080, 0.0
          %v8656 = vsel %vm8144, %v6081, 0.0
          %v8657 = vsel %vm8145, %v6082, 0.0
          %v8658 = vsel %vm8146, %v6083, 0.0
          %v8659 = vsel %vm8147, %v6084, 0.0
          %v8660 = vsel %vm8148, %v6085, 0.0
          %v8661 = vsel %vm8149, %v6086, 0.0
          %v8662 = vsel %vm8150, %v6087, 0.0
          %v8663 = vsel %vm8151, %v6088, 0.0
          %v8664 = vsel %vm8152, %v6089, 0.0
          %v8665 = vsel %vm8153, %v6090, 0.0
          %v8666 = vsel %vm8154, %v6091, 0.0
          %v8667 = vsel %vm8155, %v6092, 0.0
          %v8668 = vsel %vm8156, %v6093, 0.0
          %v8669 = vsel %vm8157, %v6094, 0.0
          %v8670 = vsel %vm8158, %v6095, 0.0
          %v8671 = vsel %vm8159, %v6096, 0.0
          %v8672 = vsel %vm8160, %v6097, 0.0
          %v8673 = vsel %vm8161, %v6098, 0.0
          %v8674 = vsel %vm8162, %v6099, 0.0
          %v8675 = vsel %vm8163, %v6100, 0.0
          %v8676 = vsel %vm8164, %v6101, 0.0
          %v8677 = vsel %vm8165, %v6102, 0.0
          %v8678 = vsel %vm8166, %v6103, 0.0
          %v8679 = vsel %vm8167, %v6104, 0.0
          %v8680 = vsel %vm8168, %v6105, 0.0
          %v8681 = vsel %vm8169, %v6106, 0.0
          %v8682 = vsel %vm8170, %v6107, 0.0
          %v8683 = vsel %vm8171, %v6108, 0.0
          %v8684 = vsel %vm8172, %v6109, 0.0
          %v8685 = vsel %vm8173, %v6110, 0.0
          %v8686 = vsel %vm8174, %v6111, 0.0
          %v8687 = vsel %vm8175, %v6112, 0.0
          %v8688 = vsel %vm8176, %v6113, 0.0
          %v8689 = vsel %vm8177, %v6114, 0.0
          %v8690 = vsel %vm8178, %v6115, 0.0
          %v8691 = vsel %vm8179, %v6116, 0.0
          %v8692 = vsel %vm8180, %v6117, 0.0
          %v8693 = vsel %vm8181, %v6118, 0.0
          %v8694 = vsel %vm8182, %v6119, 0.0
          %v8695 = vsel %vm8183, %v6120, 0.0
          %v8696 = vsel %vm8184, %v6121, 0.0
          %v8697 = vsel %vm8185, %v6122, 0.0
          %v8698 = vsel %vm8186, %v6123, 0.0
          %v8699 = vsel %vm8187, %v6124, 0.0
          %v8700 = vsel %vm8188, %v6125, 0.0
          %v8701 = vsel %vm8189, %v6126, 0.0
          %v8702 = vsel %vm8190, %v6127, 0.0
          %v8703 = vsel %vm8191, %v6128, 0.0
          %v8704 = vsel %vm8192, %v6129, 0.0
          %v8705 = vsel %vm8193, %v6130, 0.0
          %v8706 = vsel %vm8194, %v6131, 0.0
          %v8707 = vsel %vm8195, %v6132, 0.0
          %v8708 = vsel %vm8196, %v6133, 0.0
          %v8709 = vsel %vm8197, %v6134, 0.0
          %v8710 = vsel %vm8198, %v6135, 0.0
          %v8711 = vsel %vm8199, %v6136, 0.0
          %v8712 = vsel %vm8200, %v6137, 0.0
          %v8713 = vsel %vm8201, %v6138, 0.0
          %v8714 = vsel %vm8202, %v6139, 0.0
          %v8715 = vsel %vm8203, %v6140, 0.0
          %v8716 = vsel %vm8204, %v6141, 0.0
          %v8717 = vsel %vm8205, %v6142, 0.0
          %v8718 = vsel %vm8206, %v6143, 0.0
          %v8719 = vsel %vm8207, %v6144, 0.0
          %v8720 = vsel %vm8208, %v6145, 0.0
          %v8721 = vsel %vm8209, %v6146, 0.0
          %v8722 = vsel %vm8210, %v6147, 0.0
          %v8723 = vsel %vm8211, %v6148, 0.0
          %v8724 = vsel %vm8212, %v6149, 0.0
          %v8725 = vsel %vm8213, %v6150, 0.0
          %v8726 = vsel %vm8214, %v6151, 0.0
          %v8727 = vsel %vm8215, %v6152, 0.0
          %v8728 = vsel %vm8216, %v6153, 0.0
          %v8729 = vsel %vm8217, %v6154, 0.0
          %v8730 = vsel %vm8218, %v6155, 0.0
          %v8731 = vsel %vm8219, %v6156, 0.0
          %v8732 = vsel %vm8220, %v6157, 0.0
          %v8733 = vsel %vm8221, %v6158, 0.0
          %v8734 = vsel %vm8222, %v6159, 0.0
          %v8735 = vsel %vm8223, %v6160, 0.0
          %v8736 = vsel %vm8224, %v6161, 0.0
          %v8737 = vsel %vm8225, %v6162, 0.0
          %v8738 = vsel %vm8226, %v6163, 0.0
          %v8739 = vsel %vm8227, %v6164, 0.0
          %v8740 = vsel %vm8228, %v6165, 0.0
          %v8741 = vsel %vm8229, %v6166, 0.0
          %v8742 = vsel %vm8230, %v6167, 0.0
          %v8743 = vsel %vm8231, %v6168, 0.0
          %v8744 = vsel %vm8232, %v6169, 0.0
          %v8745 = vsel %vm8233, %v6170, 0.0
          %v8746 = vsel %vm8234, %v6171, 0.0
          %v8747 = vsel %vm8235, %v6172, 0.0
          %v8748 = vsel %vm8236, %v6173, 0.0
          %v8749 = vsel %vm8237, %v6174, 0.0
          %v8750 = vsel %vm8238, %v6175, 0.0
          %v8751 = vsel %vm8239, %v6176, 0.0
          %v8752 = vsel %vm8240, %v6177, 0.0
          %v8753 = vsel %vm8241, %v6178, 0.0
          %v8754 = vsel %vm8242, %v6179, 0.0
          %v8755 = vsel %vm8243, %v6180, 0.0
          %v8756 = vsel %vm8244, %v6181, 0.0
          %v8757 = vsel %vm8245, %v6182, 0.0
          %v8758 = vsel %vm8246, %v6183, 0.0
          %v8759 = vsel %vm8247, %v6184, 0.0
          %v8760 = vsel %vm8248, %v6185, 0.0
          %v8761 = vsel %vm8249, %v6186, 0.0
          %v8762 = vsel %vm8250, %v6187, 0.0
          %v8763 = vsel %vm8251, %v6188, 0.0
          %v8764 = vsel %vm8252, %v6189, 0.0
          %v8765 = vsel %vm8253, %v6190, 0.0
          %v8766 = vsel %vm8254, %v6191, 0.0
          %v8767 = vsel %vm8255, %v6192, 0.0
          %v8768 = vsel %vm8256, %v6193, 0.0
          %v8769 = vsel %vm8257, %v6194, 0.0
          %v8770 = vsel %vm8258, %v6195, 0.0
          %v8771 = vsel %vm8259, %v6196, 0.0
          %v8772 = vsel %vm8260, %v6197, 0.0
          %v8773 = vsel %vm8261, %v6198, 0.0
          %v8774 = vsel %vm8262, %v6199, 0.0
          %v8775 = vsel %vm8263, %v6200, 0.0
          %v8776 = vsel %vm8264, %v6201, 0.0
          %v8777 = vsel %vm8265, %v6202, 0.0
          %v8778 = vsel %vm8266, %v6203, 0.0
          %v8779 = vsel %vm8267, %v6204, 0.0
          %v8780 = vsel %vm8268, %v6205, 0.0
          %v8781 = vsel %vm8269, %v6206, 0.0
          %v8782 = vsel %vm8270, %v6207, 0.0
          %v8783 = vsel %vm8271, %v6208, 0.0
          %v8784 = vsel %vm8272, %v6209, 0.0
          %v8785 = vsel %vm8273, %v6210, 0.0
          %v8786 = vsel %vm8274, %v6211, 0.0
          %v8787 = vsel %vm8275, %v6212, 0.0
          %v8788 = vsel %vm8276, %v6213, 0.0
          %v8789 = vsel %vm8277, %v6214, 0.0
          %v8790 = vsel %vm8278, %v6215, 0.0
          %v8791 = vsel %vm8279, %v6216, 0.0
          %v8792 = vsel %vm8280, %v6217, 0.0
          %v8793 = vsel %vm8281, %v6218, 0.0
          %v8794 = vsel %vm8282, %v6219, 0.0
          %v8795 = vsel %vm8283, %v6220, 0.0
          %v8796 = vsel %vm8284, %v6221, 0.0
          %v8797 = vsel %vm8285, %v6222, 0.0
          %v8798 = vsel %vm8286, %v6223, 0.0
          %v8799 = vsel %vm8287, %v6224, 0.0
          %v8800 = vsel %vm8288, %v6225, 0.0
          %v8801 = vsel %vm8289, %v6226, 0.0
          %v8802 = vsel %vm8290, %v6227, 0.0
          %v8803 = vsel %vm8291, %v6228, 0.0
          %v8804 = vsel %vm8292, %v6229, 0.0
          %v8805 = vsel %vm8293, %v6230, 0.0
          %v8806 = vsel %vm8294, %v6231, 0.0
          %v8807 = vsel %vm8295, %v6232, 0.0
          %v8808 = vsel %vm8296, %v6233, 0.0
          %v8809 = vsel %vm8297, %v6234, 0.0
          %v8810 = vsel %vm8298, %v6235, 0.0
          %v8811 = vsel %vm8299, %v6236, 0.0
          %v8812 = vsel %vm8300, %v6237, 0.0
          %v8813 = vsel %vm8301, %v6238, 0.0
          %v8814 = vsel %vm8302, %v6239, 0.0
          %v8815 = vsel %vm8303, %v6240, 0.0
          %v8816 = vsel %vm8304, %v6241, 0.0
          %v8817 = vsel %vm8305, %v6242, 0.0
          %v8818 = vsel %vm8306, %v6243, 0.0
          %v8819 = vsel %vm8307, %v6244, 0.0
          %v8820 = vsel %vm8308, %v6245, 0.0
          %v8821 = vsel %vm8309, %v6246, 0.0
          %v8822 = vsel %vm8310, %v6247, 0.0
          %v8823 = vsel %vm8311, %v6248, 0.0
          %v8824 = vsel %vm8312, %v6249, 0.0
          %v8825 = vsel %vm8313, %v6250, 0.0
          %v8826 = vsel %vm8314, %v6251, 0.0
          %v8827 = vsel %vm8315, %v6252, 0.0
          %v8828 = vsel %vm8316, %v6253, 0.0
          %v8829 = vsel %vm8317, %v6254, 0.0
          %v8830 = vsel %vm8318, %v6255, 0.0
          %v8831 = vsel %vm8319, %v6256, 0.0
          %v8832 = vsel %vm8320, %v6257, 0.0
          %v8833 = vsel %vm8321, %v6258, 0.0
          %v8834 = vsel %vm8322, %v6259, 0.0
          %v8835 = vsel %vm8323, %v6260, 0.0
          %v8836 = vsel %vm8324, %v6261, 0.0
          %v8837 = vsel %vm8325, %v6262, 0.0
          %v8838 = vsel %vm8326, %v6263, 0.0
          %v8839 = vsel %vm8327, %v6264, 0.0
          %v8840 = vsel %vm8328, %v6265, 0.0
          %v8841 = vsel %vm8329, %v6266, 0.0
          %v8842 = vsel %vm8330, %v6267, 0.0
          %v8843 = vsel %vm8331, %v6268, 0.0
          %v8844 = vsel %vm8332, %v6269, 0.0
          %v8845 = vsel %vm8333, %v6270, 0.0
          %v8846 = vsel %vm8334, %v6271, 0.0
          %v8847 = vsel %vm8335, %v6272, 0.0
          %v8848 = vsel %vm8336, %v6273, 0.0
          %v8849 = vsel %vm8337, %v6274, 0.0
          %v8850 = vsel %vm8338, %v6275, 0.0
          %v8851 = vsel %vm8339, %v6276, 0.0
          %v8852 = vsel %vm8340, %v6277, 0.0
          %v8853 = vsel %vm8341, %v6278, 0.0
          %v8854 = vsel %vm8342, %v6279, 0.0
          %v8855 = vsel %vm8343, %v6280, 0.0
          %v8856 = vsel %vm8344, %v6281, 0.0
          %v8857 = vsel %vm8345, %v6282, 0.0
          %v8858 = vsel %vm8346, %v6283, 0.0
          %v8859 = vsel %vm8347, %v6284, 0.0
          %v8860 = vsel %vm8348, %v6285, 0.0
          %v8861 = vsel %vm8349, %v6286, 0.0
          %v8862 = vsel %vm8350, %v6287, 0.0
          %v8863 = vsel %vm8351, %v6288, 0.0
          %v8864 = vsel %vm8352, %v6289, 0.0
          %v8865 = vsel %vm8353, %v6290, 0.0
          %v8866 = vsel %vm8354, %v6291, 0.0
          %v8867 = vsel %vm8355, %v6292, 0.0
          %v8868 = vsel %vm8356, %v6293, 0.0
          %v8869 = vsel %vm8357, %v6294, 0.0
          %v8870 = vsel %vm8358, %v6295, 0.0
          %v8871 = vsel %vm8359, %v6296, 0.0
          %v8872 = vsel %vm8360, %v6297, 0.0
          %v8873 = vsel %vm8361, %v6298, 0.0
          %v8874 = vsel %vm8362, %v6299, 0.0
          %v8875 = vsel %vm8363, %v6300, 0.0
          %v8876 = vsel %vm8364, %v6301, 0.0
          %v8877 = vsel %vm8365, %v6302, 0.0
          %v8878 = vsel %vm8366, %v6303, 0.0
          %v8879 = vsel %vm8367, %v6304, 0.0
          %v8880 = vsel %vm8368, %v6305, 0.0
          %v8881 = vsel %vm8369, %v6306, 0.0
          %v8882 = vsel %vm8370, %v6307, 0.0
          %v8883 = vsel %vm8371, %v6308, 0.0
          %v8884 = vsel %vm8372, %v6309, 0.0
          %v8885 = vsel %vm8373, %v6310, 0.0
          %v8886 = vsel %vm8374, %v6311, 0.0
          %v8887 = vsel %vm8375, %v6312, 0.0
          %v8888 = vsel %vm8376, %v6313, 0.0
          %v8889 = vsel %vm8377, %v6314, 0.0
          %v8890 = vsel %vm8378, %v6315, 0.0
          %v8891 = vsel %vm8379, %v6316, 0.0
          %v8892 = vsel %vm8380, %v6317, 0.0
          %v8893 = vsel %vm8381, %v6318, 0.0
          %v8894 = vsel %vm8382, %v6319, 0.0
          %v8895 = vsel %vm8383, %v6320, 0.0
          %v8896 = vsel %vm8384, %v6321, 0.0
          %v8897 = vsel %vm8385, %v6322, 0.0
          %v8898 = vsel %vm8386, %v6323, 0.0
          %v8899 = vsel %vm8387, %v6324, 0.0
          %v8900 = vsel %vm8388, %v6325, 0.0
          %v8901 = vsel %vm8389, %v6326, 0.0
          %v8902 = vsel %vm8390, %v6327, 0.0
          %v8903 = vsel %vm8391, %v6328, 0.0
          %v8904 = vsel %vm8392, %v6329, 0.0
          %v8905 = vsel %vm8393, %v6330, 0.0
          %v8906 = vsel %vm8394, %v6331, 0.0
          %v8907 = vsel %vm8395, %v6332, 0.0
          %v8908 = vsel %vm8396, %v6333, 0.0
          %v8909 = vsel %vm8397, %v6334, 0.0
          %v8910 = vsel %vm8398, %v6335, 0.0
          %v8911 = vsel %vm8399, %v6336, 0.0
          %v8912 = vsel %vm8400, %v6337, 0.0
          %v8913 = vsel %vm8401, %v6338, 0.0
          %v8914 = vsel %vm8402, %v6339, 0.0
          %v8915 = vsel %vm8403, %v6340, 0.0
          %v8916 = vsel %vm8404, %v6341, 0.0
          %v8917 = vsel %vm8405, %v6342, 0.0
          %v8918 = vsel %vm8406, %v6343, 0.0
          %v8919 = vsel %vm8407, %v6344, 0.0
          %v8920 = vsel %vm8408, %v6345, 0.0
          %v8921 = vsel %vm8409, %v6346, 0.0
          %v8922 = vsel %vm8410, %v6347, 0.0
          %v8923 = vsel %vm8411, %v6348, 0.0
          %v8924 = vsel %vm8412, %v6349, 0.0
          %v8925 = vsel %vm8413, %v6350, 0.0
          %v8926 = vsel %vm8414, %v6351, 0.0
          %v8927 = vsel %vm8415, %v6352, 0.0
          %v8928 = vsel %vm8416, %v6353, 0.0
          %v8929 = vsel %vm8417, %v6354, 0.0
          %v8930 = vsel %vm8418, %v6355, 0.0
          %v8931 = vsel %vm8419, %v6356, 0.0
          %v8932 = vsel %vm8420, %v6357, 0.0
          %v8933 = vsel %vm8421, %v6358, 0.0
          %v8934 = vsel %vm8422, %v6359, 0.0
          %v8935 = vsel %vm8423, %v6360, 0.0
          %v8936 = vsel %vm8424, %v6361, 0.0
          %v8937 = vsel %vm8425, %v6362, 0.0
          %v8938 = vsel %vm8426, %v6363, 0.0
          %v8939 = vsel %vm8427, %v6364, 0.0
          %v8940 = vsel %vm8428, %v6365, 0.0
          %v8941 = vsel %vm8429, %v6366, 0.0
          %v8942 = vsel %vm8430, %v6367, 0.0
          %v8943 = vsel %vm8431, %v6368, 0.0
          %v8944 = vsel %vm8432, %v6369, 0.0
          %v8945 = vsel %vm8433, %v6370, 0.0
          %v8946 = vsel %vm8434, %v6371, 0.0
          %v8947 = vsel %vm8435, %v6372, 0.0
          %v8948 = vsel %vm8436, %v6373, 0.0
          %v8949 = vsel %vm8437, %v6374, 0.0
          %v8950 = vsel %vm8438, %v6375, 0.0
          %v8951 = vsel %vm8439, %v6376, 0.0
          %v8952 = vsel %vm8440, %v6377, 0.0
          %v8953 = vsel %vm8441, %v6378, 0.0
          %v8954 = vsel %vm8442, %v6379, 0.0
          %v8955 = vsel %vm8443, %v6380, 0.0
          %v8956 = vsel %vm8444, %v6381, 0.0
          %v8957 = vsel %vm8445, %v6382, 0.0
          %v8958 = vsel %vm8446, %v6383, 0.0
          %v8959 = vsel %vm8447, %v6384, 0.0
          %v8960 = vsel %vm8448, %v6385, 0.0
          %v8961 = vsel %vm8449, %v6386, 0.0
          %v8962 = vsel %vm8450, %v6387, 0.0
          %v8963 = vsel %vm8451, %v6388, 0.0
          %v8964 = vsel %vm8452, %v6389, 0.0
          %v8965 = vsel %vm8453, %v6390, 0.0
          %v8966 = vsel %vm8454, %v6391, 0.0
          %v8967 = vsel %vm8455, %v6392, 0.0
          %v8968 = vsel %vm8456, %v6393, 0.0
          %v8969 = vsel %vm8457, %v6394, 0.0
          %v8970 = vsel %vm8458, %v6395, 0.0
          %v8971 = vsel %vm8459, %v6396, 0.0
          %v8972 = vsel %vm8460, %v6397, 0.0
          %v8973 = vsel %vm8461, %v6398, 0.0
          %v8974 = vsel %vm8462, %v6399, 0.0
          %v8975 = vsel %vm8463, %v6400, 0.0
          %v8976 = vsel %vm8464, %v6401, 0.0
          %v8977 = vsel %vm8465, %v6402, 0.0
          %v8978 = vsel %vm8466, %v6403, 0.0
          %v8979 = vsel %vm8467, %v6404, 0.0
          %v8980 = vsel %vm8468, %v6405, 0.0
          %v8981 = vsel %vm8469, %v6406, 0.0
          %v8982 = vsel %vm8470, %v6407, 0.0
          %v8983 = vsel %vm8471, %v6408, 0.0
          %v8984 = vsel %vm8472, %v6409, 0.0
          %v8985 = vsel %vm8473, %v6410, 0.0
          %v8986 = vsel %vm8474, %v6411, 0.0
          %v8987 = vsel %vm8475, %v6412, 0.0
          %v8988 = vsel %vm8476, %v6413, 0.0
          %v8989 = vsel %vm8477, %v6414, 0.0
          %v8990 = vsel %vm8478, %v6415, 0.0
          %v8991 = vsel %vm8479, %v6416, 0.0
          %v8992 = vsel %vm8480, %v6417, 0.0
          %v8993 = vsel %vm8481, %v6418, 0.0
          %v8994 = vld [vmem:[#allocation2] sm:$0xff]
          %v8995 = vadd.f32 %v8482, %v8483
          %v8996 = vadd.f32 %v8995, %v8484
          %v8997 = vadd.f32 %v8996, %v8485
          %v8998 = vadd.f32 %v8997, %v8486
          %v8999 = vadd.f32 %v8998, %v8487
          %v9000 = vadd.f32 %v8999, %v8488
          %v9001 = vadd.f32 %v9000, %v8489
          %v9002 = vadd.f32 %v9001, %v8490
          %v9003 = vadd.f32 %v9002, %v8491
          %v9004 = vadd.f32 %v9003, %v8492
          %v9005 = vadd.f32 %v9004, %v8493
          %v9006 = vadd.f32 %v9005, %v8494
          %v9007 = vadd.f32 %v9006, %v8495
          %v9008 = vadd.f32 %v9007, %v8496
          %v9009 = vadd.f32 %v9008, %v8497
          %v9010 = vadd.f32 %v9009, %v8498
          %v9011 = vadd.f32 %v9010, %v8499
          %v9012 = vadd.f32 %v9011, %v8500
          %v9013 = vadd.f32 %v9012, %v8501
          %v9014 = vadd.f32 %v9013, %v8502
          %v9015 = vadd.f32 %v9014, %v8503
          %v9016 = vadd.f32 %v9015, %v8504
          %v9017 = vadd.f32 %v9016, %v8505
          %v9018 = vadd.f32 %v9017, %v8506
          %v9019 = vadd.f32 %v9018, %v8507
          %v9020 = vadd.f32 %v9019, %v8508
          %v9021 = vadd.f32 %v9020, %v8509
          %v9022 = vadd.f32 %v9021, %v8510
          %v9023 = vadd.f32 %v9022, %v8511
          %v9024 = vadd.f32 %v9023, %v8512
          %v9025 = vadd.f32 %v9024, %v8513
          %v9026 = vadd.f32 %v9025, %v8514
          %v9027 = vadd.f32 %v9026, %v8515
          %v9028 = vadd.f32 %v9027, %v8516
          %v9029 = vadd.f32 %v9028, %v8517
          %v9030 = vadd.f32 %v9029, %v8518
          %v9031 = vadd.f32 %v9030, %v8519
          %v9032 = vadd.f32 %v9031, %v8520
          %v9033 = vadd.f32 %v9032, %v8521
          %v9034 = vadd.f32 %v9033, %v8522
          %v9035 = vadd.f32 %v9034, %v8523
          %v9036 = vadd.f32 %v9035, %v8524
          %v9037 = vadd.f32 %v9036, %v8525
          %v9038 = vadd.f32 %v9037, %v8526
          %v9039 = vadd.f32 %v9038, %v8527
          %v9040 = vadd.f32 %v9039, %v8528
          %v9041 = vadd.f32 %v9040, %v8529
          %v9042 = vadd.f32 %v9041, %v8530
          %v9043 = vadd.f32 %v9042, %v8531
          %v9044 = vadd.f32 %v9043, %v8532
          %v9045 = vadd.f32 %v9044, %v8533
          %v9046 = vadd.f32 %v9045, %v8534
          %v9047 = vadd.f32 %v9046, %v8535
          %v9048 = vadd.f32 %v9047, %v8536
          %v9049 = vadd.f32 %v9048, %v8537
          %v9050 = vadd.f32 %v9049, %v8538
          %v9051 = vadd.f32 %v9050, %v8539
          %v9052 = vadd.f32 %v9051, %v8540
          %v9053 = vadd.f32 %v9052, %v8541
          %v9054 = vadd.f32 %v9053, %v8542
          %v9055 = vadd.f32 %v9054, %v8543
          %v9056 = vadd.f32 %v9055, %v8544
          %v9057 = vadd.f32 %v9056, %v8545
          %v9058 = vadd.f32 %v9057, %v8546
          %v9059 = vadd.f32 %v9058, %v8547
          %v9060 = vadd.f32 %v9059, %v8548
          %v9061 = vadd.f32 %v9060, %v8549
          %v9062 = vadd.f32 %v9061, %v8550
          %v9063 = vadd.f32 %v9062, %v8551
          %v9064 = vadd.f32 %v9063, %v8552
          %v9065 = vadd.f32 %v9064, %v8553
          %v9066 = vadd.f32 %v9065, %v8554
          %v9067 = vadd.f32 %v9066, %v8555
          %v9068 = vadd.f32 %v9067, %v8556
          %v9069 = vadd.f32 %v9068, %v8557
          %v9070 = vadd.f32 %v9069, %v8558
          %v9071 = vadd.f32 %v9070, %v8559
          %v9072 = vadd.f32 %v9071, %v8560
          %v9073 = vadd.f32 %v9072, %v8561
          %v9074 = vadd.f32 %v9073, %v8562
          %v9075 = vadd.f32 %v9074, %v8563
          %v9076 = vadd.f32 %v9075, %v8564
          %v9077 = vadd.f32 %v9076, %v8565
          %v9078 = vadd.f32 %v9077, %v8566
          %v9079 = vadd.f32 %v9078, %v8567
          %v9080 = vadd.f32 %v9079, %v8568
          %v9081 = vadd.f32 %v9080, %v8569
          %v9082 = vadd.f32 %v9081, %v8570
          %v9083 = vadd.f32 %v9082, %v8571
          %v9084 = vadd.f32 %v9083, %v8572
          %v9085 = vadd.f32 %v9084, %v8573
          %v9086 = vadd.f32 %v9085, %v8574
          %v9087 = vadd.f32 %v9086, %v8575
          %v9088 = vadd.f32 %v9087, %v8576
          %v9089 = vadd.f32 %v9088, %v8577
          %v9090 = vadd.f32 %v9089, %v8578
          %v9091 = vadd.f32 %v9090, %v8579
          %v9092 = vadd.f32 %v9091, %v8580
          %v9093 = vadd.f32 %v9092, %v8581
          %v9094 = vadd.f32 %v9093, %v8582
          %v9095 = vadd.f32 %v9094, %v8583
          %v9096 = vadd.f32 %v9095, %v8584
          %v9097 = vadd.f32 %v9096, %v8585
          %v9098 = vadd.f32 %v9097, %v8586
          %v9099 = vadd.f32 %v9098, %v8587
          %v9100 = vadd.f32 %v9099, %v8588
          %v9101 = vadd.f32 %v9100, %v8589
          %v9102 = vadd.f32 %v9101, %v8590
          %v9103 = vadd.f32 %v9102, %v8591
          %v9104 = vadd.f32 %v9103, %v8592
          %v9105 = vadd.f32 %v9104, %v8593
          %v9106 = vadd.f32 %v9105, %v8594
          %v9107 = vadd.f32 %v9106, %v8595
          %v9108 = vadd.f32 %v9107, %v8596
          %v9109 = vadd.f32 %v9108, %v8597
          %v9110 = vadd.f32 %v9109, %v8598
          %v9111 = vadd.f32 %v9110, %v8599
          %v9112 = vadd.f32 %v9111, %v8600
          %v9113 = vadd.f32 %v9112, %v8601
          %v9114 = vadd.f32 %v9113, %v8602
          %v9115 = vadd.f32 %v9114, %v8603
          %v9116 = vadd.f32 %v9115, %v8604
          %v9117 = vadd.f32 %v9116, %v8605
          %v9118 = vadd.f32 %v9117, %v8606
          %v9119 = vadd.f32 %v9118, %v8607
          %v9120 = vadd.f32 %v9119, %v8608
          %v9121 = vadd.f32 %v9120, %v8609
          %v9122 = vadd.f32 %v9121, %v8610
          %v9123 = vadd.f32 %v9122, %v8611
          %v9124 = vadd.f32 %v9123, %v8612
          %v9125 = vadd.f32 %v9124, %v8613
          %v9126 = vadd.f32 %v9125, %v8614
          %v9127 = vadd.f32 %v9126, %v8615
          %v9128 = vadd.f32 %v9127, %v8616
          %v9129 = vadd.f32 %v9128, %v8617
          %v9130 = vadd.f32 %v9129, %v8618
          %v9131 = vadd.f32 %v9130, %v8619
          %v9132 = vadd.f32 %v9131, %v8620
          %v9133 = vadd.f32 %v9132, %v8621
          %v9134 = vadd.f32 %v9133, %v8622
          %v9135 = vadd.f32 %v9134, %v8623
          %v9136 = vadd.f32 %v9135, %v8624
          %v9137 = vadd.f32 %v9136, %v8625
          %v9138 = vadd.f32 %v9137, %v8626
          %v9139 = vadd.f32 %v9138, %v8627
          %v9140 = vadd.f32 %v9139, %v8628
          %v9141 = vadd.f32 %v9140, %v8629
          %v9142 = vadd.f32 %v9141, %v8630
          %v9143 = vadd.f32 %v9142, %v8631
          %v9144 = vadd.f32 %v9143, %v8632
          %v9145 = vadd.f32 %v9144, %v8633
          %v9146 = vadd.f32 %v9145, %v8634
          %v9147 = vadd.f32 %v9146, %v8635
          %v9148 = vadd.f32 %v9147, %v8636
          %v9149 = vadd.f32 %v9148, %v8637
          %v9150 = vadd.f32 %v9149, %v8638
          %v9151 = vadd.f32 %v9150, %v8639
          %v9152 = vadd.f32 %v9151, %v8640
          %v9153 = vadd.f32 %v9152, %v8641
          %v9154 = vadd.f32 %v9153, %v8642
          %v9155 = vadd.f32 %v9154, %v8643
          %v9156 = vadd.f32 %v9155, %v8644
          %v9157 = vadd.f32 %v9156, %v8645
          %v9158 = vadd.f32 %v9157, %v8646
          %v9159 = vadd.f32 %v9158, %v8647
          %v9160 = vadd.f32 %v9159, %v8648
          %v9161 = vadd.f32 %v9160, %v8649
          %v9162 = vadd.f32 %v9161, %v8650
          %v9163 = vadd.f32 %v9162, %v8651
          %v9164 = vadd.f32 %v9163, %v8652
          %v9165 = vadd.f32 %v9164, %v8653
          %v9166 = vadd.f32 %v9165, %v8654
          %v9167 = vadd.f32 %v9166, %v8655
          %v9168 = vadd.f32 %v9167, %v8656
          %v9169 = vadd.f32 %v9168, %v8657
          %v9170 = vadd.f32 %v9169, %v8658
          %v9171 = vadd.f32 %v9170, %v8659
          %v9172 = vadd.f32 %v9171, %v8660
          %v9173 = vadd.f32 %v9172, %v8661
          %v9174 = vadd.f32 %v9173, %v8662
          %v9175 = vadd.f32 %v9174, %v8663
          %v9176 = vadd.f32 %v9175, %v8664
          %v9177 = vadd.f32 %v9176, %v8665
          %v9178 = vadd.f32 %v9177, %v8666
          %v9179 = vadd.f32 %v9178, %v8667
          %v9180 = vadd.f32 %v9179, %v8668
          %v9181 = vadd.f32 %v9180, %v8669
          %v9182 = vadd.f32 %v9181, %v8670
          %v9183 = vadd.f32 %v9182, %v8671
          %v9184 = vadd.f32 %v9183, %v8672
          %v9185 = vadd.f32 %v9184, %v8673
          %v9186 = vadd.f32 %v9185, %v8674
          %v9187 = vadd.f32 %v9186, %v8675
          %v9188 = vadd.f32 %v9187, %v8676
          %v9189 = vadd.f32 %v9188, %v8677
          %v9190 = vadd.f32 %v9189, %v8678
          %v9191 = vadd.f32 %v9190, %v8679
          %v9192 = vadd.f32 %v9191, %v8680
          %v9193 = vadd.f32 %v9192, %v8681
          %v9194 = vadd.f32 %v9193, %v8682
          %v9195 = vadd.f32 %v9194, %v8683
          %v9196 = vadd.f32 %v9195, %v8684
          %v9197 = vadd.f32 %v9196, %v8685
          %v9198 = vadd.f32 %v9197, %v8686
          %v9199 = vadd.f32 %v9198, %v8687
          %v9200 = vadd.f32 %v9199, %v8688
          %v9201 = vadd.f32 %v9200, %v8689
          %v9202 = vadd.f32 %v9201, %v8690
          %v9203 = vadd.f32 %v9202, %v8691
          %v9204 = vadd.f32 %v9203, %v8692
          %v9205 = vadd.f32 %v9204, %v8693
          %v9206 = vadd.f32 %v9205, %v8694
          %v9207 = vadd.f32 %v9206, %v8695
          %v9208 = vadd.f32 %v9207, %v8696
          %v9209 = vadd.f32 %v9208, %v8697
          %v9210 = vadd.f32 %v9209, %v8698
          %v9211 = vadd.f32 %v9210, %v8699
          %v9212 = vadd.f32 %v9211, %v8700
          %v9213 = vadd.f32 %v9212, %v8701
          %v9214 = vadd.f32 %v9213, %v8702
          %v9215 = vadd.f32 %v9214, %v8703
          %v9216 = vadd.f32 %v9215, %v8704
          %v9217 = vadd.f32 %v9216, %v8705
          %v9218 = vadd.f32 %v9217, %v8706
          %v9219 = vadd.f32 %v9218, %v8707
          %v9220 = vadd.f32 %v9219, %v8708
          %v9221 = vadd.f32 %v9220, %v8709
          %v9222 = vadd.f32 %v9221, %v8710
          %v9223 = vadd.f32 %v9222, %v8711
          %v9224 = vadd.f32 %v9223, %v8712
          %v9225 = vadd.f32 %v9224, %v8713
          %v9226 = vadd.f32 %v9225, %v8714
          %v9227 = vadd.f32 %v9226, %v8715
          %v9228 = vadd.f32 %v9227, %v8716
          %v9229 = vadd.f32 %v9228, %v8717
          %v9230 = vadd.f32 %v9229, %v8718
          %v9231 = vadd.f32 %v9230, %v8719
          %v9232 = vadd.f32 %v9231, %v8720
          %v9233 = vadd.f32 %v9232, %v8721
          %v9234 = vadd.f32 %v9233, %v8722
          %v9235 = vadd.f32 %v9234, %v8723
          %v9236 = vadd.f32 %v9235, %v8724
          %v9237 = vadd.f32 %v9236, %v8725
          %v9238 = vadd.f32 %v9237, %v8726
          %v9239 = vadd.f32 %v9238, %v8727
          %v9240 = vadd.f32 %v9239, %v8728
          %v9241 = vadd.f32 %v9240, %v8729
          %v9242 = vadd.f32 %v9241, %v8730
          %v9243 = vadd.f32 %v9242, %v8731
          %v9244 = vadd.f32 %v9243, %v8732
          %v9245 = vadd.f32 %v9244, %v8733
          %v9246 = vadd.f32 %v9245, %v8734
          %v9247 = vadd.f32 %v9246, %v8735
          %v9248 = vadd.f32 %v9247, %v8736
          %v9249 = vadd.f32 %v9248, %v8737
          %v9250 = vadd.f32 %v9249, %v8738
          %v9251 = vadd.f32 %v9250, %v8739
          %v9252 = vadd.f32 %v9251, %v8740
          %v9253 = vadd.f32 %v9252, %v8741
          %v9254 = vadd.f32 %v9253, %v8742
          %v9255 = vadd.f32 %v9254, %v8743
          %v9256 = vadd.f32 %v9255, %v8744
          %v9257 = vadd.f32 %v9256, %v8745
          %v9258 = vadd.f32 %v9257, %v8746
          %v9259 = vadd.f32 %v9258, %v8747
          %v9260 = vadd.f32 %v9259, %v8748
          %v9261 = vadd.f32 %v9260, %v8749
          %v9262 = vadd.f32 %v9261, %v8750
          %v9263 = vadd.f32 %v9262, %v8751
          %v9264 = vadd.f32 %v9263, %v8752
          %v9265 = vadd.f32 %v9264, %v8753
          %v9266 = vadd.f32 %v9265, %v8754
          %v9267 = vadd.f32 %v9266, %v8755
          %v9268 = vadd.f32 %v9267, %v8756
          %v9269 = vadd.f32 %v9268, %v8757
          %v9270 = vadd.f32 %v9269, %v8758
          %v9271 = vadd.f32 %v9270, %v8759
          %v9272 = vadd.f32 %v9271, %v8760
          %v9273 = vadd.f32 %v9272, %v8761
          %v9274 = vadd.f32 %v9273, %v8762
          %v9275 = vadd.f32 %v9274, %v8763
          %v9276 = vadd.f32 %v9275, %v8764
          %v9277 = vadd.f32 %v9276, %v8765
          %v9278 = vadd.f32 %v9277, %v8766
          %v9279 = vadd.f32 %v9278, %v8767
          %v9280 = vadd.f32 %v9279, %v8768
          %v9281 = vadd.f32 %v9280, %v8769
          %v9282 = vadd.f32 %v9281, %v8770
          %v9283 = vadd.f32 %v9282, %v8771
          %v9284 = vadd.f32 %v9283, %v8772
          %v9285 = vadd.f32 %v9284, %v8773
          %v9286 = vadd.f32 %v9285, %v8774
          %v9287 = vadd.f32 %v9286, %v8775
          %v9288 = vadd.f32 %v9287, %v8776
          %v9289 = vadd.f32 %v9288, %v8777
          %v9290 = vadd.f32 %v9289, %v8778
          %v9291 = vadd.f32 %v9290, %v8779
          %v9292 = vadd.f32 %v9291, %v8780
          %v9293 = vadd.f32 %v9292, %v8781
          %v9294 = vadd.f32 %v9293, %v8782
          %v9295 = vadd.f32 %v9294, %v8783
          %v9296 = vadd.f32 %v9295, %v8784
          %v9297 = vadd.f32 %v9296, %v8785
          %v9298 = vadd.f32 %v9297, %v8786
          %v9299 = vadd.f32 %v9298, %v8787
          %v9300 = vadd.f32 %v9299, %v8788
          %v9301 = vadd.f32 %v9300, %v8789
          %v9302 = vadd.f32 %v9301, %v8790
          %v9303 = vadd.f32 %v9302, %v8791
          %v9304 = vadd.f32 %v9303, %v8792
          %v9305 = vadd.f32 %v9304, %v8793
          %v9306 = vadd.f32 %v9305, %v8794
          %v9307 = vadd.f32 %v9306, %v8795
          %v9308 = vadd.f32 %v9307, %v8796
          %v9309 = vadd.f32 %v9308, %v8797
          %v9310 = vadd.f32 %v9309, %v8798
          %v9311 = vadd.f32 %v9310, %v8799
          %v9312 = vadd.f32 %v9311, %v8800
          %v9313 = vadd.f32 %v9312, %v8801
          %v9314 = vadd.f32 %v9313, %v8802
          %v9315 = vadd.f32 %v9314, %v8803
          %v9316 = vadd.f32 %v9315, %v8804
          %v9317 = vadd.f32 %v9316, %v8805
          %v9318 = vadd.f32 %v9317, %v8806
          %v9319 = vadd.f32 %v9318, %v8807
          %v9320 = vadd.f32 %v9319, %v8808
          %v9321 = vadd.f32 %v9320, %v8809
          %v9322 = vadd.f32 %v9321, %v8810
          %v9323 = vadd.f32 %v9322, %v8811
          %v9324 = vadd.f32 %v9323, %v8812
          %v9325 = vadd.f32 %v9324, %v8813
          %v9326 = vadd.f32 %v9325, %v8814
          %v9327 = vadd.f32 %v9326, %v8815
          %v9328 = vadd.f32 %v9327, %v8816
          %v9329 = vadd.f32 %v9328, %v8817
          %v9330 = vadd.f32 %v9329, %v8818
          %v9331 = vadd.f32 %v9330, %v8819
          %v9332 = vadd.f32 %v9331, %v8820
          %v9333 = vadd.f32 %v9332, %v8821
          %v9334 = vadd.f32 %v9333, %v8822
          %v9335 = vadd.f32 %v9334, %v8823
          %v9336 = vadd.f32 %v9335, %v8824
          %v9337 = vadd.f32 %v9336, %v8825
          %v9338 = vadd.f32 %v9337, %v8826
          %v9339 = vadd.f32 %v9338, %v8827
          %v9340 = vadd.f32 %v9339, %v8828
          %v9341 = vadd.f32 %v9340, %v8829
          %v9342 = vadd.f32 %v9341, %v8830
          %v9343 = vadd.f32 %v9342, %v8831
          %v9344 = vadd.f32 %v9343, %v8832
          %v9345 = vadd.f32 %v9344, %v8833
          %v9346 = vadd.f32 %v9345, %v8834
          %v9347 = vadd.f32 %v9346, %v8835
          %v9348 = vadd.f32 %v9347, %v8836
          %v9349 = vadd.f32 %v9348, %v8837
          %v9350 = vadd.f32 %v9349, %v8838
          %v9351 = vadd.f32 %v9350, %v8839
          %v9352 = vadd.f32 %v9351, %v8840
          %v9353 = vadd.f32 %v9352, %v8841
          %v9354 = vadd.f32 %v9353, %v8842
          %v9355 = vadd.f32 %v9354, %v8843
          %v9356 = vadd.f32 %v9355, %v8844
          %v9357 = vadd.f32 %v9356, %v8845
          %v9358 = vadd.f32 %v9357, %v8846
          %v9359 = vadd.f32 %v9358, %v8847
          %v9360 = vadd.f32 %v9359, %v8848
          %v9361 = vadd.f32 %v9360, %v8849
          %v9362 = vadd.f32 %v9361, %v8850
          %v9363 = vadd.f32 %v9362, %v8851
          %v9364 = vadd.f32 %v9363, %v8852
          %v9365 = vadd.f32 %v9364, %v8853
          %v9366 = vadd.f32 %v9365, %v8854
          %v9367 = vadd.f32 %v9366, %v8855
          %v9368 = vadd.f32 %v9367, %v8856
          %v9369 = vadd.f32 %v9368, %v8857
          %v9370 = vadd.f32 %v9369, %v8858
          %v9371 = vadd.f32 %v9370, %v8859
          %v9372 = vadd.f32 %v9371, %v8860
          %v9373 = vadd.f32 %v9372, %v8861
          %v9374 = vadd.f32 %v9373, %v8862
          %v9375 = vadd.f32 %v9374, %v8863
          %v9376 = vadd.f32 %v9375, %v8864
          %v9377 = vadd.f32 %v9376, %v8865
          %v9378 = vadd.f32 %v9377, %v8866
          %v9379 = vadd.f32 %v9378, %v8867
          %v9380 = vadd.f32 %v9379, %v8868
          %v9381 = vadd.f32 %v9380, %v8869
          %v9382 = vadd.f32 %v9381, %v8870
          %v9383 = vadd.f32 %v9382, %v8871
          %v9384 = vadd.f32 %v9383, %v8872
          %v9385 = vadd.f32 %v9384, %v8873
          %v9386 = vadd.f32 %v9385, %v8874
          %v9387 = vadd.f32 %v9386, %v8875
          %v9388 = vadd.f32 %v9387, %v8876
          %v9389 = vadd.f32 %v9388, %v8877
          %v9390 = vadd.f32 %v9389, %v8878
          %v9391 = vadd.f32 %v9390, %v8879
          %v9392 = vadd.f32 %v9391, %v8880
          %v9393 = vadd.f32 %v9392, %v8881
          %v9394 = vadd.f32 %v9393, %v8882
          %v9395 = vadd.f32 %v9394, %v8883
          %v9396 = vadd.f32 %v9395, %v8884
          %v9397 = vadd.f32 %v9396, %v8885
          %v9398 = vadd.f32 %v9397, %v8886
          %v9399 = vadd.f32 %v9398, %v8887
          %v9400 = vadd.f32 %v9399, %v8888
          %v9401 = vadd.f32 %v9400, %v8889
          %v9402 = vadd.f32 %v9401, %v8890
          %v9403 = vadd.f32 %v9402, %v8891
          %v9404 = vadd.f32 %v9403, %v8892
          %v9405 = vadd.f32 %v9404, %v8893
          %v9406 = vadd.f32 %v9405, %v8894
          %v9407 = vadd.f32 %v9406, %v8895
          %v9408 = vadd.f32 %v9407, %v8896
          %v9409 = vadd.f32 %v9408, %v8897
          %v9410 = vadd.f32 %v9409, %v8898
          %v9411 = vadd.f32 %v9410, %v8899
          %v9412 = vadd.f32 %v9411, %v8900
          %v9413 = vadd.f32 %v9412, %v8901
          %v9414 = vadd.f32 %v9413, %v8902
          %v9415 = vadd.f32 %v9414, %v8903
          %v9416 = vadd.f32 %v9415, %v8904
          %v9417 = vadd.f32 %v9416, %v8905
          %v9418 = vadd.f32 %v9417, %v8906
          %v9419 = vadd.f32 %v9418, %v8907
          %v9420 = vadd.f32 %v9419, %v8908
          %v9421 = vadd.f32 %v9420, %v8909
          %v9422 = vadd.f32 %v9421, %v8910
          %v9423 = vadd.f32 %v9422, %v8911
          %v9424 = vadd.f32 %v9423, %v8912
          %v9425 = vadd.f32 %v9424, %v8913
          %v9426 = vadd.f32 %v9425, %v8914
          %v9427 = vadd.f32 %v9426, %v8915
          %v9428 = vadd.f32 %v9427, %v8916
          %v9429 = vadd.f32 %v9428, %v8917
          %v9430 = vadd.f32 %v9429, %v8918
          %v9431 = vadd.f32 %v9430, %v8919
          %v9432 = vadd.f32 %v9431, %v8920
          %v9433 = vadd.f32 %v9432, %v8921
          %v9434 = vadd.f32 %v9433, %v8922
          %v9435 = vadd.f32 %v9434, %v8923
          %v9436 = vadd.f32 %v9435, %v8924
          %v9437 = vadd.f32 %v9436, %v8925
          %v9438 = vadd.f32 %v9437, %v8926
          %v9439 = vadd.f32 %v9438, %v8927
          %v9440 = vadd.f32 %v9439, %v8928
          %v9441 = vadd.f32 %v9440, %v8929
          %v9442 = vadd.f32 %v9441, %v8930
          %v9443 = vadd.f32 %v9442, %v8931
          %v9444 = vadd.f32 %v9443, %v8932
          %v9445 = vadd.f32 %v9444, %v8933
          %v9446 = vadd.f32 %v9445, %v8934
          %v9447 = vadd.f32 %v9446, %v8935
          %v9448 = vadd.f32 %v9447, %v8936
          %v9449 = vadd.f32 %v9448, %v8937
          %v9450 = vadd.f32 %v9449, %v8938
          %v9451 = vadd.f32 %v9450, %v8939
          %v9452 = vadd.f32 %v9451, %v8940
          %v9453 = vadd.f32 %v9452, %v8941
          %v9454 = vadd.f32 %v9453, %v8942
          %v9455 = vadd.f32 %v9454, %v8943
          %v9456 = vadd.f32 %v9455, %v8944
          %v9457 = vadd.f32 %v9456, %v8945
          %v9458 = vadd.f32 %v9457, %v8946
          %v9459 = vadd.f32 %v9458, %v8947
          %v9460 = vadd.f32 %v9459, %v8948
          %v9461 = vadd.f32 %v9460, %v8949
          %v9462 = vadd.f32 %v9461, %v8950
          %v9463 = vadd.f32 %v9462, %v8951
          %v9464 = vadd.f32 %v9463, %v8952
          %v9465 = vadd.f32 %v9464, %v8953
          %v9466 = vadd.f32 %v9465, %v8954
          %v9467 = vadd.f32 %v9466, %v8955
          %v9468 = vadd.f32 %v9467, %v8956
          %v9469 = vadd.f32 %v9468, %v8957
          %v9470 = vadd.f32 %v9469, %v8958
          %v9471 = vadd.f32 %v9470, %v8959
          %v9472 = vadd.f32 %v9471, %v8960
          %v9473 = vadd.f32 %v9472, %v8961
          %v9474 = vadd.f32 %v9473, %v8962
          %v9475 = vadd.f32 %v9474, %v8963
          %v9476 = vadd.f32 %v9475, %v8964
          %v9477 = vadd.f32 %v9476, %v8965
          %v9478 = vadd.f32 %v9477, %v8966
          %v9479 = vadd.f32 %v9478, %v8967
          %v9480 = vadd.f32 %v9479, %v8968
          %v9481 = vadd.f32 %v9480, %v8969
          %v9482 = vadd.f32 %v9481, %v8970
          %v9483 = vadd.f32 %v9482, %v8971
          %v9484 = vadd.f32 %v9483, %v8972
          %v9485 = vadd.f32 %v9484, %v8973
          %v9486 = vadd.f32 %v9485, %v8974
          %v9487 = vadd.f32 %v9486, %v8975
          %v9488 = vadd.f32 %v9487, %v8976
          %v9489 = vadd.f32 %v9488, %v8977
          %v9490 = vadd.f32 %v9489, %v8978
          %v9491 = vadd.f32 %v9490, %v8979
          %v9492 = vadd.f32 %v9491, %v8980
          %v9493 = vadd.f32 %v9492, %v8981
          %v9494 = vadd.f32 %v9493, %v8982
          %v9495 = vadd.f32 %v9494, %v8983
          %v9496 = vadd.f32 %v9495, %v8984
          %v9497 = vadd.f32 %v9496, %v8985
          %v9498 = vadd.f32 %v9497, %v8986
          %v9499 = vadd.f32 %v9498, %v8987
          %v9500 = vadd.f32 %v9499, %v8988
          %v9501 = vadd.f32 %v9500, %v8989
          %v9502 = vadd.f32 %v9501, %v8990
          %v9503 = vadd.f32 %v9502, %v8991
          %v9504 = vadd.f32 %v9503, %v8992
          %v9505 = vadd.f32 %v9504, %v8993
          %v9506 = vadd.f32 %v8994, %v9505
          %9507 = vst [vmem:[#allocation2] sm:$0xff] %v9506
        $region48: #{tpu_custom_call.1} parent=27 // pred_fallthru
          _
        %p9508 = scmp.eq.s32.totalorder %s27, 1
        // Predicated region
        $region49: #{tpu_custom_call.1} parent=27 // pred_check
          %p9509 = pneg %p9508
        $region50: #{tpu_custom_call.1} parent=27 // pred_check_branch
          %9511 = sbr.rel (%p9509) target = $region52
        $region51: #{tpu_custom_call.1} parent=27 // pred_region
          %v9512 = vld [vmem:[#allocation2] sm:$0xff]
          %9513 = vst [vmem:[%s249] sm:$0xff] %v9512
        $region52: #{tpu_custom_call.1} parent=27 // pred_fallthru
          _
        %s9514 = sand.u32 %s110, 1
        %s9515 = scalar_lea.sflag [#allocation5], %s9514
        %s9516 = sand.u32 %s110, 1
        %s9517 = smul.addr %s9516, 8
        %s9518 = scalar_lea.vmem [#allocation8], %s9517
        // Predicated region
        $region53: #{tpu_custom_call.1} parent=27 // pred_check
          %p9519 = pneg %p120
        $region54: #{tpu_custom_call.1} parent=27 // pred_check_branch
          %9521 = sbr.rel (%p9519) target = $region56
        $region55: #{tpu_custom_call.1} parent=27 // pred_region
          %s9523 = ssub.s32 128, 128
          %9524 = vsyncadd %s9515, %s9523
          %s9525 = smul.addr %s26, 128
          %s9526 = scalar_lea.hbm %s2, %s9525
          %s9528 = sshll.u32 %s9518, 4
          %s9529 = int_to_ptr.vmem [resolvable:$true] %s9528
          %9531 = dma.vmem_to_hbm [thread:$0]  %s9529, 128, %s9526, %s9515
        $region56: #{tpu_custom_call.1} parent=27 // pred_fallthru
          _
      $region28: #{tpu_custom_call.1} parent=5 // pred_fallthru
        _
      %p9532 = scmp.le.s32.totalorder 2, %s17
      // Predicated region
      $region57: #{tpu_custom_call.1} parent=5 // pred_check
        %p9533 = pneg %p9532
      $region58: #{tpu_custom_call.1} parent=5 // pred_check_branch
        %9535 = sbr.rel (%p9533) target = $region60
      $region59: #{tpu_custom_call.1} parent=5 // pred_region
        %s9536 = ssub.s32 %s17, 2
        // Predicated region
        $region61: #{tpu_custom_call.1} parent=59 // pred_check
          %p9537 = pneg %p126
        $region62: #{tpu_custom_call.1} parent=59 // pred_check_branch
          %9539 = sbr.rel (%p9537) target = $region64
        $region63: #{tpu_custom_call.1} parent=59 // pred_region
          %s9540 = sand.u32 %s111, 1
          %s9541 = scalar_lea.sflag [#allocation5], %s9540
          %s9542 = sand.u32 %s111, 1
          %s9543 = smul.addr %s9542, 8
          %s9544 = scalar_lea.vmem [#allocation8], %s9543
          %9545 = dma.done %s9541, 128
        $region64: #{tpu_custom_call.1} parent=59 // pred_fallthru
          _
      $region60: #{tpu_custom_call.1} parent=5 // pred_fallthru
        _
    $region6: #{tpu_custom_call.1} parent=1 // loop_footer
      %s21 = sadd.s32 1, %s17
    $region7: #{tpu_custom_call.1} parent=1 // loop_footer_branch
      %16 = sbr.rel target = $region3
    $region8: #{tpu_custom_call.1} parent=1 // loop_exit
      _
    %9546 = vsyncpa [#allocation4], 1
    %s9547 = scalar_lea.sflag [#allocation4], 1
    %9548 = vsyncpa %s9547, 1
    %9549 = vsyncpa [#allocation7], 1
    %s9550 = scalar_lea.sflag [#allocation7], 1
    %9551 = vsyncpa %s9550, 1
    %9552 = vsyncpa [#allocation5], 1
    %s9553 = scalar_lea.sflag [#allocation5], 1
    %9554 = vsyncpa %s9553, 1

</llo_original>
